<compile_context>
chip_gen: v7x
topology: tpu7x:2x2x1
jax: 0.10.0
libtpu: 0.0.40
codegen_flags: <defaults>
</compile_context>

<pallas_src>
import functools

import jax
import jax.numpy as jnp
from jax import lax
from jax.experimental import pallas as pl
from jax.experimental.pallas import tpu as pltpu


def _silu(x):
    return x * jax.nn.sigmoid(x)


def _round_up(n, m):
    return ((n + m - 1) // m) * m


_MAX_TILE_DST = 128   # dst nodes: lane axis of adj / coords / outputs
_MAX_TILE_SRC = 128   # src nodes: sublane axis


def _vmem_capacity_bytes():
    try:
        return int(pltpu.get_tpu_info().vmem_capacity_bytes)
    except Exception:
        return 64 * 1024 * 1024          # conservative default (v7x per-core)


def _choose_tiles(n_dst, n_src, hidden):
    cap = _vmem_capacity_bytes()
    vmem_limit = int(min(max(cap - 12 * 1024 * 1024, 32 * 1024 * 1024),
                         96 * 1024 * 1024))

    # Destination tile: it is the lane axis of adj / x_dst / outputs, so a
    # partial tile must be a multiple of 128.  For n_dst <= 128 a single full
    # tile is forced by the lane-tiling constraint (one v7x core idles then).
    if n_dst <= _MAX_TILE_DST:
        t_d = _round_up(n_dst, 8)
        d_pad = t_d
    else:
        t_d = _MAX_TILE_DST
        d_pad = _round_up(n_dst, t_d)

    # Source tile (sublane axis): cap it so the ~6 live (tS, tD, H) f32
    # temporaries stay within about half the VMEM limit -> ~64 on 64 MiB VMEM
    # (v7x), 128 on 128 MiB VMEM (v5e/v6e) at H=128.
    budget = vmem_limit // 2
    per_row = 6 * 4 * t_d * max(hidden, 8)
    cap_s = max(16, min(_MAX_TILE_SRC, (budget // per_row) // 16 * 16))
    if n_src <= cap_s:
        t_s = _round_up(n_src, 8)
        s_pad = t_s
    else:
        t_s = cap_s
        s_pad = _round_up(n_src, t_s)
    return t_d, d_pad, t_s, s_pad, vmem_limit


# -----------------------------------------------------------------------------
# Fused per-layer kernel.
# Grid = (n_dst_tiles, 2 edge types, n_src_tiles); last two axes = reduction.
# -----------------------------------------------------------------------------
def _ligrec_layer_kernel(
        inv_z_ref,                                          # SMEM (1,1): 1/z
        h_src_ref, x_src_ref, adj_ref, h_dst_ref, x_dst_ref,
        wE_ref, bE1_ref, wE2_ref, bE2_ref, waT_ref, ba_ref,
        wC_ref, bC1_ref, wC2_ref, bC2_ref, wc3T_ref,
        wn1_ref, bn1_ref, wn2_ref, bn2_ref,
        h_out_ref, x_out_ref,
        acc_h_ref, acc_x_ref, dstE_ref, dstC_ref,
        *, in_size, hidden, use_tanh, coords_range):
    F = in_size
    H = hidden
    e = pl.program_id(1)
    s = pl.program_id(2)
    is_first = jnp.logical_and(e == 0, s == 0)
    is_last = jnp.logical_and(e == pl.num_programs(1) - 1,
                              s == pl.num_programs(2) - 1)

    @pl.when(is_first)
    def _():
        acc_h_ref[...] = jnp.zeros_like(acc_h_ref)
        acc_x_ref[...] = jnp.zeros_like(acc_x_ref)

    h_d = h_dst_ref[...]                       # (tD, F) f32
    x_d = x_dst_ref[...]                       # (3, tD) f32, lane-dense

    # Per-edge-type weights stay VMEM-resident for the whole grid (constant
    # index_map); select the current type with a dynamic leading index.
    wE = wE_ref[e]                             # (2F+1, H) bf16
    wC = wC_ref[e]

    # dst-side first-layer projections depend only on (dst tile, edge type):
    # compute once per (d, e) block with the bias folded in.
    @pl.when(s == 0)
    def _():
        h_d_bf = h_d.astype(jnp.bfloat16)
        dstE_ref[...] = (jnp.dot(h_d_bf, wE[F:2 * F, :],
                                 preferred_element_type=jnp.float32)
                         + bE1_ref[e])
        dstC_ref[...] = (jnp.dot(h_d_bf, wC[F:2 * F, :],
                                 preferred_element_type=jnp.float32)
                         + bC1_ref[e])

    h_s = h_src_ref[...]                       # (tS, F) f32
    x_s = x_src_ref[...]                       # (tS, 3) f32
    adj = adj_ref[...].astype(jnp.float32)     # (tS, tD) 0/1 mask (bf16 in HBM)

    # Pairwise coordinate differences (src - dst), (tS, tD) each; dst coords
    # are already lane-dense, no in-kernel transpose.
    dx = x_s[:, 0:1] - x_d[0:1, :]
    dy = x_s[:, 1:2] - x_d[1:2, :]
    dz = x_s[:, 2:3] - x_d[2:3, :]
    dij = jnp.sqrt(dx * dx + dy * dy + dz * dz)
    inv = 1.0 / (dij + 1.0)                    # exact 1/(dij+1) for x_diff

    # --- first MLP layer (edge path E, coord path C), bf16 operands on MXU ---
    h_s_bf = h_s.astype(jnp.bfloat16)
    srcE = jnp.dot(h_s_bf, wE[:F, :], preferred_element_type=jnp.float32)
    srcC = jnp.dot(h_s_bf, wC[:F, :], preferred_element_type=jnp.float32)
    wE_dij = wE[2 * F:2 * F + 1, :].astype(jnp.float32).reshape(1, 1, H)
    wC_dij = wC[2 * F:2 * F + 1, :].astype(jnp.float32).reshape(1, 1, H)
    dij3 = dij[:, :, None]

    pre_e = srcE[:, None, :] + dstE_ref[...][None, :, :] + dij3 * wE_dij
    pre_c = srcC[:, None, :] + dstC_ref[...][None, :, :] + dij3 * wC_dij
    hid_e = _silu(pre_e).astype(jnp.bfloat16)  # (tS, tD, H)
    hid_c = _silu(pre_c).astype(jnp.bfloat16)

    # --- second MLP layer: per-path (tS,tD,H) x (H,H) contractions (no
    # block-diagonal zero work, no 2H lane-slices, no flatten copies) ---------
    dn = (((2,), (0,)), ((), ()))
    hid2_e = _silu(lax.dot_general(hid_e, wE2_ref[e], dimension_numbers=dn,
                                   preferred_element_type=jnp.float32)
                   + bE2_ref[e][None])         # (tS, tD, H) = msg_h (pre-gate)
    hid2_c = _silu(lax.dot_general(hid_c, wC2_ref[e], dimension_numbers=dn,
                                   preferred_element_type=jnp.float32)
                   + bC2_ref[e][None])

    # --- heads: lane-dense (tS, tD) attention logits / coord coefficients ----
    attn = jnp.sum(hid2_e * waT_ref[e][None], axis=-1) + ba_ref[e]   # (tS, tD)
    gate = jax.nn.sigmoid(attn) * adj
    acc_h_ref[...] += jnp.sum(hid2_e * gate[:, :, None], axis=0)     # (tD, H)

    coef = jnp.sum(hid2_c * wc3T_ref[e][None], axis=-1)              # (tS, tD)
    if use_tanh:
        coef = jnp.tanh(coef) * coords_range
    # NOTE: the reference `if edge_type[1] in ['kk','lk']` branch compares one
    # character against two-char strings and can never be taken, so msg_x is
    # always coef * x_diff (reproduced exactly).
    ce = adj * coef * inv
    xx = jnp.sum(ce * dx, axis=0, keepdims=True)                     # (1, tD)
    xy = jnp.sum(ce * dy, axis=0, keepdims=True)
    xz = jnp.sum(ce * dz, axis=0, keepdims=True)
    acc_x_ref[...] += jnp.concatenate([xx, xy, xz], axis=0)          # (3, tD)

    # --- epilogue: node MLP + residual on the last reduction step ------------
    @pl.when(is_last)
    def _():
        inv_z = inv_z_ref[0, 0]
        hn = acc_h_ref[...] * inv_z                                  # h_neigh/z
        xn = acc_x_ref[...] * inv_z                                  # x_neigh/z
        wn1 = wn1_ref[...]                                           # (F+H, H)
        pre_n = (jnp.dot(h_d.astype(jnp.bfloat16), wn1[:F, :],
                         preferred_element_type=jnp.float32)
                 + jnp.dot(hn.astype(jnp.bfloat16), wn1[F:, :],
                           preferred_element_type=jnp.float32)
                 + bn1_ref[...])
        upd = jnp.dot(_silu(pre_n).astype(jnp.bfloat16), wn2_ref[...],
                      preferred_element_type=jnp.float32) + bn2_ref[...]
        # norm=False -> nn.Identity layer norm.
        # TODO(synk): LayerNorm path (norm=True) not implemented.
        h_out_ref[...] = h_d + upd
        x_out_ref[...] = x_d + xn


# -----------------------------------------------------------------------------
# One fused LigRecConv layer.
# -----------------------------------------------------------------------------
def ligrec_conv_layer(h_lig, x_lig, h_kp, x_kp, adj_ll, adj_kl, layer_p,
                      message_norm=1.0, use_tanh=False, coords_range=10.0):
    n_lig, F = h_lig.shape
    n_kp = h_kp.shape[0]
    H = layer_p['node']['wn2'].shape[0]
    out_size = layer_p['node']['wn2'].shape[1]
    assert out_size == F, "residual h + node_mlp(...) requires out_size == in_size"

    t_d, d_pad, t_s, s_pad, vmem_limit = _choose_tiles(n_lig,
                                                       max(n_lig, n_kp), H)

    def pad2(a, r, c):
        return jnp.pad(a, ((0, r - a.shape[0]), (0, c - a.shape[1])))

    # Stacked, zero-padded per-edge-type sources (slot 0: lig->lig, 1: kp->lig).
    h_src = jnp.stack([pad2(h_lig, s_pad, F), pad2(h_kp, s_pad, F)])   # (2,S,F)
    x_src = jnp.stack([pad2(x_lig, s_pad, 3), pad2(x_kp, s_pad, 3)])   # (2,S,3)
    # bf16 adjacency: exact for 0/1 masks (lossy only for weighted adjacency).
    adj = jnp.stack([pad2(adj_ll, s_pad, d_pad),
                     pad2(adj_kl, s_pad, d_pad)]).astype(jnp.bfloat16)  # (2,S,D)
    h_dst = pad2(h_lig, d_pad, F)                                      # (D,F)
    x_dst_t = pad2(x_lig, d_pad, 3).T                                  # (3,D)

    bf16 = jnp.bfloat16

    def stack2(name):
        return jnp.stack([layer_p['ll'][name], layer_p['kl'][name]])

    wE = stack2('w1').astype(bf16)                                     # (2,2F+1,H)
    bE1 = stack2('b1')                                                 # (2,1,H)
    wE2 = stack2('w2').astype(bf16)                                    # (2,H,H)
    bE2 = stack2('b2')                                                 # (2,1,H)
    waT = jnp.stack([layer_p['ll']['wa'].T, layer_p['kl']['wa'].T])    # (2,1,H)
    ba = stack2('ba')                                                  # (2,1,1)
    wC = stack2('wc1').astype(bf16)
    bC1 = stack2('bc1')
    wC2 = stack2('wc2').astype(bf16)
    bC2 = stack2('bc2')
    wc3T = jnp.stack([layer_p['ll']['wc3'].T, layer_p['kl']['wc3'].T])  # (2,1,H)

    nd = layer_p['node']
    wn1 = nd['wn1'].astype(bf16)
    bn1 = nd['bn1']
    wn2 = nd['wn2'].astype(bf16)
    bn2 = nd['bn2']

    inv_z = jnp.full((1, 1), 1.0 / float(message_norm), jnp.float32)

    F2 = 2 * F + 1
    grid = (d_pad // t_d, 2, s_pad // t_s)

    kernel = functools.partial(_ligrec_layer_kernel, in_size=F, hidden=H,
                               use_tanh=use_tanh, coords_range=coords_range)

    const3 = lambda d, e, s: (0, 0, 0)
    const2 = lambda d, e, s: (0, 0)

    in_specs = [
        pl.BlockSpec((1, 1), const2, memory_space=pltpu.MemorySpace.SMEM),
        pl.BlockSpec((None, t_s, F), lambda d, e, s: (e, s, 0)),       # h_src
        pl.BlockSpec((None, t_s, 3), lambda d, e, s: (e, s, 0)),       # x_src
        pl.BlockSpec((None, t_s, t_d), lambda d, e, s: (e, s, d)),     # adj
        pl.BlockSpec((t_d, F), lambda d, e, s: (d, 0)),                # h_dst
        pl.BlockSpec((3, t_d), lambda d, e, s: (0, d)),                # x_dst_t
        pl.BlockSpec((2, F2, H), const3),                              # wE
        pl.BlockSpec((2, 1, H), const3),                               # bE1
        pl.BlockSpec((2, H, H), const3),                               # wE2
        pl.BlockSpec((2, 1, H), const3),                               # bE2
        pl.BlockSpec((2, 1, H), const3),                               # waT
        pl.BlockSpec((2, 1, 1), const3),                               # ba
        pl.BlockSpec((2, F2, H), const3),                              # wC
        pl.BlockSpec((2, 1, H), const3),                               # bC1
        pl.BlockSpec((2, H, H), const3),                               # wC2
        pl.BlockSpec((2, 1, H), const3),                               # bC2
        pl.BlockSpec((2, 1, H), const3),                               # wc3T
        pl.BlockSpec((F + H, H), const2),                              # wn1
        pl.BlockSpec((1, H), const2),                                  # bn1
        pl.BlockSpec((H, out_size), const2),                           # wn2
        pl.BlockSpec((1, out_size), const2),                           # bn2
    ]
    out_specs = (
        pl.BlockSpec((t_d, out_size), lambda d, e, s: (d, 0)),         # h_out
        pl.BlockSpec((3, t_d), lambda d, e, s: (0, d)),                # x_out
    )

    h_out, x_out_t = pl.pallas_call(
        kernel,
        grid=grid,
        in_specs=in_specs,
        out_specs=out_specs,
        out_shape=(jax.ShapeDtypeStruct((d_pad, out_size), jnp.float32),
                   jax.ShapeDtypeStruct((3, d_pad), jnp.float32)),
        scratch_shapes=[pltpu.VMEM((t_d, H), jnp.float32),   # acc_h
                        pltpu.VMEM((3, t_d), jnp.float32),   # acc_x
                        pltpu.VMEM((t_d, H), jnp.float32),   # dstE
                        pltpu.VMEM((t_d, H), jnp.float32)],  # dstC
        compiler_params=pltpu.CompilerParams(
            dimension_semantics=("parallel", "arbitrary", "arbitrary"),
            vmem_limit_bytes=vmem_limit),
    )(inv_z, h_src, x_src, adj, h_dst, x_dst_t,
      wE, bE1, wE2, bE2, waT, ba,
      wC, bC1, wC2, bC2, wc3T,
      wn1, bn1, wn2, bn2)

    return h_out[:n_lig], x_out_t[:, :n_lig].T


# -----------------------------------------------------------------------------
# Multi-layer EGNN driver (update_kp_feat=False: kp features/coords are never
# updated, only lig nodes) and parameter init.
# -----------------------------------------------------------------------------
def ligrec_egnn_forward(layer_params, h_lig0, x_lig0, h_kp0, x_kp0,
                        adj_ll, adj_kl, message_norm=1.0,
                        use_tanh=False, coords_range=10.0):
    h_lig, x_lig = h_lig0, x_lig0
    for lp in layer_params:
        h_lig, x_lig = ligrec_conv_layer(
            h_lig, x_lig, h_kp0, x_kp0, adj_ll, adj_kl, lp,
            message_norm=message_norm, use_tanh=use_tanh,
            coords_range=coords_range)
    return h_lig, x_lig


def _linear_init(key, fan_in, fan_out):
    kw, kb = jax.random.split(key)
    bound = 1.0 / float(fan_in) ** 0.5
    w = jax.random.uniform(kw, (fan_in, fan_out), jnp.float32, -bound, bound)
    b = jax.random.uniform(kb, (1, fan_out), jnp.float32, -bound, bound)
    return w, b


def _init_edge_params(key, in_size, hidden):
    ks = jax.random.split(key, 6)
    w1, b1 = _linear_init(ks[0], 2 * in_size + 1, hidden)
    w2, b2 = _linear_init(ks[1], hidden, hidden)
    wa, ba = _linear_init(ks[2], hidden, 1)
    wc1, bc1 = _linear_init(ks[3], 2 * in_size + 1, hidden)
    wc2, bc2 = _linear_init(ks[4], hidden, hidden)
    xb = 0.001 * (6.0 / (hidden + 1)) ** 0.5              # xavier_uniform gain=0.001
    wc3 = jax.random.uniform(ks[5], (hidden, 1), jnp.float32, -xb, xb)
    return dict(w1=w1, b1=b1, w2=w2, b2=b2, wa=wa, ba=ba,
                wc1=wc1, bc1=bc1, wc2=wc2, bc2=bc2, wc3=wc3)


def _init_conv_params(key, in_size, hidden, out_size):
    k_ll, k_kl, k_n1, k_n2 = jax.random.split(key, 4)
    wn1, bn1 = _linear_init(k_n1, in_size + hidden, hidden)
    wn2, bn2 = _linear_init(k_n2, hidden, out_size)
    return dict(ll=_init_edge_params(k_ll, in_size, hidden),
                kl=_init_edge_params(k_kl, in_size, hidden),
                node=dict(wn1=wn1, bn1=bn1, wn2=wn2, bn2=bn2))


def make_egnn_params(key, n_layers, in_size, hidden_size, out_size):
    layers = []
    for i in range(n_layers):
        if n_layers == 1:
            li, lh, lo = in_size, hidden_size, out_size
        elif i == 0:
            li, lh, lo = in_size, hidden_size, hidden_size
        elif i == n_layers - 1:
            li, lh, lo = hidden_size, hidden_size, out_size
        else:
            li, lh, lo = hidden_size, hidden_size, hidden_size
        key, k = jax.random.split(key)
        layers.append(_init_conv_params(k, li, lh, lo))
    return layers


if __name__ == "__main__":
    key = jax.random.PRNGKey(0)
    N_LIG, N_KP = 16, 8
    IN_SIZE = HIDDEN = OUT_SIZE = 32
    N_LAYERS = 2

    k1, k2, k3, k4, k5, k6, kp = jax.random.split(key, 7)
    h_lig0 = jax.random.normal(k1, (N_LIG, IN_SIZE), jnp.float32)
    x_lig0 = jax.random.normal(k2, (N_LIG, 3), jnp.float32)
    h_kp0 = jax.random.normal(k3, (N_KP, IN_SIZE), jnp.float32)
    x_kp0 = jax.random.normal(k4, (N_KP, 3), jnp.float32)
    adj_ll = (jax.random.uniform(k5, (N_LIG, N_LIG)) < 0.5).astype(jnp.float32)
    adj_kl = (jax.random.uniform(k6, (N_KP, N_LIG)) < 0.5).astype(jnp.float32)

    params = make_egnn_params(kp, N_LAYERS, IN_SIZE, HIDDEN, OUT_SIZE)

    fwd = jax.jit(functools.partial(ligrec_egnn_forward, message_norm=1.0,
                                    use_tanh=False, coords_range=10.0))
    h_out, x_out = fwd(params, h_lig0, x_lig0, h_kp0, x_kp0, adj_ll, adj_kl)
    jax.block_until_ready((h_out, x_out))
    assert h_out.shape == (N_LIG, OUT_SIZE) and x_out.shape == (N_LIG, 3)
    assert bool(jnp.all(jnp.isfinite(h_out))) and bool(jnp.all(jnp.isfinite(x_out)))
    print("KERNEL_OK")
</pallas_src>

<mosaic_0001>
module attributes {stable_mosaic.version = 11 : i64} {
  func.func @_ligrec_layer_kernel(%arg0: i32, %arg1: i32, %arg2: i32, %arg3: memref<1x1xf32, #tpu.memory_space<smem>>, %arg4: memref<1x16x32xf32, #tpu.memory_space<vmem>>, %arg5: memref<1x16x3xf32, #tpu.memory_space<vmem>>, %arg6: memref<1x16x16xbf16, #tpu.memory_space<vmem>>, %arg7: memref<16x32xf32, #tpu.memory_space<vmem>>, %arg8: memref<3x16xf32, #tpu.memory_space<vmem>>, %arg9: memref<2x65x32xbf16, #tpu.memory_space<vmem>>, %arg10: memref<2x1x32xf32, #tpu.memory_space<vmem>>, %arg11: memref<2x32x32xbf16, #tpu.memory_space<vmem>>, %arg12: memref<2x1x32xf32, #tpu.memory_space<vmem>>, %arg13: memref<2x1x32xf32, #tpu.memory_space<vmem>>, %arg14: memref<2x1x1xf32, #tpu.memory_space<vmem>>, %arg15: memref<2x65x32xbf16, #tpu.memory_space<vmem>>, %arg16: memref<2x1x32xf32, #tpu.memory_space<vmem>>, %arg17: memref<2x32x32xbf16, #tpu.memory_space<vmem>>, %arg18: memref<2x1x32xf32, #tpu.memory_space<vmem>>, %arg19: memref<2x1x32xf32, #tpu.memory_space<vmem>>, %arg20: memref<64x32xbf16, #tpu.memory_space<vmem>>, %arg21: memref<1x32xf32, #tpu.memory_space<vmem>>, %arg22: memref<32x32xbf16, #tpu.memory_space<vmem>>, %arg23: memref<1x32xf32, #tpu.memory_space<vmem>>, %arg24: memref<16x32xf32, #tpu.memory_space<vmem>>, %arg25: memref<3x16xf32, #tpu.memory_space<vmem>>, %arg26: memref<16x32xf32, #tpu.memory_space<vmem>>, %arg27: memref<3x16xf32, #tpu.memory_space<vmem>>, %arg28: memref<16x32xf32, #tpu.memory_space<vmem>>, %arg29: memref<16x32xf32, #tpu.memory_space<vmem>>) attributes {dimension_semantics = [#tpu.dimension_semantics<parallel>, #tpu.dimension_semantics<arbitrary>, #tpu.dimension_semantics<arbitrary>], iteration_bounds = array<i64: 1, 2, 1>, scalar_prefetch = 0 : i64, scratch_operands = 4 : i64, tpu.core_type = #tpu.core_type<tc>, window_params = [{transform_indices = @transform_0, window_bounds = array<i64: 1, 1>}, {transform_indices = @transform_1, window_bounds = array<i64: 1, 16, 32>}, {transform_indices = @transform_2, window_bounds = array<i64: 1, 16, 3>}, {transform_indices = @transform_3, window_bounds = array<i64: 1, 16, 16>}, {transform_indices = @transform_4, window_bounds = array<i64: 16, 32>}, {transform_indices = @transform_5, window_bounds = array<i64: 3, 16>}, {pipeline_mode = #tpu.pipeline_mode<synchronous>, transform_indices = @transform_6, window_bounds = array<i64: 2, 65, 32>}, {pipeline_mode = #tpu.pipeline_mode<synchronous>, transform_indices = @transform_7, window_bounds = array<i64: 2, 1, 32>}, {pipeline_mode = #tpu.pipeline_mode<synchronous>, transform_indices = @transform_8, window_bounds = array<i64: 2, 32, 32>}, {pipeline_mode = #tpu.pipeline_mode<synchronous>, transform_indices = @transform_9, window_bounds = array<i64: 2, 1, 32>}, {pipeline_mode = #tpu.pipeline_mode<synchronous>, transform_indices = @transform_10, window_bounds = array<i64: 2, 1, 32>}, {pipeline_mode = #tpu.pipeline_mode<synchronous>, transform_indices = @transform_11, window_bounds = array<i64: 2, 1, 1>}, {pipeline_mode = #tpu.pipeline_mode<synchronous>, transform_indices = @transform_12, window_bounds = array<i64: 2, 65, 32>}, {pipeline_mode = #tpu.pipeline_mode<synchronous>, transform_indices = @transform_13, window_bounds = array<i64: 2, 1, 32>}, {pipeline_mode = #tpu.pipeline_mode<synchronous>, transform_indices = @transform_14, window_bounds = array<i64: 2, 32, 32>}, {pipeline_mode = #tpu.pipeline_mode<synchronous>, transform_indices = @transform_15, window_bounds = array<i64: 2, 1, 32>}, {pipeline_mode = #tpu.pipeline_mode<synchronous>, transform_indices = @transform_16, window_bounds = array<i64: 2, 1, 32>}, {pipeline_mode = #tpu.pipeline_mode<synchronous>, transform_indices = @transform_17, window_bounds = array<i64: 64, 32>}, {pipeline_mode = #tpu.pipeline_mode<synchronous>, transform_indices = @transform_18, window_bounds = array<i64: 1, 32>}, {pipeline_mode = #tpu.pipeline_mode<synchronous>, transform_indices = @transform_19, window_bounds = array<i64: 32, 32>}, {pipeline_mode = #tpu.pipeline_mode<synchronous>, transform_indices = @transform_20, window_bounds = array<i64: 1, 32>}, {transform_indices = @transform_21, window_bounds = array<i64: 16, 32>}, {transform_indices = @transform_22, window_bounds = array<i64: 3, 16>}]} {
    %c0_i32 = arith.constant 0 : i32
    %0 = arith.cmpi eq, %arg1, %c0_i32 : i32
    %c0_i32_0 = arith.constant 0 : i32
    %1 = arith.cmpi eq, %arg2, %c0_i32_0 : i32
    %2 = arith.andi %0, %1 : i1
    %c1_i32 = arith.constant 1 : i32
    %3 = arith.cmpi eq, %arg1, %c1_i32 : i32
    %c0_i32_1 = arith.constant 0 : i32
    %4 = arith.cmpi eq, %arg2, %c0_i32_1 : i32
    %5 = arith.andi %3, %4 : i1
    %6 = arith.extui %2 : i1 to i32
    %c0_i32_2 = arith.constant 0 : i32
    %7 = arith.cmpi ne, %6, %c0_i32_2 : i32
    scf.if %7 {
      %cst_64 = arith.constant 0.000000e+00 : f32
      %178 = vector.broadcast %cst_64 : f32 to vector<16x32xf32>
      %c0_65 = arith.constant 0 : index
      %c0_66 = arith.constant 0 : index
      %179 = vector.load %arg26[%c0_65, %c0_66] : memref<16x32xf32, #tpu.memory_space<vmem>>, vector<16x32xf32>
      tpu.vector_store %arg26[%c0_65, %c0_66], %178 {strides = array<i32>} : memref<16x32xf32, #tpu.memory_space<vmem>>, vector<16x32xf32>,
      %cst_67 = arith.constant 0.000000e+00 : f32
      %180 = vector.broadcast %cst_67 : f32 to vector<3x16xf32>
      %c0_68 = arith.constant 0 : index
      %c0_69 = arith.constant 0 : index
      %181 = vector.load %arg27[%c0_68, %c0_69] : memref<3x16xf32, #tpu.memory_space<vmem>>, vector<3x16xf32>
      tpu.vector_store %arg27[%c0_68, %c0_69], %180 {strides = array<i32>} : memref<3x16xf32, #tpu.memory_space<vmem>>, vector<3x16xf32>,
    } else {
    }
    %c0 = arith.constant 0 : index
    %c0_3 = arith.constant 0 : index
    %8 = vector.load %arg7[%c0, %c0_3] : memref<16x32xf32, #tpu.memory_space<vmem>>, vector<16x32xf32>
    %c0_4 = arith.constant 0 : index
    %c0_5 = arith.constant 0 : index
    %9 = vector.load %arg8[%c0_4, %c0_5] : memref<3x16xf32, #tpu.memory_space<vmem>>, vector<3x16xf32>
    %10 = arith.index_cast %arg1 : i32 to index
    %c0_6 = arith.constant 0 : index
    %c0_7 = arith.constant 0 : index
    %11 = vector.load %arg9[%10, %c0_6, %c0_7] : memref<2x65x32xbf16, #tpu.memory_space<vmem>>, vector<1x65x32xbf16>
    %12 = vector.shape_cast %11 : vector<1x65x32xbf16> to vector<65x32xbf16>
    %13 = arith.index_cast %arg1 : i32 to index
    %c0_8 = arith.constant 0 : index
    %c0_9 = arith.constant 0 : index
    %14 = vector.load %arg15[%13, %c0_8, %c0_9] : memref<2x65x32xbf16, #tpu.memory_space<vmem>>, vector<1x65x32xbf16>
    %15 = vector.shape_cast %14 : vector<1x65x32xbf16> to vector<65x32xbf16>
    %c0_i32_10 = arith.constant 0 : i32
    %16 = arith.cmpi eq, %arg2, %c0_i32_10 : i32
    %17 = arith.extui %16 : i1 to i32
    %c0_i32_11 = arith.constant 0 : i32
    %18 = arith.cmpi ne, %17, %c0_i32_11 : i32
    scf.if %18 {
      %178 = arith.truncf %8 : vector<16x32xf32> to vector<16x32xbf16>
      %179 = vector.extract_strided_slice %12 {offsets = [32, 0], sizes = [32, 32], strides = [1, 1]} : vector<65x32xbf16> to vector<32x32xbf16>
      %cst_64 = arith.constant dense<0.000000e+00> : vector<16x32xf32>
      %180 = tpu.matmul %178, %179, %cst_64 {dimension_numbers = #tpu.dot_dimension_numbers<[1], [0], [0], [1], [0, 0, 1, 1], [], []>} : vector<16x32xbf16>, vector<32x32xbf16>, vector<16x32xf32> -> vector<16x32xf32>
      %181 = arith.index_cast %arg1 : i32 to index
      %c0_65 = arith.constant 0 : index
      %c0_66 = arith.constant 0 : index
      %182 = vector.load %arg10[%181, %c0_65, %c0_66] : memref<2x1x32xf32, #tpu.memory_space<vmem>>, vector<1x1x32xf32>
      %183 = vector.shape_cast %182 : vector<1x1x32xf32> to vector<1x32xf32>
      %184 = vector.broadcast %183 : vector<1x32xf32> to vector<16x32xf32>
      %185 = arith.addf %180, %184 : vector<16x32xf32>
      %c0_67 = arith.constant 0 : index
      %c0_68 = arith.constant 0 : index
      %186 = vector.load %arg28[%c0_67, %c0_68] : memref<16x32xf32, #tpu.memory_space<vmem>>, vector<16x32xf32>
      tpu.vector_store %arg28[%c0_67, %c0_68], %185 {strides = array<i32>} : memref<16x32xf32, #tpu.memory_space<vmem>>, vector<16x32xf32>,
      %187 = vector.extract_strided_slice %15 {offsets = [32, 0], sizes = [32, 32], strides = [1, 1]} : vector<65x32xbf16> to vector<32x32xbf16>
      %cst_69 = arith.constant dense<0.000000e+00> : vector<16x32xf32>
      %188 = tpu.matmul %178, %187, %cst_69 {dimension_numbers = #tpu.dot_dimension_numbers<[1], [0], [0], [1], [0, 0, 1, 1], [], []>} : vector<16x32xbf16>, vector<32x32xbf16>, vector<16x32xf32> -> vector<16x32xf32>
      %189 = arith.index_cast %arg1 : i32 to index
      %c0_70 = arith.constant 0 : index
      %c0_71 = arith.constant 0 : index
      %190 = vector.load %arg16[%189, %c0_70, %c0_71] : memref<2x1x32xf32, #tpu.memory_space<vmem>>, vector<1x1x32xf32>
      %191 = vector.shape_cast %190 : vector<1x1x32xf32> to vector<1x32xf32>
      %192 = vector.broadcast %191 : vector<1x32xf32> to vector<16x32xf32>
      %193 = arith.addf %188, %192 : vector<16x32xf32>
      %c0_72 = arith.constant 0 : index
      %c0_73 = arith.constant 0 : index
      %194 = vector.load %arg29[%c0_72, %c0_73] : memref<16x32xf32, #tpu.memory_space<vmem>>, vector<16x32xf32>
      tpu.vector_store %arg29[%c0_72, %c0_73], %193 {strides = array<i32>} : memref<16x32xf32, #tpu.memory_space<vmem>>, vector<16x32xf32>,
    } else {
    }
    %c0_12 = arith.constant 0 : index
    %c0_13 = arith.constant 0 : index
    %c0_14 = arith.constant 0 : index
    %19 = vector.load %arg4[%c0_12, %c0_13, %c0_14] : memref<1x16x32xf32, #tpu.memory_space<vmem>>, vector<1x16x32xf32>
    %20 = vector.shape_cast %19 : vector<1x16x32xf32> to vector<16x32xf32>
    %c0_15 = arith.constant 0 : index
    %c0_16 = arith.constant 0 : index
    %c0_17 = arith.constant 0 : index
    %21 = vector.load %arg5[%c0_15, %c0_16, %c0_17] : memref<1x16x3xf32, #tpu.memory_space<vmem>>, vector<1x16x3xf32>
    %22 = vector.shape_cast %21 : vector<1x16x3xf32> to vector<16x3xf32>
    %c0_18 = arith.constant 0 : index
    %c0_19 = arith.constant 0 : index
    %c0_20 = arith.constant 0 : index
    %23 = vector.load %arg6[%c0_18, %c0_19, %c0_20] : memref<1x16x16xbf16, #tpu.memory_space<vmem>>, vector<1x16x16xbf16>
    %24 = vector.shape_cast %23 : vector<1x16x16xbf16> to vector<16x16xbf16>
    %25 = arith.extf %24 : vector<16x16xbf16> to vector<16x16xf32>
    %26 = vector.extract_strided_slice %22 {offsets = [0, 0], sizes = [16, 1], strides = [1, 1]} : vector<16x3xf32> to vector<16x1xf32>
    %27 = vector.extract_strided_slice %9 {offsets = [0, 0], sizes = [1, 16], strides = [1, 1]} : vector<3x16xf32> to vector<1x16xf32>
    %28 = vector.broadcast %26 : vector<16x1xf32> to vector<16x16xf32>
    %29 = vector.broadcast %27 : vector<1x16xf32> to vector<16x16xf32>
    %30 = arith.subf %28, %29 : vector<16x16xf32>
    %31 = vector.extract_strided_slice %22 {offsets = [0, 1], sizes = [16, 1], strides = [1, 1]} : vector<16x3xf32> to vector<16x1xf32>
    %32 = vector.extract_strided_slice %9 {offsets = [1, 0], sizes = [1, 16], strides = [1, 1]} : vector<3x16xf32> to vector<1x16xf32>
    %33 = vector.broadcast %31 : vector<16x1xf32> to vector<16x16xf32>
    %34 = vector.broadcast %32 : vector<1x16xf32> to vector<16x16xf32>
    %35 = arith.subf %33, %34 : vector<16x16xf32>
    %36 = vector.extract_strided_slice %22 {offsets = [0, 2], sizes = [16, 1], strides = [1, 1]} : vector<16x3xf32> to vector<16x1xf32>
    %37 = vector.extract_strided_slice %9 {offsets = [2, 0], sizes = [1, 16], strides = [1, 1]} : vector<3x16xf32> to vector<1x16xf32>
    %38 = vector.broadcast %36 : vector<16x1xf32> to vector<16x16xf32>
    %39 = vector.broadcast %37 : vector<1x16xf32> to vector<16x16xf32>
    %40 = arith.subf %38, %39 : vector<16x16xf32>
    %41 = arith.mulf %30, %30 : vector<16x16xf32>
    %42 = arith.mulf %35, %35 : vector<16x16xf32>
    %43 = arith.addf %41, %42 : vector<16x16xf32>
    %44 = arith.mulf %40, %40 : vector<16x16xf32>
    %45 = arith.addf %43, %44 : vector<16x16xf32>
    %46 = math.sqrt %45 : vector<16x16xf32>
    %cst = arith.constant 1.000000e+00 : f32
    %47 = vector.broadcast %cst : f32 to vector<16x16xf32>
    %48 = arith.addf %46, %47 : vector<16x16xf32>
    %cst_21 = arith.constant 1.000000e+00 : f32
    %49 = vector.broadcast %cst_21 : f32 to vector<16x16xf32>
    %50 = arith.divf %49, %48 : vector<16x16xf32>
    %51 = arith.truncf %20 : vector<16x32xf32> to vector<16x32xbf16>
    %52 = vector.extract_strided_slice %12 {offsets = [0, 0], sizes = [32, 32], strides = [1, 1]} : vector<65x32xbf16> to vector<32x32xbf16>
    %cst_22 = arith.constant dense<0.000000e+00> : vector<16x32xf32>
    %53 = tpu.matmul %51, %52, %cst_22 {dimension_numbers = #tpu.dot_dimension_numbers<[1], [0], [0], [1], [0, 0, 1, 1], [], []>} : vector<16x32xbf16>, vector<32x32xbf16>, vector<16x32xf32> -> vector<16x32xf32>
    %54 = vector.extract_strided_slice %15 {offsets = [0, 0], sizes = [32, 32], strides = [1, 1]} : vector<65x32xbf16> to vector<32x32xbf16>
    %cst_23 = arith.constant dense<0.000000e+00> : vector<16x32xf32>
    %55 = tpu.matmul %51, %54, %cst_23 {dimension_numbers = #tpu.dot_dimension_numbers<[1], [0], [0], [1], [0, 0, 1, 1], [], []>} : vector<16x32xbf16>, vector<32x32xbf16>, vector<16x32xf32> -> vector<16x32xf32>
    %56 = vector.extract_strided_slice %12 {offsets = [64, 0], sizes = [1, 32], strides = [1, 1]} : vector<65x32xbf16> to vector<1x32xbf16>
    %57 = arith.extf %56 : vector<1x32xbf16> to vector<1x32xf32>
    %58 = vector.shape_cast %57 : vector<1x32xf32> to vector<1x1x32xf32>
    %59 = vector.extract_strided_slice %15 {offsets = [64, 0], sizes = [1, 32], strides = [1, 1]} : vector<65x32xbf16> to vector<1x32xbf16>
    %60 = arith.extf %59 : vector<1x32xbf16> to vector<1x32xf32>
    %61 = vector.shape_cast %60 : vector<1x32xf32> to vector<1x1x32xf32>
    %62 = vector.shape_cast %46 : vector<16x16xf32> to vector<16x16x1xf32>
    %63 = vector.shape_cast %53 : vector<16x32xf32> to vector<16x1x32xf32>
    %c0_24 = arith.constant 0 : index
    %c0_25 = arith.constant 0 : index
    %64 = vector.load %arg28[%c0_24, %c0_25] : memref<16x32xf32, #tpu.memory_space<vmem>>, vector<16x32xf32>
    %65 = vector.shape_cast %64 : vector<16x32xf32> to vector<1x16x32xf32>
    %66 = vector.broadcast %63 : vector<16x1x32xf32> to vector<16x16x32xf32>
    %67 = vector.broadcast %65 : vector<1x16x32xf32> to vector<16x16x32xf32>
    %68 = arith.addf %66, %67 : vector<16x16x32xf32>
    %69 = vector.broadcast %62 : vector<16x16x1xf32> to vector<16x16x32xf32>
    %70 = vector.broadcast %58 : vector<1x1x32xf32> to vector<16x16x32xf32>
    %71 = arith.mulf %69, %70 : vector<16x16x32xf32>
    %72 = arith.addf %68, %71 : vector<16x16x32xf32>
    %73 = vector.shape_cast %55 : vector<16x32xf32> to vector<16x1x32xf32>
    %c0_26 = arith.constant 0 : index
    %c0_27 = arith.constant 0 : index
    %74 = vector.load %arg29[%c0_26, %c0_27] : memref<16x32xf32, #tpu.memory_space<vmem>>, vector<16x32xf32>
    %75 = vector.shape_cast %74 : vector<16x32xf32> to vector<1x16x32xf32>
    %76 = vector.broadcast %73 : vector<16x1x32xf32> to vector<16x16x32xf32>
    %77 = vector.broadcast %75 : vector<1x16x32xf32> to vector<16x16x32xf32>
    %78 = arith.addf %76, %77 : vector<16x16x32xf32>
    %79 = vector.broadcast %62 : vector<16x16x1xf32> to vector<16x16x32xf32>
    %80 = vector.broadcast %61 : vector<1x1x32xf32> to vector<16x16x32xf32>
    %81 = arith.mulf %79, %80 : vector<16x16x32xf32>
    %82 = arith.addf %78, %81 : vector<16x16x32xf32>
    %83 = arith.negf %72 : vector<16x16x32xf32>
    %84 = math.exp %83 : vector<16x16x32xf32>
    %cst_28 = arith.constant 1.000000e+00 : f32
    %85 = vector.broadcast %cst_28 : f32 to vector<16x16x32xf32>
    %86 = arith.addf %85, %84 : vector<16x16x32xf32>
    %87 = arith.divf %85, %86 : vector<16x16x32xf32>
    %88 = arith.mulf %72, %87 : vector<16x16x32xf32>
    %89 = arith.truncf %88 : vector<16x16x32xf32> to vector<16x16x32xbf16>
    %90 = arith.negf %82 : vector<16x16x32xf32>
    %91 = math.exp %90 : vector<16x16x32xf32>
    %cst_29 = arith.constant 1.000000e+00 : f32
    %92 = vector.broadcast %cst_29 : f32 to vector<16x16x32xf32>
    %93 = arith.addf %92, %91 : vector<16x16x32xf32>
    %94 = arith.divf %92, %93 : vector<16x16x32xf32>
    %95 = arith.mulf %82, %94 : vector<16x16x32xf32>
    %96 = arith.truncf %95 : vector<16x16x32xf32> to vector<16x16x32xbf16>
    %97 = arith.index_cast %arg1 : i32 to index
    %c0_30 = arith.constant 0 : index
    %c0_31 = arith.constant 0 : index
    %98 = vector.load %arg11[%97, %c0_30, %c0_31] : memref<2x32x32xbf16, #tpu.memory_space<vmem>>, vector<1x32x32xbf16>
    %99 = vector.shape_cast %98 : vector<1x32x32xbf16> to vector<32x32xbf16>
    %cst_32 = arith.constant dense<0.000000e+00> : vector<16x16x32xf32>
    %100 = tpu.matmul %89, %99, %cst_32 {dimension_numbers = #tpu.dot_dimension_numbers<[2], [0], [0, 1], [1], [0, 0, 0, 1, 1, 1], [], []>} : vector<16x16x32xbf16>, vector<32x32xbf16>, vector<16x16x32xf32> -> vector<16x16x32xf32>
    %101 = arith.index_cast %arg1 : i32 to index
    %c0_33 = arith.constant 0 : index
    %c0_34 = arith.constant 0 : index
    %102 = vector.load %arg12[%101, %c0_33, %c0_34] : memref<2x1x32xf32, #tpu.memory_space<vmem>>, vector<1x1x32xf32>
    %103 = vector.shape_cast %102 : vector<1x1x32xf32> to vector<1x32xf32>
    %104 = vector.shape_cast %103 : vector<1x32xf32> to vector<1x1x32xf32>
    %105 = vector.broadcast %104 : vector<1x1x32xf32> to vector<16x16x32xf32>
    %106 = arith.addf %100, %105 : vector<16x16x32xf32>
    %107 = arith.negf %106 : vector<16x16x32xf32>
    %108 = math.exp %107 : vector<16x16x32xf32>
    %cst_35 = arith.constant 1.000000e+00 : f32
    %109 = vector.broadcast %cst_35 : f32 to vector<16x16x32xf32>
    %110 = arith.addf %109, %108 : vector<16x16x32xf32>
    %111 = arith.divf %109, %110 : vector<16x16x32xf32>
    %112 = arith.mulf %106, %111 : vector<16x16x32xf32>
    %113 = arith.index_cast %arg1 : i32 to index
    %c0_36 = arith.constant 0 : index
    %c0_37 = arith.constant 0 : index
    %114 = vector.load %arg17[%113, %c0_36, %c0_37] : memref<2x32x32xbf16, #tpu.memory_space<vmem>>, vector<1x32x32xbf16>
    %115 = vector.shape_cast %114 : vector<1x32x32xbf16> to vector<32x32xbf16>
    %cst_38 = arith.constant dense<0.000000e+00> : vector<16x16x32xf32>
    %116 = tpu.matmul %96, %115, %cst_38 {dimension_numbers = #tpu.dot_dimension_numbers<[2], [0], [0, 1], [1], [0, 0, 0, 1, 1, 1], [], []>} : vector<16x16x32xbf16>, vector<32x32xbf16>, vector<16x16x32xf32> -> vector<16x16x32xf32>
    %117 = arith.index_cast %arg1 : i32 to index
    %c0_39 = arith.constant 0 : index
    %c0_40 = arith.constant 0 : index
    %118 = vector.load %arg18[%117, %c0_39, %c0_40] : memref<2x1x32xf32, #tpu.memory_space<vmem>>, vector<1x1x32xf32>
    %119 = vector.shape_cast %118 : vector<1x1x32xf32> to vector<1x32xf32>
    %120 = vector.shape_cast %119 : vector<1x32xf32> to vector<1x1x32xf32>
    %121 = vector.broadcast %120 : vector<1x1x32xf32> to vector<16x16x32xf32>
    %122 = arith.addf %116, %121 : vector<16x16x32xf32>
    %123 = arith.negf %122 : vector<16x16x32xf32>
    %124 = math.exp %123 : vector<16x16x32xf32>
    %cst_41 = arith.constant 1.000000e+00 : f32
    %125 = vector.broadcast %cst_41 : f32 to vector<16x16x32xf32>
    %126 = arith.addf %125, %124 : vector<16x16x32xf32>
    %127 = arith.divf %125, %126 : vector<16x16x32xf32>
    %128 = arith.mulf %122, %127 : vector<16x16x32xf32>
    %129 = arith.index_cast %arg1 : i32 to index
    %c0_42 = arith.constant 0 : index
    %c0_43 = arith.constant 0 : index
    %130 = vector.load %arg13[%129, %c0_42, %c0_43] : memref<2x1x32xf32, #tpu.memory_space<vmem>>, vector<1x1x32xf32>
    %131 = vector.shape_cast %130 : vector<1x1x32xf32> to vector<1x32xf32>
    %132 = vector.shape_cast %131 : vector<1x32xf32> to vector<1x1x32xf32>
    %133 = vector.broadcast %132 : vector<1x1x32xf32> to vector<16x16x32xf32>
    %134 = arith.mulf %112, %133 : vector<16x16x32xf32>
    %cst_44 = arith.constant dense<0.000000e+00> : vector<16x16xf32>
    %135 = vector.multi_reduction <add>, %134, %cst_44 [2] : vector<16x16x32xf32> to vector<16x16xf32>
    %136 = arith.index_cast %arg1 : i32 to index
    %c0_45 = arith.constant 0 : index
    %c0_46 = arith.constant 0 : index
    %137 = vector.load %arg14[%136, %c0_45, %c0_46] : memref<2x1x1xf32, #tpu.memory_space<vmem>>, vector<1x1x1xf32>
    %138 = vector.shape_cast %137 : vector<1x1x1xf32> to vector<1x1xf32>
    %139 = vector.broadcast %138 : vector<1x1xf32> to vector<16x16xf32>
    %140 = arith.addf %135, %139 : vector<16x16xf32>
    %141 = arith.negf %140 : vector<16x16xf32>
    %142 = math.exp %141 : vector<16x16xf32>
    %cst_47 = arith.constant 1.000000e+00 : f32
    %143 = vector.broadcast %cst_47 : f32 to vector<16x16xf32>
    %144 = arith.addf %143, %142 : vector<16x16xf32>
    %145 = arith.divf %143, %144 : vector<16x16xf32>
    %146 = arith.mulf %145, %25 : vector<16x16xf32>
    %c0_48 = arith.constant 0 : index
    %c0_49 = arith.constant 0 : index
    %147 = vector.load %arg26[%c0_48, %c0_49] : memref<16x32xf32, #tpu.memory_space<vmem>>, vector<16x32xf32>
    %148 = vector.shape_cast %146 : vector<16x16xf32> to vector<16x16x1xf32>
    %149 = vector.broadcast %148 : vector<16x16x1xf32> to vector<16x16x32xf32>
    %150 = arith.mulf %112, %149 : vector<16x16x32xf32>
    %cst_50 = arith.constant dense<0.000000e+00> : vector<16x32xf32>
    %151 = vector.multi_reduction <add>, %150, %cst_50 [0] : vector<16x16x32xf32> to vector<16x32xf32>
    %152 = arith.addf %147, %151 : vector<16x32xf32>
    %c0_51 = arith.constant 0 : index
    %c0_52 = arith.constant 0 : index
    %153 = vector.load %arg26[%c0_51, %c0_52] : memref<16x32xf32, #tpu.memory_space<vmem>>, vector<16x32xf32>
    tpu.vector_store %arg26[%c0_51, %c0_52], %152 {strides = array<i32>} : memref<16x32xf32, #tpu.memory_space<vmem>>, vector<16x32xf32>,
    %154 = arith.index_cast %arg1 : i32 to index
    %c0_53 = arith.constant 0 : index
    %c0_54 = arith.constant 0 : index
    %155 = vector.load %arg19[%154, %c0_53, %c0_54] : memref<2x1x32xf32, #tpu.memory_space<vmem>>, vector<1x1x32xf32>
    %156 = vector.shape_cast %155 : vector<1x1x32xf32> to vector<1x32xf32>
    %157 = vector.shape_cast %156 : vector<1x32xf32> to vector<1x1x32xf32>
    %158 = vector.broadcast %157 : vector<1x1x32xf32> to vector<16x16x32xf32>
    %159 = arith.mulf %128, %158 : vector<16x16x32xf32>
    %cst_55 = arith.constant dense<0.000000e+00> : vector<16x16xf32>
    %160 = vector.multi_reduction <add>, %159, %cst_55 [2] : vector<16x16x32xf32> to vector<16x16xf32>
    %161 = arith.mulf %25, %160 : vector<16x16xf32>
    %162 = arith.mulf %161, %50 : vector<16x16xf32>
    %163 = arith.mulf %162, %30 : vector<16x16xf32>
    %cst_56 = arith.constant dense<0.000000e+00> : vector<16xf32>
    %164 = vector.multi_reduction <add>, %163, %cst_56 [0] : vector<16x16xf32> to vector<16xf32>
    %165 = vector.shape_cast %164 : vector<16xf32> to vector<1x16xf32>
    %166 = arith.mulf %162, %35 : vector<16x16xf32>
    %cst_57 = arith.constant dense<0.000000e+00> : vector<16xf32>
    %167 = vector.multi_reduction <add>, %166, %cst_57 [0] : vector<16x16xf32> to vector<16xf32>
    %168 = vector.shape_cast %167 : vector<16xf32> to vector<1x16xf32>
    %169 = arith.mulf %162, %40 : vector<16x16xf32>
    %cst_58 = arith.constant dense<0.000000e+00> : vector<16xf32>
    %170 = vector.multi_reduction <add>, %169, %cst_58 [0] : vector<16x16xf32> to vector<16xf32>
    %171 = vector.shape_cast %170 : vector<16xf32> to vector<1x16xf32>
    %c0_59 = arith.constant 0 : index
    %c0_60 = arith.constant 0 : index
    %172 = vector.load %arg27[%c0_59, %c0_60] : memref<3x16xf32, #tpu.memory_space<vmem>>, vector<3x16xf32>
    %173 = tpu.concatenate %165, %168, %171 in 0 : vector<1x16xf32>, vector<1x16xf32>, vector<1x16xf32> -> vector<3x16xf32>
    %174 = arith.addf %172, %173 : vector<3x16xf32>
    %c0_61 = arith.constant 0 : index
    %c0_62 = arith.constant 0 : index
    %175 = vector.load %arg27[%c0_61, %c0_62] : memref<3x16xf32, #tpu.memory_space<vmem>>, vector<3x16xf32>
    tpu.vector_store %arg27[%c0_61, %c0_62], %174 {strides = array<i32>} : memref<3x16xf32, #tpu.memory_space<vmem>>, vector<3x16xf32>,
    %176 = arith.extui %5 : i1 to i32
    %c0_i32_63 = arith.constant 0 : i32
    %177 = arith.cmpi ne, %176, %c0_i32_63 : i32
    scf.if %177 {
      %c0_64 = arith.constant 0 : index
      %c0_65 = arith.constant 0 : index
      %178 = memref.load %arg3[%c0_64, %c0_65] : memref<1x1xf32, #tpu.memory_space<smem>>
      %c0_66 = arith.constant 0 : index
      %c0_67 = arith.constant 0 : index
      %179 = vector.load %arg26[%c0_66, %c0_67] : memref<16x32xf32, #tpu.memory_space<vmem>>, vector<16x32xf32>
      %180 = vector.broadcast %178 : f32 to vector<16x32xf32>
      %181 = arith.mulf %179, %180 : vector<16x32xf32>
      %c0_68 = arith.constant 0 : index
      %c0_69 = arith.constant 0 : index
      %182 = vector.load %arg27[%c0_68, %c0_69] : memref<3x16xf32, #tpu.memory_space<vmem>>, vector<3x16xf32>
      %183 = vector.broadcast %178 : f32 to vector<3x16xf32>
      %184 = arith.mulf %182, %183 : vector<3x16xf32>
      %c0_70 = arith.constant 0 : index
      %c0_71 = arith.constant 0 : index
      %185 = vector.load %arg20[%c0_70, %c0_71] : memref<64x32xbf16, #tpu.memory_space<vmem>>, vector<64x32xbf16>
      %186 = arith.truncf %8 : vector<16x32xf32> to vector<16x32xbf16>
      %187 = vector.extract_strided_slice %185 {offsets = [0, 0], sizes = [32, 32], strides = [1, 1]} : vector<64x32xbf16> to vector<32x32xbf16>
      %cst_72 = arith.constant dense<0.000000e+00> : vector<16x32xf32>
      %188 = tpu.matmul %186, %187, %cst_72 {dimension_numbers = #tpu.dot_dimension_numbers<[1], [0], [0], [1], [0, 0, 1, 1], [], []>} : vector<16x32xbf16>, vector<32x32xbf16>, vector<16x32xf32> -> vector<16x32xf32>
      %189 = arith.truncf %181 : vector<16x32xf32> to vector<16x32xbf16>
      %190 = vector.extract_strided_slice %185 {offsets = [32, 0], sizes = [32, 32], strides = [1, 1]} : vector<64x32xbf16> to vector<32x32xbf16>
      %cst_73 = arith.constant dense<0.000000e+00> : vector<16x32xf32>
      %191 = tpu.matmul %189, %190, %cst_73 {dimension_numbers = #tpu.dot_dimension_numbers<[1], [0], [0], [1], [0, 0, 1, 1], [], []>} : vector<16x32xbf16>, vector<32x32xbf16>, vector<16x32xf32> -> vector<16x32xf32>
      %192 = arith.addf %188, %191 : vector<16x32xf32>
      %c0_74 = arith.constant 0 : index
      %c0_75 = arith.constant 0 : index
      %193 = vector.load %arg21[%c0_74, %c0_75] : memref<1x32xf32, #tpu.memory_space<vmem>>, vector<1x32xf32>
      %194 = vector.broadcast %193 : vector<1x32xf32> to vector<16x32xf32>
      %195 = arith.addf %192, %194 : vector<16x32xf32>
      %196 = arith.negf %195 : vector<16x32xf32>
      %197 = math.exp %196 : vector<16x32xf32>
      %cst_76 = arith.constant 1.000000e+00 : f32
      %198 = vector.broadcast %cst_76 : f32 to vector<16x32xf32>
      %199 = arith.addf %198, %197 : vector<16x32xf32>
      %200 = arith.divf %198, %199 : vector<16x32xf32>
      %201 = arith.mulf %195, %200 : vector<16x32xf32>
      %202 = arith.truncf %201 : vector<16x32xf32> to vector<16x32xbf16>
      %c0_77 = arith.constant 0 : index
      %c0_78 = arith.constant 0 : index
      %203 = vector.load %arg22[%c0_77, %c0_78] : memref<32x32xbf16, #tpu.memory_space<vmem>>, vector<32x32xbf16>
      %cst_79 = arith.constant dense<0.000000e+00> : vector<16x32xf32>
      %204 = tpu.matmul %202, %203, %cst_79 {dimension_numbers = #tpu.dot_dimension_numbers<[1], [0], [0], [1], [0, 0, 1, 1], [], []>} : vector<16x32xbf16>, vector<32x32xbf16>, vector<16x32xf32> -> vector<16x32xf32>
      %c0_80 = arith.constant 0 : index
      %c0_81 = arith.constant 0 : index
      %205 = vector.load %arg23[%c0_80, %c0_81] : memref<1x32xf32, #tpu.memory_space<vmem>>, vector<1x32xf32>
      %206 = vector.broadcast %205 : vector<1x32xf32> to vector<16x32xf32>
      %207 = arith.addf %204, %206 : vector<16x32xf32>
      %208 = arith.addf %8, %207 : vector<16x32xf32>
      %c0_82 = arith.constant 0 : index
      %c0_83 = arith.constant 0 : index
      %209 = vector.load %arg24[%c0_82, %c0_83] : memref<16x32xf32, #tpu.memory_space<vmem>>, vector<16x32xf32>
      tpu.vector_store %arg24[%c0_82, %c0_83], %208 {strides = array<i32>} : memref<16x32xf32, #tpu.memory_space<vmem>>, vector<16x32xf32>,
      %210 = arith.addf %9, %184 : vector<3x16xf32>
      %c0_84 = arith.constant 0 : index
      %c0_85 = arith.constant 0 : index
      %211 = vector.load %arg25[%c0_84, %c0_85] : memref<3x16xf32, #tpu.memory_space<vmem>>, vector<3x16xf32>
      tpu.vector_store %arg25[%c0_84, %c0_85], %210 {strides = array<i32>} : memref<3x16xf32, #tpu.memory_space<vmem>>, vector<3x16xf32>,
    } else {
    }
    return
  }
  func.func @transform_0(%arg0: i32, %arg1: i32, %arg2: i32) -> (i32, i32) {
    %c0_i32 = arith.constant 0 : i32
    %c0_i32_0 = arith.constant 0 : i32
    %c0_i32_1 = arith.constant 0 : i32
    return %c0_i32, %c0_i32_0 : i32, i32
  }
  func.func @transform_1(%arg0: i32, %arg1: i32, %arg2: i32) -> (i32, i32, i32) {
    %c0_i32 = arith.constant 0 : i32
    %c0_i32_0 = arith.constant 0 : i32
    return %arg1, %arg2, %c0_i32 : i32, i32, i32
  }
  func.func @transform_2(%arg0: i32, %arg1: i32, %arg2: i32) -> (i32, i32, i32) {
    %c0_i32 = arith.constant 0 : i32
    %c0_i32_0 = arith.constant 0 : i32
    return %arg1, %arg2, %c0_i32 : i32, i32, i32
  }
  func.func @transform_3(%arg0: i32, %arg1: i32, %arg2: i32) -> (i32, i32, i32) {
    %c0_i32 = arith.constant 0 : i32
    return %arg1, %arg2, %arg0 : i32, i32, i32
  }
  func.func @transform_4(%arg0: i32, %arg1: i32, %arg2: i32) -> (i32, i32) {
    %c0_i32 = arith.constant 0 : i32
    %c0_i32_0 = arith.constant 0 : i32
    return %arg0, %c0_i32 : i32, i32
  }
  func.func @transform_5(%arg0: i32, %arg1: i32, %arg2: i32) -> (i32, i32) {
    %c0_i32 = arith.constant 0 : i32
    %c0_i32_0 = arith.constant 0 : i32
    return %c0_i32, %arg0 : i32, i32
  }
  func.func @transform_6(%arg0: i32, %arg1: i32, %arg2: i32) -> (i32, i32, i32) {
    %c0_i32 = arith.constant 0 : i32
    %c0_i32_0 = arith.constant 0 : i32
    %c0_i32_1 = arith.constant 0 : i32
    %c0_i32_2 = arith.constant 0 : i32
    return %c0_i32, %c0_i32_0, %c0_i32_1 : i32, i32, i32
  }
  func.func @transform_7(%arg0: i32, %arg1: i32, %arg2: i32) -> (i32, i32, i32) {
    %c0_i32 = arith.constant 0 : i32
    %c0_i32_0 = arith.constant 0 : i32
    %c0_i32_1 = arith.constant 0 : i32
    %c0_i32_2 = arith.constant 0 : i32
    return %c0_i32, %c0_i32_0, %c0_i32_1 : i32, i32, i32
  }
  func.func @transform_8(%arg0: i32, %arg1: i32, %arg2: i32) -> (i32, i32, i32) {
    %c0_i32 = arith.constant 0 : i32
    %c0_i32_0 = arith.constant 0 : i32
    %c0_i32_1 = arith.constant 0 : i32
    %c0_i32_2 = arith.constant 0 : i32
    return %c0_i32, %c0_i32_0, %c0_i32_1 : i32, i32, i32
  }
  func.func @transform_9(%arg0: i32, %arg1: i32, %arg2: i32) -> (i32, i32, i32) {
    %c0_i32 = arith.constant 0 : i32
    %c0_i32_0 = arith.constant 0 : i32
    %c0_i32_1 = arith.constant 0 : i32
    %c0_i32_2 = arith.constant 0 : i32
    return %c0_i32, %c0_i32_0, %c0_i32_1 : i32, i32, i32
  }
  func.func @transform_10(%arg0: i32, %arg1: i32, %arg2: i32) -> (i32, i32, i32) {
    %c0_i32 = arith.constant 0 : i32
    %c0_i32_0 = arith.constant 0 : i32
    %c0_i32_1 = arith.constant 0 : i32
    %c0_i32_2 = arith.constant 0 : i32
    return %c0_i32, %c0_i32_0, %c0_i32_1 : i32, i32, i32
  }
  func.func @transform_11(%arg0: i32, %arg1: i32, %arg2: i32) -> (i32, i32, i32) {
    %c0_i32 = arith.constant 0 : i32
    %c0_i32_0 = arith.constant 0 : i32
    %c0_i32_1 = arith.constant 0 : i32
    %c0_i32_2 = arith.constant 0 : i32
    return %c0_i32, %c0_i32_0, %c0_i32_1 : i32, i32, i32
  }
  func.func @transform_12(%arg0: i32, %arg1: i32, %arg2: i32) -> (i32, i32, i32) {
    %c0_i32 = arith.constant 0 : i32
    %c0_i32_0 = arith.constant 0 : i32
    %c0_i32_1 = arith.constant 0 : i32
    %c0_i32_2 = arith.constant 0 : i32
    return %c0_i32, %c0_i32_0, %c0_i32_1 : i32, i32, i32
  }
  func.func @transform_13(%arg0: i32, %arg1: i32, %arg2: i32) -> (i32, i32, i32) {
    %c0_i32 = arith.constant 0 : i32
    %c0_i32_0 = arith.constant 0 : i32
    %c0_i32_1 = arith.constant 0 : i32
    %c0_i32_2 = arith.constant 0 : i32
    return %c0_i32, %c0_i32_0, %c0_i32_1 : i32, i32, i32
  }
  func.func @transform_14(%arg0: i32, %arg1: i32, %arg2: i32) -> (i32, i32, i32) {
    %c0_i32 = arith.constant 0 : i32
    %c0_i32_0 = arith.constant 0 : i32
    %c0_i32_1 = arith.constant 0 : i32
    %c0_i32_2 = arith.constant 0 : i32
    return %c0_i32, %c0_i32_0, %c0_i32_1 : i32, i32, i32
  }
  func.func @transform_15(%arg0: i32, %arg1: i32, %arg2: i32) -> (i32, i32, i32) {
    %c0_i32 = arith.constant 0 : i32
    %c0_i32_0 = arith.constant 0 : i32
    %c0_i32_1 = arith.constant 0 : i32
    %c0_i32_2 = arith.constant 0 : i32
    return %c0_i32, %c0_i32_0, %c0_i32_1 : i32, i32, i32
  }
  func.func @transform_16(%arg0: i32, %arg1: i32, %arg2: i32) -> (i32, i32, i32) {
    %c0_i32 = arith.constant 0 : i32
    %c0_i32_0 = arith.constant 0 : i32
    %c0_i32_1 = arith.constant 0 : i32
    %c0_i32_2 = arith.constant 0 : i32
    return %c0_i32, %c0_i32_0, %c0_i32_1 : i32, i32, i32
  }
  func.func @transform_17(%arg0: i32, %arg1: i32, %arg2: i32) -> (i32, i32) {
    %c0_i32 = arith.constant 0 : i32
    %c0_i32_0 = arith.constant 0 : i32
    %c0_i32_1 = arith.constant 0 : i32
    return %c0_i32, %c0_i32_0 : i32, i32
  }
  func.func @transform_18(%arg0: i32, %arg1: i32, %arg2: i32) -> (i32, i32) {
    %c0_i32 = arith.constant 0 : i32
    %c0_i32_0 = arith.constant 0 : i32
    %c0_i32_1 = arith.constant 0 : i32
    return %c0_i32, %c0_i32_0 : i32, i32
  }
  func.func @transform_19(%arg0: i32, %arg1: i32, %arg2: i32) -> (i32, i32) {
    %c0_i32 = arith.constant 0 : i32
    %c0_i32_0 = arith.constant 0 : i32
    %c0_i32_1 = arith.constant 0 : i32
    return %c0_i32, %c0_i32_0 : i32, i32
  }
  func.func @transform_20(%arg0: i32, %arg1: i32, %arg2: i32) -> (i32, i32) {
    %c0_i32 = arith.constant 0 : i32
    %c0_i32_0 = arith.constant 0 : i32
    %c0_i32_1 = arith.constant 0 : i32
    return %c0_i32, %c0_i32_0 : i32, i32
  }
  func.func @transform_21(%arg0: i32, %arg1: i32, %arg2: i32) -> (i32, i32) {
    %c0_i32 = arith.constant 0 : i32
    %c0_i32_0 = arith.constant 0 : i32
    return %arg0, %c0_i32 : i32, i32
  }
  func.func @transform_22(%arg0: i32, %arg1: i32, %arg2: i32) -> (i32, i32) {
    %c0_i32 = arith.constant 0 : i32
    %c0_i32_0 = arith.constant 0 : i32
    return %c0_i32, %arg0 : i32, i32
  }
}

module attributes {stable_mosaic.version = 11 : i64} {
  func.func @_ligrec_layer_kernel(%arg0: i32, %arg1: i32, %arg2: i32, %arg3: memref<1x1xf32, #tpu.memory_space<smem>>, %arg4: memref<1x16x32xf32, #tpu.memory_space<vmem>>, %arg5: memref<1x16x3xf32, #tpu.memory_space<vmem>>, %arg6: memref<1x16x16xbf16, #tpu.memory_space<vmem>>, %arg7: memref<16x32xf32, #tpu.memory_space<vmem>>, %arg8: memref<3x16xf32, #tpu.memory_space<vmem>>, %arg9: memref<2x65x32xbf16, #tpu.memory_space<vmem>>, %arg10: memref<2x1x32xf32, #tpu.memory_space<vmem>>, %arg11: memref<2x32x32xbf16, #tpu.memory_space<vmem>>, %arg12: memref<2x1x32xf32, #tpu.memory_space<vmem>>, %arg13: memref<2x1x32xf32, #tpu.memory_space<vmem>>, %arg14: memref<2x1x1xf32, #tpu.memory_space<vmem>>, %arg15: memref<2x65x32xbf16, #tpu.memory_space<vmem>>, %arg16: memref<2x1x32xf32, #tpu.memory_space<vmem>>, %arg17: memref<2x32x32xbf16, #tpu.memory_space<vmem>>, %arg18: memref<2x1x32xf32, #tpu.memory_space<vmem>>, %arg19: memref<2x1x32xf32, #tpu.memory_space<vmem>>, %arg20: memref<64x32xbf16, #tpu.memory_space<vmem>>, %arg21: memref<1x32xf32, #tpu.memory_space<vmem>>, %arg22: memref<32x32xbf16, #tpu.memory_space<vmem>>, %arg23: memref<1x32xf32, #tpu.memory_space<vmem>>, %arg24: memref<16x32xf32, #tpu.memory_space<vmem>>, %arg25: memref<3x16xf32, #tpu.memory_space<vmem>>, %arg26: memref<16x32xf32, #tpu.memory_space<vmem>>, %arg27: memref<3x16xf32, #tpu.memory_space<vmem>>, %arg28: memref<16x32xf32, #tpu.memory_space<vmem>>, %arg29: memref<16x32xf32, #tpu.memory_space<vmem>>) attributes {dimension_semantics = [#tpu.dimension_semantics<parallel>, #tpu.dimension_semantics<arbitrary>, #tpu.dimension_semantics<arbitrary>], iteration_bounds = array<i64: 1, 2, 1>, scalar_prefetch = 0 : i64, scratch_operands = 4 : i64, tpu.core_type = #tpu.core_type<tc>, window_params = [{transform_indices = @transform_0, window_bounds = array<i64: 1, 1>}, {transform_indices = @transform_1, window_bounds = array<i64: 1, 16, 32>}, {transform_indices = @transform_2, window_bounds = array<i64: 1, 16, 3>}, {transform_indices = @transform_3, window_bounds = array<i64: 1, 16, 16>}, {transform_indices = @transform_4, window_bounds = array<i64: 16, 32>}, {transform_indices = @transform_5, window_bounds = array<i64: 3, 16>}, {pipeline_mode = #tpu.pipeline_mode<synchronous>, transform_indices = @transform_6, window_bounds = array<i64: 2, 65, 32>}, {pipeline_mode = #tpu.pipeline_mode<synchronous>, transform_indices = @transform_7, window_bounds = array<i64: 2, 1, 32>}, {pipeline_mode = #tpu.pipeline_mode<synchronous>, transform_indices = @transform_8, window_bounds = array<i64: 2, 32, 32>}, {pipeline_mode = #tpu.pipeline_mode<synchronous>, transform_indices = @transform_9, window_bounds = array<i64: 2, 1, 32>}, {pipeline_mode = #tpu.pipeline_mode<synchronous>, transform_indices = @transform_10, window_bounds = array<i64: 2, 1, 32>}, {pipeline_mode = #tpu.pipeline_mode<synchronous>, transform_indices = @transform_11, window_bounds = array<i64: 2, 1, 1>}, {pipeline_mode = #tpu.pipeline_mode<synchronous>, transform_indices = @transform_12, window_bounds = array<i64: 2, 65, 32>}, {pipeline_mode = #tpu.pipeline_mode<synchronous>, transform_indices = @transform_13, window_bounds = array<i64: 2, 1, 32>}, {pipeline_mode = #tpu.pipeline_mode<synchronous>, transform_indices = @transform_14, window_bounds = array<i64: 2, 32, 32>}, {pipeline_mode = #tpu.pipeline_mode<synchronous>, transform_indices = @transform_15, window_bounds = array<i64: 2, 1, 32>}, {pipeline_mode = #tpu.pipeline_mode<synchronous>, transform_indices = @transform_16, window_bounds = array<i64: 2, 1, 32>}, {pipeline_mode = #tpu.pipeline_mode<synchronous>, transform_indices = @transform_17, window_bounds = array<i64: 64, 32>}, {pipeline_mode = #tpu.pipeline_mode<synchronous>, transform_indices = @transform_18, window_bounds = array<i64: 1, 32>}, {pipeline_mode = #tpu.pipeline_mode<synchronous>, transform_indices = @transform_19, window_bounds = array<i64: 32, 32>}, {pipeline_mode = #tpu.pipeline_mode<synchronous>, transform_indices = @transform_20, window_bounds = array<i64: 1, 32>}, {transform_indices = @transform_21, window_bounds = array<i64: 16, 32>}, {transform_indices = @transform_22, window_bounds = array<i64: 3, 16>}]} {
    %c0_i32 = arith.constant 0 : i32
    %0 = arith.cmpi eq, %arg1, %c0_i32 : i32
    %c0_i32_0 = arith.constant 0 : i32
    %1 = arith.cmpi eq, %arg2, %c0_i32_0 : i32
    %2 = arith.andi %0, %1 : i1
    %c1_i32 = arith.constant 1 : i32
    %3 = arith.cmpi eq, %arg1, %c1_i32 : i32
    %c0_i32_1 = arith.constant 0 : i32
    %4 = arith.cmpi eq, %arg2, %c0_i32_1 : i32
    %5 = arith.andi %3, %4 : i1
    %6 = arith.extui %2 : i1 to i32
    %c0_i32_2 = arith.constant 0 : i32
    %7 = arith.cmpi ne, %6, %c0_i32_2 : i32
    scf.if %7 {
      %cst_64 = arith.constant 0.000000e+00 : f32
      %178 = vector.broadcast %cst_64 : f32 to vector<16x32xf32>
      %c0_65 = arith.constant 0 : index
      %c0_66 = arith.constant 0 : index
      %179 = vector.load %arg26[%c0_65, %c0_66] : memref<16x32xf32, #tpu.memory_space<vmem>>, vector<16x32xf32>
      tpu.vector_store %arg26[%c0_65, %c0_66], %178 {strides = array<i32>} : memref<16x32xf32, #tpu.memory_space<vmem>>, vector<16x32xf32>,
      %cst_67 = arith.constant 0.000000e+00 : f32
      %180 = vector.broadcast %cst_67 : f32 to vector<3x16xf32>
      %c0_68 = arith.constant 0 : index
      %c0_69 = arith.constant 0 : index
      %181 = vector.load %arg27[%c0_68, %c0_69] : memref<3x16xf32, #tpu.memory_space<vmem>>, vector<3x16xf32>
      tpu.vector_store %arg27[%c0_68, %c0_69], %180 {strides = array<i32>} : memref<3x16xf32, #tpu.memory_space<vmem>>, vector<3x16xf32>,
    } else {
    }
    %c0 = arith.constant 0 : index
    %c0_3 = arith.constant 0 : index
    %8 = vector.load %arg7[%c0, %c0_3] : memref<16x32xf32, #tpu.memory_space<vmem>>, vector<16x32xf32>
    %c0_4 = arith.constant 0 : index
    %c0_5 = arith.constant 0 : index
    %9 = vector.load %arg8[%c0_4, %c0_5] : memref<3x16xf32, #tpu.memory_space<vmem>>, vector<3x16xf32>
    %10 = arith.index_cast %arg1 : i32 to index
    %c0_6 = arith.constant 0 : index
    %c0_7 = arith.constant 0 : index
    %11 = vector.load %arg9[%10, %c0_6, %c0_7] : memref<2x65x32xbf16, #tpu.memory_space<vmem>>, vector<1x65x32xbf16>
    %12 = vector.shape_cast %11 : vector<1x65x32xbf16> to vector<65x32xbf16>
    %13 = arith.index_cast %arg1 : i32 to index
    %c0_8 = arith.constant 0 : index
    %c0_9 = arith.constant 0 : index
    %14 = vector.load %arg15[%13, %c0_8, %c0_9] : memref<2x65x32xbf16, #tpu.memory_space<vmem>>, vector<1x65x32xbf16>
    %15 = vector.shape_cast %14 : vector<1x65x32xbf16> to vector<65x32xbf16>
    %c0_i32_10 = arith.constant 0 : i32
    %16 = arith.cmpi eq, %arg2, %c0_i32_10 : i32
    %17 = arith.extui %16 : i1 to i32
    %c0_i32_11 = arith.constant 0 : i32
    %18 = arith.cmpi ne, %17, %c0_i32_11 : i32
    scf.if %18 {
      %178 = arith.truncf %8 : vector<16x32xf32> to vector<16x32xbf16>
      %179 = vector.extract_strided_slice %12 {offsets = [32, 0], sizes = [32, 32], strides = [1, 1]} : vector<65x32xbf16> to vector<32x32xbf16>
      %cst_64 = arith.constant dense<0.000000e+00> : vector<16x32xf32>
      %180 = tpu.matmul %178, %179, %cst_64 {dimension_numbers = #tpu.dot_dimension_numbers<[1], [0], [0], [1], [0, 0, 1, 1], [], []>} : vector<16x32xbf16>, vector<32x32xbf16>, vector<16x32xf32> -> vector<16x32xf32>
      %181 = arith.index_cast %arg1 : i32 to index
      %c0_65 = arith.constant 0 : index
      %c0_66 = arith.constant 0 : index
      %182 = vector.load %arg10[%181, %c0_65, %c0_66] : memref<2x1x32xf32, #tpu.memory_space<vmem>>, vector<1x1x32xf32>
      %183 = vector.shape_cast %182 : vector<1x1x32xf32> to vector<1x32xf32>
      %184 = vector.broadcast %183 : vector<1x32xf32> to vector<16x32xf32>
      %185 = arith.addf %180, %184 : vector<16x32xf32>
      %c0_67 = arith.constant 0 : index
      %c0_68 = arith.constant 0 : index
      %186 = vector.load %arg28[%c0_67, %c0_68] : memref<16x32xf32, #tpu.memory_space<vmem>>, vector<16x32xf32>
      tpu.vector_store %arg28[%c0_67, %c0_68], %185 {strides = array<i32>} : memref<16x32xf32, #tpu.memory_space<vmem>>, vector<16x32xf32>,
      %187 = vector.extract_strided_slice %15 {offsets = [32, 0], sizes = [32, 32], strides = [1, 1]} : vector<65x32xbf16> to vector<32x32xbf16>
      %cst_69 = arith.constant dense<0.000000e+00> : vector<16x32xf32>
      %188 = tpu.matmul %178, %187, %cst_69 {dimension_numbers = #tpu.dot_dimension_numbers<[1], [0], [0], [1], [0, 0, 1, 1], [], []>} : vector<16x32xbf16>, vector<32x32xbf16>, vector<16x32xf32> -> vector<16x32xf32>
      %189 = arith.index_cast %arg1 : i32 to index
      %c0_70 = arith.constant 0 : index
      %c0_71 = arith.constant 0 : index
      %190 = vector.load %arg16[%189, %c0_70, %c0_71] : memref<2x1x32xf32, #tpu.memory_space<vmem>>, vector<1x1x32xf32>
      %191 = vector.shape_cast %190 : vector<1x1x32xf32> to vector<1x32xf32>
      %192 = vector.broadcast %191 : vector<1x32xf32> to vector<16x32xf32>
      %193 = arith.addf %188, %192 : vector<16x32xf32>
      %c0_72 = arith.constant 0 : index
      %c0_73 = arith.constant 0 : index
      %194 = vector.load %arg29[%c0_72, %c0_73] : memref<16x32xf32, #tpu.memory_space<vmem>>, vector<16x32xf32>
      tpu.vector_store %arg29[%c0_72, %c0_73], %193 {strides = array<i32>} : memref<16x32xf32, #tpu.memory_space<vmem>>, vector<16x32xf32>,
    } else {
    }
    %c0_12 = arith.constant 0 : index
    %c0_13 = arith.constant 0 : index
    %c0_14 = arith.constant 0 : index
    %19 = vector.load %arg4[%c0_12, %c0_13, %c0_14] : memref<1x16x32xf32, #tpu.memory_space<vmem>>, vector<1x16x32xf32>
    %20 = vector.shape_cast %19 : vector<1x16x32xf32> to vector<16x32xf32>
    %c0_15 = arith.constant 0 : index
    %c0_16 = arith.constant 0 : index
    %c0_17 = arith.constant 0 : index
    %21 = vector.load %arg5[%c0_15, %c0_16, %c0_17] : memref<1x16x3xf32, #tpu.memory_space<vmem>>, vector<1x16x3xf32>
    %22 = vector.shape_cast %21 : vector<1x16x3xf32> to vector<16x3xf32>
    %c0_18 = arith.constant 0 : index
    %c0_19 = arith.constant 0 : index
    %c0_20 = arith.constant 0 : index
    %23 = vector.load %arg6[%c0_18, %c0_19, %c0_20] : memref<1x16x16xbf16, #tpu.memory_space<vmem>>, vector<1x16x16xbf16>
    %24 = vector.shape_cast %23 : vector<1x16x16xbf16> to vector<16x16xbf16>
    %25 = arith.extf %24 : vector<16x16xbf16> to vector<16x16xf32>
    %26 = vector.extract_strided_slice %22 {offsets = [0, 0], sizes = [16, 1], strides = [1, 1]} : vector<16x3xf32> to vector<16x1xf32>
    %27 = vector.extract_strided_slice %9 {offsets = [0, 0], sizes = [1, 16], strides = [1, 1]} : vector<3x16xf32> to vector<1x16xf32>
    %28 = vector.broadcast %26 : vector<16x1xf32> to vector<16x16xf32>
    %29 = vector.broadcast %27 : vector<1x16xf32> to vector<16x16xf32>
    %30 = arith.subf %28, %29 : vector<16x16xf32>
    %31 = vector.extract_strided_slice %22 {offsets = [0, 1], sizes = [16, 1], strides = [1, 1]} : vector<16x3xf32> to vector<16x1xf32>
    %32 = vector.extract_strided_slice %9 {offsets = [1, 0], sizes = [1, 16], strides = [1, 1]} : vector<3x16xf32> to vector<1x16xf32>
    %33 = vector.broadcast %31 : vector<16x1xf32> to vector<16x16xf32>
    %34 = vector.broadcast %32 : vector<1x16xf32> to vector<16x16xf32>
    %35 = arith.subf %33, %34 : vector<16x16xf32>
    %36 = vector.extract_strided_slice %22 {offsets = [0, 2], sizes = [16, 1], strides = [1, 1]} : vector<16x3xf32> to vector<16x1xf32>
    %37 = vector.extract_strided_slice %9 {offsets = [2, 0], sizes = [1, 16], strides = [1, 1]} : vector<3x16xf32> to vector<1x16xf32>
    %38 = vector.broadcast %36 : vector<16x1xf32> to vector<16x16xf32>
    %39 = vector.broadcast %37 : vector<1x16xf32> to vector<16x16xf32>
    %40 = arith.subf %38, %39 : vector<16x16xf32>
    %41 = arith.mulf %30, %30 : vector<16x16xf32>
    %42 = arith.mulf %35, %35 : vector<16x16xf32>
    %43 = arith.addf %41, %42 : vector<16x16xf32>
    %44 = arith.mulf %40, %40 : vector<16x16xf32>
    %45 = arith.addf %43, %44 : vector<16x16xf32>
    %46 = math.sqrt %45 : vector<16x16xf32>
    %cst = arith.constant 1.000000e+00 : f32
    %47 = vector.broadcast %cst : f32 to vector<16x16xf32>
    %48 = arith.addf %46, %47 : vector<16x16xf32>
    %cst_21 = arith.constant 1.000000e+00 : f32
    %49 = vector.broadcast %cst_21 : f32 to vector<16x16xf32>
    %50 = arith.divf %49, %48 : vector<16x16xf32>
    %51 = arith.truncf %20 : vector<16x32xf32> to vector<16x32xbf16>
    %52 = vector.extract_strided_slice %12 {offsets = [0, 0], sizes = [32, 32], strides = [1, 1]} : vector<65x32xbf16> to vector<32x32xbf16>
    %cst_22 = arith.constant dense<0.000000e+00> : vector<16x32xf32>
    %53 = tpu.matmul %51, %52, %cst_22 {dimension_numbers = #tpu.dot_dimension_numbers<[1], [0], [0], [1], [0, 0, 1, 1], [], []>} : vector<16x32xbf16>, vector<32x32xbf16>, vector<16x32xf32> -> vector<16x32xf32>
    %54 = vector.extract_strided_slice %15 {offsets = [0, 0], sizes = [32, 32], strides = [1, 1]} : vector<65x32xbf16> to vector<32x32xbf16>
    %cst_23 = arith.constant dense<0.000000e+00> : vector<16x32xf32>
    %55 = tpu.matmul %51, %54, %cst_23 {dimension_numbers = #tpu.dot_dimension_numbers<[1], [0], [0], [1], [0, 0, 1, 1], [], []>} : vector<16x32xbf16>, vector<32x32xbf16>, vector<16x32xf32> -> vector<16x32xf32>
    %56 = vector.extract_strided_slice %12 {offsets = [64, 0], sizes = [1, 32], strides = [1, 1]} : vector<65x32xbf16> to vector<1x32xbf16>
    %57 = arith.extf %56 : vector<1x32xbf16> to vector<1x32xf32>
    %58 = vector.shape_cast %57 : vector<1x32xf32> to vector<1x1x32xf32>
    %59 = vector.extract_strided_slice %15 {offsets = [64, 0], sizes = [1, 32], strides = [1, 1]} : vector<65x32xbf16> to vector<1x32xbf16>
    %60 = arith.extf %59 : vector<1x32xbf16> to vector<1x32xf32>
    %61 = vector.shape_cast %60 : vector<1x32xf32> to vector<1x1x32xf32>
    %62 = vector.shape_cast %46 : vector<16x16xf32> to vector<16x16x1xf32>
    %63 = vector.shape_cast %53 : vector<16x32xf32> to vector<16x1x32xf32>
    %c0_24 = arith.constant 0 : index
    %c0_25 = arith.constant 0 : index
    %64 = vector.load %arg28[%c0_24, %c0_25] : memref<16x32xf32, #tpu.memory_space<vmem>>, vector<16x32xf32>
    %65 = vector.shape_cast %64 : vector<16x32xf32> to vector<1x16x32xf32>
    %66 = vector.broadcast %63 : vector<16x1x32xf32> to vector<16x16x32xf32>
    %67 = vector.broadcast %65 : vector<1x16x32xf32> to vector<16x16x32xf32>
    %68 = arith.addf %66, %67 : vector<16x16x32xf32>
    %69 = vector.broadcast %62 : vector<16x16x1xf32> to vector<16x16x32xf32>
    %70 = vector.broadcast %58 : vector<1x1x32xf32> to vector<16x16x32xf32>
    %71 = arith.mulf %69, %70 : vector<16x16x32xf32>
    %72 = arith.addf %68, %71 : vector<16x16x32xf32>
    %73 = vector.shape_cast %55 : vector<16x32xf32> to vector<16x1x32xf32>
    %c0_26 = arith.constant 0 : index
    %c0_27 = arith.constant 0 : index
    %74 = vector.load %arg29[%c0_26, %c0_27] : memref<16x32xf32, #tpu.memory_space<vmem>>, vector<16x32xf32>
    %75 = vector.shape_cast %74 : vector<16x32xf32> to vector<1x16x32xf32>
    %76 = vector.broadcast %73 : vector<16x1x32xf32> to vector<16x16x32xf32>
    %77 = vector.broadcast %75 : vector<1x16x32xf32> to vector<16x16x32xf32>
    %78 = arith.addf %76, %77 : vector<16x16x32xf32>
    %79 = vector.broadcast %62 : vector<16x16x1xf32> to vector<16x16x32xf32>
    %80 = vector.broadcast %61 : vector<1x1x32xf32> to vector<16x16x32xf32>
    %81 = arith.mulf %79, %80 : vector<16x16x32xf32>
    %82 = arith.addf %78, %81 : vector<16x16x32xf32>
    %83 = arith.negf %72 : vector<16x16x32xf32>
    %84 = math.exp %83 : vector<16x16x32xf32>
    %cst_28 = arith.constant 1.000000e+00 : f32
    %85 = vector.broadcast %cst_28 : f32 to vector<16x16x32xf32>
    %86 = arith.addf %85, %84 : vector<16x16x32xf32>
    %87 = arith.divf %85, %86 : vector<16x16x32xf32>
    %88 = arith.mulf %72, %87 : vector<16x16x32xf32>
    %89 = arith.truncf %88 : vector<16x16x32xf32> to vector<16x16x32xbf16>
    %90 = arith.negf %82 : vector<16x16x32xf32>
    %91 = math.exp %90 : vector<16x16x32xf32>
    %cst_29 = arith.constant 1.000000e+00 : f32
    %92 = vector.broadcast %cst_29 : f32 to vector<16x16x32xf32>
    %93 = arith.addf %92, %91 : vector<16x16x32xf32>
    %94 = arith.divf %92, %93 : vector<16x16x32xf32>
    %95 = arith.mulf %82, %94 : vector<16x16x32xf32>
    %96 = arith.truncf %95 : vector<16x16x32xf32> to vector<16x16x32xbf16>
    %97 = arith.index_cast %arg1 : i32 to index
    %c0_30 = arith.constant 0 : index
    %c0_31 = arith.constant 0 : index
    %98 = vector.load %arg11[%97, %c0_30, %c0_31] : memref<2x32x32xbf16, #tpu.memory_space<vmem>>, vector<1x32x32xbf16>
    %99 = vector.shape_cast %98 : vector<1x32x32xbf16> to vector<32x32xbf16>
    %cst_32 = arith.constant dense<0.000000e+00> : vector<16x16x32xf32>
    %100 = tpu.matmul %89, %99, %cst_32 {dimension_numbers = #tpu.dot_dimension_numbers<[2], [0], [0, 1], [1], [0, 0, 0, 1, 1, 1], [], []>} : vector<16x16x32xbf16>, vector<32x32xbf16>, vector<16x16x32xf32> -> vector<16x16x32xf32>
    %101 = arith.index_cast %arg1 : i32 to index
    %c0_33 = arith.constant 0 : index
    %c0_34 = arith.constant 0 : index
    %102 = vector.load %arg12[%101, %c0_33, %c0_34] : memref<2x1x32xf32, #tpu.memory_space<vmem>>, vector<1x1x32xf32>
    %103 = vector.shape_cast %102 : vector<1x1x32xf32> to vector<1x32xf32>
    %104 = vector.shape_cast %103 : vector<1x32xf32> to vector<1x1x32xf32>
    %105 = vector.broadcast %104 : vector<1x1x32xf32> to vector<16x16x32xf32>
    %106 = arith.addf %100, %105 : vector<16x16x32xf32>
    %107 = arith.negf %106 : vector<16x16x32xf32>
    %108 = math.exp %107 : vector<16x16x32xf32>
    %cst_35 = arith.constant 1.000000e+00 : f32
    %109 = vector.broadcast %cst_35 : f32 to vector<16x16x32xf32>
    %110 = arith.addf %109, %108 : vector<16x16x32xf32>
    %111 = arith.divf %109, %110 : vector<16x16x32xf32>
    %112 = arith.mulf %106, %111 : vector<16x16x32xf32>
    %113 = arith.index_cast %arg1 : i32 to index
    %c0_36 = arith.constant 0 : index
    %c0_37 = arith.constant 0 : index
    %114 = vector.load %arg17[%113, %c0_36, %c0_37] : memref<2x32x32xbf16, #tpu.memory_space<vmem>>, vector<1x32x32xbf16>
    %115 = vector.shape_cast %114 : vector<1x32x32xbf16> to vector<32x32xbf16>
    %cst_38 = arith.constant dense<0.000000e+00> : vector<16x16x32xf32>
    %116 = tpu.matmul %96, %115, %cst_38 {dimension_numbers = #tpu.dot_dimension_numbers<[2], [0], [0, 1], [1], [0, 0, 0, 1, 1, 1], [], []>} : vector<16x16x32xbf16>, vector<32x32xbf16>, vector<16x16x32xf32> -> vector<16x16x32xf32>
    %117 = arith.index_cast %arg1 : i32 to index
    %c0_39 = arith.constant 0 : index
    %c0_40 = arith.constant 0 : index
    %118 = vector.load %arg18[%117, %c0_39, %c0_40] : memref<2x1x32xf32, #tpu.memory_space<vmem>>, vector<1x1x32xf32>
    %119 = vector.shape_cast %118 : vector<1x1x32xf32> to vector<1x32xf32>
    %120 = vector.shape_cast %119 : vector<1x32xf32> to vector<1x1x32xf32>
    %121 = vector.broadcast %120 : vector<1x1x32xf32> to vector<16x16x32xf32>
    %122 = arith.addf %116, %121 : vector<16x16x32xf32>
    %123 = arith.negf %122 : vector<16x16x32xf32>
    %124 = math.exp %123 : vector<16x16x32xf32>
    %cst_41 = arith.constant 1.000000e+00 : f32
    %125 = vector.broadcast %cst_41 : f32 to vector<16x16x32xf32>
    %126 = arith.addf %125, %124 : vector<16x16x32xf32>
    %127 = arith.divf %125, %126 : vector<16x16x32xf32>
    %128 = arith.mulf %122, %127 : vector<16x16x32xf32>
    %129 = arith.index_cast %arg1 : i32 to index
    %c0_42 = arith.constant 0 : index
    %c0_43 = arith.constant 0 : index
    %130 = vector.load %arg13[%129, %c0_42, %c0_43] : memref<2x1x32xf32, #tpu.memory_space<vmem>>, vector<1x1x32xf32>
    %131 = vector.shape_cast %130 : vector<1x1x32xf32> to vector<1x32xf32>
    %132 = vector.shape_cast %131 : vector<1x32xf32> to vector<1x1x32xf32>
    %133 = vector.broadcast %132 : vector<1x1x32xf32> to vector<16x16x32xf32>
    %134 = arith.mulf %112, %133 : vector<16x16x32xf32>
    %cst_44 = arith.constant dense<0.000000e+00> : vector<16x16xf32>
    %135 = vector.multi_reduction <add>, %134, %cst_44 [2] : vector<16x16x32xf32> to vector<16x16xf32>
    %136 = arith.index_cast %arg1 : i32 to index
    %c0_45 = arith.constant 0 : index
    %c0_46 = arith.constant 0 : index
    %137 = vector.load %arg14[%136, %c0_45, %c0_46] : memref<2x1x1xf32, #tpu.memory_space<vmem>>, vector<1x1x1xf32>
    %138 = vector.shape_cast %137 : vector<1x1x1xf32> to vector<1x1xf32>
    %139 = vector.broadcast %138 : vector<1x1xf32> to vector<16x16xf32>
    %140 = arith.addf %135, %139 : vector<16x16xf32>
    %141 = arith.negf %140 : vector<16x16xf32>
    %142 = math.exp %141 : vector<16x16xf32>
    %cst_47 = arith.constant 1.000000e+00 : f32
    %143 = vector.broadcast %cst_47 : f32 to vector<16x16xf32>
    %144 = arith.addf %143, %142 : vector<16x16xf32>
    %145 = arith.divf %143, %144 : vector<16x16xf32>
    %146 = arith.mulf %145, %25 : vector<16x16xf32>
    %c0_48 = arith.constant 0 : index
    %c0_49 = arith.constant 0 : index
    %147 = vector.load %arg26[%c0_48, %c0_49] : memref<16x32xf32, #tpu.memory_space<vmem>>, vector<16x32xf32>
    %148 = vector.shape_cast %146 : vector<16x16xf32> to vector<16x16x1xf32>
    %149 = vector.broadcast %148 : vector<16x16x1xf32> to vector<16x16x32xf32>
    %150 = arith.mulf %112, %149 : vector<16x16x32xf32>
    %cst_50 = arith.constant dense<0.000000e+00> : vector<16x32xf32>
    %151 = vector.multi_reduction <add>, %150, %cst_50 [0] : vector<16x16x32xf32> to vector<16x32xf32>
    %152 = arith.addf %147, %151 : vector<16x32xf32>
    %c0_51 = arith.constant 0 : index
    %c0_52 = arith.constant 0 : index
    %153 = vector.load %arg26[%c0_51, %c0_52] : memref<16x32xf32, #tpu.memory_space<vmem>>, vector<16x32xf32>
    tpu.vector_store %arg26[%c0_51, %c0_52], %152 {strides = array<i32>} : memref<16x32xf32, #tpu.memory_space<vmem>>, vector<16x32xf32>,
    %154 = arith.index_cast %arg1 : i32 to index
    %c0_53 = arith.constant 0 : index
    %c0_54 = arith.constant 0 : index
    %155 = vector.load %arg19[%154, %c0_53, %c0_54] : memref<2x1x32xf32, #tpu.memory_space<vmem>>, vector<1x1x32xf32>
    %156 = vector.shape_cast %155 : vector<1x1x32xf32> to vector<1x32xf32>
    %157 = vector.shape_cast %156 : vector<1x32xf32> to vector<1x1x32xf32>
    %158 = vector.broadcast %157 : vector<1x1x32xf32> to vector<16x16x32xf32>
    %159 = arith.mulf %128, %158 : vector<16x16x32xf32>
    %cst_55 = arith.constant dense<0.000000e+00> : vector<16x16xf32>
    %160 = vector.multi_reduction <add>, %159, %cst_55 [2] : vector<16x16x32xf32> to vector<16x16xf32>
    %161 = arith.mulf %25, %160 : vector<16x16xf32>
    %162 = arith.mulf %161, %50 : vector<16x16xf32>
    %163 = arith.mulf %162, %30 : vector<16x16xf32>
    %cst_56 = arith.constant dense<0.000000e+00> : vector<16xf32>
    %164 = vector.multi_reduction <add>, %163, %cst_56 [0] : vector<16x16xf32> to vector<16xf32>
    %165 = vector.shape_cast %164 : vector<16xf32> to vector<1x16xf32>
    %166 = arith.mulf %162, %35 : vector<16x16xf32>
    %cst_57 = arith.constant dense<0.000000e+00> : vector<16xf32>
    %167 = vector.multi_reduction <add>, %166, %cst_57 [0] : vector<16x16xf32> to vector<16xf32>
    %168 = vector.shape_cast %167 : vector<16xf32> to vector<1x16xf32>
    %169 = arith.mulf %162, %40 : vector<16x16xf32>
    %cst_58 = arith.constant dense<0.000000e+00> : vector<16xf32>
    %170 = vector.multi_reduction <add>, %169, %cst_58 [0] : vector<16x16xf32> to vector<16xf32>
    %171 = vector.shape_cast %170 : vector<16xf32> to vector<1x16xf32>
    %c0_59 = arith.constant 0 : index
    %c0_60 = arith.constant 0 : index
    %172 = vector.load %arg27[%c0_59, %c0_60] : memref<3x16xf32, #tpu.memory_space<vmem>>, vector<3x16xf32>
    %173 = tpu.concatenate %165, %168, %171 in 0 : vector<1x16xf32>, vector<1x16xf32>, vector<1x16xf32> -> vector<3x16xf32>
    %174 = arith.addf %172, %173 : vector<3x16xf32>
    %c0_61 = arith.constant 0 : index
    %c0_62 = arith.constant 0 : index
    %175 = vector.load %arg27[%c0_61, %c0_62] : memref<3x16xf32, #tpu.memory_space<vmem>>, vector<3x16xf32>
    tpu.vector_store %arg27[%c0_61, %c0_62], %174 {strides = array<i32>} : memref<3x16xf32, #tpu.memory_space<vmem>>, vector<3x16xf32>,
    %176 = arith.extui %5 : i1 to i32
    %c0_i32_63 = arith.constant 0 : i32
    %177 = arith.cmpi ne, %176, %c0_i32_63 : i32
    scf.if %177 {
      %c0_64 = arith.constant 0 : index
      %c0_65 = arith.constant 0 : index
      %178 = memref.load %arg3[%c0_64, %c0_65] : memref<1x1xf32, #tpu.memory_space<smem>>
      %c0_66 = arith.constant 0 : index
      %c0_67 = arith.constant 0 : index
      %179 = vector.load %arg26[%c0_66, %c0_67] : memref<16x32xf32, #tpu.memory_space<vmem>>, vector<16x32xf32>
      %180 = vector.broadcast %178 : f32 to vector<16x32xf32>
      %181 = arith.mulf %179, %180 : vector<16x32xf32>
      %c0_68 = arith.constant 0 : index
      %c0_69 = arith.constant 0 : index
      %182 = vector.load %arg27[%c0_68, %c0_69] : memref<3x16xf32, #tpu.memory_space<vmem>>, vector<3x16xf32>
      %183 = vector.broadcast %178 : f32 to vector<3x16xf32>
      %184 = arith.mulf %182, %183 : vector<3x16xf32>
      %c0_70 = arith.constant 0 : index
      %c0_71 = arith.constant 0 : index
      %185 = vector.load %arg20[%c0_70, %c0_71] : memref<64x32xbf16, #tpu.memory_space<vmem>>, vector<64x32xbf16>
      %186 = arith.truncf %8 : vector<16x32xf32> to vector<16x32xbf16>
      %187 = vector.extract_strided_slice %185 {offsets = [0, 0], sizes = [32, 32], strides = [1, 1]} : vector<64x32xbf16> to vector<32x32xbf16>
      %cst_72 = arith.constant dense<0.000000e+00> : vector<16x32xf32>
      %188 = tpu.matmul %186, %187, %cst_72 {dimension_numbers = #tpu.dot_dimension_numbers<[1], [0], [0], [1], [0, 0, 1, 1], [], []>} : vector<16x32xbf16>, vector<32x32xbf16>, vector<16x32xf32> -> vector<16x32xf32>
      %189 = arith.truncf %181 : vector<16x32xf32> to vector<16x32xbf16>
      %190 = vector.extract_strided_slice %185 {offsets = [32, 0], sizes = [32, 32], strides = [1, 1]} : vector<64x32xbf16> to vector<32x32xbf16>
      %cst_73 = arith.constant dense<0.000000e+00> : vector<16x32xf32>
      %191 = tpu.matmul %189, %190, %cst_73 {dimension_numbers = #tpu.dot_dimension_numbers<[1], [0], [0], [1], [0, 0, 1, 1], [], []>} : vector<16x32xbf16>, vector<32x32xbf16>, vector<16x32xf32> -> vector<16x32xf32>
      %192 = arith.addf %188, %191 : vector<16x32xf32>
      %c0_74 = arith.constant 0 : index
      %c0_75 = arith.constant 0 : index
      %193 = vector.load %arg21[%c0_74, %c0_75] : memref<1x32xf32, #tpu.memory_space<vmem>>, vector<1x32xf32>
      %194 = vector.broadcast %193 : vector<1x32xf32> to vector<16x32xf32>
      %195 = arith.addf %192, %194 : vector<16x32xf32>
      %196 = arith.negf %195 : vector<16x32xf32>
      %197 = math.exp %196 : vector<16x32xf32>
      %cst_76 = arith.constant 1.000000e+00 : f32
      %198 = vector.broadcast %cst_76 : f32 to vector<16x32xf32>
      %199 = arith.addf %198, %197 : vector<16x32xf32>
      %200 = arith.divf %198, %199 : vector<16x32xf32>
      %201 = arith.mulf %195, %200 : vector<16x32xf32>
      %202 = arith.truncf %201 : vector<16x32xf32> to vector<16x32xbf16>
      %c0_77 = arith.constant 0 : index
      %c0_78 = arith.constant 0 : index
      %203 = vector.load %arg22[%c0_77, %c0_78] : memref<32x32xbf16, #tpu.memory_space<vmem>>, vector<32x32xbf16>
      %cst_79 = arith.constant dense<0.000000e+00> : vector<16x32xf32>
      %204 = tpu.matmul %202, %203, %cst_79 {dimension_numbers = #tpu.dot_dimension_numbers<[1], [0], [0], [1], [0, 0, 1, 1], [], []>} : vector<16x32xbf16>, vector<32x32xbf16>, vector<16x32xf32> -> vector<16x32xf32>
      %c0_80 = arith.constant 0 : index
      %c0_81 = arith.constant 0 : index
      %205 = vector.load %arg23[%c0_80, %c0_81] : memref<1x32xf32, #tpu.memory_space<vmem>>, vector<1x32xf32>
      %206 = vector.broadcast %205 : vector<1x32xf32> to vector<16x32xf32>
      %207 = arith.addf %204, %206 : vector<16x32xf32>
      %208 = arith.addf %8, %207 : vector<16x32xf32>
      %c0_82 = arith.constant 0 : index
      %c0_83 = arith.constant 0 : index
      %209 = vector.load %arg24[%c0_82, %c0_83] : memref<16x32xf32, #tpu.memory_space<vmem>>, vector<16x32xf32>
      tpu.vector_store %arg24[%c0_82, %c0_83], %208 {strides = array<i32>} : memref<16x32xf32, #tpu.memory_space<vmem>>, vector<16x32xf32>,
      %210 = arith.addf %9, %184 : vector<3x16xf32>
      %c0_84 = arith.constant 0 : index
      %c0_85 = arith.constant 0 : index
      %211 = vector.load %arg25[%c0_84, %c0_85] : memref<3x16xf32, #tpu.memory_space<vmem>>, vector<3x16xf32>
      tpu.vector_store %arg25[%c0_84, %c0_85], %210 {strides = array<i32>} : memref<3x16xf32, #tpu.memory_space<vmem>>, vector<3x16xf32>,
    } else {
    }
    return
  }
  func.func @transform_0(%arg0: i32, %arg1: i32, %arg2: i32) -> (i32, i32) {
    %c0_i32 = arith.constant 0 : i32
    %c0_i32_0 = arith.constant 0 : i32
    %c0_i32_1 = arith.constant 0 : i32
    return %c0_i32, %c0_i32_0 : i32, i32
  }
  func.func @transform_1(%arg0: i32, %arg1: i32, %arg2: i32) -> (i32, i32, i32) {
    %c0_i32 = arith.constant 0 : i32
    %c0_i32_0 = arith.constant 0 : i32
    return %arg1, %arg2, %c0_i32 : i32, i32, i32
  }
  func.func @transform_2(%arg0: i32, %arg1: i32, %arg2: i32) -> (i32, i32, i32) {
    %c0_i32 = arith.constant 0 : i32
    %c0_i32_0 = arith.constant 0 : i32
    return %arg1, %arg2, %c0_i32 : i32, i32, i32
  }
  func.func @transform_3(%arg0: i32, %arg1: i32, %arg2: i32) -> (i32, i32, i32) {
    %c0_i32 = arith.constant 0 : i32
    return %arg1, %arg2, %arg0 : i32, i32, i32
  }
  func.func @transform_4(%arg0: i32, %arg1: i32, %arg2: i32) -> (i32, i32) {
    %c0_i32 = arith.constant 0 : i32
    %c0_i32_0 = arith.constant 0 : i32
    return %arg0, %c0_i32 : i32, i32
  }
  func.func @transform_5(%arg0: i32, %arg1: i32, %arg2: i32) -> (i32, i32) {
    %c0_i32 = arith.constant 0 : i32
    %c0_i32_0 = arith.constant 0 : i32
    return %c0_i32, %arg0 : i32, i32
  }
  func.func @transform_6(%arg0: i32, %arg1: i32, %arg2: i32) -> (i32, i32, i32) {
    %c0_i32 = arith.constant 0 : i32
    %c0_i32_0 = arith.constant 0 : i32
    %c0_i32_1 = arith.constant 0 : i32
    %c0_i32_2 = arith.constant 0 : i32
    return %c0_i32, %c0_i32_0, %c0_i32_1 : i32, i32, i32
  }
  func.func @transform_7(%arg0: i32, %arg1: i32, %arg2: i32) -> (i32, i32, i32) {
    %c0_i32 = arith.constant 0 : i32
    %c0_i32_0 = arith.constant 0 : i32
    %c0_i32_1 = arith.constant 0 : i32
    %c0_i32_2 = arith.constant 0 : i32
    return %c0_i32, %c0_i32_0, %c0_i32_1 : i32, i32, i32
  }
  func.func @transform_8(%arg0: i32, %arg1: i32, %arg2: i32) -> (i32, i32, i32) {
    %c0_i32 = arith.constant 0 : i32
    %c0_i32_0 = arith.constant 0 : i32
    %c0_i32_1 = arith.constant 0 : i32
    %c0_i32_2 = arith.constant 0 : i32
    return %c0_i32, %c0_i32_0, %c0_i32_1 : i32, i32, i32
  }
  func.func @transform_9(%arg0: i32, %arg1: i32, %arg2: i32) -> (i32, i32, i32) {
    %c0_i32 = arith.constant 0 : i32
    %c0_i32_0 = arith.constant 0 : i32
    %c0_i32_1 = arith.constant 0 : i32
    %c0_i32_2 = arith.constant 0 : i32
    return %c0_i32, %c0_i32_0, %c0_i32_1 : i32, i32, i32
  }
  func.func @transform_10(%arg0: i32, %arg1: i32, %arg2: i32) -> (i32, i32, i32) {
    %c0_i32 = arith.constant 0 : i32
    %c0_i32_0 = arith.constant 0 : i32
    %c0_i32_1 = arith.constant 0 : i32
    %c0_i32_2 = arith.constant 0 : i32
    return %c0_i32, %c0_i32_0, %c0_i32_1 : i32, i32, i32
  }
  func.func @transform_11(%arg0: i32, %arg1: i32, %arg2: i32) -> (i32, i32, i32) {
    %c0_i32 = arith.constant 0 : i32
    %c0_i32_0 = arith.constant 0 : i32
    %c0_i32_1 = arith.constant 0 : i32
    %c0_i32_2 = arith.constant 0 : i32
    return %c0_i32, %c0_i32_0, %c0_i32_1 : i32, i32, i32
  }
  func.func @transform_12(%arg0: i32, %arg1: i32, %arg2: i32) -> (i32, i32, i32) {
    %c0_i32 = arith.constant 0 : i32
    %c0_i32_0 = arith.constant 0 : i32
    %c0_i32_1 = arith.constant 0 : i32
    %c0_i32_2 = arith.constant 0 : i32
    return %c0_i32, %c0_i32_0, %c0_i32_1 : i32, i32, i32
  }
  func.func @transform_13(%arg0: i32, %arg1: i32, %arg2: i32) -> (i32, i32, i32) {
    %c0_i32 = arith.constant 0 : i32
    %c0_i32_0 = arith.constant 0 : i32
    %c0_i32_1 = arith.constant 0 : i32
    %c0_i32_2 = arith.constant 0 : i32
    return %c0_i32, %c0_i32_0, %c0_i32_1 : i32, i32, i32
  }
  func.func @transform_14(%arg0: i32, %arg1: i32, %arg2: i32) -> (i32, i32, i32) {
    %c0_i32 = arith.constant 0 : i32
    %c0_i32_0 = arith.constant 0 : i32
    %c0_i32_1 = arith.constant 0 : i32
    %c0_i32_2 = arith.constant 0 : i32
    return %c0_i32, %c0_i32_0, %c0_i32_1 : i32, i32, i32
  }
  func.func @transform_15(%arg0: i32, %arg1: i32, %arg2: i32) -> (i32, i32, i32) {
    %c0_i32 = arith.constant 0 : i32
    %c0_i32_0 = arith.constant 0 : i32
    %c0_i32_1 = arith.constant 0 : i32
    %c0_i32_2 = arith.constant 0 : i32
    return %c0_i32, %c0_i32_0, %c0_i32_1 : i32, i32, i32
  }
  func.func @transform_16(%arg0: i32, %arg1: i32, %arg2: i32) -> (i32, i32, i32) {
    %c0_i32 = arith.constant 0 : i32
    %c0_i32_0 = arith.constant 0 : i32
    %c0_i32_1 = arith.constant 0 : i32
    %c0_i32_2 = arith.constant 0 : i32
    return %c0_i32, %c0_i32_0, %c0_i32_1 : i32, i32, i32
  }
  func.func @transform_17(%arg0: i32, %arg1: i32, %arg2: i32) -> (i32, i32) {
    %c0_i32 = arith.constant 0 : i32
    %c0_i32_0 = arith.constant 0 : i32
    %c0_i32_1 = arith.constant 0 : i32
    return %c0_i32, %c0_i32_0 : i32, i32
  }
  func.func @transform_18(%arg0: i32, %arg1: i32, %arg2: i32) -> (i32, i32) {
    %c0_i32 = arith.constant 0 : i32
    %c0_i32_0 = arith.constant 0 : i32
    %c0_i32_1 = arith.constant 0 : i32
    return %c0_i32, %c0_i32_0 : i32, i32
  }
  func.func @transform_19(%arg0: i32, %arg1: i32, %arg2: i32) -> (i32, i32) {
    %c0_i32 = arith.constant 0 : i32
    %c0_i32_0 = arith.constant 0 : i32
    %c0_i32_1 = arith.constant 0 : i32
    return %c0_i32, %c0_i32_0 : i32, i32
  }
  func.func @transform_20(%arg0: i32, %arg1: i32, %arg2: i32) -> (i32, i32) {
    %c0_i32 = arith.constant 0 : i32
    %c0_i32_0 = arith.constant 0 : i32
    %c0_i32_1 = arith.constant 0 : i32
    return %c0_i32, %c0_i32_0 : i32, i32
  }
  func.func @transform_21(%arg0: i32, %arg1: i32, %arg2: i32) -> (i32, i32) {
    %c0_i32 = arith.constant 0 : i32
    %c0_i32_0 = arith.constant 0 : i32
    return %arg0, %c0_i32 : i32, i32
  }
  func.func @transform_22(%arg0: i32, %arg1: i32, %arg2: i32) -> (i32, i32) {
    %c0_i32 = arith.constant 0 : i32
    %c0_i32_0 = arith.constant 0 : i32
    return %c0_i32, %arg0 : i32, i32
  }
}

</mosaic_0001>

<llo_original>
// kernel: ligrec_egnn_forward.2
$region0: #{ligrec_egnn_forward.2}
  #allocation0 [shape = 'u32[]', space=smem, size = 0x4, offset = 0x4, fixed_abs, tag = 'smem constant byte address 0x4 - core index']
  #allocation1 [shape = 'u32[144,128]{1,0:T(1,128)}', space=vmem, size = 0x12000, scoped, tag = 'internal scratch']
  #allocation2 [shape = 'f32[16,32]{1,0:T(8,128)}', space=vmem, size = 0x2000, scoped, tag = 'scratch operand']
  #allocation3 [shape = 'f32[3,16]{1,0:T(4,128)}', space=vmem, size = 0x800, scoped, tag = 'scratch operand']
  #allocation4 [shape = 'f32[16,32]{1,0:T(8,128)}', space=vmem, size = 0x2000, scoped, tag = 'scratch operand']
  #allocation5 [shape = 'f32[16,32]{1,0:T(8,128)}', space=vmem, size = 0x2000, scoped, tag = 'scratch operand']
  #allocation6 [shape = 'f32[1,1]{1,0:T(1,128)S(6)}', space=smem, size = 0x200, scoped, tag = 'scoped memory for ligrec_egnn_forward.2']
  %s0 = inlined_call_operand.<no memory space> [shape: f32[1,1], index: 0, kind: input, shape index: {}]
  %s1 = inlined_call_operand.vmem [shape: f32[2,16,32], index: 1, kind: input, shape index: {}]
  %s2 = inlined_call_operand.vmem [shape: f32[2,16,3], index: 2, kind: input, shape index: {}]
  %s3 = inlined_call_operand.vmem [shape: bf16[2,16,16], index: 3, kind: input, shape index: {}]
  %s4 = inlined_call_operand.vmem [shape: f32[16,32], index: 4, kind: input, shape index: {}]
  %s5 = inlined_call_operand.vmem [shape: f32[3,16], index: 5, kind: input, shape index: {}]
  %s6 = inlined_call_operand.vmem [shape: bf16[2,65,32], index: 6, kind: input, shape index: {}]
  %s7 = inlined_call_operand.vmem [shape: f32[2,1,32], index: 7, kind: input, shape index: {}]
  %s8 = inlined_call_operand.vmem [shape: bf16[2,32,32], index: 8, kind: input, shape index: {}]
  %s9 = inlined_call_operand.vmem [shape: f32[2,1,32], index: 9, kind: input, shape index: {}]
  %s10 = inlined_call_operand.vmem [shape: f32[2,1,32], index: 10, kind: input, shape index: {}]
  %s11 = inlined_call_operand.vmem [shape: f32[2,1,1], index: 11, kind: input, shape index: {}]
  %s12 = inlined_call_operand.vmem [shape: bf16[2,65,32], index: 12, kind: input, shape index: {}]
  %s13 = inlined_call_operand.vmem [shape: f32[2,1,32], index: 13, kind: input, shape index: {}]
  %s14 = inlined_call_operand.vmem [shape: bf16[2,32,32], index: 14, kind: input, shape index: {}]
  %s15 = inlined_call_operand.vmem [shape: f32[2,1,32], index: 15, kind: input, shape index: {}]
  %s16 = inlined_call_operand.vmem [shape: f32[2,1,32], index: 16, kind: input, shape index: {}]
  %s17 = inlined_call_operand.vmem [shape: bf16[64,32], index: 17, kind: input, shape index: {}]
  %s18 = inlined_call_operand.vmem [shape: f32[1,32], index: 18, kind: input, shape index: {}]
  %s19 = inlined_call_operand.vmem [shape: bf16[32,32], index: 19, kind: input, shape index: {}]
  %s20 = inlined_call_operand.vmem [shape: f32[1,32], index: 20, kind: input, shape index: {}]
  %s21 = inlined_call_operand.vmem [shape: f32[16,32], index: 21, kind: output, shape index: {0}]
  %s22 = inlined_call_operand.vmem [shape: f32[3,16], index: 22, kind: output, shape index: {1}]
  %23 = xla_tuple %s21, %s22
  %s24 = sld [smem:[#allocation0]]
  $region137: #{ligrec_egnn_forward.2} parent=0
    _
  %s26 = ssub.s32 1, %s24
  %s27 = scalar_select 0, %s26, %s24
  %28 = sst [smem:[#allocation6]] %s0
  loop: start=0, step=1, limit=4
  $region2: #{ligrec_egnn_forward.2} parent=0 // loop_pre_header
    _
  $region3: #{ligrec_egnn_forward.2} parent=0 // loop_header
    %s30 = sphi 0, %s34
    %p31 = scmp.ge.s32.totalorder %s30, 4
    %s37 = sphi 0, %s56
    %s38 = sphi 0, %s52
    %s39 = sphi 0, %s48
    %s40 = sphi 0, %s37
    %s41 = sphi 0, %s38
    %s42 = sphi 0, %s39
    %s43 = sphi 0, %s40
    %s44 = sphi 0, %s41
    %s45 = sphi 0, %s42
    %s57 = sphi 0, %s57
    %s59 = sphi 0, %s57
    %s60 = sphi 0, %s59
    %s74 = sphi 0, %s60
    %s82 = sphi 0, %s84
    %s85 = sphi 0, %s82
    %s86 = sphi 0, %s85
    %s102 = sphi 0, %s86
    %s110 = sphi 0, %s112
    %s113 = sphi 0, %s110
    %s114 = sphi 0, %s113
    %s130 = sphi 0, %s114
    %s140 = sphi 0, %s142
    %s143 = sphi 0, %s140
    %s144 = sphi 0, %s143
    %s160 = sphi 0, %s144
    %s166 = sphi 0, %s168
    %s169 = sphi 0, %s166
    %s170 = sphi 0, %s169
    %s186 = sphi 0, %s170
    %s192 = sphi 0, %s194
    %s195 = sphi 0, %s192
    %s196 = sphi 0, %s195
    %s212 = sphi 0, %s196
    %s216 = sphi 0, %s216
    %s218 = sphi 0, %s216
    %s219 = sphi 0, %s218
    %s233 = sphi 0, %s219
    %s237 = sphi 0, %s237
    %s239 = sphi 0, %s237
    %s240 = sphi 0, %s239
    %s254 = sphi 0, %s240
    %s258 = sphi 0, %s258
    %s260 = sphi 0, %s258
    %s261 = sphi 0, %s260
    %s275 = sphi 0, %s261
    %s279 = sphi 0, %s279
    %s281 = sphi 0, %s279
    %s282 = sphi 0, %s281
    %s296 = sphi 0, %s282
    %s300 = sphi 0, %s300
    %s302 = sphi 0, %s300
    %s303 = sphi 0, %s302
    %s317 = sphi 0, %s303
    %s321 = sphi 0, %s321
    %s323 = sphi 0, %s321
    %s324 = sphi 0, %s323
    %s338 = sphi 0, %s324
    %s342 = sphi 0, %s342
    %s344 = sphi 0, %s342
    %s345 = sphi 0, %s344
    %s359 = sphi 0, %s345
    %s363 = sphi 0, %s363
    %s365 = sphi 0, %s363
    %s366 = sphi 0, %s365
    %s380 = sphi 0, %s366
    %s384 = sphi 0, %s384
    %s386 = sphi 0, %s384
    %s387 = sphi 0, %s386
    %s401 = sphi 0, %s387
    %s405 = sphi 0, %s405
    %s407 = sphi 0, %s405
    %s408 = sphi 0, %s407
    %s422 = sphi 0, %s408
    %s426 = sphi 0, %s426
    %s428 = sphi 0, %s426
    %s429 = sphi 0, %s428
    %s443 = sphi 0, %s429
    %s447 = sphi 0, %s447
    %s449 = sphi 0, %s447
    %s450 = sphi 0, %s449
    %s464 = sphi 0, %s450
    %s468 = sphi 0, %s468
    %s470 = sphi 0, %s468
    %s471 = sphi 0, %s470
    %s485 = sphi 0, %s471
    %s489 = sphi 0, %s489
    %s491 = sphi 0, %s489
    %s492 = sphi 0, %s491
    %s506 = sphi 0, %s492
    %s510 = sphi 0, %s510
    %s512 = sphi 0, %s510
    %s513 = sphi 0, %s512
    %s527 = sphi 0, %s513
    %s533 = sphi 0, %s535
    %s536 = sphi 0, %s533
    %s537 = sphi 0, %s536
    %s553 = sphi 0, %s537
    %s559 = sphi 0, %s561
    %s562 = sphi 0, %s559
    %s563 = sphi 0, %s562
    %s579 = sphi 0, %s563
  $region4: #{ligrec_egnn_forward.2} parent=0 // loop_header_branch
    %33 = sbr.rel (%p31) target = $region8
  $region5: #{ligrec_egnn_forward.2} parent=0 // loop_body
    %s35 = ssub.s32 %s30, 1
    %s36 = ssub.s32 %s30, 2
    %s46 = sadd.s32 1, %s39
    %p47 = scmp.ge.s32.totalorder %s46, 1
    %s48 = scalar_select %p47, 0, %s46
    %s49 = sadd.s32 1, %s38
    %s50 = scalar_select %p47, %s49, %s38
    %p51 = scmp.ge.s32.totalorder %s50, 2
    %s52 = scalar_select %p51, 0, %s50
    %s53 = sadd.s32 1, %s37
    %s54 = scalar_select %p51, %s53, %s37
    %p55 = scmp.ge.s32.totalorder %s54, 1
    %s56 = scalar_select %p55, 0, %s54
    %s58 = sadd.s32 %s57, 1
    %p61 = scmp.eq.s32.totalorder %s30, 1
    %p62 = scmp.ne.s32.totalorder %s57, %s59
    %p63 = scmp.eq.s32.totalorder %s30, 0
    %p64 = por %p62, %p63
    %p65 = scmp.ne.s32.totalorder %s57, %s59
    %p66 = scmp.eq.s32.totalorder %s35, 1
    %p67 = por %p65, %p66
    %p68 = scmp.ne.s32.totalorder %s59, %s60
    %p69 = scmp.eq.s32.totalorder %s35, 0
    %p70 = por %p68, %p69
    %p71 = scmp.ne.s32.totalorder %s59, %s60
    %p72 = scmp.eq.s32.totalorder %s36, 1
    %p73 = por %p71, %p72
    %p75 = scmp.ne.s32.totalorder %s60, %s74
    %p76 = scmp.eq.s32.totalorder %s36, 0
    %p77 = por %p75, %p76
    %s78 = ssub.s32 %s38, %s52
    %s79 = ssub.s32 %s39, %s48
    %s80 = sor.u32 %s78, %s79
    %p81 = scmp.eq.s32.totalorder %s80, 0
    %s83 = sadd.s32 %s82, 1
    %s84 = scalar_select %p81, %s82, %s83
    %p87 = pneg %p81
    %p88 = scmp.eq.s32.totalorder %s30, 1
    %p89 = por %p87, %p88
    %p90 = scmp.ne.s32.totalorder %s82, %s85
    %p91 = scmp.eq.s32.totalorder %s30, 0
    %p92 = por %p90, %p91
    %p93 = scmp.ne.s32.totalorder %s82, %s85
    %p94 = scmp.eq.s32.totalorder %s35, 1
    %p95 = por %p93, %p94
    %p96 = scmp.ne.s32.totalorder %s85, %s86
    %p97 = scmp.eq.s32.totalorder %s35, 0
    %p98 = por %p96, %p97
    %p99 = scmp.ne.s32.totalorder %s85, %s86
    %p100 = scmp.eq.s32.totalorder %s36, 1
    %p101 = por %p99, %p100
    %p103 = scmp.ne.s32.totalorder %s86, %s102
    %p104 = scmp.eq.s32.totalorder %s36, 0
    %p105 = por %p103, %p104
    %s106 = ssub.s32 %s38, %s52
    %s107 = ssub.s32 %s39, %s48
    %s108 = sor.u32 %s106, %s107
    %p109 = scmp.eq.s32.totalorder %s108, 0
    %s111 = sadd.s32 %s110, 1
    %s112 = scalar_select %p109, %s110, %s111
    %p115 = pneg %p109
    %p116 = scmp.eq.s32.totalorder %s30, 1
    %p117 = por %p115, %p116
    %p118 = scmp.ne.s32.totalorder %s110, %s113
    %p119 = scmp.eq.s32.totalorder %s30, 0
    %p120 = por %p118, %p119
    %p121 = scmp.ne.s32.totalorder %s110, %s113
    %p122 = scmp.eq.s32.totalorder %s35, 1
    %p123 = por %p121, %p122
    %p124 = scmp.ne.s32.totalorder %s113, %s114
    %p125 = scmp.eq.s32.totalorder %s35, 0
    %p126 = por %p124, %p125
    %p127 = scmp.ne.s32.totalorder %s113, %s114
    %p128 = scmp.eq.s32.totalorder %s36, 1
    %p129 = por %p127, %p128
    %p131 = scmp.ne.s32.totalorder %s114, %s130
    %p132 = scmp.eq.s32.totalorder %s36, 0
    %p133 = por %p131, %p132
    %s134 = ssub.s32 %s38, %s52
    %s135 = ssub.s32 %s39, %s48
    %s136 = sor.u32 %s134, %s135
    %s137 = ssub.s32 %s37, %s56
    %s138 = sor.u32 %s136, %s137
    %p139 = scmp.eq.s32.totalorder %s138, 0
    %s141 = sadd.s32 %s140, 1
    %s142 = scalar_select %p139, %s140, %s141
    %p145 = pneg %p139
    %p146 = scmp.eq.s32.totalorder %s30, 1
    %p147 = por %p145, %p146
    %p148 = scmp.ne.s32.totalorder %s140, %s143
    %p149 = scmp.eq.s32.totalorder %s30, 0
    %p150 = por %p148, %p149
    %p151 = scmp.ne.s32.totalorder %s140, %s143
    %p152 = scmp.eq.s32.totalorder %s35, 1
    %p153 = por %p151, %p152
    %p154 = scmp.ne.s32.totalorder %s143, %s144
    %p155 = scmp.eq.s32.totalorder %s35, 0
    %p156 = por %p154, %p155
    %p157 = scmp.ne.s32.totalorder %s143, %s144
    %p158 = scmp.eq.s32.totalorder %s36, 1
    %p159 = por %p157, %p158
    %p161 = scmp.ne.s32.totalorder %s144, %s160
    %p162 = scmp.eq.s32.totalorder %s36, 0
    %p163 = por %p161, %p162
    %s164 = ssub.s32 %s37, %s56
    %p165 = scmp.eq.s32.totalorder %s164, 0
    %s167 = sadd.s32 %s166, 1
    %s168 = scalar_select %p165, %s166, %s167
    %p171 = pneg %p165
    %p172 = scmp.eq.s32.totalorder %s30, 1
    %p173 = por %p171, %p172
    %p174 = scmp.ne.s32.totalorder %s166, %s169
    %p175 = scmp.eq.s32.totalorder %s30, 0
    %p176 = por %p174, %p175
    %p177 = scmp.ne.s32.totalorder %s166, %s169
    %p178 = scmp.eq.s32.totalorder %s35, 1
    %p179 = por %p177, %p178
    %p180 = scmp.ne.s32.totalorder %s169, %s170
    %p181 = scmp.eq.s32.totalorder %s35, 0
    %p182 = por %p180, %p181
    %p183 = scmp.ne.s32.totalorder %s169, %s170
    %p184 = scmp.eq.s32.totalorder %s36, 1
    %p185 = por %p183, %p184
    %p187 = scmp.ne.s32.totalorder %s170, %s186
    %p188 = scmp.eq.s32.totalorder %s36, 0
    %p189 = por %p187, %p188
    %s190 = ssub.s32 %s37, %s56
    %p191 = scmp.eq.s32.totalorder %s190, 0
    %s193 = sadd.s32 %s192, 1
    %s194 = scalar_select %p191, %s192, %s193
    %p197 = pneg %p191
    %p198 = scmp.eq.s32.totalorder %s30, 1
    %p199 = por %p197, %p198
    %p200 = scmp.ne.s32.totalorder %s192, %s195
    %p201 = scmp.eq.s32.totalorder %s30, 0
    %p202 = por %p200, %p201
    %p203 = scmp.ne.s32.totalorder %s192, %s195
    %p204 = scmp.eq.s32.totalorder %s35, 1
    %p205 = por %p203, %p204
    %p206 = scmp.ne.s32.totalorder %s195, %s196
    %p207 = scmp.eq.s32.totalorder %s35, 0
    %p208 = por %p206, %p207
    %p209 = scmp.ne.s32.totalorder %s195, %s196
    %p210 = scmp.eq.s32.totalorder %s36, 1
    %p211 = por %p209, %p210
    %p213 = scmp.ne.s32.totalorder %s196, %s212
    %p214 = scmp.eq.s32.totalorder %s36, 0
    %p215 = por %p213, %p214
    %s217 = sadd.s32 %s216, 1
    %p220 = scmp.eq.s32.totalorder %s30, 1
    %p221 = scmp.ne.s32.totalorder %s216, %s218
    %p222 = scmp.eq.s32.totalorder %s30, 0
    %p223 = por %p221, %p222
    %p224 = scmp.ne.s32.totalorder %s216, %s218
    %p225 = scmp.eq.s32.totalorder %s35, 1
    %p226 = por %p224, %p225
    %p227 = scmp.ne.s32.totalorder %s218, %s219
    %p228 = scmp.eq.s32.totalorder %s35, 0
    %p229 = por %p227, %p228
    %p230 = scmp.ne.s32.totalorder %s218, %s219
    %p231 = scmp.eq.s32.totalorder %s36, 1
    %p232 = por %p230, %p231
    %p234 = scmp.ne.s32.totalorder %s219, %s233
    %p235 = scmp.eq.s32.totalorder %s36, 0
    %p236 = por %p234, %p235
    %s238 = sadd.s32 %s237, 1
    %p241 = scmp.eq.s32.totalorder %s30, 1
    %p242 = scmp.ne.s32.totalorder %s237, %s239
    %p243 = scmp.eq.s32.totalorder %s30, 0
    %p244 = por %p242, %p243
    %p245 = scmp.ne.s32.totalorder %s237, %s239
    %p246 = scmp.eq.s32.totalorder %s35, 1
    %p247 = por %p245, %p246
    %p248 = scmp.ne.s32.totalorder %s239, %s240
    %p249 = scmp.eq.s32.totalorder %s35, 0
    %p250 = por %p248, %p249
    %p251 = scmp.ne.s32.totalorder %s239, %s240
    %p252 = scmp.eq.s32.totalorder %s36, 1
    %p253 = por %p251, %p252
    %p255 = scmp.ne.s32.totalorder %s240, %s254
    %p256 = scmp.eq.s32.totalorder %s36, 0
    %p257 = por %p255, %p256
    %s259 = sadd.s32 %s258, 1
    %p262 = scmp.eq.s32.totalorder %s30, 1
    %p263 = scmp.ne.s32.totalorder %s258, %s260
    %p264 = scmp.eq.s32.totalorder %s30, 0
    %p265 = por %p263, %p264
    %p266 = scmp.ne.s32.totalorder %s258, %s260
    %p267 = scmp.eq.s32.totalorder %s35, 1
    %p268 = por %p266, %p267
    %p269 = scmp.ne.s32.totalorder %s260, %s261
    %p270 = scmp.eq.s32.totalorder %s35, 0
    %p271 = por %p269, %p270
    %p272 = scmp.ne.s32.totalorder %s260, %s261
    %p273 = scmp.eq.s32.totalorder %s36, 1
    %p274 = por %p272, %p273
    %p276 = scmp.ne.s32.totalorder %s261, %s275
    %p277 = scmp.eq.s32.totalorder %s36, 0
    %p278 = por %p276, %p277
    %s280 = sadd.s32 %s279, 1
    %p283 = scmp.eq.s32.totalorder %s30, 1
    %p284 = scmp.ne.s32.totalorder %s279, %s281
    %p285 = scmp.eq.s32.totalorder %s30, 0
    %p286 = por %p284, %p285
    %p287 = scmp.ne.s32.totalorder %s279, %s281
    %p288 = scmp.eq.s32.totalorder %s35, 1
    %p289 = por %p287, %p288
    %p290 = scmp.ne.s32.totalorder %s281, %s282
    %p291 = scmp.eq.s32.totalorder %s35, 0
    %p292 = por %p290, %p291
    %p293 = scmp.ne.s32.totalorder %s281, %s282
    %p294 = scmp.eq.s32.totalorder %s36, 1
    %p295 = por %p293, %p294
    %p297 = scmp.ne.s32.totalorder %s282, %s296
    %p298 = scmp.eq.s32.totalorder %s36, 0
    %p299 = por %p297, %p298
    %s301 = sadd.s32 %s300, 1
    %p304 = scmp.eq.s32.totalorder %s30, 1
    %p305 = scmp.ne.s32.totalorder %s300, %s302
    %p306 = scmp.eq.s32.totalorder %s30, 0
    %p307 = por %p305, %p306
    %p308 = scmp.ne.s32.totalorder %s300, %s302
    %p309 = scmp.eq.s32.totalorder %s35, 1
    %p310 = por %p308, %p309
    %p311 = scmp.ne.s32.totalorder %s302, %s303
    %p312 = scmp.eq.s32.totalorder %s35, 0
    %p313 = por %p311, %p312
    %p314 = scmp.ne.s32.totalorder %s302, %s303
    %p315 = scmp.eq.s32.totalorder %s36, 1
    %p316 = por %p314, %p315
    %p318 = scmp.ne.s32.totalorder %s303, %s317
    %p319 = scmp.eq.s32.totalorder %s36, 0
    %p320 = por %p318, %p319
    %s322 = sadd.s32 %s321, 1
    %p325 = scmp.eq.s32.totalorder %s30, 1
    %p326 = scmp.ne.s32.totalorder %s321, %s323
    %p327 = scmp.eq.s32.totalorder %s30, 0
    %p328 = por %p326, %p327
    %p329 = scmp.ne.s32.totalorder %s321, %s323
    %p330 = scmp.eq.s32.totalorder %s35, 1
    %p331 = por %p329, %p330
    %p332 = scmp.ne.s32.totalorder %s323, %s324
    %p333 = scmp.eq.s32.totalorder %s35, 0
    %p334 = por %p332, %p333
    %p335 = scmp.ne.s32.totalorder %s323, %s324
    %p336 = scmp.eq.s32.totalorder %s36, 1
    %p337 = por %p335, %p336
    %p339 = scmp.ne.s32.totalorder %s324, %s338
    %p340 = scmp.eq.s32.totalorder %s36, 0
    %p341 = por %p339, %p340
    %s343 = sadd.s32 %s342, 1
    %p346 = scmp.eq.s32.totalorder %s30, 1
    %p347 = scmp.ne.s32.totalorder %s342, %s344
    %p348 = scmp.eq.s32.totalorder %s30, 0
    %p349 = por %p347, %p348
    %p350 = scmp.ne.s32.totalorder %s342, %s344
    %p351 = scmp.eq.s32.totalorder %s35, 1
    %p352 = por %p350, %p351
    %p353 = scmp.ne.s32.totalorder %s344, %s345
    %p354 = scmp.eq.s32.totalorder %s35, 0
    %p355 = por %p353, %p354
    %p356 = scmp.ne.s32.totalorder %s344, %s345
    %p357 = scmp.eq.s32.totalorder %s36, 1
    %p358 = por %p356, %p357
    %p360 = scmp.ne.s32.totalorder %s345, %s359
    %p361 = scmp.eq.s32.totalorder %s36, 0
    %p362 = por %p360, %p361
    %s364 = sadd.s32 %s363, 1
    %p367 = scmp.eq.s32.totalorder %s30, 1
    %p368 = scmp.ne.s32.totalorder %s363, %s365
    %p369 = scmp.eq.s32.totalorder %s30, 0
    %p370 = por %p368, %p369
    %p371 = scmp.ne.s32.totalorder %s363, %s365
    %p372 = scmp.eq.s32.totalorder %s35, 1
    %p373 = por %p371, %p372
    %p374 = scmp.ne.s32.totalorder %s365, %s366
    %p375 = scmp.eq.s32.totalorder %s35, 0
    %p376 = por %p374, %p375
    %p377 = scmp.ne.s32.totalorder %s365, %s366
    %p378 = scmp.eq.s32.totalorder %s36, 1
    %p379 = por %p377, %p378
    %p381 = scmp.ne.s32.totalorder %s366, %s380
    %p382 = scmp.eq.s32.totalorder %s36, 0
    %p383 = por %p381, %p382
    %s385 = sadd.s32 %s384, 1
    %p388 = scmp.eq.s32.totalorder %s30, 1
    %p389 = scmp.ne.s32.totalorder %s384, %s386
    %p390 = scmp.eq.s32.totalorder %s30, 0
    %p391 = por %p389, %p390
    %p392 = scmp.ne.s32.totalorder %s384, %s386
    %p393 = scmp.eq.s32.totalorder %s35, 1
    %p394 = por %p392, %p393
    %p395 = scmp.ne.s32.totalorder %s386, %s387
    %p396 = scmp.eq.s32.totalorder %s35, 0
    %p397 = por %p395, %p396
    %p398 = scmp.ne.s32.totalorder %s386, %s387
    %p399 = scmp.eq.s32.totalorder %s36, 1
    %p400 = por %p398, %p399
    %p402 = scmp.ne.s32.totalorder %s387, %s401
    %p403 = scmp.eq.s32.totalorder %s36, 0
    %p404 = por %p402, %p403
    %s406 = sadd.s32 %s405, 1
    %p409 = scmp.eq.s32.totalorder %s30, 1
    %p410 = scmp.ne.s32.totalorder %s405, %s407
    %p411 = scmp.eq.s32.totalorder %s30, 0
    %p412 = por %p410, %p411
    %p413 = scmp.ne.s32.totalorder %s405, %s407
    %p414 = scmp.eq.s32.totalorder %s35, 1
    %p415 = por %p413, %p414
    %p416 = scmp.ne.s32.totalorder %s407, %s408
    %p417 = scmp.eq.s32.totalorder %s35, 0
    %p418 = por %p416, %p417
    %p419 = scmp.ne.s32.totalorder %s407, %s408
    %p420 = scmp.eq.s32.totalorder %s36, 1
    %p421 = por %p419, %p420
    %p423 = scmp.ne.s32.totalorder %s408, %s422
    %p424 = scmp.eq.s32.totalorder %s36, 0
    %p425 = por %p423, %p424
    %s427 = sadd.s32 %s426, 1
    %p430 = scmp.eq.s32.totalorder %s30, 1
    %p431 = scmp.ne.s32.totalorder %s426, %s428
    %p432 = scmp.eq.s32.totalorder %s30, 0
    %p433 = por %p431, %p432
    %p434 = scmp.ne.s32.totalorder %s426, %s428
    %p435 = scmp.eq.s32.totalorder %s35, 1
    %p436 = por %p434, %p435
    %p437 = scmp.ne.s32.totalorder %s428, %s429
    %p438 = scmp.eq.s32.totalorder %s35, 0
    %p439 = por %p437, %p438
    %p440 = scmp.ne.s32.totalorder %s428, %s429
    %p441 = scmp.eq.s32.totalorder %s36, 1
    %p442 = por %p440, %p441
    %p444 = scmp.ne.s32.totalorder %s429, %s443
    %p445 = scmp.eq.s32.totalorder %s36, 0
    %p446 = por %p444, %p445
    %s448 = sadd.s32 %s447, 1
    %p451 = scmp.eq.s32.totalorder %s30, 1
    %p452 = scmp.ne.s32.totalorder %s447, %s449
    %p453 = scmp.eq.s32.totalorder %s30, 0
    %p454 = por %p452, %p453
    %p455 = scmp.ne.s32.totalorder %s447, %s449
    %p456 = scmp.eq.s32.totalorder %s35, 1
    %p457 = por %p455, %p456
    %p458 = scmp.ne.s32.totalorder %s449, %s450
    %p459 = scmp.eq.s32.totalorder %s35, 0
    %p460 = por %p458, %p459
    %p461 = scmp.ne.s32.totalorder %s449, %s450
    %p462 = scmp.eq.s32.totalorder %s36, 1
    %p463 = por %p461, %p462
    %p465 = scmp.ne.s32.totalorder %s450, %s464
    %p466 = scmp.eq.s32.totalorder %s36, 0
    %p467 = por %p465, %p466
    %s469 = sadd.s32 %s468, 1
    %p472 = scmp.eq.s32.totalorder %s30, 1
    %p473 = scmp.ne.s32.totalorder %s468, %s470
    %p474 = scmp.eq.s32.totalorder %s30, 0
    %p475 = por %p473, %p474
    %p476 = scmp.ne.s32.totalorder %s468, %s470
    %p477 = scmp.eq.s32.totalorder %s35, 1
    %p478 = por %p476, %p477
    %p479 = scmp.ne.s32.totalorder %s470, %s471
    %p480 = scmp.eq.s32.totalorder %s35, 0
    %p481 = por %p479, %p480
    %p482 = scmp.ne.s32.totalorder %s470, %s471
    %p483 = scmp.eq.s32.totalorder %s36, 1
    %p484 = por %p482, %p483
    %p486 = scmp.ne.s32.totalorder %s471, %s485
    %p487 = scmp.eq.s32.totalorder %s36, 0
    %p488 = por %p486, %p487
    %s490 = sadd.s32 %s489, 1
    %p493 = scmp.eq.s32.totalorder %s30, 1
    %p494 = scmp.ne.s32.totalorder %s489, %s491
    %p495 = scmp.eq.s32.totalorder %s30, 0
    %p496 = por %p494, %p495
    %p497 = scmp.ne.s32.totalorder %s489, %s491
    %p498 = scmp.eq.s32.totalorder %s35, 1
    %p499 = por %p497, %p498
    %p500 = scmp.ne.s32.totalorder %s491, %s492
    %p501 = scmp.eq.s32.totalorder %s35, 0
    %p502 = por %p500, %p501
    %p503 = scmp.ne.s32.totalorder %s491, %s492
    %p504 = scmp.eq.s32.totalorder %s36, 1
    %p505 = por %p503, %p504
    %p507 = scmp.ne.s32.totalorder %s492, %s506
    %p508 = scmp.eq.s32.totalorder %s36, 0
    %p509 = por %p507, %p508
    %s511 = sadd.s32 %s510, 1
    %p514 = scmp.eq.s32.totalorder %s30, 1
    %p515 = scmp.ne.s32.totalorder %s510, %s512
    %p516 = scmp.eq.s32.totalorder %s30, 0
    %p517 = por %p515, %p516
    %p518 = scmp.ne.s32.totalorder %s510, %s512
    %p519 = scmp.eq.s32.totalorder %s35, 1
    %p520 = por %p518, %p519
    %p521 = scmp.ne.s32.totalorder %s512, %s513
    %p522 = scmp.eq.s32.totalorder %s35, 0
    %p523 = por %p521, %p522
    %p524 = scmp.ne.s32.totalorder %s512, %s513
    %p525 = scmp.eq.s32.totalorder %s36, 1
    %p526 = por %p524, %p525
    %p528 = scmp.ne.s32.totalorder %s513, %s527
    %p529 = scmp.eq.s32.totalorder %s36, 0
    %p530 = por %p528, %p529
    %s531 = ssub.s32 %s37, %s56
    %p532 = scmp.eq.s32.totalorder %s531, 0
    %s534 = sadd.s32 %s533, 1
    %s535 = scalar_select %p532, %s533, %s534
    %p538 = pneg %p532
    %p539 = scmp.eq.s32.totalorder %s30, 1
    %p540 = por %p538, %p539
    %p541 = scmp.ne.s32.totalorder %s533, %s536
    %p542 = scmp.eq.s32.totalorder %s30, 0
    %p543 = por %p541, %p542
    %p544 = scmp.ne.s32.totalorder %s533, %s536
    %p545 = scmp.eq.s32.totalorder %s35, 1
    %p546 = por %p544, %p545
    %p547 = scmp.ne.s32.totalorder %s536, %s537
    %p548 = scmp.eq.s32.totalorder %s35, 0
    %p549 = por %p547, %p548
    %p550 = scmp.ne.s32.totalorder %s536, %s537
    %p551 = scmp.eq.s32.totalorder %s36, 1
    %p552 = por %p550, %p551
    %p554 = scmp.ne.s32.totalorder %s537, %s553
    %p555 = scmp.eq.s32.totalorder %s36, 0
    %p556 = por %p554, %p555
    %s557 = ssub.s32 %s37, %s56
    %p558 = scmp.eq.s32.totalorder %s557, 0
    %s560 = sadd.s32 %s559, 1
    %s561 = scalar_select %p558, %s559, %s560
    %p564 = pneg %p558
    %p565 = scmp.eq.s32.totalorder %s30, 1
    %p566 = por %p564, %p565
    %p567 = scmp.ne.s32.totalorder %s559, %s562
    %p568 = scmp.eq.s32.totalorder %s30, 0
    %p569 = por %p567, %p568
    %p570 = scmp.ne.s32.totalorder %s559, %s562
    %p571 = scmp.eq.s32.totalorder %s35, 1
    %p572 = por %p570, %p571
    %p573 = scmp.ne.s32.totalorder %s562, %s563
    %p574 = scmp.eq.s32.totalorder %s35, 0
    %p575 = por %p573, %p574
    %p576 = scmp.ne.s32.totalorder %s562, %s563
    %p577 = scmp.eq.s32.totalorder %s36, 1
    %p578 = por %p576, %p577
    %p580 = scmp.ne.s32.totalorder %s563, %s579
    %p581 = scmp.eq.s32.totalorder %s36, 0
    %p582 = por %p580, %p581
    %p583 = scmp.le.s32.totalorder 1, %s30
    %p584 = scmp.lt.s32.totalorder %s30, 3
    %p585 = pnand %p583, %p584
    %p586 = pneg %p585
    // Predicated region
    $region9: #{ligrec_egnn_forward.2} parent=5 // pred_check
      _
    $region10: #{ligrec_egnn_forward.2} parent=5 // pred_check_branch
      %588 = sbr.rel (%p585) target = $region12
    $region11: #{ligrec_egnn_forward.2} parent=5 // pred_region
      %s589 = ssub.s32 %s30, 1
      // Predicated region
      $region13: #{ligrec_egnn_forward.2} parent=11 // pred_check
        %p590 = pneg %p70
      $region14: #{ligrec_egnn_forward.2} parent=11 // pred_check_branch
        %592 = sbr.rel (%p590) target = $region16
      $region15: #{ligrec_egnn_forward.2} parent=11 // pred_region
        _
      $region16: #{ligrec_egnn_forward.2} parent=11 // pred_fallthru
        _
      // Predicated region
      $region17: #{ligrec_egnn_forward.2} parent=11 // pred_check
        %p593 = pneg %p182
      $region18: #{ligrec_egnn_forward.2} parent=11 // pred_check_branch
        %595 = sbr.rel (%p593) target = $region20
      $region19: #{ligrec_egnn_forward.2} parent=11 // pred_region
        %s596 = smul.u32 2, %s40
        %p597 = scmp.lt.s32.totalorder %s596, 1
        %s598 = scalar_select %p597, %s596, 1
        %s599 = smul.addr %s598, 8
        %s600 = scalar_lea.vmem %s4, %s599
        %s601 = smul.u32 2, %s40
      $region20: #{ligrec_egnn_forward.2} parent=11 // pred_fallthru
        _
      // Predicated region
      $region21: #{ligrec_egnn_forward.2} parent=11 // pred_check
        %p602 = pneg %p208
      $region22: #{ligrec_egnn_forward.2} parent=11 // pred_check_branch
        %604 = sbr.rel (%p602) target = $region24
      $region23: #{ligrec_egnn_forward.2} parent=11 // pred_region
        %p605 = scmp.lt.s32.totalorder %s40, 0
        %s606 = scalar_select %p605, %s40, 0
        %s607 = smul.addr %s606, 4
        %s608 = scalar_lea.vmem %s5, %s607
      $region24: #{ligrec_egnn_forward.2} parent=11 // pred_fallthru
        _
      // Predicated region
      $region25: #{ligrec_egnn_forward.2} parent=11 // pred_check
        %p609 = pneg %p229
      $region26: #{ligrec_egnn_forward.2} parent=11 // pred_check_branch
        %611 = sbr.rel (%p609) target = $region28
      $region27: #{ligrec_egnn_forward.2} parent=11 // pred_region
        _
      $region28: #{ligrec_egnn_forward.2} parent=11 // pred_fallthru
        _
      // Predicated region
      $region29: #{ligrec_egnn_forward.2} parent=11 // pred_check
        %p612 = pneg %p250
      $region30: #{ligrec_egnn_forward.2} parent=11 // pred_check_branch
        %614 = sbr.rel (%p612) target = $region32
      $region31: #{ligrec_egnn_forward.2} parent=11 // pred_region
        _
      $region32: #{ligrec_egnn_forward.2} parent=11 // pred_fallthru
        _
      // Predicated region
      $region33: #{ligrec_egnn_forward.2} parent=11 // pred_check
        %p615 = pneg %p271
      $region34: #{ligrec_egnn_forward.2} parent=11 // pred_check_branch
        %617 = sbr.rel (%p615) target = $region36
      $region35: #{ligrec_egnn_forward.2} parent=11 // pred_region
        _
      $region36: #{ligrec_egnn_forward.2} parent=11 // pred_fallthru
        _
      // Predicated region
      $region37: #{ligrec_egnn_forward.2} parent=11 // pred_check
        %p618 = pneg %p292
      $region38: #{ligrec_egnn_forward.2} parent=11 // pred_check_branch
        %620 = sbr.rel (%p618) target = $region40
      $region39: #{ligrec_egnn_forward.2} parent=11 // pred_region
        _
      $region40: #{ligrec_egnn_forward.2} parent=11 // pred_fallthru
        _
      // Predicated region
      $region41: #{ligrec_egnn_forward.2} parent=11 // pred_check
        %p621 = pneg %p313
      $region42: #{ligrec_egnn_forward.2} parent=11 // pred_check_branch
        %623 = sbr.rel (%p621) target = $region44
      $region43: #{ligrec_egnn_forward.2} parent=11 // pred_region
        _
      $region44: #{ligrec_egnn_forward.2} parent=11 // pred_fallthru
        _
      // Predicated region
      $region45: #{ligrec_egnn_forward.2} parent=11 // pred_check
        %p624 = pneg %p334
      $region46: #{ligrec_egnn_forward.2} parent=11 // pred_check_branch
        %626 = sbr.rel (%p624) target = $region48
      $region47: #{ligrec_egnn_forward.2} parent=11 // pred_region
        _
      $region48: #{ligrec_egnn_forward.2} parent=11 // pred_fallthru
        _
      // Predicated region
      $region49: #{ligrec_egnn_forward.2} parent=11 // pred_check
        %p627 = pneg %p355
      $region50: #{ligrec_egnn_forward.2} parent=11 // pred_check_branch
        %629 = sbr.rel (%p627) target = $region52
      $region51: #{ligrec_egnn_forward.2} parent=11 // pred_region
        _
      $region52: #{ligrec_egnn_forward.2} parent=11 // pred_fallthru
        _
      // Predicated region
      $region53: #{ligrec_egnn_forward.2} parent=11 // pred_check
        %p630 = pneg %p376
      $region54: #{ligrec_egnn_forward.2} parent=11 // pred_check_branch
        %632 = sbr.rel (%p630) target = $region56
      $region55: #{ligrec_egnn_forward.2} parent=11 // pred_region
        _
      $region56: #{ligrec_egnn_forward.2} parent=11 // pred_fallthru
        _
      // Predicated region
      $region57: #{ligrec_egnn_forward.2} parent=11 // pred_check
        %p633 = pneg %p397
      $region58: #{ligrec_egnn_forward.2} parent=11 // pred_check_branch
        %635 = sbr.rel (%p633) target = $region60
      $region59: #{ligrec_egnn_forward.2} parent=11 // pred_region
        _
      $region60: #{ligrec_egnn_forward.2} parent=11 // pred_fallthru
        _
      // Predicated region
      $region61: #{ligrec_egnn_forward.2} parent=11 // pred_check
        %p636 = pneg %p418
      $region62: #{ligrec_egnn_forward.2} parent=11 // pred_check_branch
        %638 = sbr.rel (%p636) target = $region64
      $region63: #{ligrec_egnn_forward.2} parent=11 // pred_region
        _
      $region64: #{ligrec_egnn_forward.2} parent=11 // pred_fallthru
        _
      // Predicated region
      $region65: #{ligrec_egnn_forward.2} parent=11 // pred_check
        %p639 = pneg %p439
      $region66: #{ligrec_egnn_forward.2} parent=11 // pred_check_branch
        %641 = sbr.rel (%p639) target = $region68
      $region67: #{ligrec_egnn_forward.2} parent=11 // pred_region
        _
      $region68: #{ligrec_egnn_forward.2} parent=11 // pred_fallthru
        _
      // Predicated region
      $region69: #{ligrec_egnn_forward.2} parent=11 // pred_check
        %p642 = pneg %p460
      $region70: #{ligrec_egnn_forward.2} parent=11 // pred_check_branch
        %644 = sbr.rel (%p642) target = $region72
      $region71: #{ligrec_egnn_forward.2} parent=11 // pred_region
        _
      $region72: #{ligrec_egnn_forward.2} parent=11 // pred_fallthru
        _
      // Predicated region
      $region73: #{ligrec_egnn_forward.2} parent=11 // pred_check
        %p645 = pneg %p481
      $region74: #{ligrec_egnn_forward.2} parent=11 // pred_check_branch
        %647 = sbr.rel (%p645) target = $region76
      $region75: #{ligrec_egnn_forward.2} parent=11 // pred_region
        _
      $region76: #{ligrec_egnn_forward.2} parent=11 // pred_fallthru
        _
      // Predicated region
      $region77: #{ligrec_egnn_forward.2} parent=11 // pred_check
        %p648 = pneg %p502
      $region78: #{ligrec_egnn_forward.2} parent=11 // pred_check_branch
        %650 = sbr.rel (%p648) target = $region80
      $region79: #{ligrec_egnn_forward.2} parent=11 // pred_region
        _
      $region80: #{ligrec_egnn_forward.2} parent=11 // pred_fallthru
        _
      // Predicated region
      $region81: #{ligrec_egnn_forward.2} parent=11 // pred_check
        %p651 = pneg %p523
      $region82: #{ligrec_egnn_forward.2} parent=11 // pred_check_branch
        %653 = sbr.rel (%p651) target = $region84
      $region83: #{ligrec_egnn_forward.2} parent=11 // pred_region
        _
      $region84: #{ligrec_egnn_forward.2} parent=11 // pred_fallthru
        _
    $region12: #{ligrec_egnn_forward.2} parent=5 // pred_fallthru
      _
    %p654 = scmp.lt.s32.totalorder %s30, 2
    // Predicated region
    $region85: #{ligrec_egnn_forward.2} parent=5 // pred_check
      %p655 = pneg %p654
    $region86: #{ligrec_egnn_forward.2} parent=5 // pred_check_branch
      %657 = sbr.rel (%p655) target = $region88
    $region87: #{ligrec_egnn_forward.2} parent=5 // pred_region
      // Predicated region
      $region89: #{ligrec_egnn_forward.2} parent=87 // pred_check
        %p658 = pneg %p92
      $region90: #{ligrec_egnn_forward.2} parent=87 // pred_check_branch
        %660 = sbr.rel (%p658) target = $region92
      $region91: #{ligrec_egnn_forward.2} parent=87 // pred_region
        %s661 = smul.u32 2, %s39
        %p662 = scmp.lt.s32.totalorder %s38, 1
        %s663 = scalar_select %p662, %s38, 1
        %p664 = scmp.lt.s32.totalorder %s661, 1
        %s665 = scalar_select %p664, %s661, 1
        %s666 = smul.addr %s663, 2
        %s667 = sadd.s32 %s665, %s666
        %s668 = smul.addr %s667, 8
        %s669 = scalar_lea.vmem %s1, %s668
        %s670 = smul.u32 2, %s39
      $region92: #{ligrec_egnn_forward.2} parent=87 // pred_fallthru
        _
      // Predicated region
      $region93: #{ligrec_egnn_forward.2} parent=87 // pred_check
        %p671 = pneg %p120
      $region94: #{ligrec_egnn_forward.2} parent=87 // pred_check_branch
        %673 = sbr.rel (%p671) target = $region96
      $region95: #{ligrec_egnn_forward.2} parent=87 // pred_region
        %s674 = smul.u32 2, %s39
        %p675 = scmp.lt.s32.totalorder %s38, 1
        %s676 = scalar_select %p675, %s38, 1
        %p677 = scmp.lt.s32.totalorder %s674, 1
        %s678 = scalar_select %p677, %s674, 1
        %s679 = smul.addr %s676, 2
        %s680 = sadd.s32 %s678, %s679
        %s681 = smul.addr %s680, 8
        %s682 = scalar_lea.vmem %s2, %s681
        %s683 = smul.u32 2, %s39
      $region96: #{ligrec_egnn_forward.2} parent=87 // pred_fallthru
        _
      // Predicated region
      $region97: #{ligrec_egnn_forward.2} parent=87 // pred_check
        %p684 = pneg %p150
      $region98: #{ligrec_egnn_forward.2} parent=87 // pred_check_branch
        %686 = sbr.rel (%p684) target = $region100
      $region99: #{ligrec_egnn_forward.2} parent=87 // pred_region
        %s687 = smul.u32 2, %s39
        %p688 = scmp.lt.s32.totalorder %s38, 1
        %s689 = scalar_select %p688, %s38, 1
        %p690 = scmp.lt.s32.totalorder %s687, 1
        %s691 = scalar_select %p690, %s687, 1
        %p692 = scmp.lt.s32.totalorder %s37, 0
        %s693 = scalar_select %p692, %s37, 0
        %s694 = sadd.s32 %s693, %s691
        %s695 = smul.addr %s689, 2
        %s696 = sadd.s32 %s694, %s695
        %s697 = smul.addr %s696, 4
        %s698 = scalar_lea.vmem %s3, %s697
        %s699 = smul.u32 2, %s39
      $region100: #{ligrec_egnn_forward.2} parent=87 // pred_fallthru
        _
    $region88: #{ligrec_egnn_forward.2} parent=5 // pred_fallthru
      _
    %p700 = scmp.le.s32.totalorder 1, %s30
    %p701 = scmp.lt.s32.totalorder %s30, 3
    %p702 = pnand %p700, %p701
    %p703 = pneg %p702
    // Predicated region
    $region101: #{ligrec_egnn_forward.2} parent=5 // pred_check
      _
    $region102: #{ligrec_egnn_forward.2} parent=5 // pred_check_branch
      %705 = sbr.rel (%p702) target = $region104
    $region103: #{ligrec_egnn_forward.2} parent=5 // pred_region
      %s706 = ssub.s32 %s30, 1
      %p707 = pneg %p70
      %p708 = pneg %p67
      %s709 = smul.u32 2, %s42
      %p710 = scmp.lt.s32.totalorder %s41, 1
      %s711 = scalar_select %p710, %s41, 1
      %p712 = scmp.lt.s32.totalorder %s709, 1
      %s713 = scalar_select %p712, %s709, 1
      %s714 = smul.addr %s711, 2
      %s715 = sadd.s32 %s713, %s714
      %s716 = smul.addr %s715, 8
      %s717 = scalar_lea.vmem %s1, %s716
      %p718 = pneg %p98
      %p719 = pneg %p95
      %s720 = smul.u32 2, %s42
      %p721 = scmp.lt.s32.totalorder %s41, 1
      %s722 = scalar_select %p721, %s41, 1
      %p723 = scmp.lt.s32.totalorder %s720, 1
      %s724 = scalar_select %p723, %s720, 1
      %s725 = smul.addr %s722, 2
      %s726 = sadd.s32 %s724, %s725
      %s727 = smul.addr %s726, 8
      %s728 = scalar_lea.vmem %s2, %s727
      %p729 = pneg %p126
      %p730 = pneg %p123
      %s731 = smul.u32 2, %s42
      %p732 = scmp.lt.s32.totalorder %s41, 1
      %s733 = scalar_select %p732, %s41, 1
      %p734 = scmp.lt.s32.totalorder %s731, 1
      %s735 = scalar_select %p734, %s731, 1
      %p736 = scmp.lt.s32.totalorder %s40, 0
      %s737 = scalar_select %p736, %s40, 0
      %s738 = sadd.s32 %s737, %s735
      %s739 = smul.addr %s733, 2
      %s740 = sadd.s32 %s738, %s739
      %s741 = smul.addr %s740, 4
      %s742 = scalar_lea.vmem %s3, %s741
      %p743 = pneg %p156
      %p744 = pneg %p153
      %s745 = smul.u32 2, %s40
      %p746 = scmp.lt.s32.totalorder %s745, 1
      %s747 = scalar_select %p746, %s745, 1
      %s748 = smul.addr %s747, 8
      %s749 = scalar_lea.vmem %s4, %s748
      %p750 = pneg %p182
      %p751 = pneg %p179
      %p752 = scmp.lt.s32.totalorder %s40, 0
      %s753 = scalar_select %p752, %s40, 0
      %s754 = smul.addr %s753, 4
      %s755 = scalar_lea.vmem %s5, %s754
      %p756 = pneg %p208
      %p757 = pneg %p205
      %p758 = pneg %p229
      %p759 = pneg %p226
      %p760 = pneg %p250
      %p761 = pneg %p247
      %p762 = pneg %p271
      %p763 = pneg %p268
      %p764 = pneg %p292
      %p765 = pneg %p289
      %p766 = pneg %p313
      %p767 = pneg %p310
      %p768 = pneg %p334
      %p769 = pneg %p331
      %p770 = pneg %p355
      %p771 = pneg %p352
      %p772 = pneg %p376
      %p773 = pneg %p373
      %p774 = pneg %p397
      %p775 = pneg %p394
      %p776 = pneg %p418
      %p777 = pneg %p415
      %p778 = pneg %p439
      %p779 = pneg %p436
      %p780 = pneg %p460
      %p781 = pneg %p457
      %p782 = pneg %p481
      %p783 = pneg %p478
      %p784 = pneg %p502
      %p785 = pneg %p499
      %p786 = pneg %p523
      %p787 = pneg %p520
      %p788 = pneg %p549
      %p789 = pneg %p546
      %s790 = smul.u32 2, %s40
      %p791 = scmp.lt.s32.totalorder %s790, 1
      %s792 = scalar_select %p791, %s790, 1
      %s793 = smul.addr %s792, 8
      %s794 = scalar_lea.vmem %s21, %s793
      %p795 = pneg %p575
      %p796 = pneg %p572
      %p797 = scmp.lt.s32.totalorder %s40, 0
      %s798 = scalar_select %p797, %s40, 0
      %s799 = smul.addr %s798, 4
      %s800 = scalar_lea.vmem %s22, %s799
      %s801 = smul.u32 2, %s42
      %p802 = scmp.lt.s32.totalorder %s41, 1
      %s803 = scalar_select %p802, %s41, 1
      %p804 = scmp.lt.s32.totalorder %s801, 1
      %s805 = scalar_select %p804, %s801, 1
      %s806 = smul.addr %s803, 2
      %s807 = sadd.s32 %s805, %s806
      %s808 = smul.addr %s807, 8
      %s809 = scalar_lea.vmem %s1, %s808
      %s810 = smul.u32 2, %s42
      %s811 = smul.u32 2, %s42
      %p812 = scmp.lt.s32.totalorder %s41, 1
      %s813 = scalar_select %p812, %s41, 1
      %p814 = scmp.lt.s32.totalorder %s811, 1
      %s815 = scalar_select %p814, %s811, 1
      %s816 = smul.addr %s813, 2
      %s817 = sadd.s32 %s815, %s816
      %s818 = smul.addr %s817, 8
      %s819 = scalar_lea.vmem %s2, %s818
      %s820 = smul.u32 2, %s42
      %s821 = smul.u32 2, %s42
      %p822 = scmp.lt.s32.totalorder %s41, 1
      %s823 = scalar_select %p822, %s41, 1
      %p824 = scmp.lt.s32.totalorder %s821, 1
      %s825 = scalar_select %p824, %s821, 1
      %p826 = scmp.lt.s32.totalorder %s40, 0
      %s827 = scalar_select %p826, %s40, 0
      %s828 = sadd.s32 %s827, %s825
      %s829 = smul.addr %s823, 2
      %s830 = sadd.s32 %s828, %s829
      %s831 = smul.addr %s830, 4
      %s832 = scalar_lea.vmem %s3, %s831
      %s833 = smul.u32 2, %s42
      %s834 = smul.u32 2, %s40
      %p835 = scmp.lt.s32.totalorder %s834, 1
      %s836 = scalar_select %p835, %s834, 1
      %s837 = smul.addr %s836, 8
      %s838 = scalar_lea.vmem %s4, %s837
      %s839 = smul.u32 2, %s40
      %p840 = scmp.lt.s32.totalorder %s40, 0
      %s841 = scalar_select %p840, %s40, 0
      %s842 = smul.addr %s841, 4
      %s843 = scalar_lea.vmem %s5, %s842
      %s844 = smul.u32 2, %s40
      %p845 = scmp.lt.s32.totalorder %s844, 1
      %s846 = scalar_select %p845, %s844, 1
      %s847 = smul.addr %s846, 8
      %s848 = scalar_lea.vmem %s21, %s847
      %s849 = smul.u32 2, %s40
      %p850 = scmp.lt.s32.totalorder %s40, 0
      %s851 = scalar_select %p850, %s40, 0
      %s852 = smul.addr %s851, 4
      %s853 = scalar_lea.vmem %s22, %s852
      %p855 = scmp.eq.s32.totalorder %s41, 0
      %p856 = scmp.eq.s32.totalorder %s42, 0
      %p857 = pnand %p855, %p856
      %p858 = pneg %p857
      %p859 = scmp.eq.s32.totalorder %s41, 1
      %p860 = pnand %p859, %p856
      %p861 = pneg %p860
      // Predicated region
      $region105: #{ligrec_egnn_forward.2} parent=103 // pred_check
        _
      $region106: #{ligrec_egnn_forward.2} parent=103 // pred_check_branch
        %863 = sbr.rel (%p857) target = $region108
      $region107: #{ligrec_egnn_forward.2} parent=103 // pred_region
        %vm864 = vcmask 261120
        %865 = vst.msk [vmem:[#allocation2] sm:$0xff] %vm864, 0.0
        %866 = vst.msk [vmem:[#allocation2 + $0x8] sm:$0xff] %vm864, 0.0
        %vm867 = vcmask 124928
        %868 = vst.msk [vmem:[#allocation3] sm:$0x7] %vm867, 0.0
      $region108: #{ligrec_egnn_forward.2} parent=103 // pred_fallthru
        _
      %v869 = vld [vmem:[%s838] sm:$0xff]
      %v870 = vld [vmem:[%s838 + $0x8] sm:$0xff]
      %v871 = vld [vmem:[%s843] sm:$0x7]
      %s872 = smul.u32 %s41, 9
      %s873 = smul.addr %s872, 4
      %s874 = scalar_lea.vmem %s6, %s873
      %v875 = vld [vmem:[%s874] sm:$0xf]
      %v876 = vld [vmem:[%s874 + $0x4] sm:$0xf]
      %v877 = vld [vmem:[%s874 + $0x8] sm:$0xf]
      %v878 = vld [vmem:[%s874 + $0xc] sm:$0xf]
      %v879 = vld [vmem:[%s874 + $0x10] sm:$0xf]
      %v880 = vld [vmem:[%s874 + $0x14] sm:$0xf]
      %v881 = vld [vmem:[%s874 + $0x18] sm:$0xf]
      %v882 = vld [vmem:[%s874 + $0x1c] sm:$0xf]
      %v883 = vld [vmem:[%s874 + $0x20] sm:$0x1]
      %s884 = smul.addr %s872, 4
      %s885 = scalar_lea.vmem %s12, %s884
      %v886 = vld [vmem:[%s885] sm:$0xf]
      %v887 = vld [vmem:[%s885 + $0x4] sm:$0xf]
      %v888 = vld [vmem:[%s885 + $0x8] sm:$0xf]
      %v889 = vld [vmem:[%s885 + $0xc] sm:$0xf]
      %v890 = vld [vmem:[%s885 + $0x10] sm:$0xf]
      %v891 = vld [vmem:[%s885 + $0x14] sm:$0xf]
      %v892 = vld [vmem:[%s885 + $0x18] sm:$0xf]
      %v893 = vld [vmem:[%s885 + $0x1c] sm:$0xf]
      %v894 = vld [vmem:[%s885 + $0x20] sm:$0x1]
      // Predicated region
      $region109: #{ligrec_egnn_forward.2} parent=103 // pred_check
        %p895 = pneg %p856
      $region110: #{ligrec_egnn_forward.2} parent=103 // pred_check_branch
        %897 = sbr.rel (%p895) target = $region112
      $region111: #{ligrec_egnn_forward.2} parent=103 // pred_region
        %v898 = vpack.c.bf16 %v870, %v869
        %s899 = scalar_lea.vmem %s7, %s41
        %v900 = vld [vmem:[%s899] sm:$0x1]
        %v902 = vlaneseq
        %v903 = vshrl.u32 %v902, 7
        %v904 = vsub.s32 0, %v903
        %v905 = vrot.slane %v900, %v904
        %v911 = vunpack.c.l.b16 %v879
        %v912 = vunpack.c.l.b16 %v880
        %v913 = vunpack.c.l.b16 %v881
        %v914 = vunpack.c.l.b16 %v882
        %v915 = vpack.c.b16 %v912, %v911
        %v916 = vpack.c.b16 %v914, %v913
        %vm919 = vcmask 261120
        %v921 = vsel %vm919, %v898, 0
        %923 = vmatprep.subr.bf16.mxu0 0
        %924 = vmatpush1.bf16.msra.mxu0 %v915
        %925 = vmatprep.subr.bf16.mxu0 0
        %926 = vmatpush1.bf16.msra.mxu0 %v916
        %927 = vmatprep.subr.bf16.mxu0 0
        %928 = vmatpush1.bf16.msra.mxu0 0
        %929 = vmatprep.subr.bf16.mxu0 0
        %930 = vmatpush1.bf16.msra.mxu0 0
        %931 = vmatprep.subr.bf16.mxu0 0
        %932 = vmatpush1.bf16.msra.mxu0 0
        %933 = vmatprep.subr.bf16.mxu0 0
        %934 = vmatpush1.bf16.msra.mxu0 0
        %935 = vmatprep.subr.bf16.mxu0 0
        %936 = vmatpush1.bf16.msra.mxu0 0
        %937 = vmatprep.subr.bf16.mxu0 0
        %938 = vmatpush1.bf16.msra.mxu0 0
        %939 = vmatprep.subr.bf16.mxu0 0
        %940 = vmatpush1.bf16.msra.mxu0 0
        %941 = vmatprep.subr.bf16.mxu0 0
        %942 = vmatpush1.bf16.msra.mxu0 0
        %943 = vmatprep.subr.bf16.mxu0 0
        %944 = vmatpush1.bf16.msra.mxu0 0
        %945 = vmatprep.subr.bf16.mxu0 0
        %946 = vmatpush1.bf16.msra.mxu0 0
        %947 = vmatprep.subr.bf16.mxu0 0
        %948 = vmatpush1.bf16.msra.mxu0 0
        %949 = vmatprep.subr.bf16.mxu0 0
        %950 = vmatpush1.bf16.msra.mxu0 0
        %951 = vmatprep.subr.bf16.mxu0 0
        %952 = vmatpush1.bf16.msra.mxu0 0
        %953 = vmatprep.subr.bf16.mxu0 0
        %954 = vmatpush1.bf16.msra.mxu0 0
        %955 = vmatprep.mubr.bf16.mxu0 0
        %956 = vmatmul.mubr.bf16.gmra.mrb[0].mxu0 %v921
        %v957 = vpop.f32.mrb[0].mxu0
        %v958 = vadd.f32 %v905, %v957
        %v959 = vpop.f32.mrb[0].mxu0
        %v960 = vpop.f32.mrb[0].mxu0
        %v961 = vadd.f32 %v905, %v960
        %v962 = vpop.f32.mrb[0].mxu0
        %963 = vdwg.mxu0
        %964 = vst.msk [vmem:[#allocation4] sm:$0xff] %vm919, %v958
        %965 = vst.msk [vmem:[#allocation4 + $0x8] sm:$0xff] %vm919, %v961
        %s966 = scalar_lea.vmem %s13, %s41
        %v967 = vld [vmem:[%s966] sm:$0x1]
        %v969 = vlaneseq
        %v970 = vshrl.u32 %v969, 7
        %v971 = vsub.s32 0, %v970
        %v972 = vrot.slane %v967, %v971
        %v978 = vunpack.c.l.b16 %v890
        %v979 = vunpack.c.l.b16 %v891
        %v980 = vunpack.c.l.b16 %v892
        %v981 = vunpack.c.l.b16 %v893
        %v982 = vpack.c.b16 %v979, %v978
        %v983 = vpack.c.b16 %v981, %v980
        %986 = vmatprep.subr.bf16.mxu0 0
        %987 = vmatpush1.bf16.msra.mxu0 %v982
        %988 = vmatprep.subr.bf16.mxu0 0
        %989 = vmatpush1.bf16.msra.mxu0 %v983
        %990 = vmatprep.subr.bf16.mxu0 0
        %991 = vmatpush1.bf16.msra.mxu0 0
        %992 = vmatprep.subr.bf16.mxu0 0
        %993 = vmatpush1.bf16.msra.mxu0 0
        %994 = vmatprep.subr.bf16.mxu0 0
        %995 = vmatpush1.bf16.msra.mxu0 0
        %996 = vmatprep.subr.bf16.mxu0 0
        %997 = vmatpush1.bf16.msra.mxu0 0
        %998 = vmatprep.subr.bf16.mxu0 0
        %999 = vmatpush1.bf16.msra.mxu0 0
        %1000 = vmatprep.subr.bf16.mxu0 0
        %1001 = vmatpush1.bf16.msra.mxu0 0
        %1002 = vmatprep.subr.bf16.mxu0 0
        %1003 = vmatpush1.bf16.msra.mxu0 0
        %1004 = vmatprep.subr.bf16.mxu0 0
        %1005 = vmatpush1.bf16.msra.mxu0 0
        %1006 = vmatprep.subr.bf16.mxu0 0
        %1007 = vmatpush1.bf16.msra.mxu0 0
        %1008 = vmatprep.subr.bf16.mxu0 0
        %1009 = vmatpush1.bf16.msra.mxu0 0
        %1010 = vmatprep.subr.bf16.mxu0 0
        %1011 = vmatpush1.bf16.msra.mxu0 0
        %1012 = vmatprep.subr.bf16.mxu0 0
        %1013 = vmatpush1.bf16.msra.mxu0 0
        %1014 = vmatprep.subr.bf16.mxu0 0
        %1015 = vmatpush1.bf16.msra.mxu0 0
        %1016 = vmatprep.subr.bf16.mxu0 0
        %1017 = vmatpush1.bf16.msra.mxu0 0
        %1018 = vmatprep.mubr.bf16.mxu0 0
        %1019 = vmatmul.mubr.bf16.gmra.mrb[0].mxu0 %v921
        %v1020 = vpop.f32.mrb[0].mxu0
        %v1021 = vadd.f32 %v972, %v1020
        %v1022 = vpop.f32.mrb[0].mxu0
        %v1023 = vpop.f32.mrb[0].mxu0
        %v1024 = vadd.f32 %v972, %v1023
        %v1025 = vpop.f32.mrb[0].mxu0
        %1026 = vdwg.mxu0
        %1027 = vst.msk [vmem:[#allocation5] sm:$0xff] %vm919, %v1021
        %1028 = vst.msk [vmem:[#allocation5 + $0x8] sm:$0xff] %vm919, %v1024
      $region112: #{ligrec_egnn_forward.2} parent=103 // pred_fallthru
        _
      %v1029 = vld [vmem:[%s809] sm:$0xff]
      %v1030 = vld [vmem:[%s809 + $0x8] sm:$0xff]
      %v1031 = vld [vmem:[%s819] sm:$0xff]
      %v1032 = vld [vmem:[%s819 + $0x8] sm:$0xff]
      %v1033 = vld [vmem:[%s832] sm:$0xf]
      %v1034 = vld [vmem:[%s832 + $0x4] sm:$0xf]
      %v1035 = vunpack.c.l.bf16 %v1033
      %v1036 = vunpack.c.l.bf16 %v1034
      %1038 = vset.pattern.permute.xlu0 0
      %1039 = vperm.xlu0 %1038, %v1031
      %v1040 = vpop.permute.xlu0 %1039
      %1043 = vset.pattern.permute.xlu0 0
      %1044 = vperm.xlu0 %1043, %v1032
      %v1045 = vpop.permute.xlu0 %1044
      %v1047 = vlaneseq
      %v1048 = vshrl.u32 %v1047, 7
      %v1049 = vsub.s32 0, %v1048
      %v1050 = vrot.slane %v871, %v1049
      %v1051 = vsub.f32 %v1040, %v1050
      %v1052 = vsub.f32 %v1045, %v1050
      %1053 = vset.pattern.permute.xlu0 1
      %1054 = vperm.xlu0 %1053, %v1031
      %v1055 = vpop.permute.xlu0 %1054
      %1057 = vset.pattern.permute.xlu0 1
      %1058 = vperm.xlu0 %1057, %v1032
      %v1059 = vpop.permute.xlu0 %1058
      %v1061 = vlaneseq
      %v1062 = vshrl.u32 %v1061, 7
      %v1063 = vsub.s32 1, %v1062
      %v1064 = vrot.slane %v871, %v1063
      %v1065 = vsub.f32 %v1055, %v1064
      %v1066 = vsub.f32 %v1059, %v1064
      %1067 = vset.pattern.permute.xlu0 2
      %1068 = vperm.xlu0 %1067, %v1031
      %v1069 = vpop.permute.xlu0 %1068
      %1071 = vset.pattern.permute.xlu0 2
      %1072 = vperm.xlu0 %1071, %v1032
      %v1073 = vpop.permute.xlu0 %1072
      %v1075 = vlaneseq
      %v1076 = vshrl.u32 %v1075, 7
      %v1077 = vsub.s32 2, %v1076
      %v1078 = vrot.slane %v871, %v1077
      %v1079 = vsub.f32 %v1069, %v1078
      %v1080 = vsub.f32 %v1073, %v1078
      %v1081 = vmul.f32 %v1051, %v1051
      %v1082 = vmul.f32 %v1052, %v1052
      %v1083 = vmul.f32 %v1065, %v1065
      %v1084 = vmul.f32 %v1066, %v1066
      %v1085 = vadd.f32 %v1081, %v1083
      %v1086 = vadd.f32 %v1082, %v1084
      %v1087 = vmul.f32 %v1079, %v1079
      %v1088 = vmul.f32 %v1080, %v1080
      %v1089 = vadd.f32 %v1085, %v1087
      %v1090 = vadd.f32 %v1086, %v1088
      %v1091 = vrsqrt.pop %v1089
      %v1092 = vmul.f32 %v1089, %v1091
      %vm1093 = vcmp.eq.f32.partialorder %v1089, inf
      %v1094 = vsel %vm1093, %v1089, %v1092
      %vm1095 = vcmp.eq.f32.partialorder %v1089, 0.0
      %v1096 = vand.u32 %v1089, 2147483648
      %v1097 = vsel %vm1095, %v1096, %v1094
      %v1098 = vrsqrt.pop %v1090
      %v1099 = vmul.f32 %v1090, %v1098
      %vm1100 = vcmp.eq.f32.partialorder %v1090, inf
      %v1101 = vsel %vm1100, %v1090, %v1099
      %vm1102 = vcmp.eq.f32.partialorder %v1090, 0.0
      %v1103 = vand.u32 %v1090, 2147483648
      %v1104 = vsel %vm1102, %v1103, %v1101
      %v1105 = vadd.f32 %v1097, 1.0
      %v1106 = vadd.f32 %v1104, 1.0
      %v1107 = vrcp.pop %v1105
      %v1108 = vmul.f32 1.0, %v1107
      %v1109 = vrcp.pop %v1106
      %v1110 = vmul.f32 1.0, %v1109
      %v1111 = vpack.c.bf16 %v1030, %v1029
      %v1116 = vunpack.c.l.b16 %v875
      %v1117 = vunpack.c.l.b16 %v876
      %v1118 = vunpack.c.l.b16 %v877
      %v1119 = vunpack.c.l.b16 %v878
      %v1120 = vpack.c.b16 %v1117, %v1116
      %v1121 = vpack.c.b16 %v1119, %v1118
      %vm1124 = vcmask 261120
      %v1126 = vsel %vm1124, %v1111, 0
      %1128 = vmatprep.subr.bf16.mxu0 0
      %1129 = vmatpush1.bf16.msra.mxu0 %v1120
      %1130 = vmatprep.subr.bf16.mxu0 0
      %1131 = vmatpush1.bf16.msra.mxu0 %v1121
      %1132 = vmatprep.subr.bf16.mxu0 0
      %1133 = vmatpush1.bf16.msra.mxu0 0
      %1134 = vmatprep.subr.bf16.mxu0 0
      %1135 = vmatpush1.bf16.msra.mxu0 0
      %1136 = vmatprep.subr.bf16.mxu0 0
      %1137 = vmatpush1.bf16.msra.mxu0 0
      %1138 = vmatprep.subr.bf16.mxu0 0
      %1139 = vmatpush1.bf16.msra.mxu0 0
      %1140 = vmatprep.subr.bf16.mxu0 0
      %1141 = vmatpush1.bf16.msra.mxu0 0
      %1142 = vmatprep.subr.bf16.mxu0 0
      %1143 = vmatpush1.bf16.msra.mxu0 0
      %1144 = vmatprep.subr.bf16.mxu0 0
      %1145 = vmatpush1.bf16.msra.mxu0 0
      %1146 = vmatprep.subr.bf16.mxu0 0
      %1147 = vmatpush1.bf16.msra.mxu0 0
      %1148 = vmatprep.subr.bf16.mxu0 0
      %1149 = vmatpush1.bf16.msra.mxu0 0
      %1150 = vmatprep.subr.bf16.mxu0 0
      %1151 = vmatpush1.bf16.msra.mxu0 0
      %1152 = vmatprep.subr.bf16.mxu0 0
      %1153 = vmatpush1.bf16.msra.mxu0 0
      %1154 = vmatprep.subr.bf16.mxu0 0
      %1155 = vmatpush1.bf16.msra.mxu0 0
      %1156 = vmatprep.subr.bf16.mxu0 0
      %1157 = vmatpush1.bf16.msra.mxu0 0
      %1158 = vmatprep.subr.bf16.mxu0 0
      %1159 = vmatpush1.bf16.msra.mxu0 0
      %1160 = vmatprep.mubr.bf16.mxu0 0
      %1161 = vmatmul.mubr.bf16.gmra.mrb[0].mxu0 %v1126
      %v1162 = vpop.f32.mrb[0].mxu0
      %v1163 = vadd.f32 0.0, %v1162
      %v1164 = vpop.f32.mrb[0].mxu0
      %v1165 = vpop.f32.mrb[0].mxu0
      %v1166 = vadd.f32 0.0, %v1165
      %v1167 = vpop.f32.mrb[0].mxu0
      %1168 = vdwg.mxu0
      %v1173 = vunpack.c.l.b16 %v886
      %v1174 = vunpack.c.l.b16 %v887
      %v1175 = vunpack.c.l.b16 %v888
      %v1176 = vunpack.c.l.b16 %v889
      %v1177 = vpack.c.b16 %v1174, %v1173
      %v1178 = vpack.c.b16 %v1176, %v1175
      %1181 = vmatprep.subr.bf16.mxu0 0
      %1182 = vmatpush1.bf16.msra.mxu0 %v1177
      %1183 = vmatprep.subr.bf16.mxu0 0
      %1184 = vmatpush1.bf16.msra.mxu0 %v1178
      %1185 = vmatprep.subr.bf16.mxu0 0
      %1186 = vmatpush1.bf16.msra.mxu0 0
      %1187 = vmatprep.subr.bf16.mxu0 0
      %1188 = vmatpush1.bf16.msra.mxu0 0
      %1189 = vmatprep.subr.bf16.mxu0 0
      %1190 = vmatpush1.bf16.msra.mxu0 0
      %1191 = vmatprep.subr.bf16.mxu0 0
      %1192 = vmatpush1.bf16.msra.mxu0 0
      %1193 = vmatprep.subr.bf16.mxu0 0
      %1194 = vmatpush1.bf16.msra.mxu0 0
      %1195 = vmatprep.subr.bf16.mxu0 0
      %1196 = vmatpush1.bf16.msra.mxu0 0
      %1197 = vmatprep.subr.bf16.mxu0 0
      %1198 = vmatpush1.bf16.msra.mxu0 0
      %1199 = vmatprep.subr.bf16.mxu0 0
      %1200 = vmatpush1.bf16.msra.mxu0 0
      %1201 = vmatprep.subr.bf16.mxu0 0
      %1202 = vmatpush1.bf16.msra.mxu0 0
      %1203 = vmatprep.subr.bf16.mxu0 0
      %1204 = vmatpush1.bf16.msra.mxu0 0
      %1205 = vmatprep.subr.bf16.mxu0 0
      %1206 = vmatpush1.bf16.msra.mxu0 0
      %1207 = vmatprep.subr.bf16.mxu0 0
      %1208 = vmatpush1.bf16.msra.mxu0 0
      %1209 = vmatprep.subr.bf16.mxu0 0
      %1210 = vmatpush1.bf16.msra.mxu0 0
      %1211 = vmatprep.subr.bf16.mxu0 0
      %1212 = vmatpush1.bf16.msra.mxu0 0
      %1213 = vmatprep.mubr.bf16.mxu0 0
      %1214 = vmatmul.mubr.bf16.gmra.mrb[0].mxu0 %v1126
      %v1215 = vpop.f32.mrb[0].mxu0
      %v1216 = vadd.f32 0.0, %v1215
      %v1217 = vpop.f32.mrb[0].mxu0
      %v1218 = vpop.f32.mrb[0].mxu0
      %v1219 = vadd.f32 0.0, %v1218
      %v1220 = vpop.f32.mrb[0].mxu0
      %1221 = vdwg.mxu0
      %v1222 = vunpack.c.l.bf16 %v883
      %v1223 = vunpack.c.l.bf16 %v894
      %v1224 = vlaneseq
      %v1225 = vshrl.u32 %v1224, 7
      %v1226 = vsub.s32 0, %v1225
      %v1227 = vrot.slane %v1097, %v1226
      %1229 = vbcast.lane.b32.xlu0 %v1227, 256
      %v1230 = vpop.permute.xlu0 %1229
      %s1232 = sor.u32 256, 8
      %1233 = vbcast.lane.b32.xlu0 %v1227, %s1232
      %v1234 = vpop.permute.xlu0 %1233
      %v1235 = vlaneseq
      %v1236 = vshrl.u32 %v1235, 7
      %v1237 = vsub.s32 1, %v1236
      %v1238 = vrot.slane %v1097, %v1237
      %1240 = vbcast.lane.b32.xlu0 %v1238, 256
      %v1241 = vpop.permute.xlu0 %1240
      %s1243 = sor.u32 256, 8
      %1244 = vbcast.lane.b32.xlu0 %v1238, %s1243
      %v1245 = vpop.permute.xlu0 %1244
      %v1246 = vlaneseq
      %v1247 = vshrl.u32 %v1246, 7
      %v1248 = vsub.s32 2, %v1247
      %v1249 = vrot.slane %v1097, %v1248
      %1251 = vbcast.lane.b32.xlu0 %v1249, 256
      %v1252 = vpop.permute.xlu0 %1251
      %s1254 = sor.u32 256, 8
      %1255 = vbcast.lane.b32.xlu0 %v1249, %s1254
      %v1256 = vpop.permute.xlu0 %1255
      %v1257 = vlaneseq
      %v1258 = vshrl.u32 %v1257, 7
      %v1259 = vsub.s32 3, %v1258
      %v1260 = vrot.slane %v1097, %v1259
      %1262 = vbcast.lane.b32.xlu0 %v1260, 256
      %v1263 = vpop.permute.xlu0 %1262
      %s1265 = sor.u32 256, 8
      %1266 = vbcast.lane.b32.xlu0 %v1260, %s1265
      %v1267 = vpop.permute.xlu0 %1266
      %v1268 = vlaneseq
      %v1269 = vshrl.u32 %v1268, 7
      %v1270 = vsub.s32 4, %v1269
      %v1271 = vrot.slane %v1097, %v1270
      %1273 = vbcast.lane.b32.xlu0 %v1271, 256
      %v1274 = vpop.permute.xlu0 %1273
      %s1276 = sor.u32 256, 8
      %1277 = vbcast.lane.b32.xlu0 %v1271, %s1276
      %v1278 = vpop.permute.xlu0 %1277
      %v1279 = vlaneseq
      %v1280 = vshrl.u32 %v1279, 7
      %v1281 = vsub.s32 5, %v1280
      %v1282 = vrot.slane %v1097, %v1281
      %1284 = vbcast.lane.b32.xlu0 %v1282, 256
      %v1285 = vpop.permute.xlu0 %1284
      %s1287 = sor.u32 256, 8
      %1288 = vbcast.lane.b32.xlu0 %v1282, %s1287
      %v1289 = vpop.permute.xlu0 %1288
      %v1290 = vlaneseq
      %v1291 = vshrl.u32 %v1290, 7
      %v1292 = vsub.s32 6, %v1291
      %v1293 = vrot.slane %v1097, %v1292
      %1295 = vbcast.lane.b32.xlu0 %v1293, 256
      %v1296 = vpop.permute.xlu0 %1295
      %s1298 = sor.u32 256, 8
      %1299 = vbcast.lane.b32.xlu0 %v1293, %s1298
      %v1300 = vpop.permute.xlu0 %1299
      %v1301 = vlaneseq
      %v1302 = vshrl.u32 %v1301, 7
      %v1303 = vsub.s32 7, %v1302
      %v1304 = vrot.slane %v1097, %v1303
      %1306 = vbcast.lane.b32.xlu0 %v1304, 256
      %v1307 = vpop.permute.xlu0 %1306
      %s1309 = sor.u32 256, 8
      %1310 = vbcast.lane.b32.xlu0 %v1304, %s1309
      %v1311 = vpop.permute.xlu0 %1310
      %v1312 = vlaneseq
      %v1313 = vshrl.u32 %v1312, 7
      %v1314 = vsub.s32 0, %v1313
      %v1315 = vrot.slane %v1104, %v1314
      %1317 = vbcast.lane.b32.xlu0 %v1315, 256
      %v1318 = vpop.permute.xlu0 %1317
      %s1320 = sor.u32 256, 8
      %1321 = vbcast.lane.b32.xlu0 %v1315, %s1320
      %v1322 = vpop.permute.xlu0 %1321
      %v1323 = vlaneseq
      %v1324 = vshrl.u32 %v1323, 7
      %v1325 = vsub.s32 1, %v1324
      %v1326 = vrot.slane %v1104, %v1325
      %1328 = vbcast.lane.b32.xlu0 %v1326, 256
      %v1329 = vpop.permute.xlu0 %1328
      %s1331 = sor.u32 256, 8
      %1332 = vbcast.lane.b32.xlu0 %v1326, %s1331
      %v1333 = vpop.permute.xlu0 %1332
      %v1334 = vlaneseq
      %v1335 = vshrl.u32 %v1334, 7
      %v1336 = vsub.s32 2, %v1335
      %v1337 = vrot.slane %v1104, %v1336
      %1339 = vbcast.lane.b32.xlu0 %v1337, 256
      %v1340 = vpop.permute.xlu0 %1339
      %s1342 = sor.u32 256, 8
      %1343 = vbcast.lane.b32.xlu0 %v1337, %s1342
      %v1344 = vpop.permute.xlu0 %1343
      %v1345 = vlaneseq
      %v1346 = vshrl.u32 %v1345, 7
      %v1347 = vsub.s32 3, %v1346
      %v1348 = vrot.slane %v1104, %v1347
      %1350 = vbcast.lane.b32.xlu0 %v1348, 256
      %v1351 = vpop.permute.xlu0 %1350
      %s1353 = sor.u32 256, 8
      %1354 = vbcast.lane.b32.xlu0 %v1348, %s1353
      %v1355 = vpop.permute.xlu0 %1354
      %v1356 = vlaneseq
      %v1357 = vshrl.u32 %v1356, 7
      %v1358 = vsub.s32 4, %v1357
      %v1359 = vrot.slane %v1104, %v1358
      %1361 = vbcast.lane.b32.xlu0 %v1359, 256
      %v1362 = vpop.permute.xlu0 %1361
      %s1364 = sor.u32 256, 8
      %1365 = vbcast.lane.b32.xlu0 %v1359, %s1364
      %v1366 = vpop.permute.xlu0 %1365
      %v1367 = vlaneseq
      %v1368 = vshrl.u32 %v1367, 7
      %v1369 = vsub.s32 5, %v1368
      %v1370 = vrot.slane %v1104, %v1369
      %1372 = vbcast.lane.b32.xlu0 %v1370, 256
      %v1373 = vpop.permute.xlu0 %1372
      %s1375 = sor.u32 256, 8
      %1376 = vbcast.lane.b32.xlu0 %v1370, %s1375
      %v1377 = vpop.permute.xlu0 %1376
      %v1378 = vlaneseq
      %v1379 = vshrl.u32 %v1378, 7
      %v1380 = vsub.s32 6, %v1379
      %v1381 = vrot.slane %v1104, %v1380
      %1383 = vbcast.lane.b32.xlu0 %v1381, 256
      %v1384 = vpop.permute.xlu0 %1383
      %s1386 = sor.u32 256, 8
      %1387 = vbcast.lane.b32.xlu0 %v1381, %s1386
      %v1388 = vpop.permute.xlu0 %1387
      %v1389 = vlaneseq
      %v1390 = vshrl.u32 %v1389, 7
      %v1391 = vsub.s32 7, %v1390
      %v1392 = vrot.slane %v1104, %v1391
      %1394 = vbcast.lane.b32.xlu0 %v1392, 256
      %v1395 = vpop.permute.xlu0 %1394
      %s1397 = sor.u32 256, 8
      %1398 = vbcast.lane.b32.xlu0 %v1392, %s1397
      %v1399 = vpop.permute.xlu0 %1398
      %v1402 = vcombine.high %v1163, %v1163
      %v1404 = vunpack.c.l.s4 1966171168
      %v1405 = vunpack.c.0.s8 %v1404
      %v1406 = vlaneseq
      %v1407 = vshrl.u32 %v1406, 7
      %v1408 = vsub.s32 %v1405, %v1407
      %v1409 = vrot.slane %v1163, %v1408
      %v1411 = vunpack.c.l.s4 1966171168
      %v1412 = vunpack.c.0.s8 %v1411
      %v1413 = vlaneseq
      %v1414 = vshrl.u32 %v1413, 7
      %v1415 = vsub.s32 %v1412, %v1414
      %v1416 = vrot.slane %v1402, %v1415
      %v1417 = vcombine.high %v1409, %v1409
      %v1418 = vcombine.high %v1416, %v1416
      %v1420 = vunpack.c.l.s4 1966171168
      %v1421 = vunpack.c.0.s8 %v1420
      %v1422 = vlaneseq
      %v1423 = vshrl.u32 %v1422, 7
      %v1424 = vsub.s32 %v1421, %v1423
      %v1425 = vrot.slane %v1409, %v1424
      %v1427 = vunpack.c.l.s4 1966171168
      %v1428 = vunpack.c.0.s8 %v1427
      %v1429 = vlaneseq
      %v1430 = vshrl.u32 %v1429, 7
      %v1431 = vsub.s32 %v1428, %v1430
      %v1432 = vrot.slane %v1416, %v1431
      %v1434 = vunpack.c.l.s4 1966171168
      %v1435 = vunpack.c.0.s8 %v1434
      %v1436 = vlaneseq
      %v1437 = vshrl.u32 %v1436, 7
      %v1438 = vsub.s32 %v1435, %v1437
      %v1439 = vrot.slane %v1417, %v1438
      %v1441 = vunpack.c.l.s4 1966171168
      %v1442 = vunpack.c.0.s8 %v1441
      %v1443 = vlaneseq
      %v1444 = vshrl.u32 %v1443, 7
      %v1445 = vsub.s32 %v1442, %v1444
      %v1446 = vrot.slane %v1418, %v1445
      %v1447 = vcombine.high %v1425, %v1425
      %v1448 = vcombine.high %v1432, %v1432
      %v1449 = vcombine.high %v1439, %v1439
      %v1450 = vcombine.high %v1446, %v1446
      %v1451 = vcombine.high %v1166, %v1166
      %v1453 = vunpack.c.l.s4 1966171168
      %v1454 = vunpack.c.0.s8 %v1453
      %v1455 = vlaneseq
      %v1456 = vshrl.u32 %v1455, 7
      %v1457 = vsub.s32 %v1454, %v1456
      %v1458 = vrot.slane %v1166, %v1457
      %v1460 = vunpack.c.l.s4 1966171168
      %v1461 = vunpack.c.0.s8 %v1460
      %v1462 = vlaneseq
      %v1463 = vshrl.u32 %v1462, 7
      %v1464 = vsub.s32 %v1461, %v1463
      %v1465 = vrot.slane %v1451, %v1464
      %v1466 = vcombine.high %v1458, %v1458
      %v1467 = vcombine.high %v1465, %v1465
      %v1469 = vunpack.c.l.s4 1966171168
      %v1470 = vunpack.c.0.s8 %v1469
      %v1471 = vlaneseq
      %v1472 = vshrl.u32 %v1471, 7
      %v1473 = vsub.s32 %v1470, %v1472
      %v1474 = vrot.slane %v1458, %v1473
      %v1476 = vunpack.c.l.s4 1966171168
      %v1477 = vunpack.c.0.s8 %v1476
      %v1478 = vlaneseq
      %v1479 = vshrl.u32 %v1478, 7
      %v1480 = vsub.s32 %v1477, %v1479
      %v1481 = vrot.slane %v1465, %v1480
      %v1483 = vunpack.c.l.s4 1966171168
      %v1484 = vunpack.c.0.s8 %v1483
      %v1485 = vlaneseq
      %v1486 = vshrl.u32 %v1485, 7
      %v1487 = vsub.s32 %v1484, %v1486
      %v1488 = vrot.slane %v1466, %v1487
      %v1490 = vunpack.c.l.s4 1966171168
      %v1491 = vunpack.c.0.s8 %v1490
      %v1492 = vlaneseq
      %v1493 = vshrl.u32 %v1492, 7
      %v1494 = vsub.s32 %v1491, %v1493
      %v1495 = vrot.slane %v1467, %v1494
      %v1496 = vcombine.high %v1474, %v1474
      %v1497 = vcombine.high %v1481, %v1481
      %v1498 = vcombine.high %v1488, %v1488
      %v1499 = vcombine.high %v1495, %v1495
      %v1500 = vld [vmem:[#allocation4] sm:$0xff]
      %v1501 = vld [vmem:[#allocation4 + $0x8] sm:$0xff]
      %v1502 = vlaneseq
      %v1503 = vshrl.u32 %v1502, 7
      %v1504 = vsub.s32 0, %v1503
      %v1505 = vrot.slane %v1425, %v1504
      %v1506 = vlaneseq
      %v1507 = vshrl.u32 %v1506, 7
      %v1508 = vsub.s32 0, %v1507
      %v1509 = vrot.slane %v1439, %v1508
      %v1510 = vlaneseq
      %v1511 = vshrl.u32 %v1510, 7
      %v1512 = vsub.s32 0, %v1511
      %v1513 = vrot.slane %v1447, %v1512
      %v1514 = vlaneseq
      %v1515 = vshrl.u32 %v1514, 7
      %v1516 = vsub.s32 0, %v1515
      %v1517 = vrot.slane %v1449, %v1516
      %v1518 = vlaneseq
      %v1519 = vshrl.u32 %v1518, 7
      %v1520 = vsub.s32 0, %v1519
      %v1521 = vrot.slane %v1432, %v1520
      %v1522 = vlaneseq
      %v1523 = vshrl.u32 %v1522, 7
      %v1524 = vsub.s32 0, %v1523
      %v1525 = vrot.slane %v1446, %v1524
      %v1526 = vlaneseq
      %v1527 = vshrl.u32 %v1526, 7
      %v1528 = vsub.s32 0, %v1527
      %v1529 = vrot.slane %v1448, %v1528
      %v1530 = vlaneseq
      %v1531 = vshrl.u32 %v1530, 7
      %v1532 = vsub.s32 0, %v1531
      %v1533 = vrot.slane %v1450, %v1532
      %v1534 = vlaneseq
      %v1535 = vshrl.u32 %v1534, 7
      %v1536 = vsub.s32 0, %v1535
      %v1537 = vrot.slane %v1474, %v1536
      %v1538 = vlaneseq
      %v1539 = vshrl.u32 %v1538, 7
      %v1540 = vsub.s32 0, %v1539
      %v1541 = vrot.slane %v1488, %v1540
      %v1542 = vlaneseq
      %v1543 = vshrl.u32 %v1542, 7
      %v1544 = vsub.s32 0, %v1543
      %v1545 = vrot.slane %v1496, %v1544
      %v1546 = vlaneseq
      %v1547 = vshrl.u32 %v1546, 7
      %v1548 = vsub.s32 0, %v1547
      %v1549 = vrot.slane %v1498, %v1548
      %v1550 = vlaneseq
      %v1551 = vshrl.u32 %v1550, 7
      %v1552 = vsub.s32 0, %v1551
      %v1553 = vrot.slane %v1481, %v1552
      %v1554 = vlaneseq
      %v1555 = vshrl.u32 %v1554, 7
      %v1556 = vsub.s32 0, %v1555
      %v1557 = vrot.slane %v1495, %v1556
      %v1558 = vlaneseq
      %v1559 = vshrl.u32 %v1558, 7
      %v1560 = vsub.s32 0, %v1559
      %v1561 = vrot.slane %v1497, %v1560
      %v1562 = vlaneseq
      %v1563 = vshrl.u32 %v1562, 7
      %v1564 = vsub.s32 0, %v1563
      %v1565 = vrot.slane %v1499, %v1564
      %v1582 = vadd.f32 %v1505, %v1500
      %v1583 = vadd.f32 %v1505, %v1501
      %v1584 = vadd.f32 %v1509, %v1500
      %v1585 = vadd.f32 %v1509, %v1501
      %v1586 = vadd.f32 %v1513, %v1500
      %v1587 = vadd.f32 %v1513, %v1501
      %v1588 = vadd.f32 %v1517, %v1500
      %v1589 = vadd.f32 %v1517, %v1501
      %v1590 = vadd.f32 %v1521, %v1500
      %v1591 = vadd.f32 %v1521, %v1501
      %v1592 = vadd.f32 %v1525, %v1500
      %v1593 = vadd.f32 %v1525, %v1501
      %v1594 = vadd.f32 %v1529, %v1500
      %v1595 = vadd.f32 %v1529, %v1501
      %v1596 = vadd.f32 %v1533, %v1500
      %v1597 = vadd.f32 %v1533, %v1501
      %v1598 = vadd.f32 %v1537, %v1500
      %v1599 = vadd.f32 %v1537, %v1501
      %v1600 = vadd.f32 %v1541, %v1500
      %v1601 = vadd.f32 %v1541, %v1501
      %v1602 = vadd.f32 %v1545, %v1500
      %v1603 = vadd.f32 %v1545, %v1501
      %v1604 = vadd.f32 %v1549, %v1500
      %v1605 = vadd.f32 %v1549, %v1501
      %v1606 = vadd.f32 %v1553, %v1500
      %v1607 = vadd.f32 %v1553, %v1501
      %v1608 = vadd.f32 %v1557, %v1500
      %v1609 = vadd.f32 %v1557, %v1501
      %v1610 = vadd.f32 %v1561, %v1500
      %v1611 = vadd.f32 %v1561, %v1501
      %v1612 = vadd.f32 %v1565, %v1500
      %v1613 = vadd.f32 %v1565, %v1501
      %v1614 = vlaneseq
      %v1615 = vshrl.u32 %v1614, 7
      %v1616 = vsub.s32 0, %v1615
      %v1617 = vrot.slane %v1222, %v1616
      %v1618 = vmul.f32 %v1230, %v1617
      %v1619 = vmul.f32 %v1234, %v1617
      %v1620 = vmul.f32 %v1241, %v1617
      %v1621 = vmul.f32 %v1245, %v1617
      %v1622 = vmul.f32 %v1252, %v1617
      %v1623 = vmul.f32 %v1256, %v1617
      %v1624 = vmul.f32 %v1263, %v1617
      %v1625 = vmul.f32 %v1267, %v1617
      %v1626 = vmul.f32 %v1274, %v1617
      %v1627 = vmul.f32 %v1278, %v1617
      %v1628 = vmul.f32 %v1285, %v1617
      %v1629 = vmul.f32 %v1289, %v1617
      %v1630 = vmul.f32 %v1296, %v1617
      %v1631 = vmul.f32 %v1300, %v1617
      %v1632 = vmul.f32 %v1307, %v1617
      %v1633 = vmul.f32 %v1311, %v1617
      %v1634 = vmul.f32 %v1318, %v1617
      %v1635 = vmul.f32 %v1322, %v1617
      %v1636 = vmul.f32 %v1329, %v1617
      %v1637 = vmul.f32 %v1333, %v1617
      %v1638 = vmul.f32 %v1340, %v1617
      %v1639 = vmul.f32 %v1344, %v1617
      %v1640 = vmul.f32 %v1351, %v1617
      %v1641 = vmul.f32 %v1355, %v1617
      %v1642 = vmul.f32 %v1362, %v1617
      %v1643 = vmul.f32 %v1366, %v1617
      %v1644 = vmul.f32 %v1373, %v1617
      %v1645 = vmul.f32 %v1377, %v1617
      %v1646 = vmul.f32 %v1384, %v1617
      %v1647 = vmul.f32 %v1388, %v1617
      %v1648 = vmul.f32 %v1395, %v1617
      %v1649 = vmul.f32 %v1399, %v1617
      %v1650 = vadd.f32 %v1582, %v1618
      %v1651 = vadd.f32 %v1583, %v1619
      %v1652 = vadd.f32 %v1584, %v1620
      %v1653 = vadd.f32 %v1585, %v1621
      %v1654 = vadd.f32 %v1586, %v1622
      %v1655 = vadd.f32 %v1587, %v1623
      %v1656 = vadd.f32 %v1588, %v1624
      %v1657 = vadd.f32 %v1589, %v1625
      %v1658 = vadd.f32 %v1590, %v1626
      %v1659 = vadd.f32 %v1591, %v1627
      %v1660 = vadd.f32 %v1592, %v1628
      %v1661 = vadd.f32 %v1593, %v1629
      %v1662 = vadd.f32 %v1594, %v1630
      %v1663 = vadd.f32 %v1595, %v1631
      %v1664 = vadd.f32 %v1596, %v1632
      %v1665 = vadd.f32 %v1597, %v1633
      %v1666 = vadd.f32 %v1598, %v1634
      %v1667 = vadd.f32 %v1599, %v1635
      %v1668 = vadd.f32 %v1600, %v1636
      %v1669 = vadd.f32 %v1601, %v1637
      %v1670 = vadd.f32 %v1602, %v1638
      %v1671 = vadd.f32 %v1603, %v1639
      %v1672 = vadd.f32 %v1604, %v1640
      %v1673 = vadd.f32 %v1605, %v1641
      %v1674 = vadd.f32 %v1606, %v1642
      %v1675 = vadd.f32 %v1607, %v1643
      %v1676 = vadd.f32 %v1608, %v1644
      %v1677 = vadd.f32 %v1609, %v1645
      %v1678 = vadd.f32 %v1610, %v1646
      %v1679 = vadd.f32 %v1611, %v1647
      %v1680 = vadd.f32 %v1612, %v1648
      %v1681 = vadd.f32 %v1613, %v1649
      %v1684 = vcombine.high %v1216, %v1216
      %v1686 = vunpack.c.l.s4 1966171168
      %v1687 = vunpack.c.0.s8 %v1686
      %v1688 = vlaneseq
      %v1689 = vshrl.u32 %v1688, 7
      %v1690 = vsub.s32 %v1687, %v1689
      %v1691 = vrot.slane %v1216, %v1690
      %v1693 = vunpack.c.l.s4 1966171168
      %v1694 = vunpack.c.0.s8 %v1693
      %v1695 = vlaneseq
      %v1696 = vshrl.u32 %v1695, 7
      %v1697 = vsub.s32 %v1694, %v1696
      %v1698 = vrot.slane %v1684, %v1697
      %v1699 = vcombine.high %v1691, %v1691
      %v1700 = vcombine.high %v1698, %v1698
      %v1702 = vunpack.c.l.s4 1966171168
      %v1703 = vunpack.c.0.s8 %v1702
      %v1704 = vlaneseq
      %v1705 = vshrl.u32 %v1704, 7
      %v1706 = vsub.s32 %v1703, %v1705
      %v1707 = vrot.slane %v1691, %v1706
      %v1709 = vunpack.c.l.s4 1966171168
      %v1710 = vunpack.c.0.s8 %v1709
      %v1711 = vlaneseq
      %v1712 = vshrl.u32 %v1711, 7
      %v1713 = vsub.s32 %v1710, %v1712
      %v1714 = vrot.slane %v1698, %v1713
      %v1716 = vunpack.c.l.s4 1966171168
      %v1717 = vunpack.c.0.s8 %v1716
      %v1718 = vlaneseq
      %v1719 = vshrl.u32 %v1718, 7
      %v1720 = vsub.s32 %v1717, %v1719
      %v1721 = vrot.slane %v1699, %v1720
      %v1723 = vunpack.c.l.s4 1966171168
      %v1724 = vunpack.c.0.s8 %v1723
      %v1725 = vlaneseq
      %v1726 = vshrl.u32 %v1725, 7
      %v1727 = vsub.s32 %v1724, %v1726
      %v1728 = vrot.slane %v1700, %v1727
      %v1729 = vcombine.high %v1707, %v1707
      %v1730 = vcombine.high %v1714, %v1714
      %v1731 = vcombine.high %v1721, %v1721
      %v1732 = vcombine.high %v1728, %v1728
      %v1733 = vcombine.high %v1219, %v1219
      %v1735 = vunpack.c.l.s4 1966171168
      %v1736 = vunpack.c.0.s8 %v1735
      %v1737 = vlaneseq
      %v1738 = vshrl.u32 %v1737, 7
      %v1739 = vsub.s32 %v1736, %v1738
      %v1740 = vrot.slane %v1219, %v1739
      %v1742 = vunpack.c.l.s4 1966171168
      %v1743 = vunpack.c.0.s8 %v1742
      %v1744 = vlaneseq
      %v1745 = vshrl.u32 %v1744, 7
      %v1746 = vsub.s32 %v1743, %v1745
      %v1747 = vrot.slane %v1733, %v1746
      %v1748 = vcombine.high %v1740, %v1740
      %v1749 = vcombine.high %v1747, %v1747
      %v1751 = vunpack.c.l.s4 1966171168
      %v1752 = vunpack.c.0.s8 %v1751
      %v1753 = vlaneseq
      %v1754 = vshrl.u32 %v1753, 7
      %v1755 = vsub.s32 %v1752, %v1754
      %v1756 = vrot.slane %v1740, %v1755
      %v1758 = vunpack.c.l.s4 1966171168
      %v1759 = vunpack.c.0.s8 %v1758
      %v1760 = vlaneseq
      %v1761 = vshrl.u32 %v1760, 7
      %v1762 = vsub.s32 %v1759, %v1761
      %v1763 = vrot.slane %v1747, %v1762
      %v1765 = vunpack.c.l.s4 1966171168
      %v1766 = vunpack.c.0.s8 %v1765
      %v1767 = vlaneseq
      %v1768 = vshrl.u32 %v1767, 7
      %v1769 = vsub.s32 %v1766, %v1768
      %v1770 = vrot.slane %v1748, %v1769
      %v1772 = vunpack.c.l.s4 1966171168
      %v1773 = vunpack.c.0.s8 %v1772
      %v1774 = vlaneseq
      %v1775 = vshrl.u32 %v1774, 7
      %v1776 = vsub.s32 %v1773, %v1775
      %v1777 = vrot.slane %v1749, %v1776
      %v1778 = vcombine.high %v1756, %v1756
      %v1779 = vcombine.high %v1763, %v1763
      %v1780 = vcombine.high %v1770, %v1770
      %v1781 = vcombine.high %v1777, %v1777
      %v1782 = vld [vmem:[#allocation5] sm:$0xff]
      %v1783 = vld [vmem:[#allocation5 + $0x8] sm:$0xff]
      %v1784 = vlaneseq
      %v1785 = vshrl.u32 %v1784, 7
      %v1786 = vsub.s32 0, %v1785
      %v1787 = vrot.slane %v1707, %v1786
      %v1788 = vlaneseq
      %v1789 = vshrl.u32 %v1788, 7
      %v1790 = vsub.s32 0, %v1789
      %v1791 = vrot.slane %v1721, %v1790
      %v1792 = vlaneseq
      %v1793 = vshrl.u32 %v1792, 7
      %v1794 = vsub.s32 0, %v1793
      %v1795 = vrot.slane %v1729, %v1794
      %v1796 = vlaneseq
      %v1797 = vshrl.u32 %v1796, 7
      %v1798 = vsub.s32 0, %v1797
      %v1799 = vrot.slane %v1731, %v1798
      %v1800 = vlaneseq
      %v1801 = vshrl.u32 %v1800, 7
      %v1802 = vsub.s32 0, %v1801
      %v1803 = vrot.slane %v1714, %v1802
      %v1804 = vlaneseq
      %v1805 = vshrl.u32 %v1804, 7
      %v1806 = vsub.s32 0, %v1805
      %v1807 = vrot.slane %v1728, %v1806
      %v1808 = vlaneseq
      %v1809 = vshrl.u32 %v1808, 7
      %v1810 = vsub.s32 0, %v1809
      %v1811 = vrot.slane %v1730, %v1810
      %v1812 = vlaneseq
      %v1813 = vshrl.u32 %v1812, 7
      %v1814 = vsub.s32 0, %v1813
      %v1815 = vrot.slane %v1732, %v1814
      %v1816 = vlaneseq
      %v1817 = vshrl.u32 %v1816, 7
      %v1818 = vsub.s32 0, %v1817
      %v1819 = vrot.slane %v1756, %v1818
      %v1820 = vlaneseq
      %v1821 = vshrl.u32 %v1820, 7
      %v1822 = vsub.s32 0, %v1821
      %v1823 = vrot.slane %v1770, %v1822
      %v1824 = vlaneseq
      %v1825 = vshrl.u32 %v1824, 7
      %v1826 = vsub.s32 0, %v1825
      %v1827 = vrot.slane %v1778, %v1826
      %v1828 = vlaneseq
      %v1829 = vshrl.u32 %v1828, 7
      %v1830 = vsub.s32 0, %v1829
      %v1831 = vrot.slane %v1780, %v1830
      %v1832 = vlaneseq
      %v1833 = vshrl.u32 %v1832, 7
      %v1834 = vsub.s32 0, %v1833
      %v1835 = vrot.slane %v1763, %v1834
      %v1836 = vlaneseq
      %v1837 = vshrl.u32 %v1836, 7
      %v1838 = vsub.s32 0, %v1837
      %v1839 = vrot.slane %v1777, %v1838
      %v1840 = vlaneseq
      %v1841 = vshrl.u32 %v1840, 7
      %v1842 = vsub.s32 0, %v1841
      %v1843 = vrot.slane %v1779, %v1842
      %v1844 = vlaneseq
      %v1845 = vshrl.u32 %v1844, 7
      %v1846 = vsub.s32 0, %v1845
      %v1847 = vrot.slane %v1781, %v1846
      %v1864 = vadd.f32 %v1787, %v1782
      %v1865 = vadd.f32 %v1787, %v1783
      %v1866 = vadd.f32 %v1791, %v1782
      %v1867 = vadd.f32 %v1791, %v1783
      %v1868 = vadd.f32 %v1795, %v1782
      %v1869 = vadd.f32 %v1795, %v1783
      %v1870 = vadd.f32 %v1799, %v1782
      %v1871 = vadd.f32 %v1799, %v1783
      %v1872 = vadd.f32 %v1803, %v1782
      %v1873 = vadd.f32 %v1803, %v1783
      %v1874 = vadd.f32 %v1807, %v1782
      %v1875 = vadd.f32 %v1807, %v1783
      %v1876 = vadd.f32 %v1811, %v1782
      %v1877 = vadd.f32 %v1811, %v1783
      %v1878 = vadd.f32 %v1815, %v1782
      %v1879 = vadd.f32 %v1815, %v1783
      %v1880 = vadd.f32 %v1819, %v1782
      %v1881 = vadd.f32 %v1819, %v1783
      %v1882 = vadd.f32 %v1823, %v1782
      %v1883 = vadd.f32 %v1823, %v1783
      %v1884 = vadd.f32 %v1827, %v1782
      %v1885 = vadd.f32 %v1827, %v1783
      %v1886 = vadd.f32 %v1831, %v1782
      %v1887 = vadd.f32 %v1831, %v1783
      %v1888 = vadd.f32 %v1835, %v1782
      %v1889 = vadd.f32 %v1835, %v1783
      %v1890 = vadd.f32 %v1839, %v1782
      %v1891 = vadd.f32 %v1839, %v1783
      %v1892 = vadd.f32 %v1843, %v1782
      %v1893 = vadd.f32 %v1843, %v1783
      %v1894 = vadd.f32 %v1847, %v1782
      %v1895 = vadd.f32 %v1847, %v1783
      %v1896 = vlaneseq
      %v1897 = vshrl.u32 %v1896, 7
      %v1898 = vsub.s32 0, %v1897
      %v1899 = vrot.slane %v1223, %v1898
      %v1900 = vmul.f32 %v1230, %v1899
      %v1901 = vmul.f32 %v1234, %v1899
      %v1902 = vmul.f32 %v1241, %v1899
      %v1903 = vmul.f32 %v1245, %v1899
      %v1904 = vmul.f32 %v1252, %v1899
      %v1905 = vmul.f32 %v1256, %v1899
      %v1906 = vmul.f32 %v1263, %v1899
      %v1907 = vmul.f32 %v1267, %v1899
      %v1908 = vmul.f32 %v1274, %v1899
      %v1909 = vmul.f32 %v1278, %v1899
      %v1910 = vmul.f32 %v1285, %v1899
      %v1911 = vmul.f32 %v1289, %v1899
      %v1912 = vmul.f32 %v1296, %v1899
      %v1913 = vmul.f32 %v1300, %v1899
      %v1914 = vmul.f32 %v1307, %v1899
      %v1915 = vmul.f32 %v1311, %v1899
      %v1916 = vmul.f32 %v1318, %v1899
      %v1917 = vmul.f32 %v1322, %v1899
      %v1918 = vmul.f32 %v1329, %v1899
      %v1919 = vmul.f32 %v1333, %v1899
      %v1920 = vmul.f32 %v1340, %v1899
      %v1921 = vmul.f32 %v1344, %v1899
      %v1922 = vmul.f32 %v1351, %v1899
      %v1923 = vmul.f32 %v1355, %v1899
      %v1924 = vmul.f32 %v1362, %v1899
      %v1925 = vmul.f32 %v1366, %v1899
      %v1926 = vmul.f32 %v1373, %v1899
      %v1927 = vmul.f32 %v1377, %v1899
      %v1928 = vmul.f32 %v1384, %v1899
      %v1929 = vmul.f32 %v1388, %v1899
      %v1930 = vmul.f32 %v1395, %v1899
      %v1931 = vmul.f32 %v1399, %v1899
      %v1932 = vadd.f32 %v1864, %v1900
      %v1933 = vadd.f32 %v1865, %v1901
      %v1934 = vadd.f32 %v1866, %v1902
      %v1935 = vadd.f32 %v1867, %v1903
      %v1936 = vadd.f32 %v1868, %v1904
      %v1937 = vadd.f32 %v1869, %v1905
      %v1938 = vadd.f32 %v1870, %v1906
      %v1939 = vadd.f32 %v1871, %v1907
      %v1940 = vadd.f32 %v1872, %v1908
      %v1941 = vadd.f32 %v1873, %v1909
      %v1942 = vadd.f32 %v1874, %v1910
      %v1943 = vadd.f32 %v1875, %v1911
      %v1944 = vadd.f32 %v1876, %v1912
      %v1945 = vadd.f32 %v1877, %v1913
      %v1946 = vadd.f32 %v1878, %v1914
      %v1947 = vadd.f32 %v1879, %v1915
      %v1948 = vadd.f32 %v1880, %v1916
      %v1949 = vadd.f32 %v1881, %v1917
      %v1950 = vadd.f32 %v1882, %v1918
      %v1951 = vadd.f32 %v1883, %v1919
      %v1952 = vadd.f32 %v1884, %v1920
      %v1953 = vadd.f32 %v1885, %v1921
      %v1954 = vadd.f32 %v1886, %v1922
      %v1955 = vadd.f32 %v1887, %v1923
      %v1956 = vadd.f32 %v1888, %v1924
      %v1957 = vadd.f32 %v1889, %v1925
      %v1958 = vadd.f32 %v1890, %v1926
      %v1959 = vadd.f32 %v1891, %v1927
      %v1960 = vadd.f32 %v1892, %v1928
      %v1961 = vadd.f32 %v1893, %v1929
      %v1962 = vadd.f32 %v1894, %v1930
      %v1963 = vadd.f32 %v1895, %v1931
      %v1964 = vxor.u32 %v1650, 2147483648
      %v1965 = vxor.u32 %v1651, 2147483648
      %v1966 = vxor.u32 %v1652, 2147483648
      %v1967 = vxor.u32 %v1653, 2147483648
      %v1968 = vxor.u32 %v1654, 2147483648
      %v1969 = vxor.u32 %v1655, 2147483648
      %v1970 = vxor.u32 %v1656, 2147483648
      %v1971 = vxor.u32 %v1657, 2147483648
      %v1972 = vxor.u32 %v1658, 2147483648
      %v1973 = vxor.u32 %v1659, 2147483648
      %v1974 = vxor.u32 %v1660, 2147483648
      %v1975 = vxor.u32 %v1661, 2147483648
      %v1976 = vxor.u32 %v1662, 2147483648
      %v1977 = vxor.u32 %v1663, 2147483648
      %v1978 = vxor.u32 %v1664, 2147483648
      %v1979 = vxor.u32 %v1665, 2147483648
      %v1980 = vxor.u32 %v1666, 2147483648
      %v1981 = vxor.u32 %v1667, 2147483648
      %v1982 = vxor.u32 %v1668, 2147483648
      %v1983 = vxor.u32 %v1669, 2147483648
      %v1984 = vxor.u32 %v1670, 2147483648
      %v1985 = vxor.u32 %v1671, 2147483648
      %v1986 = vxor.u32 %v1672, 2147483648
      %v1987 = vxor.u32 %v1673, 2147483648
      %v1988 = vxor.u32 %v1674, 2147483648
      %v1989 = vxor.u32 %v1675, 2147483648
      %v1990 = vxor.u32 %v1676, 2147483648
      %v1991 = vxor.u32 %v1677, 2147483648
      %v1992 = vxor.u32 %v1678, 2147483648
      %v1993 = vxor.u32 %v1679, 2147483648
      %v1994 = vxor.u32 %v1680, 2147483648
      %v1995 = vxor.u32 %v1681, 2147483648
      %v1996 = vmul.f32 %v1964, 1.442695
      %v1997 = vpow.pop %v1996
      %v1998 = vmul.f32 %v1965, 1.442695
      %v1999 = vpow.pop %v1998
      %v2000 = vmul.f32 %v1966, 1.442695
      %v2001 = vpow.pop %v2000
      %v2002 = vmul.f32 %v1967, 1.442695
      %v2003 = vpow.pop %v2002
      %v2004 = vmul.f32 %v1968, 1.442695
      %v2005 = vpow.pop %v2004
      %v2006 = vmul.f32 %v1969, 1.442695
      %v2007 = vpow.pop %v2006
      %v2008 = vmul.f32 %v1970, 1.442695
      %v2009 = vpow.pop %v2008
      %v2010 = vmul.f32 %v1971, 1.442695
      %v2011 = vpow.pop %v2010
      %v2012 = vmul.f32 %v1972, 1.442695
      %v2013 = vpow.pop %v2012
      %v2014 = vmul.f32 %v1973, 1.442695
      %v2015 = vpow.pop %v2014
      %v2016 = vmul.f32 %v1974, 1.442695
      %v2017 = vpow.pop %v2016
      %v2018 = vmul.f32 %v1975, 1.442695
      %v2019 = vpow.pop %v2018
      %v2020 = vmul.f32 %v1976, 1.442695
      %v2021 = vpow.pop %v2020
      %v2022 = vmul.f32 %v1977, 1.442695
      %v2023 = vpow.pop %v2022
      %v2024 = vmul.f32 %v1978, 1.442695
      %v2025 = vpow.pop %v2024
      %v2026 = vmul.f32 %v1979, 1.442695
      %v2027 = vpow.pop %v2026
      %v2028 = vmul.f32 %v1980, 1.442695
      %v2029 = vpow.pop %v2028
      %v2030 = vmul.f32 %v1981, 1.442695
      %v2031 = vpow.pop %v2030
      %v2032 = vmul.f32 %v1982, 1.442695
      %v2033 = vpow.pop %v2032
      %v2034 = vmul.f32 %v1983, 1.442695
      %v2035 = vpow.pop %v2034
      %v2036 = vmul.f32 %v1984, 1.442695
      %v2037 = vpow.pop %v2036
      %v2038 = vmul.f32 %v1985, 1.442695
      %v2039 = vpow.pop %v2038
      %v2040 = vmul.f32 %v1986, 1.442695
      %v2041 = vpow.pop %v2040
      %v2042 = vmul.f32 %v1987, 1.442695
      %v2043 = vpow.pop %v2042
      %v2044 = vmul.f32 %v1988, 1.442695
      %v2045 = vpow.pop %v2044
      %v2046 = vmul.f32 %v1989, 1.442695
      %v2047 = vpow.pop %v2046
      %v2048 = vmul.f32 %v1990, 1.442695
      %v2049 = vpow.pop %v2048
      %v2050 = vmul.f32 %v1991, 1.442695
      %v2051 = vpow.pop %v2050
      %v2052 = vmul.f32 %v1992, 1.442695
      %v2053 = vpow.pop %v2052
      %v2054 = vmul.f32 %v1993, 1.442695
      %v2055 = vpow.pop %v2054
      %v2056 = vmul.f32 %v1994, 1.442695
      %v2057 = vpow.pop %v2056
      %v2058 = vmul.f32 %v1995, 1.442695
      %v2059 = vpow.pop %v2058
      %v2060 = vadd.f32 %v1997, 1.0
      %v2061 = vadd.f32 %v1999, 1.0
      %v2062 = vadd.f32 %v2001, 1.0
      %v2063 = vadd.f32 %v2003, 1.0
      %v2064 = vadd.f32 %v2005, 1.0
      %v2065 = vadd.f32 %v2007, 1.0
      %v2066 = vadd.f32 %v2009, 1.0
      %v2067 = vadd.f32 %v2011, 1.0
      %v2068 = vadd.f32 %v2013, 1.0
      %v2069 = vadd.f32 %v2015, 1.0
      %v2070 = vadd.f32 %v2017, 1.0
      %v2071 = vadd.f32 %v2019, 1.0
      %v2072 = vadd.f32 %v2021, 1.0
      %v2073 = vadd.f32 %v2023, 1.0
      %v2074 = vadd.f32 %v2025, 1.0
      %v2075 = vadd.f32 %v2027, 1.0
      %v2076 = vadd.f32 %v2029, 1.0
      %v2077 = vadd.f32 %v2031, 1.0
      %v2078 = vadd.f32 %v2033, 1.0
      %v2079 = vadd.f32 %v2035, 1.0
      %v2080 = vadd.f32 %v2037, 1.0
      %v2081 = vadd.f32 %v2039, 1.0
      %v2082 = vadd.f32 %v2041, 1.0
      %v2083 = vadd.f32 %v2043, 1.0
      %v2084 = vadd.f32 %v2045, 1.0
      %v2085 = vadd.f32 %v2047, 1.0
      %v2086 = vadd.f32 %v2049, 1.0
      %v2087 = vadd.f32 %v2051, 1.0
      %v2088 = vadd.f32 %v2053, 1.0
      %v2089 = vadd.f32 %v2055, 1.0
      %v2090 = vadd.f32 %v2057, 1.0
      %v2091 = vadd.f32 %v2059, 1.0
      %v2092 = vrcp.pop %v2060
      %v2093 = vmul.f32 1.0, %v2092
      %v2094 = vrcp.pop %v2061
      %v2095 = vmul.f32 1.0, %v2094
      %v2096 = vrcp.pop %v2062
      %v2097 = vmul.f32 1.0, %v2096
      %v2098 = vrcp.pop %v2063
      %v2099 = vmul.f32 1.0, %v2098
      %v2100 = vrcp.pop %v2064
      %v2101 = vmul.f32 1.0, %v2100
      %v2102 = vrcp.pop %v2065
      %v2103 = vmul.f32 1.0, %v2102
      %v2104 = vrcp.pop %v2066
      %v2105 = vmul.f32 1.0, %v2104
      %v2106 = vrcp.pop %v2067
      %v2107 = vmul.f32 1.0, %v2106
      %v2108 = vrcp.pop %v2068
      %v2109 = vmul.f32 1.0, %v2108
      %v2110 = vrcp.pop %v2069
      %v2111 = vmul.f32 1.0, %v2110
      %v2112 = vrcp.pop %v2070
      %v2113 = vmul.f32 1.0, %v2112
      %v2114 = vrcp.pop %v2071
      %v2115 = vmul.f32 1.0, %v2114
      %v2116 = vrcp.pop %v2072
      %v2117 = vmul.f32 1.0, %v2116
      %v2118 = vrcp.pop %v2073
      %v2119 = vmul.f32 1.0, %v2118
      %v2120 = vrcp.pop %v2074
      %v2121 = vmul.f32 1.0, %v2120
      %v2122 = vrcp.pop %v2075
      %v2123 = vmul.f32 1.0, %v2122
      %v2124 = vrcp.pop %v2076
      %v2125 = vmul.f32 1.0, %v2124
      %v2126 = vrcp.pop %v2077
      %v2127 = vmul.f32 1.0, %v2126
      %v2128 = vrcp.pop %v2078
      %v2129 = vmul.f32 1.0, %v2128
      %v2130 = vrcp.pop %v2079
      %v2131 = vmul.f32 1.0, %v2130
      %v2132 = vrcp.pop %v2080
      %v2133 = vmul.f32 1.0, %v2132
      %v2134 = vrcp.pop %v2081
      %v2135 = vmul.f32 1.0, %v2134
      %v2136 = vrcp.pop %v2082
      %v2137 = vmul.f32 1.0, %v2136
      %v2138 = vrcp.pop %v2083
      %v2139 = vmul.f32 1.0, %v2138
      %v2140 = vrcp.pop %v2084
      %v2141 = vmul.f32 1.0, %v2140
      %v2142 = vrcp.pop %v2085
      %v2143 = vmul.f32 1.0, %v2142
      %v2144 = vrcp.pop %v2086
      %v2145 = vmul.f32 1.0, %v2144
      %v2146 = vrcp.pop %v2087
      %v2147 = vmul.f32 1.0, %v2146
      %v2148 = vrcp.pop %v2088
      %v2149 = vmul.f32 1.0, %v2148
      %v2150 = vrcp.pop %v2089
      %v2151 = vmul.f32 1.0, %v2150
      %v2152 = vrcp.pop %v2090
      %v2153 = vmul.f32 1.0, %v2152
      %v2154 = vrcp.pop %v2091
      %v2155 = vmul.f32 1.0, %v2154
      %v2156 = vmul.f32 %v1650, %v2093
      %v2157 = vmul.f32 %v1651, %v2095
      %v2158 = vmul.f32 %v1652, %v2097
      %v2159 = vmul.f32 %v1653, %v2099
      %v2160 = vmul.f32 %v1654, %v2101
      %v2161 = vmul.f32 %v1655, %v2103
      %v2162 = vmul.f32 %v1656, %v2105
      %v2163 = vmul.f32 %v1657, %v2107
      %v2164 = vmul.f32 %v1658, %v2109
      %v2165 = vmul.f32 %v1659, %v2111
      %v2166 = vmul.f32 %v1660, %v2113
      %v2167 = vmul.f32 %v1661, %v2115
      %v2168 = vmul.f32 %v1662, %v2117
      %v2169 = vmul.f32 %v1663, %v2119
      %v2170 = vmul.f32 %v1664, %v2121
      %v2171 = vmul.f32 %v1665, %v2123
      %v2172 = vmul.f32 %v1666, %v2125
      %v2173 = vmul.f32 %v1667, %v2127
      %v2174 = vmul.f32 %v1668, %v2129
      %v2175 = vmul.f32 %v1669, %v2131
      %v2176 = vmul.f32 %v1670, %v2133
      %v2177 = vmul.f32 %v1671, %v2135
      %v2178 = vmul.f32 %v1672, %v2137
      %v2179 = vmul.f32 %v1673, %v2139
      %v2180 = vmul.f32 %v1674, %v2141
      %v2181 = vmul.f32 %v1675, %v2143
      %v2182 = vmul.f32 %v1676, %v2145
      %v2183 = vmul.f32 %v1677, %v2147
      %v2184 = vmul.f32 %v1678, %v2149
      %v2185 = vmul.f32 %v1679, %v2151
      %v2186 = vmul.f32 %v1680, %v2153
      %v2187 = vmul.f32 %v1681, %v2155
      %v2188 = vpack.c.bf16 %v2157, %v2156
      %v2189 = vpack.c.bf16 %v2159, %v2158
      %v2190 = vpack.c.bf16 %v2161, %v2160
      %v2191 = vpack.c.bf16 %v2163, %v2162
      %v2192 = vpack.c.bf16 %v2165, %v2164
      %v2193 = vpack.c.bf16 %v2167, %v2166
      %v2194 = vpack.c.bf16 %v2169, %v2168
      %v2195 = vpack.c.bf16 %v2171, %v2170
      %v2196 = vpack.c.bf16 %v2173, %v2172
      %v2197 = vpack.c.bf16 %v2175, %v2174
      %v2198 = vpack.c.bf16 %v2177, %v2176
      %v2199 = vpack.c.bf16 %v2179, %v2178
      %v2200 = vpack.c.bf16 %v2181, %v2180
      %v2201 = vpack.c.bf16 %v2183, %v2182
      %v2202 = vpack.c.bf16 %v2185, %v2184
      %v2203 = vpack.c.bf16 %v2187, %v2186
      %v2204 = vxor.u32 %v1932, 2147483648
      %v2205 = vxor.u32 %v1933, 2147483648
      %v2206 = vxor.u32 %v1934, 2147483648
      %v2207 = vxor.u32 %v1935, 2147483648
      %v2208 = vxor.u32 %v1936, 2147483648
      %v2209 = vxor.u32 %v1937, 2147483648
      %v2210 = vxor.u32 %v1938, 2147483648
      %v2211 = vxor.u32 %v1939, 2147483648
      %v2212 = vxor.u32 %v1940, 2147483648
      %v2213 = vxor.u32 %v1941, 2147483648
      %v2214 = vxor.u32 %v1942, 2147483648
      %v2215 = vxor.u32 %v1943, 2147483648
      %v2216 = vxor.u32 %v1944, 2147483648
      %v2217 = vxor.u32 %v1945, 2147483648
      %v2218 = vxor.u32 %v1946, 2147483648
      %v2219 = vxor.u32 %v1947, 2147483648
      %v2220 = vxor.u32 %v1948, 2147483648
      %v2221 = vxor.u32 %v1949, 2147483648
      %v2222 = vxor.u32 %v1950, 2147483648
      %v2223 = vxor.u32 %v1951, 2147483648
      %v2224 = vxor.u32 %v1952, 2147483648
      %v2225 = vxor.u32 %v1953, 2147483648
      %v2226 = vxor.u32 %v1954, 2147483648
      %v2227 = vxor.u32 %v1955, 2147483648
      %v2228 = vxor.u32 %v1956, 2147483648
      %v2229 = vxor.u32 %v1957, 2147483648
      %v2230 = vxor.u32 %v1958, 2147483648
      %v2231 = vxor.u32 %v1959, 2147483648
      %v2232 = vxor.u32 %v1960, 2147483648
      %v2233 = vxor.u32 %v1961, 2147483648
      %v2234 = vxor.u32 %v1962, 2147483648
      %v2235 = vxor.u32 %v1963, 2147483648
      %v2236 = vmul.f32 %v2204, 1.442695
      %v2237 = vpow.pop %v2236
      %v2238 = vmul.f32 %v2205, 1.442695
      %v2239 = vpow.pop %v2238
      %v2240 = vmul.f32 %v2206, 1.442695
      %v2241 = vpow.pop %v2240
      %v2242 = vmul.f32 %v2207, 1.442695
      %v2243 = vpow.pop %v2242
      %v2244 = vmul.f32 %v2208, 1.442695
      %v2245 = vpow.pop %v2244
      %v2246 = vmul.f32 %v2209, 1.442695
      %v2247 = vpow.pop %v2246
      %v2248 = vmul.f32 %v2210, 1.442695
      %v2249 = vpow.pop %v2248
      %v2250 = vmul.f32 %v2211, 1.442695
      %v2251 = vpow.pop %v2250
      %v2252 = vmul.f32 %v2212, 1.442695
      %v2253 = vpow.pop %v2252
      %v2254 = vmul.f32 %v2213, 1.442695
      %v2255 = vpow.pop %v2254
      %v2256 = vmul.f32 %v2214, 1.442695
      %v2257 = vpow.pop %v2256
      %v2258 = vmul.f32 %v2215, 1.442695
      %v2259 = vpow.pop %v2258
      %v2260 = vmul.f32 %v2216, 1.442695
      %v2261 = vpow.pop %v2260
      %v2262 = vmul.f32 %v2217, 1.442695
      %v2263 = vpow.pop %v2262
      %v2264 = vmul.f32 %v2218, 1.442695
      %v2265 = vpow.pop %v2264
      %v2266 = vmul.f32 %v2219, 1.442695
      %v2267 = vpow.pop %v2266
      %v2268 = vmul.f32 %v2220, 1.442695
      %v2269 = vpow.pop %v2268
      %v2270 = vmul.f32 %v2221, 1.442695
      %v2271 = vpow.pop %v2270
      %v2272 = vmul.f32 %v2222, 1.442695
      %v2273 = vpow.pop %v2272
      %v2274 = vmul.f32 %v2223, 1.442695
      %v2275 = vpow.pop %v2274
      %v2276 = vmul.f32 %v2224, 1.442695
      %v2277 = vpow.pop %v2276
      %v2278 = vmul.f32 %v2225, 1.442695
      %v2279 = vpow.pop %v2278
      %v2280 = vmul.f32 %v2226, 1.442695
      %v2281 = vpow.pop %v2280
      %v2282 = vmul.f32 %v2227, 1.442695
      %v2283 = vpow.pop %v2282
      %v2284 = vmul.f32 %v2228, 1.442695
      %v2285 = vpow.pop %v2284
      %v2286 = vmul.f32 %v2229, 1.442695
      %v2287 = vpow.pop %v2286
      %v2288 = vmul.f32 %v2230, 1.442695
      %v2289 = vpow.pop %v2288
      %v2290 = vmul.f32 %v2231, 1.442695
      %v2291 = vpow.pop %v2290
      %v2292 = vmul.f32 %v2232, 1.442695
      %v2293 = vpow.pop %v2292
      %v2294 = vmul.f32 %v2233, 1.442695
      %v2295 = vpow.pop %v2294
      %v2296 = vmul.f32 %v2234, 1.442695
      %v2297 = vpow.pop %v2296
      %v2298 = vmul.f32 %v2235, 1.442695
      %v2299 = vpow.pop %v2298
      %v2300 = vadd.f32 %v2237, 1.0
      %v2301 = vadd.f32 %v2239, 1.0
      %v2302 = vadd.f32 %v2241, 1.0
      %v2303 = vadd.f32 %v2243, 1.0
      %v2304 = vadd.f32 %v2245, 1.0
      %v2305 = vadd.f32 %v2247, 1.0
      %v2306 = vadd.f32 %v2249, 1.0
      %v2307 = vadd.f32 %v2251, 1.0
      %v2308 = vadd.f32 %v2253, 1.0
      %v2309 = vadd.f32 %v2255, 1.0
      %v2310 = vadd.f32 %v2257, 1.0
      %v2311 = vadd.f32 %v2259, 1.0
      %v2312 = vadd.f32 %v2261, 1.0
      %v2313 = vadd.f32 %v2263, 1.0
      %v2314 = vadd.f32 %v2265, 1.0
      %v2315 = vadd.f32 %v2267, 1.0
      %v2316 = vadd.f32 %v2269, 1.0
      %v2317 = vadd.f32 %v2271, 1.0
      %v2318 = vadd.f32 %v2273, 1.0
      %v2319 = vadd.f32 %v2275, 1.0
      %v2320 = vadd.f32 %v2277, 1.0
      %v2321 = vadd.f32 %v2279, 1.0
      %v2322 = vadd.f32 %v2281, 1.0
      %v2323 = vadd.f32 %v2283, 1.0
      %v2324 = vadd.f32 %v2285, 1.0
      %v2325 = vadd.f32 %v2287, 1.0
      %v2326 = vadd.f32 %v2289, 1.0
      %v2327 = vadd.f32 %v2291, 1.0
      %v2328 = vadd.f32 %v2293, 1.0
      %v2329 = vadd.f32 %v2295, 1.0
      %v2330 = vadd.f32 %v2297, 1.0
      %v2331 = vadd.f32 %v2299, 1.0
      %v2332 = vrcp.pop %v2300
      %v2333 = vmul.f32 1.0, %v2332
      %v2334 = vrcp.pop %v2301
      %v2335 = vmul.f32 1.0, %v2334
      %v2336 = vrcp.pop %v2302
      %v2337 = vmul.f32 1.0, %v2336
      %v2338 = vrcp.pop %v2303
      %v2339 = vmul.f32 1.0, %v2338
      %v2340 = vrcp.pop %v2304
      %v2341 = vmul.f32 1.0, %v2340
      %v2342 = vrcp.pop %v2305
      %v2343 = vmul.f32 1.0, %v2342
      %v2344 = vrcp.pop %v2306
      %v2345 = vmul.f32 1.0, %v2344
      %v2346 = vrcp.pop %v2307
      %v2347 = vmul.f32 1.0, %v2346
      %v2348 = vrcp.pop %v2308
      %v2349 = vmul.f32 1.0, %v2348
      %v2350 = vrcp.pop %v2309
      %v2351 = vmul.f32 1.0, %v2350
      %v2352 = vrcp.pop %v2310
      %v2353 = vmul.f32 1.0, %v2352
      %v2354 = vrcp.pop %v2311
      %v2355 = vmul.f32 1.0, %v2354
      %v2356 = vrcp.pop %v2312
      %v2357 = vmul.f32 1.0, %v2356
      %v2358 = vrcp.pop %v2313
      %v2359 = vmul.f32 1.0, %v2358
      %v2360 = vrcp.pop %v2314
      %v2361 = vmul.f32 1.0, %v2360
      %v2362 = vrcp.pop %v2315
      %v2363 = vmul.f32 1.0, %v2362
      %v2364 = vrcp.pop %v2316
      %v2365 = vmul.f32 1.0, %v2364
      %v2366 = vrcp.pop %v2317
      %v2367 = vmul.f32 1.0, %v2366
      %v2368 = vrcp.pop %v2318
      %v2369 = vmul.f32 1.0, %v2368
      %v2370 = vrcp.pop %v2319
      %v2371 = vmul.f32 1.0, %v2370
      %v2372 = vrcp.pop %v2320
      %v2373 = vmul.f32 1.0, %v2372
      %v2374 = vrcp.pop %v2321
      %v2375 = vmul.f32 1.0, %v2374
      %v2376 = vrcp.pop %v2322
      %v2377 = vmul.f32 1.0, %v2376
      %v2378 = vrcp.pop %v2323
      %v2379 = vmul.f32 1.0, %v2378
      %v2380 = vrcp.pop %v2324
      %v2381 = vmul.f32 1.0, %v2380
      %v2382 = vrcp.pop %v2325
      %v2383 = vmul.f32 1.0, %v2382
      %v2384 = vrcp.pop %v2326
      %v2385 = vmul.f32 1.0, %v2384
      %v2386 = vrcp.pop %v2327
      %v2387 = vmul.f32 1.0, %v2386
      %v2388 = vrcp.pop %v2328
      %v2389 = vmul.f32 1.0, %v2388
      %v2390 = vrcp.pop %v2329
      %v2391 = vmul.f32 1.0, %v2390
      %v2392 = vrcp.pop %v2330
      %v2393 = vmul.f32 1.0, %v2392
      %v2394 = vrcp.pop %v2331
      %v2395 = vmul.f32 1.0, %v2394
      %v2396 = vmul.f32 %v1932, %v2333
      %v2397 = vmul.f32 %v1933, %v2335
      %v2398 = vmul.f32 %v1934, %v2337
      %v2399 = vmul.f32 %v1935, %v2339
      %v2400 = vmul.f32 %v1936, %v2341
      %v2401 = vmul.f32 %v1937, %v2343
      %v2402 = vmul.f32 %v1938, %v2345
      %v2403 = vmul.f32 %v1939, %v2347
      %v2404 = vmul.f32 %v1940, %v2349
      %v2405 = vmul.f32 %v1941, %v2351
      %v2406 = vmul.f32 %v1942, %v2353
      %v2407 = vmul.f32 %v1943, %v2355
      %v2408 = vmul.f32 %v1944, %v2357
      %v2409 = vmul.f32 %v1945, %v2359
      %v2410 = vmul.f32 %v1946, %v2361
      %v2411 = vmul.f32 %v1947, %v2363
      %v2412 = vmul.f32 %v1948, %v2365
      %v2413 = vmul.f32 %v1949, %v2367
      %v2414 = vmul.f32 %v1950, %v2369
      %v2415 = vmul.f32 %v1951, %v2371
      %v2416 = vmul.f32 %v1952, %v2373
      %v2417 = vmul.f32 %v1953, %v2375
      %v2418 = vmul.f32 %v1954, %v2377
      %v2419 = vmul.f32 %v1955, %v2379
      %v2420 = vmul.f32 %v1956, %v2381
      %v2421 = vmul.f32 %v1957, %v2383
      %v2422 = vmul.f32 %v1958, %v2385
      %v2423 = vmul.f32 %v1959, %v2387
      %v2424 = vmul.f32 %v1960, %v2389
      %v2425 = vmul.f32 %v1961, %v2391
      %v2426 = vmul.f32 %v1962, %v2393
      %v2427 = vmul.f32 %v1963, %v2395
      %v2428 = vpack.c.bf16 %v2397, %v2396
      %v2429 = vpack.c.bf16 %v2399, %v2398
      %v2430 = vpack.c.bf16 %v2401, %v2400
      %v2431 = vpack.c.bf16 %v2403, %v2402
      %v2432 = vpack.c.bf16 %v2405, %v2404
      %v2433 = vpack.c.bf16 %v2407, %v2406
      %v2434 = vpack.c.bf16 %v2409, %v2408
      %v2435 = vpack.c.bf16 %v2411, %v2410
      %v2436 = vpack.c.bf16 %v2413, %v2412
      %v2437 = vpack.c.bf16 %v2415, %v2414
      %v2438 = vpack.c.bf16 %v2417, %v2416
      %v2439 = vpack.c.bf16 %v2419, %v2418
      %v2440 = vpack.c.bf16 %v2421, %v2420
      %v2441 = vpack.c.bf16 %v2423, %v2422
      %v2442 = vpack.c.bf16 %v2425, %v2424
      %v2443 = vpack.c.bf16 %v2427, %v2426
      %s2444 = smul.u32 %s41, 4
      %s2445 = smul.addr %s2444, 4
      %s2446 = scalar_lea.vmem %s8, %s2445
      %v2447 = vld [vmem:[%s2446] sm:$0xf]
      %v2448 = vld [vmem:[%s2446 + $0x4] sm:$0xf]
      %v2449 = vld [vmem:[%s2446 + $0x8] sm:$0xf]
      %v2450 = vld [vmem:[%s2446 + $0xc] sm:$0xf]
      %s2451 = scalar_lea.vmem %s9, %s41
      %v2452 = vld [vmem:[%s2451] sm:$0x1]
      %v2454 = vlaneseq
      %v2455 = vshrl.u32 %v2454, 7
      %v2456 = vsub.s32 0, %v2455
      %v2457 = vrot.slane %v2452, %v2456
      %v2463 = vunpack.c.l.b16 %v2447
      %v2464 = vunpack.c.l.b16 %v2448
      %v2465 = vunpack.c.l.b16 %v2449
      %v2466 = vunpack.c.l.b16 %v2450
      %v2467 = vpack.c.b16 %v2464, %v2463
      %v2468 = vpack.c.b16 %v2466, %v2465
      %v2472 = vsel %vm1124, %v2188, 0
      %v2475 = vsel %vm1124, %v2189, 0
      %v2478 = vsel %vm1124, %v2190, 0
      %v2481 = vsel %vm1124, %v2191, 0
      %v2484 = vsel %vm1124, %v2192, 0
      %v2487 = vsel %vm1124, %v2193, 0
      %v2490 = vsel %vm1124, %v2194, 0
      %v2493 = vsel %vm1124, %v2195, 0
      %v2496 = vsel %vm1124, %v2196, 0
      %v2499 = vsel %vm1124, %v2197, 0
      %v2502 = vsel %vm1124, %v2198, 0
      %v2505 = vsel %vm1124, %v2199, 0
      %v2508 = vsel %vm1124, %v2200, 0
      %v2511 = vsel %vm1124, %v2201, 0
      %v2514 = vsel %vm1124, %v2202, 0
      %v2517 = vsel %vm1124, %v2203, 0
      %2519 = vmatprep.subr.bf16.mxu0 0
      %2520 = vmatpush1.bf16.msra.mxu0 %v2467
      %2521 = vmatprep.subr.bf16.mxu0 0
      %2522 = vmatpush1.bf16.msra.mxu0 %v2468
      %2523 = vmatprep.subr.bf16.mxu0 0
      %2524 = vmatpush1.bf16.msra.mxu0 0
      %2525 = vmatprep.subr.bf16.mxu0 0
      %2526 = vmatpush1.bf16.msra.mxu0 0
      %2527 = vmatprep.subr.bf16.mxu0 0
      %2528 = vmatpush1.bf16.msra.mxu0 0
      %2529 = vmatprep.subr.bf16.mxu0 0
      %2530 = vmatpush1.bf16.msra.mxu0 0
      %2531 = vmatprep.subr.bf16.mxu0 0
      %2532 = vmatpush1.bf16.msra.mxu0 0
      %2533 = vmatprep.subr.bf16.mxu0 0
      %2534 = vmatpush1.bf16.msra.mxu0 0
      %2535 = vmatprep.subr.bf16.mxu0 0
      %2536 = vmatpush1.bf16.msra.mxu0 0
      %2537 = vmatprep.subr.bf16.mxu0 0
      %2538 = vmatpush1.bf16.msra.mxu0 0
      %2539 = vmatprep.subr.bf16.mxu0 0
      %2540 = vmatpush1.bf16.msra.mxu0 0
      %2541 = vmatprep.subr.bf16.mxu0 0
      %2542 = vmatpush1.bf16.msra.mxu0 0
      %2543 = vmatprep.subr.bf16.mxu0 0
      %2544 = vmatpush1.bf16.msra.mxu0 0
      %2545 = vmatprep.subr.bf16.mxu0 0
      %2546 = vmatpush1.bf16.msra.mxu0 0
      %2547 = vmatprep.subr.bf16.mxu0 0
      %2548 = vmatpush1.bf16.msra.mxu0 0
      %2549 = vmatprep.subr.bf16.mxu0 0
      %2550 = vmatpush1.bf16.msra.mxu0 0
      %2551 = vmatprep.mubr.bf16.mxu0 0
      %2552 = vmatmul.mubr.bf16.gmra.mrb[0].mxu0 %v2472
      %v2553 = vpop.f32.mrb[0].mxu0
      %v2554 = vadd.f32 %v2457, %v2553
      %v2555 = vpop.f32.mrb[0].mxu0
      %v2556 = vpop.f32.mrb[0].mxu0
      %v2557 = vadd.f32 %v2457, %v2556
      %v2558 = vpop.f32.mrb[0].mxu0
      %2559 = vmatprep.mubr.bf16.mxu0 0
      %2560 = vmatmul.mubr.bf16.gmra.mrb[0].mxu0 %v2475
      %v2561 = vpop.f32.mrb[0].mxu0
      %v2562 = vadd.f32 %v2457, %v2561
      %v2563 = vpop.f32.mrb[0].mxu0
      %v2564 = vpop.f32.mrb[0].mxu0
      %v2565 = vadd.f32 %v2457, %v2564
      %v2566 = vpop.f32.mrb[0].mxu0
      %2567 = vmatprep.mubr.bf16.mxu0 0
      %2568 = vmatmul.mubr.bf16.gmra.mrb[0].mxu0 %v2478
      %v2569 = vpop.f32.mrb[0].mxu0
      %v2570 = vadd.f32 %v2457, %v2569
      %v2571 = vpop.f32.mrb[0].mxu0
      %v2572 = vpop.f32.mrb[0].mxu0
      %v2573 = vadd.f32 %v2457, %v2572
      %v2574 = vpop.f32.mrb[0].mxu0
      %2575 = vmatprep.mubr.bf16.mxu0 0
      %2576 = vmatmul.mubr.bf16.gmra.mrb[0].mxu0 %v2481
      %v2577 = vpop.f32.mrb[0].mxu0
      %v2578 = vadd.f32 %v2457, %v2577
      %v2579 = vpop.f32.mrb[0].mxu0
      %v2580 = vpop.f32.mrb[0].mxu0
      %v2581 = vadd.f32 %v2457, %v2580
      %v2582 = vpop.f32.mrb[0].mxu0
      %2583 = vmatprep.mubr.bf16.mxu0 0
      %2584 = vmatmul.mubr.bf16.gmra.mrb[0].mxu0 %v2484
      %v2585 = vpop.f32.mrb[0].mxu0
      %v2586 = vadd.f32 %v2457, %v2585
      %v2587 = vpop.f32.mrb[0].mxu0
      %v2588 = vpop.f32.mrb[0].mxu0
      %v2589 = vadd.f32 %v2457, %v2588
      %v2590 = vpop.f32.mrb[0].mxu0
      %2591 = vmatprep.mubr.bf16.mxu0 0
      %2592 = vmatmul.mubr.bf16.gmra.mrb[0].mxu0 %v2487
      %v2593 = vpop.f32.mrb[0].mxu0
      %v2594 = vadd.f32 %v2457, %v2593
      %v2595 = vpop.f32.mrb[0].mxu0
      %v2596 = vpop.f32.mrb[0].mxu0
      %v2597 = vadd.f32 %v2457, %v2596
      %v2598 = vpop.f32.mrb[0].mxu0
      %2599 = vmatprep.mubr.bf16.mxu0 0
      %2600 = vmatmul.mubr.bf16.gmra.mrb[0].mxu0 %v2490
      %v2601 = vpop.f32.mrb[0].mxu0
      %v2602 = vadd.f32 %v2457, %v2601
      %v2603 = vpop.f32.mrb[0].mxu0
      %v2604 = vpop.f32.mrb[0].mxu0
      %v2605 = vadd.f32 %v2457, %v2604
      %v2606 = vpop.f32.mrb[0].mxu0
      %2607 = vmatprep.mubr.bf16.mxu0 0
      %2608 = vmatmul.mubr.bf16.gmra.mrb[0].mxu0 %v2493
      %v2609 = vpop.f32.mrb[0].mxu0
      %v2610 = vadd.f32 %v2457, %v2609
      %v2611 = vpop.f32.mrb[0].mxu0
      %v2612 = vpop.f32.mrb[0].mxu0
      %v2613 = vadd.f32 %v2457, %v2612
      %v2614 = vpop.f32.mrb[0].mxu0
      %2615 = vmatprep.mubr.bf16.mxu0 0
      %2616 = vmatmul.mubr.bf16.gmra.mrb[0].mxu0 %v2496
      %v2617 = vpop.f32.mrb[0].mxu0
      %v2618 = vadd.f32 %v2457, %v2617
      %v2619 = vpop.f32.mrb[0].mxu0
      %v2620 = vpop.f32.mrb[0].mxu0
      %v2621 = vadd.f32 %v2457, %v2620
      %v2622 = vpop.f32.mrb[0].mxu0
      %2623 = vmatprep.mubr.bf16.mxu0 0
      %2624 = vmatmul.mubr.bf16.gmra.mrb[0].mxu0 %v2499
      %v2625 = vpop.f32.mrb[0].mxu0
      %v2626 = vadd.f32 %v2457, %v2625
      %v2627 = vpop.f32.mrb[0].mxu0
      %v2628 = vpop.f32.mrb[0].mxu0
      %v2629 = vadd.f32 %v2457, %v2628
      %v2630 = vpop.f32.mrb[0].mxu0
      %2631 = vmatprep.mubr.bf16.mxu0 0
      %2632 = vmatmul.mubr.bf16.gmra.mrb[0].mxu0 %v2502
      %v2633 = vpop.f32.mrb[0].mxu0
      %v2634 = vadd.f32 %v2457, %v2633
      %v2635 = vpop.f32.mrb[0].mxu0
      %v2636 = vpop.f32.mrb[0].mxu0
      %v2637 = vadd.f32 %v2457, %v2636
      %v2638 = vpop.f32.mrb[0].mxu0
      %2639 = vmatprep.mubr.bf16.mxu0 0
      %2640 = vmatmul.mubr.bf16.gmra.mrb[0].mxu0 %v2505
      %v2641 = vpop.f32.mrb[0].mxu0
      %v2642 = vadd.f32 %v2457, %v2641
      %v2643 = vpop.f32.mrb[0].mxu0
      %v2644 = vpop.f32.mrb[0].mxu0
      %v2645 = vadd.f32 %v2457, %v2644
      %v2646 = vpop.f32.mrb[0].mxu0
      %2647 = vmatprep.mubr.bf16.mxu0 0
      %2648 = vmatmul.mubr.bf16.gmra.mrb[0].mxu0 %v2508
      %v2649 = vpop.f32.mrb[0].mxu0
      %v2650 = vadd.f32 %v2457, %v2649
      %v2651 = vpop.f32.mrb[0].mxu0
      %v2652 = vpop.f32.mrb[0].mxu0
      %v2653 = vadd.f32 %v2457, %v2652
      %v2654 = vpop.f32.mrb[0].mxu0
      %2655 = vmatprep.mubr.bf16.mxu0 0
      %2656 = vmatmul.mubr.bf16.gmra.mrb[0].mxu0 %v2511
      %v2657 = vpop.f32.mrb[0].mxu0
      %v2658 = vadd.f32 %v2457, %v2657
      %v2659 = vpop.f32.mrb[0].mxu0
      %v2660 = vpop.f32.mrb[0].mxu0
      %v2661 = vadd.f32 %v2457, %v2660
      %v2662 = vpop.f32.mrb[0].mxu0
      %2663 = vmatprep.mubr.bf16.mxu0 0
      %2664 = vmatmul.mubr.bf16.gmra.mrb[0].mxu0 %v2514
      %v2665 = vpop.f32.mrb[0].mxu0
      %v2666 = vadd.f32 %v2457, %v2665
      %v2667 = vpop.f32.mrb[0].mxu0
      %v2668 = vpop.f32.mrb[0].mxu0
      %v2669 = vadd.f32 %v2457, %v2668
      %v2670 = vpop.f32.mrb[0].mxu0
      %2671 = vmatprep.mubr.bf16.mxu0 0
      %2672 = vmatmul.mubr.bf16.gmra.mrb[0].mxu0 %v2517
      %v2673 = vpop.f32.mrb[0].mxu0
      %v2674 = vadd.f32 %v2457, %v2673
      %v2675 = vpop.f32.mrb[0].mxu0
      %v2676 = vpop.f32.mrb[0].mxu0
      %v2677 = vadd.f32 %v2457, %v2676
      %v2678 = vpop.f32.mrb[0].mxu0
      %2679 = vdwg.mxu0
      %v2680 = vxor.u32 %v2554, 2147483648
      %v2681 = vxor.u32 %v2557, 2147483648
      %v2682 = vxor.u32 %v2562, 2147483648
      %v2683 = vxor.u32 %v2565, 2147483648
      %v2684 = vxor.u32 %v2570, 2147483648
      %v2685 = vxor.u32 %v2573, 2147483648
      %v2686 = vxor.u32 %v2578, 2147483648
      %v2687 = vxor.u32 %v2581, 2147483648
      %v2688 = vxor.u32 %v2586, 2147483648
      %v2689 = vxor.u32 %v2589, 2147483648
      %v2690 = vxor.u32 %v2594, 2147483648
      %v2691 = vxor.u32 %v2597, 2147483648
      %v2692 = vxor.u32 %v2602, 2147483648
      %v2693 = vxor.u32 %v2605, 2147483648
      %v2694 = vxor.u32 %v2610, 2147483648
      %v2695 = vxor.u32 %v2613, 2147483648
      %v2696 = vxor.u32 %v2618, 2147483648
      %v2697 = vxor.u32 %v2621, 2147483648
      %v2698 = vxor.u32 %v2626, 2147483648
      %v2699 = vxor.u32 %v2629, 2147483648
      %v2700 = vxor.u32 %v2634, 2147483648
      %v2701 = vxor.u32 %v2637, 2147483648
      %v2702 = vxor.u32 %v2642, 2147483648
      %v2703 = vxor.u32 %v2645, 2147483648
      %v2704 = vxor.u32 %v2650, 2147483648
      %v2705 = vxor.u32 %v2653, 2147483648
      %v2706 = vxor.u32 %v2658, 2147483648
      %v2707 = vxor.u32 %v2661, 2147483648
      %v2708 = vxor.u32 %v2666, 2147483648
      %v2709 = vxor.u32 %v2669, 2147483648
      %v2710 = vxor.u32 %v2674, 2147483648
      %v2711 = vxor.u32 %v2677, 2147483648
      %v2712 = vmul.f32 %v2680, 1.442695
      %v2713 = vpow.pop %v2712
      %v2714 = vmul.f32 %v2681, 1.442695
      %v2715 = vpow.pop %v2714
      %v2716 = vmul.f32 %v2682, 1.442695
      %v2717 = vpow.pop %v2716
      %v2718 = vmul.f32 %v2683, 1.442695
      %v2719 = vpow.pop %v2718
      %v2720 = vmul.f32 %v2684, 1.442695
      %v2721 = vpow.pop %v2720
      %v2722 = vmul.f32 %v2685, 1.442695
      %v2723 = vpow.pop %v2722
      %v2724 = vmul.f32 %v2686, 1.442695
      %v2725 = vpow.pop %v2724
      %v2726 = vmul.f32 %v2687, 1.442695
      %v2727 = vpow.pop %v2726
      %v2728 = vmul.f32 %v2688, 1.442695
      %v2729 = vpow.pop %v2728
      %v2730 = vmul.f32 %v2689, 1.442695
      %v2731 = vpow.pop %v2730
      %v2732 = vmul.f32 %v2690, 1.442695
      %v2733 = vpow.pop %v2732
      %v2734 = vmul.f32 %v2691, 1.442695
      %v2735 = vpow.pop %v2734
      %v2736 = vmul.f32 %v2692, 1.442695
      %v2737 = vpow.pop %v2736
      %v2738 = vmul.f32 %v2693, 1.442695
      %v2739 = vpow.pop %v2738
      %v2740 = vmul.f32 %v2694, 1.442695
      %v2741 = vpow.pop %v2740
      %v2742 = vmul.f32 %v2695, 1.442695
      %v2743 = vpow.pop %v2742
      %v2744 = vmul.f32 %v2696, 1.442695
      %v2745 = vpow.pop %v2744
      %v2746 = vmul.f32 %v2697, 1.442695
      %v2747 = vpow.pop %v2746
      %v2748 = vmul.f32 %v2698, 1.442695
      %v2749 = vpow.pop %v2748
      %v2750 = vmul.f32 %v2699, 1.442695
      %v2751 = vpow.pop %v2750
      %v2752 = vmul.f32 %v2700, 1.442695
      %v2753 = vpow.pop %v2752
      %v2754 = vmul.f32 %v2701, 1.442695
      %v2755 = vpow.pop %v2754
      %v2756 = vmul.f32 %v2702, 1.442695
      %v2757 = vpow.pop %v2756
      %v2758 = vmul.f32 %v2703, 1.442695
      %v2759 = vpow.pop %v2758
      %v2760 = vmul.f32 %v2704, 1.442695
      %v2761 = vpow.pop %v2760
      %v2762 = vmul.f32 %v2705, 1.442695
      %v2763 = vpow.pop %v2762
      %v2764 = vmul.f32 %v2706, 1.442695
      %v2765 = vpow.pop %v2764
      %v2766 = vmul.f32 %v2707, 1.442695
      %v2767 = vpow.pop %v2766
      %v2768 = vmul.f32 %v2708, 1.442695
      %v2769 = vpow.pop %v2768
      %v2770 = vmul.f32 %v2709, 1.442695
      %v2771 = vpow.pop %v2770
      %v2772 = vmul.f32 %v2710, 1.442695
      %v2773 = vpow.pop %v2772
      %v2774 = vmul.f32 %v2711, 1.442695
      %v2775 = vpow.pop %v2774
      %v2776 = vadd.f32 %v2713, 1.0
      %v2777 = vadd.f32 %v2715, 1.0
      %v2778 = vadd.f32 %v2717, 1.0
      %v2779 = vadd.f32 %v2719, 1.0
      %v2780 = vadd.f32 %v2721, 1.0
      %v2781 = vadd.f32 %v2723, 1.0
      %v2782 = vadd.f32 %v2725, 1.0
      %v2783 = vadd.f32 %v2727, 1.0
      %v2784 = vadd.f32 %v2729, 1.0
      %v2785 = vadd.f32 %v2731, 1.0
      %v2786 = vadd.f32 %v2733, 1.0
      %v2787 = vadd.f32 %v2735, 1.0
      %v2788 = vadd.f32 %v2737, 1.0
      %v2789 = vadd.f32 %v2739, 1.0
      %v2790 = vadd.f32 %v2741, 1.0
      %v2791 = vadd.f32 %v2743, 1.0
      %v2792 = vadd.f32 %v2745, 1.0
      %v2793 = vadd.f32 %v2747, 1.0
      %v2794 = vadd.f32 %v2749, 1.0
      %v2795 = vadd.f32 %v2751, 1.0
      %v2796 = vadd.f32 %v2753, 1.0
      %v2797 = vadd.f32 %v2755, 1.0
      %v2798 = vadd.f32 %v2757, 1.0
      %v2799 = vadd.f32 %v2759, 1.0
      %v2800 = vadd.f32 %v2761, 1.0
      %v2801 = vadd.f32 %v2763, 1.0
      %v2802 = vadd.f32 %v2765, 1.0
      %v2803 = vadd.f32 %v2767, 1.0
      %v2804 = vadd.f32 %v2769, 1.0
      %v2805 = vadd.f32 %v2771, 1.0
      %v2806 = vadd.f32 %v2773, 1.0
      %v2807 = vadd.f32 %v2775, 1.0
      %v2808 = vrcp.pop %v2776
      %v2809 = vmul.f32 1.0, %v2808
      %v2810 = vrcp.pop %v2777
      %v2811 = vmul.f32 1.0, %v2810
      %v2812 = vrcp.pop %v2778
      %v2813 = vmul.f32 1.0, %v2812
      %v2814 = vrcp.pop %v2779
      %v2815 = vmul.f32 1.0, %v2814
      %v2816 = vrcp.pop %v2780
      %v2817 = vmul.f32 1.0, %v2816
      %v2818 = vrcp.pop %v2781
      %v2819 = vmul.f32 1.0, %v2818
      %v2820 = vrcp.pop %v2782
      %v2821 = vmul.f32 1.0, %v2820
      %v2822 = vrcp.pop %v2783
      %v2823 = vmul.f32 1.0, %v2822
      %v2824 = vrcp.pop %v2784
      %v2825 = vmul.f32 1.0, %v2824
      %v2826 = vrcp.pop %v2785
      %v2827 = vmul.f32 1.0, %v2826
      %v2828 = vrcp.pop %v2786
      %v2829 = vmul.f32 1.0, %v2828
      %v2830 = vrcp.pop %v2787
      %v2831 = vmul.f32 1.0, %v2830
      %v2832 = vrcp.pop %v2788
      %v2833 = vmul.f32 1.0, %v2832
      %v2834 = vrcp.pop %v2789
      %v2835 = vmul.f32 1.0, %v2834
      %v2836 = vrcp.pop %v2790
      %v2837 = vmul.f32 1.0, %v2836
      %v2838 = vrcp.pop %v2791
      %v2839 = vmul.f32 1.0, %v2838
      %v2840 = vrcp.pop %v2792
      %v2841 = vmul.f32 1.0, %v2840
      %v2842 = vrcp.pop %v2793
      %v2843 = vmul.f32 1.0, %v2842
      %v2844 = vrcp.pop %v2794
      %v2845 = vmul.f32 1.0, %v2844
      %v2846 = vrcp.pop %v2795
      %v2847 = vmul.f32 1.0, %v2846
      %v2848 = vrcp.pop %v2796
      %v2849 = vmul.f32 1.0, %v2848
      %v2850 = vrcp.pop %v2797
      %v2851 = vmul.f32 1.0, %v2850
      %v2852 = vrcp.pop %v2798
      %v2853 = vmul.f32 1.0, %v2852
      %v2854 = vrcp.pop %v2799
      %v2855 = vmul.f32 1.0, %v2854
      %v2856 = vrcp.pop %v2800
      %v2857 = vmul.f32 1.0, %v2856
      %v2858 = vrcp.pop %v2801
      %v2859 = vmul.f32 1.0, %v2858
      %v2860 = vrcp.pop %v2802
      %v2861 = vmul.f32 1.0, %v2860
      %v2862 = vrcp.pop %v2803
      %v2863 = vmul.f32 1.0, %v2862
      %v2864 = vrcp.pop %v2804
      %v2865 = vmul.f32 1.0, %v2864
      %v2866 = vrcp.pop %v2805
      %v2867 = vmul.f32 1.0, %v2866
      %v2868 = vrcp.pop %v2806
      %v2869 = vmul.f32 1.0, %v2868
      %v2870 = vrcp.pop %v2807
      %v2871 = vmul.f32 1.0, %v2870
      %v2872 = vmul.f32 %v2554, %v2809
      %v2873 = vmul.f32 %v2557, %v2811
      %v2874 = vmul.f32 %v2562, %v2813
      %v2875 = vmul.f32 %v2565, %v2815
      %v2876 = vmul.f32 %v2570, %v2817
      %v2877 = vmul.f32 %v2573, %v2819
      %v2878 = vmul.f32 %v2578, %v2821
      %v2879 = vmul.f32 %v2581, %v2823
      %v2880 = vmul.f32 %v2586, %v2825
      %v2881 = vmul.f32 %v2589, %v2827
      %v2882 = vmul.f32 %v2594, %v2829
      %v2883 = vmul.f32 %v2597, %v2831
      %v2884 = vmul.f32 %v2602, %v2833
      %v2885 = vmul.f32 %v2605, %v2835
      %v2886 = vmul.f32 %v2610, %v2837
      %v2887 = vmul.f32 %v2613, %v2839
      %v2888 = vmul.f32 %v2618, %v2841
      %v2889 = vmul.f32 %v2621, %v2843
      %v2890 = vmul.f32 %v2626, %v2845
      %v2891 = vmul.f32 %v2629, %v2847
      %v2892 = vmul.f32 %v2634, %v2849
      %v2893 = vmul.f32 %v2637, %v2851
      %v2894 = vmul.f32 %v2642, %v2853
      %v2895 = vmul.f32 %v2645, %v2855
      %v2896 = vmul.f32 %v2650, %v2857
      %v2897 = vmul.f32 %v2653, %v2859
      %v2898 = vmul.f32 %v2658, %v2861
      %v2899 = vmul.f32 %v2661, %v2863
      %v2900 = vmul.f32 %v2666, %v2865
      %v2901 = vmul.f32 %v2669, %v2867
      %v2902 = vmul.f32 %v2674, %v2869
      %v2903 = vmul.f32 %v2677, %v2871
      %s2904 = smul.addr %s2444, 4
      %s2905 = scalar_lea.vmem %s14, %s2904
      %v2906 = vld [vmem:[%s2905] sm:$0xf]
      %v2907 = vld [vmem:[%s2905 + $0x4] sm:$0xf]
      %v2908 = vld [vmem:[%s2905 + $0x8] sm:$0xf]
      %v2909 = vld [vmem:[%s2905 + $0xc] sm:$0xf]
      %s2910 = scalar_lea.vmem %s15, %s41
      %v2911 = vld [vmem:[%s2910] sm:$0x1]
      %v2913 = vlaneseq
      %v2914 = vshrl.u32 %v2913, 7
      %v2915 = vsub.s32 0, %v2914
      %v2916 = vrot.slane %v2911, %v2915
      %v2922 = vunpack.c.l.b16 %v2906
      %v2923 = vunpack.c.l.b16 %v2907
      %v2924 = vunpack.c.l.b16 %v2908
      %v2925 = vunpack.c.l.b16 %v2909
      %v2926 = vpack.c.b16 %v2923, %v2922
      %v2927 = vpack.c.b16 %v2925, %v2924
      %v2931 = vsel %vm1124, %v2428, 0
      %v2934 = vsel %vm1124, %v2429, 0
      %v2937 = vsel %vm1124, %v2430, 0
      %v2940 = vsel %vm1124, %v2431, 0
      %v2943 = vsel %vm1124, %v2432, 0
      %v2946 = vsel %vm1124, %v2433, 0
      %v2949 = vsel %vm1124, %v2434, 0
      %v2952 = vsel %vm1124, %v2435, 0
      %v2955 = vsel %vm1124, %v2436, 0
      %v2958 = vsel %vm1124, %v2437, 0
      %v2961 = vsel %vm1124, %v2438, 0
      %v2964 = vsel %vm1124, %v2439, 0
      %v2967 = vsel %vm1124, %v2440, 0
      %v2970 = vsel %vm1124, %v2441, 0
      %v2973 = vsel %vm1124, %v2442, 0
      %v2976 = vsel %vm1124, %v2443, 0
      %2978 = vmatprep.subr.bf16.mxu0 0
      %2979 = vmatpush1.bf16.msra.mxu0 %v2926
      %2980 = vmatprep.subr.bf16.mxu0 0
      %2981 = vmatpush1.bf16.msra.mxu0 %v2927
      %2982 = vmatprep.subr.bf16.mxu0 0
      %2983 = vmatpush1.bf16.msra.mxu0 0
      %2984 = vmatprep.subr.bf16.mxu0 0
      %2985 = vmatpush1.bf16.msra.mxu0 0
      %2986 = vmatprep.subr.bf16.mxu0 0
      %2987 = vmatpush1.bf16.msra.mxu0 0
      %2988 = vmatprep.subr.bf16.mxu0 0
      %2989 = vmatpush1.bf16.msra.mxu0 0
      %2990 = vmatprep.subr.bf16.mxu0 0
      %2991 = vmatpush1.bf16.msra.mxu0 0
      %2992 = vmatprep.subr.bf16.mxu0 0
      %2993 = vmatpush1.bf16.msra.mxu0 0
      %2994 = vmatprep.subr.bf16.mxu0 0
      %2995 = vmatpush1.bf16.msra.mxu0 0
      %2996 = vmatprep.subr.bf16.mxu0 0
      %2997 = vmatpush1.bf16.msra.mxu0 0
      %2998 = vmatprep.subr.bf16.mxu0 0
      %2999 = vmatpush1.bf16.msra.mxu0 0
      %3000 = vmatprep.subr.bf16.mxu0 0
      %3001 = vmatpush1.bf16.msra.mxu0 0
      %3002 = vmatprep.subr.bf16.mxu0 0
      %3003 = vmatpush1.bf16.msra.mxu0 0
      %3004 = vmatprep.subr.bf16.mxu0 0
      %3005 = vmatpush1.bf16.msra.mxu0 0
      %3006 = vmatprep.subr.bf16.mxu0 0
      %3007 = vmatpush1.bf16.msra.mxu0 0
      %3008 = vmatprep.subr.bf16.mxu0 0
      %3009 = vmatpush1.bf16.msra.mxu0 0
      %3010 = vmatprep.mubr.bf16.mxu0 0
      %3011 = vmatmul.mubr.bf16.gmra.mrb[0].mxu0 %v2931
      %v3012 = vpop.f32.mrb[0].mxu0
      %v3013 = vadd.f32 %v2916, %v3012
      %v3014 = vpop.f32.mrb[0].mxu0
      %v3015 = vpop.f32.mrb[0].mxu0
      %v3016 = vadd.f32 %v2916, %v3015
      %v3017 = vpop.f32.mrb[0].mxu0
      %3018 = vmatprep.mubr.bf16.mxu0 0
      %3019 = vmatmul.mubr.bf16.gmra.mrb[0].mxu0 %v2934
      %v3020 = vpop.f32.mrb[0].mxu0
      %v3021 = vadd.f32 %v2916, %v3020
      %v3022 = vpop.f32.mrb[0].mxu0
      %v3023 = vpop.f32.mrb[0].mxu0
      %v3024 = vadd.f32 %v2916, %v3023
      %v3025 = vpop.f32.mrb[0].mxu0
      %3026 = vmatprep.mubr.bf16.mxu0 0
      %3027 = vmatmul.mubr.bf16.gmra.mrb[0].mxu0 %v2937
      %v3028 = vpop.f32.mrb[0].mxu0
      %v3029 = vadd.f32 %v2916, %v3028
      %v3030 = vpop.f32.mrb[0].mxu0
      %v3031 = vpop.f32.mrb[0].mxu0
      %v3032 = vadd.f32 %v2916, %v3031
      %v3033 = vpop.f32.mrb[0].mxu0
      %3034 = vmatprep.mubr.bf16.mxu0 0
      %3035 = vmatmul.mubr.bf16.gmra.mrb[0].mxu0 %v2940
      %v3036 = vpop.f32.mrb[0].mxu0
      %v3037 = vadd.f32 %v2916, %v3036
      %v3038 = vpop.f32.mrb[0].mxu0
      %v3039 = vpop.f32.mrb[0].mxu0
      %v3040 = vadd.f32 %v2916, %v3039
      %v3041 = vpop.f32.mrb[0].mxu0
      %3042 = vmatprep.mubr.bf16.mxu0 0
      %3043 = vmatmul.mubr.bf16.gmra.mrb[0].mxu0 %v2943
      %v3044 = vpop.f32.mrb[0].mxu0
      %v3045 = vadd.f32 %v2916, %v3044
      %v3046 = vpop.f32.mrb[0].mxu0
      %v3047 = vpop.f32.mrb[0].mxu0
      %v3048 = vadd.f32 %v2916, %v3047
      %v3049 = vpop.f32.mrb[0].mxu0
      %3050 = vmatprep.mubr.bf16.mxu0 0
      %3051 = vmatmul.mubr.bf16.gmra.mrb[0].mxu0 %v2946
      %v3052 = vpop.f32.mrb[0].mxu0
      %v3053 = vadd.f32 %v2916, %v3052
      %v3054 = vpop.f32.mrb[0].mxu0
      %v3055 = vpop.f32.mrb[0].mxu0
      %v3056 = vadd.f32 %v2916, %v3055
      %v3057 = vpop.f32.mrb[0].mxu0
      %3058 = vmatprep.mubr.bf16.mxu0 0
      %3059 = vmatmul.mubr.bf16.gmra.mrb[0].mxu0 %v2949
      %v3060 = vpop.f32.mrb[0].mxu0
      %v3061 = vadd.f32 %v2916, %v3060
      %v3062 = vpop.f32.mrb[0].mxu0
      %v3063 = vpop.f32.mrb[0].mxu0
      %v3064 = vadd.f32 %v2916, %v3063
      %v3065 = vpop.f32.mrb[0].mxu0
      %3066 = vmatprep.mubr.bf16.mxu0 0
      %3067 = vmatmul.mubr.bf16.gmra.mrb[0].mxu0 %v2952
      %v3068 = vpop.f32.mrb[0].mxu0
      %v3069 = vadd.f32 %v2916, %v3068
      %v3070 = vpop.f32.mrb[0].mxu0
      %v3071 = vpop.f32.mrb[0].mxu0
      %v3072 = vadd.f32 %v2916, %v3071
      %v3073 = vpop.f32.mrb[0].mxu0
      %3074 = vmatprep.mubr.bf16.mxu0 0
      %3075 = vmatmul.mubr.bf16.gmra.mrb[0].mxu0 %v2955
      %v3076 = vpop.f32.mrb[0].mxu0
      %v3077 = vadd.f32 %v2916, %v3076
      %v3078 = vpop.f32.mrb[0].mxu0
      %v3079 = vpop.f32.mrb[0].mxu0
      %v3080 = vadd.f32 %v2916, %v3079
      %v3081 = vpop.f32.mrb[0].mxu0
      %3082 = vmatprep.mubr.bf16.mxu0 0
      %3083 = vmatmul.mubr.bf16.gmra.mrb[0].mxu0 %v2958
      %v3084 = vpop.f32.mrb[0].mxu0
      %v3085 = vadd.f32 %v2916, %v3084
      %v3086 = vpop.f32.mrb[0].mxu0
      %v3087 = vpop.f32.mrb[0].mxu0
      %v3088 = vadd.f32 %v2916, %v3087
      %v3089 = vpop.f32.mrb[0].mxu0
      %3090 = vmatprep.mubr.bf16.mxu0 0
      %3091 = vmatmul.mubr.bf16.gmra.mrb[0].mxu0 %v2961
      %v3092 = vpop.f32.mrb[0].mxu0
      %v3093 = vadd.f32 %v2916, %v3092
      %v3094 = vpop.f32.mrb[0].mxu0
      %v3095 = vpop.f32.mrb[0].mxu0
      %v3096 = vadd.f32 %v2916, %v3095
      %v3097 = vpop.f32.mrb[0].mxu0
      %3098 = vmatprep.mubr.bf16.mxu0 0
      %3099 = vmatmul.mubr.bf16.gmra.mrb[0].mxu0 %v2964
      %v3100 = vpop.f32.mrb[0].mxu0
      %v3101 = vadd.f32 %v2916, %v3100
      %v3102 = vpop.f32.mrb[0].mxu0
      %v3103 = vpop.f32.mrb[0].mxu0
      %v3104 = vadd.f32 %v2916, %v3103
      %v3105 = vpop.f32.mrb[0].mxu0
      %3106 = vmatprep.mubr.bf16.mxu0 0
      %3107 = vmatmul.mubr.bf16.gmra.mrb[0].mxu0 %v2967
      %v3108 = vpop.f32.mrb[0].mxu0
      %v3109 = vadd.f32 %v2916, %v3108
      %v3110 = vpop.f32.mrb[0].mxu0
      %v3111 = vpop.f32.mrb[0].mxu0
      %v3112 = vadd.f32 %v2916, %v3111
      %v3113 = vpop.f32.mrb[0].mxu0
      %3114 = vmatprep.mubr.bf16.mxu0 0
      %3115 = vmatmul.mubr.bf16.gmra.mrb[0].mxu0 %v2970
      %v3116 = vpop.f32.mrb[0].mxu0
      %v3117 = vadd.f32 %v2916, %v3116
      %v3118 = vpop.f32.mrb[0].mxu0
      %v3119 = vpop.f32.mrb[0].mxu0
      %v3120 = vadd.f32 %v2916, %v3119
      %v3121 = vpop.f32.mrb[0].mxu0
      %3122 = vmatprep.mubr.bf16.mxu0 0
      %3123 = vmatmul.mubr.bf16.gmra.mrb[0].mxu0 %v2973
      %v3124 = vpop.f32.mrb[0].mxu0
      %v3125 = vadd.f32 %v2916, %v3124
      %v3126 = vpop.f32.mrb[0].mxu0
      %v3127 = vpop.f32.mrb[0].mxu0
      %v3128 = vadd.f32 %v2916, %v3127
      %v3129 = vpop.f32.mrb[0].mxu0
      %3130 = vmatprep.mubr.bf16.mxu0 0
      %3131 = vmatmul.mubr.bf16.gmra.mrb[0].mxu0 %v2976
      %v3132 = vpop.f32.mrb[0].mxu0
      %v3133 = vadd.f32 %v2916, %v3132
      %v3134 = vpop.f32.mrb[0].mxu0
      %v3135 = vpop.f32.mrb[0].mxu0
      %v3136 = vadd.f32 %v2916, %v3135
      %v3137 = vpop.f32.mrb[0].mxu0
      %3138 = vdwg.mxu0
      %v3139 = vxor.u32 %v3013, 2147483648
      %v3140 = vxor.u32 %v3016, 2147483648
      %v3141 = vxor.u32 %v3021, 2147483648
      %v3142 = vxor.u32 %v3024, 2147483648
      %v3143 = vxor.u32 %v3029, 2147483648
      %v3144 = vxor.u32 %v3032, 2147483648
      %v3145 = vxor.u32 %v3037, 2147483648
      %v3146 = vxor.u32 %v3040, 2147483648
      %v3147 = vxor.u32 %v3045, 2147483648
      %v3148 = vxor.u32 %v3048, 2147483648
      %v3149 = vxor.u32 %v3053, 2147483648
      %v3150 = vxor.u32 %v3056, 2147483648
      %v3151 = vxor.u32 %v3061, 2147483648
      %v3152 = vxor.u32 %v3064, 2147483648
      %v3153 = vxor.u32 %v3069, 2147483648
      %v3154 = vxor.u32 %v3072, 2147483648
      %v3155 = vxor.u32 %v3077, 2147483648
      %v3156 = vxor.u32 %v3080, 2147483648
      %v3157 = vxor.u32 %v3085, 2147483648
      %v3158 = vxor.u32 %v3088, 2147483648
      %v3159 = vxor.u32 %v3093, 2147483648
      %v3160 = vxor.u32 %v3096, 2147483648
      %v3161 = vxor.u32 %v3101, 2147483648
      %v3162 = vxor.u32 %v3104, 2147483648
      %v3163 = vxor.u32 %v3109, 2147483648
      %v3164 = vxor.u32 %v3112, 2147483648
      %v3165 = vxor.u32 %v3117, 2147483648
      %v3166 = vxor.u32 %v3120, 2147483648
      %v3167 = vxor.u32 %v3125, 2147483648
      %v3168 = vxor.u32 %v3128, 2147483648
      %v3169 = vxor.u32 %v3133, 2147483648
      %v3170 = vxor.u32 %v3136, 2147483648
      %v3171 = vmul.f32 %v3139, 1.442695
      %v3172 = vpow.pop %v3171
      %v3173 = vmul.f32 %v3140, 1.442695
      %v3174 = vpow.pop %v3173
      %v3175 = vmul.f32 %v3141, 1.442695
      %v3176 = vpow.pop %v3175
      %v3177 = vmul.f32 %v3142, 1.442695
      %v3178 = vpow.pop %v3177
      %v3179 = vmul.f32 %v3143, 1.442695
      %v3180 = vpow.pop %v3179
      %v3181 = vmul.f32 %v3144, 1.442695
      %v3182 = vpow.pop %v3181
      %v3183 = vmul.f32 %v3145, 1.442695
      %v3184 = vpow.pop %v3183
      %v3185 = vmul.f32 %v3146, 1.442695
      %v3186 = vpow.pop %v3185
      %v3187 = vmul.f32 %v3147, 1.442695
      %v3188 = vpow.pop %v3187
      %v3189 = vmul.f32 %v3148, 1.442695
      %v3190 = vpow.pop %v3189
      %v3191 = vmul.f32 %v3149, 1.442695
      %v3192 = vpow.pop %v3191
      %v3193 = vmul.f32 %v3150, 1.442695
      %v3194 = vpow.pop %v3193
      %v3195 = vmul.f32 %v3151, 1.442695
      %v3196 = vpow.pop %v3195
      %v3197 = vmul.f32 %v3152, 1.442695
      %v3198 = vpow.pop %v3197
      %v3199 = vmul.f32 %v3153, 1.442695
      %v3200 = vpow.pop %v3199
      %v3201 = vmul.f32 %v3154, 1.442695
      %v3202 = vpow.pop %v3201
      %v3203 = vmul.f32 %v3155, 1.442695
      %v3204 = vpow.pop %v3203
      %v3205 = vmul.f32 %v3156, 1.442695
      %v3206 = vpow.pop %v3205
      %v3207 = vmul.f32 %v3157, 1.442695
      %v3208 = vpow.pop %v3207
      %v3209 = vmul.f32 %v3158, 1.442695
      %v3210 = vpow.pop %v3209
      %v3211 = vmul.f32 %v3159, 1.442695
      %v3212 = vpow.pop %v3211
      %v3213 = vmul.f32 %v3160, 1.442695
      %v3214 = vpow.pop %v3213
      %v3215 = vmul.f32 %v3161, 1.442695
      %v3216 = vpow.pop %v3215
      %v3217 = vmul.f32 %v3162, 1.442695
      %v3218 = vpow.pop %v3217
      %v3219 = vmul.f32 %v3163, 1.442695
      %v3220 = vpow.pop %v3219
      %v3221 = vmul.f32 %v3164, 1.442695
      %v3222 = vpow.pop %v3221
      %v3223 = vmul.f32 %v3165, 1.442695
      %v3224 = vpow.pop %v3223
      %v3225 = vmul.f32 %v3166, 1.442695
      %v3226 = vpow.pop %v3225
      %v3227 = vmul.f32 %v3167, 1.442695
      %v3228 = vpow.pop %v3227
      %v3229 = vmul.f32 %v3168, 1.442695
      %v3230 = vpow.pop %v3229
      %v3231 = vmul.f32 %v3169, 1.442695
      %v3232 = vpow.pop %v3231
      %v3233 = vmul.f32 %v3170, 1.442695
      %v3234 = vpow.pop %v3233
      %v3235 = vadd.f32 %v3172, 1.0
      %v3236 = vadd.f32 %v3174, 1.0
      %v3237 = vadd.f32 %v3176, 1.0
      %v3238 = vadd.f32 %v3178, 1.0
      %v3239 = vadd.f32 %v3180, 1.0
      %v3240 = vadd.f32 %v3182, 1.0
      %v3241 = vadd.f32 %v3184, 1.0
      %v3242 = vadd.f32 %v3186, 1.0
      %v3243 = vadd.f32 %v3188, 1.0
      %v3244 = vadd.f32 %v3190, 1.0
      %v3245 = vadd.f32 %v3192, 1.0
      %v3246 = vadd.f32 %v3194, 1.0
      %v3247 = vadd.f32 %v3196, 1.0
      %v3248 = vadd.f32 %v3198, 1.0
      %v3249 = vadd.f32 %v3200, 1.0
      %v3250 = vadd.f32 %v3202, 1.0
      %v3251 = vadd.f32 %v3204, 1.0
      %v3252 = vadd.f32 %v3206, 1.0
      %v3253 = vadd.f32 %v3208, 1.0
      %v3254 = vadd.f32 %v3210, 1.0
      %v3255 = vadd.f32 %v3212, 1.0
      %v3256 = vadd.f32 %v3214, 1.0
      %v3257 = vadd.f32 %v3216, 1.0
      %v3258 = vadd.f32 %v3218, 1.0
      %v3259 = vadd.f32 %v3220, 1.0
      %v3260 = vadd.f32 %v3222, 1.0
      %v3261 = vadd.f32 %v3224, 1.0
      %v3262 = vadd.f32 %v3226, 1.0
      %v3263 = vadd.f32 %v3228, 1.0
      %v3264 = vadd.f32 %v3230, 1.0
      %v3265 = vadd.f32 %v3232, 1.0
      %v3266 = vadd.f32 %v3234, 1.0
      %v3267 = vrcp.pop %v3235
      %v3268 = vmul.f32 1.0, %v3267
      %v3269 = vrcp.pop %v3236
      %v3270 = vmul.f32 1.0, %v3269
      %v3271 = vrcp.pop %v3237
      %v3272 = vmul.f32 1.0, %v3271
      %v3273 = vrcp.pop %v3238
      %v3274 = vmul.f32 1.0, %v3273
      %v3275 = vrcp.pop %v3239
      %v3276 = vmul.f32 1.0, %v3275
      %v3277 = vrcp.pop %v3240
      %v3278 = vmul.f32 1.0, %v3277
      %v3279 = vrcp.pop %v3241
      %v3280 = vmul.f32 1.0, %v3279
      %v3281 = vrcp.pop %v3242
      %v3282 = vmul.f32 1.0, %v3281
      %v3283 = vrcp.pop %v3243
      %v3284 = vmul.f32 1.0, %v3283
      %v3285 = vrcp.pop %v3244
      %v3286 = vmul.f32 1.0, %v3285
      %v3287 = vrcp.pop %v3245
      %v3288 = vmul.f32 1.0, %v3287
      %v3289 = vrcp.pop %v3246
      %v3290 = vmul.f32 1.0, %v3289
      %v3291 = vrcp.pop %v3247
      %v3292 = vmul.f32 1.0, %v3291
      %v3293 = vrcp.pop %v3248
      %v3294 = vmul.f32 1.0, %v3293
      %v3295 = vrcp.pop %v3249
      %v3296 = vmul.f32 1.0, %v3295
      %v3297 = vrcp.pop %v3250
      %v3298 = vmul.f32 1.0, %v3297
      %v3299 = vrcp.pop %v3251
      %v3300 = vmul.f32 1.0, %v3299
      %v3301 = vrcp.pop %v3252
      %v3302 = vmul.f32 1.0, %v3301
      %v3303 = vrcp.pop %v3253
      %v3304 = vmul.f32 1.0, %v3303
      %v3305 = vrcp.pop %v3254
      %v3306 = vmul.f32 1.0, %v3305
      %v3307 = vrcp.pop %v3255
      %v3308 = vmul.f32 1.0, %v3307
      %v3309 = vrcp.pop %v3256
      %v3310 = vmul.f32 1.0, %v3309
      %v3311 = vrcp.pop %v3257
      %v3312 = vmul.f32 1.0, %v3311
      %v3313 = vrcp.pop %v3258
      %v3314 = vmul.f32 1.0, %v3313
      %v3315 = vrcp.pop %v3259
      %v3316 = vmul.f32 1.0, %v3315
      %v3317 = vrcp.pop %v3260
      %v3318 = vmul.f32 1.0, %v3317
      %v3319 = vrcp.pop %v3261
      %v3320 = vmul.f32 1.0, %v3319
      %v3321 = vrcp.pop %v3262
      %v3322 = vmul.f32 1.0, %v3321
      %v3323 = vrcp.pop %v3263
      %v3324 = vmul.f32 1.0, %v3323
      %v3325 = vrcp.pop %v3264
      %v3326 = vmul.f32 1.0, %v3325
      %v3327 = vrcp.pop %v3265
      %v3328 = vmul.f32 1.0, %v3327
      %v3329 = vrcp.pop %v3266
      %v3330 = vmul.f32 1.0, %v3329
      %v3331 = vmul.f32 %v3013, %v3268
      %v3332 = vmul.f32 %v3016, %v3270
      %v3333 = vmul.f32 %v3021, %v3272
      %v3334 = vmul.f32 %v3024, %v3274
      %v3335 = vmul.f32 %v3029, %v3276
      %v3336 = vmul.f32 %v3032, %v3278
      %v3337 = vmul.f32 %v3037, %v3280
      %v3338 = vmul.f32 %v3040, %v3282
      %v3339 = vmul.f32 %v3045, %v3284
      %v3340 = vmul.f32 %v3048, %v3286
      %v3341 = vmul.f32 %v3053, %v3288
      %v3342 = vmul.f32 %v3056, %v3290
      %v3343 = vmul.f32 %v3061, %v3292
      %v3344 = vmul.f32 %v3064, %v3294
      %v3345 = vmul.f32 %v3069, %v3296
      %v3346 = vmul.f32 %v3072, %v3298
      %v3347 = vmul.f32 %v3077, %v3300
      %v3348 = vmul.f32 %v3080, %v3302
      %v3349 = vmul.f32 %v3085, %v3304
      %v3350 = vmul.f32 %v3088, %v3306
      %v3351 = vmul.f32 %v3093, %v3308
      %v3352 = vmul.f32 %v3096, %v3310
      %v3353 = vmul.f32 %v3101, %v3312
      %v3354 = vmul.f32 %v3104, %v3314
      %v3355 = vmul.f32 %v3109, %v3316
      %v3356 = vmul.f32 %v3112, %v3318
      %v3357 = vmul.f32 %v3117, %v3320
      %v3358 = vmul.f32 %v3120, %v3322
      %v3359 = vmul.f32 %v3125, %v3324
      %v3360 = vmul.f32 %v3128, %v3326
      %v3361 = vmul.f32 %v3133, %v3328
      %v3362 = vmul.f32 %v3136, %v3330
      %s3363 = scalar_lea.vmem %s10, %s41
      %v3364 = vld [vmem:[%s3363] sm:$0x1]
      %v3366 = vlaneseq
      %v3367 = vshrl.u32 %v3366, 7
      %v3368 = vsub.s32 0, %v3367
      %v3369 = vrot.slane %v3364, %v3368
      %v3371 = vmul.f32 %v2872, %v3369
      %v3372 = vmul.f32 %v2873, %v3369
      %v3373 = vmul.f32 %v2874, %v3369
      %v3374 = vmul.f32 %v2875, %v3369
      %v3375 = vmul.f32 %v2876, %v3369
      %v3376 = vmul.f32 %v2877, %v3369
      %v3377 = vmul.f32 %v2878, %v3369
      %v3378 = vmul.f32 %v2879, %v3369
      %v3379 = vmul.f32 %v2880, %v3369
      %v3380 = vmul.f32 %v2881, %v3369
      %v3381 = vmul.f32 %v2882, %v3369
      %v3382 = vmul.f32 %v2883, %v3369
      %v3383 = vmul.f32 %v2884, %v3369
      %v3384 = vmul.f32 %v2885, %v3369
      %v3385 = vmul.f32 %v2886, %v3369
      %v3386 = vmul.f32 %v2887, %v3369
      %v3387 = vmul.f32 %v2888, %v3369
      %v3388 = vmul.f32 %v2889, %v3369
      %v3389 = vmul.f32 %v2890, %v3369
      %v3390 = vmul.f32 %v2891, %v3369
      %v3391 = vmul.f32 %v2892, %v3369
      %v3392 = vmul.f32 %v2893, %v3369
      %v3393 = vmul.f32 %v2894, %v3369
      %v3394 = vmul.f32 %v2895, %v3369
      %v3395 = vmul.f32 %v2896, %v3369
      %v3396 = vmul.f32 %v2897, %v3369
      %v3397 = vmul.f32 %v2898, %v3369
      %v3398 = vmul.f32 %v2899, %v3369
      %v3399 = vmul.f32 %v2900, %v3369
      %v3400 = vmul.f32 %v2901, %v3369
      %v3401 = vmul.f32 %v2902, %v3369
      %v3402 = vmul.f32 %v2903, %v3369
      %v3403 = vsel %vm1124, %v3371, 0.0
      %3404 = vadd.xlane.f32.xlu0 %v3403
      %v3405 = vpop.xlane.xlu0 %3404
      %v3406 = vsel %vm1124, %v3372, 0.0
      %3407 = vadd.xlane.f32.xlu0 %v3406
      %v3408 = vpop.xlane.xlu0 %3407
      %v3409 = vsel %vm1124, %v3373, 0.0
      %3410 = vadd.xlane.f32.xlu0 %v3409
      %v3411 = vpop.xlane.xlu0 %3410
      %v3412 = vsel %vm1124, %v3374, 0.0
      %3413 = vadd.xlane.f32.xlu0 %v3412
      %v3414 = vpop.xlane.xlu0 %3413
      %v3415 = vsel %vm1124, %v3375, 0.0
      %3416 = vadd.xlane.f32.xlu0 %v3415
      %v3417 = vpop.xlane.xlu0 %3416
      %v3418 = vsel %vm1124, %v3376, 0.0
      %3419 = vadd.xlane.f32.xlu0 %v3418
      %v3420 = vpop.xlane.xlu0 %3419
      %v3421 = vsel %vm1124, %v3377, 0.0
      %3422 = vadd.xlane.f32.xlu0 %v3421
      %v3423 = vpop.xlane.xlu0 %3422
      %v3424 = vsel %vm1124, %v3378, 0.0
      %3425 = vadd.xlane.f32.xlu0 %v3424
      %v3426 = vpop.xlane.xlu0 %3425
      %v3427 = vsel %vm1124, %v3379, 0.0
      %3428 = vadd.xlane.f32.xlu0 %v3427
      %v3429 = vpop.xlane.xlu0 %3428
      %v3430 = vsel %vm1124, %v3380, 0.0
      %3431 = vadd.xlane.f32.xlu0 %v3430
      %v3432 = vpop.xlane.xlu0 %3431
      %v3433 = vsel %vm1124, %v3381, 0.0
      %3434 = vadd.xlane.f32.xlu0 %v3433
      %v3435 = vpop.xlane.xlu0 %3434
      %v3436 = vsel %vm1124, %v3382, 0.0
      %3437 = vadd.xlane.f32.xlu0 %v3436
      %v3438 = vpop.xlane.xlu0 %3437
      %v3439 = vsel %vm1124, %v3383, 0.0
      %3440 = vadd.xlane.f32.xlu0 %v3439
      %v3441 = vpop.xlane.xlu0 %3440
      %v3442 = vsel %vm1124, %v3384, 0.0
      %3443 = vadd.xlane.f32.xlu0 %v3442
      %v3444 = vpop.xlane.xlu0 %3443
      %v3445 = vsel %vm1124, %v3385, 0.0
      %3446 = vadd.xlane.f32.xlu0 %v3445
      %v3447 = vpop.xlane.xlu0 %3446
      %v3448 = vsel %vm1124, %v3386, 0.0
      %3449 = vadd.xlane.f32.xlu0 %v3448
      %v3450 = vpop.xlane.xlu0 %3449
      %v3451 = vsel %vm1124, %v3387, 0.0
      %3452 = vadd.xlane.f32.xlu0 %v3451
      %v3453 = vpop.xlane.xlu0 %3452
      %v3454 = vsel %vm1124, %v3388, 0.0
      %3455 = vadd.xlane.f32.xlu0 %v3454
      %v3456 = vpop.xlane.xlu0 %3455
      %v3457 = vsel %vm1124, %v3389, 0.0
      %3458 = vadd.xlane.f32.xlu0 %v3457
      %v3459 = vpop.xlane.xlu0 %3458
      %v3460 = vsel %vm1124, %v3390, 0.0
      %3461 = vadd.xlane.f32.xlu0 %v3460
      %v3462 = vpop.xlane.xlu0 %3461
      %v3463 = vsel %vm1124, %v3391, 0.0
      %3464 = vadd.xlane.f32.xlu0 %v3463
      %v3465 = vpop.xlane.xlu0 %3464
      %v3466 = vsel %vm1124, %v3392, 0.0
      %3467 = vadd.xlane.f32.xlu0 %v3466
      %v3468 = vpop.xlane.xlu0 %3467
      %v3469 = vsel %vm1124, %v3393, 0.0
      %3470 = vadd.xlane.f32.xlu0 %v3469
      %v3471 = vpop.xlane.xlu0 %3470
      %v3472 = vsel %vm1124, %v3394, 0.0
      %3473 = vadd.xlane.f32.xlu0 %v3472
      %v3474 = vpop.xlane.xlu0 %3473
      %v3475 = vsel %vm1124, %v3395, 0.0
      %3476 = vadd.xlane.f32.xlu0 %v3475
      %v3477 = vpop.xlane.xlu0 %3476
      %v3478 = vsel %vm1124, %v3396, 0.0
      %3479 = vadd.xlane.f32.xlu0 %v3478
      %v3480 = vpop.xlane.xlu0 %3479
      %v3481 = vsel %vm1124, %v3397, 0.0
      %3482 = vadd.xlane.f32.xlu0 %v3481
      %v3483 = vpop.xlane.xlu0 %3482
      %v3484 = vsel %vm1124, %v3398, 0.0
      %3485 = vadd.xlane.f32.xlu0 %v3484
      %v3486 = vpop.xlane.xlu0 %3485
      %v3487 = vsel %vm1124, %v3399, 0.0
      %3488 = vadd.xlane.f32.xlu0 %v3487
      %v3489 = vpop.xlane.xlu0 %3488
      %v3490 = vsel %vm1124, %v3400, 0.0
      %3491 = vadd.xlane.f32.xlu0 %v3490
      %v3492 = vpop.xlane.xlu0 %3491
      %v3493 = vsel %vm1124, %v3401, 0.0
      %3494 = vadd.xlane.f32.xlu0 %v3493
      %v3495 = vpop.xlane.xlu0 %3494
      %v3496 = vsel %vm1124, %v3402, 0.0
      %3497 = vadd.xlane.f32.xlu0 %v3496
      %v3498 = vpop.xlane.xlu0 %3497
      %s3499 = scalar_lea.vmem %s11, %s41
      %v3500 = vld [vmem:[%s3499] sm:$0x1]
      %v3502 = vlaneseq
      %v3503 = vshrl.u32 %v3502, 7
      %v3504 = vsub.s32 0, %v3503
      %v3505 = vrot.slane %v3500, %v3504
      %3506 = vset.pattern.permute.xlu0 0
      %3507 = vperm.xlu0 %3506, %v3505
      %v3508 = vpop.permute.xlu0 %3507
      %v3510 = vadd.f32 %v3405, %v3508
      %v3511 = vadd.f32 %v3408, %v3508
      %v3512 = vadd.f32 %v3411, %v3508
      %v3513 = vadd.f32 %v3414, %v3508
      %v3514 = vadd.f32 %v3417, %v3508
      %v3515 = vadd.f32 %v3420, %v3508
      %v3516 = vadd.f32 %v3423, %v3508
      %v3517 = vadd.f32 %v3426, %v3508
      %v3518 = vadd.f32 %v3429, %v3508
      %v3519 = vadd.f32 %v3432, %v3508
      %v3520 = vadd.f32 %v3435, %v3508
      %v3521 = vadd.f32 %v3438, %v3508
      %v3522 = vadd.f32 %v3441, %v3508
      %v3523 = vadd.f32 %v3444, %v3508
      %v3524 = vadd.f32 %v3447, %v3508
      %v3525 = vadd.f32 %v3450, %v3508
      %v3526 = vadd.f32 %v3453, %v3508
      %v3527 = vadd.f32 %v3456, %v3508
      %v3528 = vadd.f32 %v3459, %v3508
      %v3529 = vadd.f32 %v3462, %v3508
      %v3530 = vadd.f32 %v3465, %v3508
      %v3531 = vadd.f32 %v3468, %v3508
      %v3532 = vadd.f32 %v3471, %v3508
      %v3533 = vadd.f32 %v3474, %v3508
      %v3534 = vadd.f32 %v3477, %v3508
      %v3535 = vadd.f32 %v3480, %v3508
      %v3536 = vadd.f32 %v3483, %v3508
      %v3537 = vadd.f32 %v3486, %v3508
      %v3538 = vadd.f32 %v3489, %v3508
      %v3539 = vadd.f32 %v3492, %v3508
      %v3540 = vadd.f32 %v3495, %v3508
      %v3541 = vadd.f32 %v3498, %v3508
      %v3542 = vxor.u32 %v3510, 2147483648
      %v3543 = vxor.u32 %v3511, 2147483648
      %v3544 = vxor.u32 %v3512, 2147483648
      %v3545 = vxor.u32 %v3513, 2147483648
      %v3546 = vxor.u32 %v3514, 2147483648
      %v3547 = vxor.u32 %v3515, 2147483648
      %v3548 = vxor.u32 %v3516, 2147483648
      %v3549 = vxor.u32 %v3517, 2147483648
      %v3550 = vxor.u32 %v3518, 2147483648
      %v3551 = vxor.u32 %v3519, 2147483648
      %v3552 = vxor.u32 %v3520, 2147483648
      %v3553 = vxor.u32 %v3521, 2147483648
      %v3554 = vxor.u32 %v3522, 2147483648
      %v3555 = vxor.u32 %v3523, 2147483648
      %v3556 = vxor.u32 %v3524, 2147483648
      %v3557 = vxor.u32 %v3525, 2147483648
      %v3558 = vxor.u32 %v3526, 2147483648
      %v3559 = vxor.u32 %v3527, 2147483648
      %v3560 = vxor.u32 %v3528, 2147483648
      %v3561 = vxor.u32 %v3529, 2147483648
      %v3562 = vxor.u32 %v3530, 2147483648
      %v3563 = vxor.u32 %v3531, 2147483648
      %v3564 = vxor.u32 %v3532, 2147483648
      %v3565 = vxor.u32 %v3533, 2147483648
      %v3566 = vxor.u32 %v3534, 2147483648
      %v3567 = vxor.u32 %v3535, 2147483648
      %v3568 = vxor.u32 %v3536, 2147483648
      %v3569 = vxor.u32 %v3537, 2147483648
      %v3570 = vxor.u32 %v3538, 2147483648
      %v3571 = vxor.u32 %v3539, 2147483648
      %v3572 = vxor.u32 %v3540, 2147483648
      %v3573 = vxor.u32 %v3541, 2147483648
      %v3574 = vmul.f32 %v3542, 1.442695
      %v3575 = vpow.pop %v3574
      %v3576 = vmul.f32 %v3543, 1.442695
      %v3577 = vpow.pop %v3576
      %v3578 = vmul.f32 %v3544, 1.442695
      %v3579 = vpow.pop %v3578
      %v3580 = vmul.f32 %v3545, 1.442695
      %v3581 = vpow.pop %v3580
      %v3582 = vmul.f32 %v3546, 1.442695
      %v3583 = vpow.pop %v3582
      %v3584 = vmul.f32 %v3547, 1.442695
      %v3585 = vpow.pop %v3584
      %v3586 = vmul.f32 %v3548, 1.442695
      %v3587 = vpow.pop %v3586
      %v3588 = vmul.f32 %v3549, 1.442695
      %v3589 = vpow.pop %v3588
      %v3590 = vmul.f32 %v3550, 1.442695
      %v3591 = vpow.pop %v3590
      %v3592 = vmul.f32 %v3551, 1.442695
      %v3593 = vpow.pop %v3592
      %v3594 = vmul.f32 %v3552, 1.442695
      %v3595 = vpow.pop %v3594
      %v3596 = vmul.f32 %v3553, 1.442695
      %v3597 = vpow.pop %v3596
      %v3598 = vmul.f32 %v3554, 1.442695
      %v3599 = vpow.pop %v3598
      %v3600 = vmul.f32 %v3555, 1.442695
      %v3601 = vpow.pop %v3600
      %v3602 = vmul.f32 %v3556, 1.442695
      %v3603 = vpow.pop %v3602
      %v3604 = vmul.f32 %v3557, 1.442695
      %v3605 = vpow.pop %v3604
      %v3606 = vmul.f32 %v3558, 1.442695
      %v3607 = vpow.pop %v3606
      %v3608 = vmul.f32 %v3559, 1.442695
      %v3609 = vpow.pop %v3608
      %v3610 = vmul.f32 %v3560, 1.442695
      %v3611 = vpow.pop %v3610
      %v3612 = vmul.f32 %v3561, 1.442695
      %v3613 = vpow.pop %v3612
      %v3614 = vmul.f32 %v3562, 1.442695
      %v3615 = vpow.pop %v3614
      %v3616 = vmul.f32 %v3563, 1.442695
      %v3617 = vpow.pop %v3616
      %v3618 = vmul.f32 %v3564, 1.442695
      %v3619 = vpow.pop %v3618
      %v3620 = vmul.f32 %v3565, 1.442695
      %v3621 = vpow.pop %v3620
      %v3622 = vmul.f32 %v3566, 1.442695
      %v3623 = vpow.pop %v3622
      %v3624 = vmul.f32 %v3567, 1.442695
      %v3625 = vpow.pop %v3624
      %v3626 = vmul.f32 %v3568, 1.442695
      %v3627 = vpow.pop %v3626
      %v3628 = vmul.f32 %v3569, 1.442695
      %v3629 = vpow.pop %v3628
      %v3630 = vmul.f32 %v3570, 1.442695
      %v3631 = vpow.pop %v3630
      %v3632 = vmul.f32 %v3571, 1.442695
      %v3633 = vpow.pop %v3632
      %v3634 = vmul.f32 %v3572, 1.442695
      %v3635 = vpow.pop %v3634
      %v3636 = vmul.f32 %v3573, 1.442695
      %v3637 = vpow.pop %v3636
      %v3638 = vadd.f32 %v3575, 1.0
      %v3639 = vadd.f32 %v3577, 1.0
      %v3640 = vadd.f32 %v3579, 1.0
      %v3641 = vadd.f32 %v3581, 1.0
      %v3642 = vadd.f32 %v3583, 1.0
      %v3643 = vadd.f32 %v3585, 1.0
      %v3644 = vadd.f32 %v3587, 1.0
      %v3645 = vadd.f32 %v3589, 1.0
      %v3646 = vadd.f32 %v3591, 1.0
      %v3647 = vadd.f32 %v3593, 1.0
      %v3648 = vadd.f32 %v3595, 1.0
      %v3649 = vadd.f32 %v3597, 1.0
      %v3650 = vadd.f32 %v3599, 1.0
      %v3651 = vadd.f32 %v3601, 1.0
      %v3652 = vadd.f32 %v3603, 1.0
      %v3653 = vadd.f32 %v3605, 1.0
      %v3654 = vadd.f32 %v3607, 1.0
      %v3655 = vadd.f32 %v3609, 1.0
      %v3656 = vadd.f32 %v3611, 1.0
      %v3657 = vadd.f32 %v3613, 1.0
      %v3658 = vadd.f32 %v3615, 1.0
      %v3659 = vadd.f32 %v3617, 1.0
      %v3660 = vadd.f32 %v3619, 1.0
      %v3661 = vadd.f32 %v3621, 1.0
      %v3662 = vadd.f32 %v3623, 1.0
      %v3663 = vadd.f32 %v3625, 1.0
      %v3664 = vadd.f32 %v3627, 1.0
      %v3665 = vadd.f32 %v3629, 1.0
      %v3666 = vadd.f32 %v3631, 1.0
      %v3667 = vadd.f32 %v3633, 1.0
      %v3668 = vadd.f32 %v3635, 1.0
      %v3669 = vadd.f32 %v3637, 1.0
      %v3670 = vrcp.pop %v3638
      %v3671 = vmul.f32 1.0, %v3670
      %v3672 = vrcp.pop %v3639
      %v3673 = vmul.f32 1.0, %v3672
      %v3674 = vrcp.pop %v3640
      %v3675 = vmul.f32 1.0, %v3674
      %v3676 = vrcp.pop %v3641
      %v3677 = vmul.f32 1.0, %v3676
      %v3678 = vrcp.pop %v3642
      %v3679 = vmul.f32 1.0, %v3678
      %v3680 = vrcp.pop %v3643
      %v3681 = vmul.f32 1.0, %v3680
      %v3682 = vrcp.pop %v3644
      %v3683 = vmul.f32 1.0, %v3682
      %v3684 = vrcp.pop %v3645
      %v3685 = vmul.f32 1.0, %v3684
      %v3686 = vrcp.pop %v3646
      %v3687 = vmul.f32 1.0, %v3686
      %v3688 = vrcp.pop %v3647
      %v3689 = vmul.f32 1.0, %v3688
      %v3690 = vrcp.pop %v3648
      %v3691 = vmul.f32 1.0, %v3690
      %v3692 = vrcp.pop %v3649
      %v3693 = vmul.f32 1.0, %v3692
      %v3694 = vrcp.pop %v3650
      %v3695 = vmul.f32 1.0, %v3694
      %v3696 = vrcp.pop %v3651
      %v3697 = vmul.f32 1.0, %v3696
      %v3698 = vrcp.pop %v3652
      %v3699 = vmul.f32 1.0, %v3698
      %v3700 = vrcp.pop %v3653
      %v3701 = vmul.f32 1.0, %v3700
      %v3702 = vrcp.pop %v3654
      %v3703 = vmul.f32 1.0, %v3702
      %v3704 = vrcp.pop %v3655
      %v3705 = vmul.f32 1.0, %v3704
      %v3706 = vrcp.pop %v3656
      %v3707 = vmul.f32 1.0, %v3706
      %v3708 = vrcp.pop %v3657
      %v3709 = vmul.f32 1.0, %v3708
      %v3710 = vrcp.pop %v3658
      %v3711 = vmul.f32 1.0, %v3710
      %v3712 = vrcp.pop %v3659
      %v3713 = vmul.f32 1.0, %v3712
      %v3714 = vrcp.pop %v3660
      %v3715 = vmul.f32 1.0, %v3714
      %v3716 = vrcp.pop %v3661
      %v3717 = vmul.f32 1.0, %v3716
      %v3718 = vrcp.pop %v3662
      %v3719 = vmul.f32 1.0, %v3718
      %v3720 = vrcp.pop %v3663
      %v3721 = vmul.f32 1.0, %v3720
      %v3722 = vrcp.pop %v3664
      %v3723 = vmul.f32 1.0, %v3722
      %v3724 = vrcp.pop %v3665
      %v3725 = vmul.f32 1.0, %v3724
      %v3726 = vrcp.pop %v3666
      %v3727 = vmul.f32 1.0, %v3726
      %v3728 = vrcp.pop %v3667
      %v3729 = vmul.f32 1.0, %v3728
      %v3730 = vrcp.pop %v3668
      %v3731 = vmul.f32 1.0, %v3730
      %v3732 = vrcp.pop %v3669
      %v3733 = vmul.f32 1.0, %v3732
      %v3736 = vlaneseq
      %v3737 = vshrl.u32 %v3736, 7
      %v3738 = vsub.s32 0, %v3737
      %v3739 = vrot.slane %v1035, %v3738
      %3741 = vbcast.lane.b32.xlu0 %v3739, 256
      %v3742 = vpop.permute.xlu0 %3741
      %s3744 = sor.u32 256, 8
      %3745 = vbcast.lane.b32.xlu0 %v3739, %s3744
      %v3746 = vpop.permute.xlu0 %3745
      %v3747 = vlaneseq
      %v3748 = vshrl.u32 %v3747, 7
      %v3749 = vsub.s32 1, %v3748
      %v3750 = vrot.slane %v1035, %v3749
      %3752 = vbcast.lane.b32.xlu0 %v3750, 256
      %v3753 = vpop.permute.xlu0 %3752
      %s3755 = sor.u32 256, 8
      %3756 = vbcast.lane.b32.xlu0 %v3750, %s3755
      %v3757 = vpop.permute.xlu0 %3756
      %v3758 = vlaneseq
      %v3759 = vshrl.u32 %v3758, 7
      %v3760 = vsub.s32 2, %v3759
      %v3761 = vrot.slane %v1035, %v3760
      %3763 = vbcast.lane.b32.xlu0 %v3761, 256
      %v3764 = vpop.permute.xlu0 %3763
      %s3766 = sor.u32 256, 8
      %3767 = vbcast.lane.b32.xlu0 %v3761, %s3766
      %v3768 = vpop.permute.xlu0 %3767
      %v3769 = vlaneseq
      %v3770 = vshrl.u32 %v3769, 7
      %v3771 = vsub.s32 3, %v3770
      %v3772 = vrot.slane %v1035, %v3771
      %3774 = vbcast.lane.b32.xlu0 %v3772, 256
      %v3775 = vpop.permute.xlu0 %3774
      %s3777 = sor.u32 256, 8
      %3778 = vbcast.lane.b32.xlu0 %v3772, %s3777
      %v3779 = vpop.permute.xlu0 %3778
      %v3780 = vlaneseq
      %v3781 = vshrl.u32 %v3780, 7
      %v3782 = vsub.s32 4, %v3781
      %v3783 = vrot.slane %v1035, %v3782
      %3785 = vbcast.lane.b32.xlu0 %v3783, 256
      %v3786 = vpop.permute.xlu0 %3785
      %s3788 = sor.u32 256, 8
      %3789 = vbcast.lane.b32.xlu0 %v3783, %s3788
      %v3790 = vpop.permute.xlu0 %3789
      %v3791 = vlaneseq
      %v3792 = vshrl.u32 %v3791, 7
      %v3793 = vsub.s32 5, %v3792
      %v3794 = vrot.slane %v1035, %v3793
      %3796 = vbcast.lane.b32.xlu0 %v3794, 256
      %v3797 = vpop.permute.xlu0 %3796
      %s3799 = sor.u32 256, 8
      %3800 = vbcast.lane.b32.xlu0 %v3794, %s3799
      %v3801 = vpop.permute.xlu0 %3800
      %v3802 = vlaneseq
      %v3803 = vshrl.u32 %v3802, 7
      %v3804 = vsub.s32 6, %v3803
      %v3805 = vrot.slane %v1035, %v3804
      %3807 = vbcast.lane.b32.xlu0 %v3805, 256
      %v3808 = vpop.permute.xlu0 %3807
      %s3810 = sor.u32 256, 8
      %3811 = vbcast.lane.b32.xlu0 %v3805, %s3810
      %v3812 = vpop.permute.xlu0 %3811
      %v3813 = vlaneseq
      %v3814 = vshrl.u32 %v3813, 7
      %v3815 = vsub.s32 7, %v3814
      %v3816 = vrot.slane %v1035, %v3815
      %3818 = vbcast.lane.b32.xlu0 %v3816, 256
      %v3819 = vpop.permute.xlu0 %3818
      %s3821 = sor.u32 256, 8
      %3822 = vbcast.lane.b32.xlu0 %v3816, %s3821
      %v3823 = vpop.permute.xlu0 %3822
      %v3824 = vlaneseq
      %v3825 = vshrl.u32 %v3824, 7
      %v3826 = vsub.s32 0, %v3825
      %v3827 = vrot.slane %v1036, %v3826
      %3829 = vbcast.lane.b32.xlu0 %v3827, 256
      %v3830 = vpop.permute.xlu0 %3829
      %s3832 = sor.u32 256, 8
      %3833 = vbcast.lane.b32.xlu0 %v3827, %s3832
      %v3834 = vpop.permute.xlu0 %3833
      %v3835 = vlaneseq
      %v3836 = vshrl.u32 %v3835, 7
      %v3837 = vsub.s32 1, %v3836
      %v3838 = vrot.slane %v1036, %v3837
      %3840 = vbcast.lane.b32.xlu0 %v3838, 256
      %v3841 = vpop.permute.xlu0 %3840
      %s3843 = sor.u32 256, 8
      %3844 = vbcast.lane.b32.xlu0 %v3838, %s3843
      %v3845 = vpop.permute.xlu0 %3844
      %v3846 = vlaneseq
      %v3847 = vshrl.u32 %v3846, 7
      %v3848 = vsub.s32 2, %v3847
      %v3849 = vrot.slane %v1036, %v3848
      %3851 = vbcast.lane.b32.xlu0 %v3849, 256
      %v3852 = vpop.permute.xlu0 %3851
      %s3854 = sor.u32 256, 8
      %3855 = vbcast.lane.b32.xlu0 %v3849, %s3854
      %v3856 = vpop.permute.xlu0 %3855
      %v3857 = vlaneseq
      %v3858 = vshrl.u32 %v3857, 7
      %v3859 = vsub.s32 3, %v3858
      %v3860 = vrot.slane %v1036, %v3859
      %3862 = vbcast.lane.b32.xlu0 %v3860, 256
      %v3863 = vpop.permute.xlu0 %3862
      %s3865 = sor.u32 256, 8
      %3866 = vbcast.lane.b32.xlu0 %v3860, %s3865
      %v3867 = vpop.permute.xlu0 %3866
      %v3868 = vlaneseq
      %v3869 = vshrl.u32 %v3868, 7
      %v3870 = vsub.s32 4, %v3869
      %v3871 = vrot.slane %v1036, %v3870
      %3873 = vbcast.lane.b32.xlu0 %v3871, 256
      %v3874 = vpop.permute.xlu0 %3873
      %s3876 = sor.u32 256, 8
      %3877 = vbcast.lane.b32.xlu0 %v3871, %s3876
      %v3878 = vpop.permute.xlu0 %3877
      %v3879 = vlaneseq
      %v3880 = vshrl.u32 %v3879, 7
      %v3881 = vsub.s32 5, %v3880
      %v3882 = vrot.slane %v1036, %v3881
      %3884 = vbcast.lane.b32.xlu0 %v3882, 256
      %v3885 = vpop.permute.xlu0 %3884
      %s3887 = sor.u32 256, 8
      %3888 = vbcast.lane.b32.xlu0 %v3882, %s3887
      %v3889 = vpop.permute.xlu0 %3888
      %v3890 = vlaneseq
      %v3891 = vshrl.u32 %v3890, 7
      %v3892 = vsub.s32 6, %v3891
      %v3893 = vrot.slane %v1036, %v3892
      %3895 = vbcast.lane.b32.xlu0 %v3893, 256
      %v3896 = vpop.permute.xlu0 %3895
      %s3898 = sor.u32 256, 8
      %3899 = vbcast.lane.b32.xlu0 %v3893, %s3898
      %v3900 = vpop.permute.xlu0 %3899
      %v3901 = vlaneseq
      %v3902 = vshrl.u32 %v3901, 7
      %v3903 = vsub.s32 7, %v3902
      %v3904 = vrot.slane %v1036, %v3903
      %3906 = vbcast.lane.b32.xlu0 %v3904, 256
      %v3907 = vpop.permute.xlu0 %3906
      %s3909 = sor.u32 256, 8
      %3910 = vbcast.lane.b32.xlu0 %v3904, %s3909
      %v3911 = vpop.permute.xlu0 %3910
      %v3944 = vmul.f32 %v3671, %v3742
      %v3945 = vmul.f32 %v3673, %v3746
      %v3946 = vmul.f32 %v3675, %v3753
      %v3947 = vmul.f32 %v3677, %v3757
      %v3948 = vmul.f32 %v3679, %v3764
      %v3949 = vmul.f32 %v3681, %v3768
      %v3950 = vmul.f32 %v3683, %v3775
      %v3951 = vmul.f32 %v3685, %v3779
      %v3952 = vmul.f32 %v3687, %v3786
      %v3953 = vmul.f32 %v3689, %v3790
      %v3954 = vmul.f32 %v3691, %v3797
      %v3955 = vmul.f32 %v3693, %v3801
      %v3956 = vmul.f32 %v3695, %v3808
      %v3957 = vmul.f32 %v3697, %v3812
      %v3958 = vmul.f32 %v3699, %v3819
      %v3959 = vmul.f32 %v3701, %v3823
      %v3960 = vmul.f32 %v3703, %v3830
      %v3961 = vmul.f32 %v3705, %v3834
      %v3962 = vmul.f32 %v3707, %v3841
      %v3963 = vmul.f32 %v3709, %v3845
      %v3964 = vmul.f32 %v3711, %v3852
      %v3965 = vmul.f32 %v3713, %v3856
      %v3966 = vmul.f32 %v3715, %v3863
      %v3967 = vmul.f32 %v3717, %v3867
      %v3968 = vmul.f32 %v3719, %v3874
      %v3969 = vmul.f32 %v3721, %v3878
      %v3970 = vmul.f32 %v3723, %v3885
      %v3971 = vmul.f32 %v3725, %v3889
      %v3972 = vmul.f32 %v3727, %v3896
      %v3973 = vmul.f32 %v3729, %v3900
      %v3974 = vmul.f32 %v3731, %v3907
      %v3975 = vmul.f32 %v3733, %v3911
      %v3976 = vld [vmem:[#allocation2] sm:$0xff]
      %v3977 = vld [vmem:[#allocation2 + $0x8] sm:$0xff]
      %3979 = vset.pattern.permute.xlu0 0
      %3980 = vperm.xlu0 %3979, %v3944
      %v3981 = vpop.permute.xlu0 %3980
      %3984 = vset.pattern.permute.xlu0 0
      %3985 = vperm.xlu0 %3984, %v3945
      %v3986 = vpop.permute.xlu0 %3985
      %3989 = vset.pattern.permute.xlu0 0
      %3990 = vperm.xlu0 %3989, %v3946
      %v3991 = vpop.permute.xlu0 %3990
      %3994 = vset.pattern.permute.xlu0 0
      %3995 = vperm.xlu0 %3994, %v3947
      %v3996 = vpop.permute.xlu0 %3995
      %3999 = vset.pattern.permute.xlu0 0
      %4000 = vperm.xlu0 %3999, %v3948
      %v4001 = vpop.permute.xlu0 %4000
      %4004 = vset.pattern.permute.xlu0 0
      %4005 = vperm.xlu0 %4004, %v3949
      %v4006 = vpop.permute.xlu0 %4005
      %4009 = vset.pattern.permute.xlu0 0
      %4010 = vperm.xlu0 %4009, %v3950
      %v4011 = vpop.permute.xlu0 %4010
      %4014 = vset.pattern.permute.xlu0 0
      %4015 = vperm.xlu0 %4014, %v3951
      %v4016 = vpop.permute.xlu0 %4015
      %4019 = vset.pattern.permute.xlu0 0
      %4020 = vperm.xlu0 %4019, %v3952
      %v4021 = vpop.permute.xlu0 %4020
      %4024 = vset.pattern.permute.xlu0 0
      %4025 = vperm.xlu0 %4024, %v3953
      %v4026 = vpop.permute.xlu0 %4025
      %4029 = vset.pattern.permute.xlu0 0
      %4030 = vperm.xlu0 %4029, %v3954
      %v4031 = vpop.permute.xlu0 %4030
      %4034 = vset.pattern.permute.xlu0 0
      %4035 = vperm.xlu0 %4034, %v3955
      %v4036 = vpop.permute.xlu0 %4035
      %4039 = vset.pattern.permute.xlu0 0
      %4040 = vperm.xlu0 %4039, %v3956
      %v4041 = vpop.permute.xlu0 %4040
      %4044 = vset.pattern.permute.xlu0 0
      %4045 = vperm.xlu0 %4044, %v3957
      %v4046 = vpop.permute.xlu0 %4045
      %4049 = vset.pattern.permute.xlu0 0
      %4050 = vperm.xlu0 %4049, %v3958
      %v4051 = vpop.permute.xlu0 %4050
      %4054 = vset.pattern.permute.xlu0 0
      %4055 = vperm.xlu0 %4054, %v3959
      %v4056 = vpop.permute.xlu0 %4055
      %4059 = vset.pattern.permute.xlu0 0
      %4060 = vperm.xlu0 %4059, %v3960
      %v4061 = vpop.permute.xlu0 %4060
      %4064 = vset.pattern.permute.xlu0 0
      %4065 = vperm.xlu0 %4064, %v3961
      %v4066 = vpop.permute.xlu0 %4065
      %4069 = vset.pattern.permute.xlu0 0
      %4070 = vperm.xlu0 %4069, %v3962
      %v4071 = vpop.permute.xlu0 %4070
      %4074 = vset.pattern.permute.xlu0 0
      %4075 = vperm.xlu0 %4074, %v3963
      %v4076 = vpop.permute.xlu0 %4075
      %4079 = vset.pattern.permute.xlu0 0
      %4080 = vperm.xlu0 %4079, %v3964
      %v4081 = vpop.permute.xlu0 %4080
      %4084 = vset.pattern.permute.xlu0 0
      %4085 = vperm.xlu0 %4084, %v3965
      %v4086 = vpop.permute.xlu0 %4085
      %4089 = vset.pattern.permute.xlu0 0
      %4090 = vperm.xlu0 %4089, %v3966
      %v4091 = vpop.permute.xlu0 %4090
      %4094 = vset.pattern.permute.xlu0 0
      %4095 = vperm.xlu0 %4094, %v3967
      %v4096 = vpop.permute.xlu0 %4095
      %4099 = vset.pattern.permute.xlu0 0
      %4100 = vperm.xlu0 %4099, %v3968
      %v4101 = vpop.permute.xlu0 %4100
      %4104 = vset.pattern.permute.xlu0 0
      %4105 = vperm.xlu0 %4104, %v3969
      %v4106 = vpop.permute.xlu0 %4105
      %4109 = vset.pattern.permute.xlu0 0
      %4110 = vperm.xlu0 %4109, %v3970
      %v4111 = vpop.permute.xlu0 %4110
      %4114 = vset.pattern.permute.xlu0 0
      %4115 = vperm.xlu0 %4114, %v3971
      %v4116 = vpop.permute.xlu0 %4115
      %4119 = vset.pattern.permute.xlu0 0
      %4120 = vperm.xlu0 %4119, %v3972
      %v4121 = vpop.permute.xlu0 %4120
      %4124 = vset.pattern.permute.xlu0 0
      %4125 = vperm.xlu0 %4124, %v3973
      %v4126 = vpop.permute.xlu0 %4125
      %4129 = vset.pattern.permute.xlu0 0
      %4130 = vperm.xlu0 %4129, %v3974
      %v4131 = vpop.permute.xlu0 %4130
      %4134 = vset.pattern.permute.xlu0 0
      %4135 = vperm.xlu0 %4134, %v3975
      %v4136 = vpop.permute.xlu0 %4135
      %v4138 = vmul.f32 %v2872, %v3981
      %v4139 = vmul.f32 %v2873, %v3986
      %v4140 = vmul.f32 %v2874, %v3991
      %v4141 = vmul.f32 %v2875, %v3996
      %v4142 = vmul.f32 %v2876, %v4001
      %v4143 = vmul.f32 %v2877, %v4006
      %v4144 = vmul.f32 %v2878, %v4011
      %v4145 = vmul.f32 %v2879, %v4016
      %v4146 = vmul.f32 %v2880, %v4021
      %v4147 = vmul.f32 %v2881, %v4026
      %v4148 = vmul.f32 %v2882, %v4031
      %v4149 = vmul.f32 %v2883, %v4036
      %v4150 = vmul.f32 %v2884, %v4041
      %v4151 = vmul.f32 %v2885, %v4046
      %v4152 = vmul.f32 %v2886, %v4051
      %v4153 = vmul.f32 %v2887, %v4056
      %v4154 = vmul.f32 %v2888, %v4061
      %v4155 = vmul.f32 %v2889, %v4066
      %v4156 = vmul.f32 %v2890, %v4071
      %v4157 = vmul.f32 %v2891, %v4076
      %v4158 = vmul.f32 %v2892, %v4081
      %v4159 = vmul.f32 %v2893, %v4086
      %v4160 = vmul.f32 %v2894, %v4091
      %v4161 = vmul.f32 %v2895, %v4096
      %v4162 = vmul.f32 %v2896, %v4101
      %v4163 = vmul.f32 %v2897, %v4106
      %v4164 = vmul.f32 %v2898, %v4111
      %v4165 = vmul.f32 %v2899, %v4116
      %v4166 = vmul.f32 %v2900, %v4121
      %v4167 = vmul.f32 %v2901, %v4126
      %v4168 = vmul.f32 %v2902, %v4131
      %v4169 = vmul.f32 %v2903, %v4136
      %v4170 = vsel %vm1124, %v4138, 0.0
      %v4171 = vsel %vm1124, %v4140, 0.0
      %v4172 = vadd.f32 %v4170, %v4171
      %v4173 = vsel %vm1124, %v4142, 0.0
      %v4174 = vadd.f32 %v4172, %v4173
      %v4175 = vsel %vm1124, %v4144, 0.0
      %v4176 = vadd.f32 %v4174, %v4175
      %v4177 = vsel %vm1124, %v4146, 0.0
      %v4178 = vadd.f32 %v4176, %v4177
      %v4179 = vsel %vm1124, %v4148, 0.0
      %v4180 = vadd.f32 %v4178, %v4179
      %v4181 = vsel %vm1124, %v4150, 0.0
      %v4182 = vadd.f32 %v4180, %v4181
      %v4183 = vsel %vm1124, %v4152, 0.0
      %v4184 = vadd.f32 %v4182, %v4183
      %v4185 = vsel %vm1124, %v4154, 0.0
      %v4186 = vadd.f32 %v4184, %v4185
      %v4187 = vsel %vm1124, %v4156, 0.0
      %v4188 = vadd.f32 %v4186, %v4187
      %v4189 = vsel %vm1124, %v4158, 0.0
      %v4190 = vadd.f32 %v4188, %v4189
      %v4191 = vsel %vm1124, %v4160, 0.0
      %v4192 = vadd.f32 %v4190, %v4191
      %v4193 = vsel %vm1124, %v4162, 0.0
      %v4194 = vadd.f32 %v4192, %v4193
      %v4195 = vsel %vm1124, %v4164, 0.0
      %v4196 = vadd.f32 %v4194, %v4195
      %v4197 = vsel %vm1124, %v4166, 0.0
      %v4198 = vadd.f32 %v4196, %v4197
      %v4199 = vsel %vm1124, %v4168, 0.0
      %v4200 = vadd.f32 %v4198, %v4199
      %v4201 = vsel %vm1124, %v4139, 0.0
      %v4202 = vsel %vm1124, %v4141, 0.0
      %v4203 = vadd.f32 %v4201, %v4202
      %v4204 = vsel %vm1124, %v4143, 0.0
      %v4205 = vadd.f32 %v4203, %v4204
      %v4206 = vsel %vm1124, %v4145, 0.0
      %v4207 = vadd.f32 %v4205, %v4206
      %v4208 = vsel %vm1124, %v4147, 0.0
      %v4209 = vadd.f32 %v4207, %v4208
      %v4210 = vsel %vm1124, %v4149, 0.0
      %v4211 = vadd.f32 %v4209, %v4210
      %v4212 = vsel %vm1124, %v4151, 0.0
      %v4213 = vadd.f32 %v4211, %v4212
      %v4214 = vsel %vm1124, %v4153, 0.0
      %v4215 = vadd.f32 %v4213, %v4214
      %v4216 = vsel %vm1124, %v4155, 0.0
      %v4217 = vadd.f32 %v4215, %v4216
      %v4218 = vsel %vm1124, %v4157, 0.0
      %v4219 = vadd.f32 %v4217, %v4218
      %v4220 = vsel %vm1124, %v4159, 0.0
      %v4221 = vadd.f32 %v4219, %v4220
      %v4222 = vsel %vm1124, %v4161, 0.0
      %v4223 = vadd.f32 %v4221, %v4222
      %v4224 = vsel %vm1124, %v4163, 0.0
      %v4225 = vadd.f32 %v4223, %v4224
      %v4226 = vsel %vm1124, %v4165, 0.0
      %v4227 = vadd.f32 %v4225, %v4226
      %v4228 = vsel %vm1124, %v4167, 0.0
      %v4229 = vadd.f32 %v4227, %v4228
      %v4230 = vsel %vm1124, %v4169, 0.0
      %v4231 = vadd.f32 %v4229, %v4230
      %v4232 = vadd.f32 %v3976, %v4200
      %v4233 = vadd.f32 %v3977, %v4231
      %4234 = vst.msk [vmem:[#allocation2] sm:$0xff] %vm1124, %v4232
      %4235 = vst.msk [vmem:[#allocation2 + $0x8] sm:$0xff] %vm1124, %v4233
      %s4236 = scalar_lea.vmem %s16, %s41
      %v4237 = vld [vmem:[%s4236] sm:$0x1]
      %v4239 = vlaneseq
      %v4240 = vshrl.u32 %v4239, 7
      %v4241 = vsub.s32 0, %v4240
      %v4242 = vrot.slane %v4237, %v4241
      %v4244 = vmul.f32 %v3331, %v4242
      %v4245 = vmul.f32 %v3332, %v4242
      %v4246 = vmul.f32 %v3333, %v4242
      %v4247 = vmul.f32 %v3334, %v4242
      %v4248 = vmul.f32 %v3335, %v4242
      %v4249 = vmul.f32 %v3336, %v4242
      %v4250 = vmul.f32 %v3337, %v4242
      %v4251 = vmul.f32 %v3338, %v4242
      %v4252 = vmul.f32 %v3339, %v4242
      %v4253 = vmul.f32 %v3340, %v4242
      %v4254 = vmul.f32 %v3341, %v4242
      %v4255 = vmul.f32 %v3342, %v4242
      %v4256 = vmul.f32 %v3343, %v4242
      %v4257 = vmul.f32 %v3344, %v4242
      %v4258 = vmul.f32 %v3345, %v4242
      %v4259 = vmul.f32 %v3346, %v4242
      %v4260 = vmul.f32 %v3347, %v4242
      %v4261 = vmul.f32 %v3348, %v4242
      %v4262 = vmul.f32 %v3349, %v4242
      %v4263 = vmul.f32 %v3350, %v4242
      %v4264 = vmul.f32 %v3351, %v4242
      %v4265 = vmul.f32 %v3352, %v4242
      %v4266 = vmul.f32 %v3353, %v4242
      %v4267 = vmul.f32 %v3354, %v4242
      %v4268 = vmul.f32 %v3355, %v4242
      %v4269 = vmul.f32 %v3356, %v4242
      %v4270 = vmul.f32 %v3357, %v4242
      %v4271 = vmul.f32 %v3358, %v4242
      %v4272 = vmul.f32 %v3359, %v4242
      %v4273 = vmul.f32 %v3360, %v4242
      %v4274 = vmul.f32 %v3361, %v4242
      %v4275 = vmul.f32 %v3362, %v4242
      %v4276 = vsel %vm1124, %v4244, 0.0
      %4277 = vadd.xlane.f32.xlu0 %v4276
      %v4278 = vpop.xlane.xlu0 %4277
      %v4279 = vsel %vm1124, %v4245, 0.0
      %4280 = vadd.xlane.f32.xlu0 %v4279
      %v4281 = vpop.xlane.xlu0 %4280
      %v4282 = vsel %vm1124, %v4246, 0.0
      %4283 = vadd.xlane.f32.xlu0 %v4282
      %v4284 = vpop.xlane.xlu0 %4283
      %v4285 = vsel %vm1124, %v4247, 0.0
      %4286 = vadd.xlane.f32.xlu0 %v4285
      %v4287 = vpop.xlane.xlu0 %4286
      %v4288 = vsel %vm1124, %v4248, 0.0
      %4289 = vadd.xlane.f32.xlu0 %v4288
      %v4290 = vpop.xlane.xlu0 %4289
      %v4291 = vsel %vm1124, %v4249, 0.0
      %4292 = vadd.xlane.f32.xlu0 %v4291
      %v4293 = vpop.xlane.xlu0 %4292
      %v4294 = vsel %vm1124, %v4250, 0.0
      %4295 = vadd.xlane.f32.xlu0 %v4294
      %v4296 = vpop.xlane.xlu0 %4295
      %v4297 = vsel %vm1124, %v4251, 0.0
      %4298 = vadd.xlane.f32.xlu0 %v4297
      %v4299 = vpop.xlane.xlu0 %4298
      %v4300 = vsel %vm1124, %v4252, 0.0
      %4301 = vadd.xlane.f32.xlu0 %v4300
      %v4302 = vpop.xlane.xlu0 %4301
      %v4303 = vsel %vm1124, %v4253, 0.0
      %4304 = vadd.xlane.f32.xlu0 %v4303
      %v4305 = vpop.xlane.xlu0 %4304
      %v4306 = vsel %vm1124, %v4254, 0.0
      %4307 = vadd.xlane.f32.xlu0 %v4306
      %v4308 = vpop.xlane.xlu0 %4307
      %v4309 = vsel %vm1124, %v4255, 0.0
      %4310 = vadd.xlane.f32.xlu0 %v4309
      %v4311 = vpop.xlane.xlu0 %4310
      %v4312 = vsel %vm1124, %v4256, 0.0
      %4313 = vadd.xlane.f32.xlu0 %v4312
      %v4314 = vpop.xlane.xlu0 %4313
      %v4315 = vsel %vm1124, %v4257, 0.0
      %4316 = vadd.xlane.f32.xlu0 %v4315
      %v4317 = vpop.xlane.xlu0 %4316
      %v4318 = vsel %vm1124, %v4258, 0.0
      %4319 = vadd.xlane.f32.xlu0 %v4318
      %v4320 = vpop.xlane.xlu0 %4319
      %v4321 = vsel %vm1124, %v4259, 0.0
      %4322 = vadd.xlane.f32.xlu0 %v4321
      %v4323 = vpop.xlane.xlu0 %4322
      %v4324 = vsel %vm1124, %v4260, 0.0
      %4325 = vadd.xlane.f32.xlu0 %v4324
      %v4326 = vpop.xlane.xlu0 %4325
      %v4327 = vsel %vm1124, %v4261, 0.0
      %4328 = vadd.xlane.f32.xlu0 %v4327
      %v4329 = vpop.xlane.xlu0 %4328
      %v4330 = vsel %vm1124, %v4262, 0.0
      %4331 = vadd.xlane.f32.xlu0 %v4330
      %v4332 = vpop.xlane.xlu0 %4331
      %v4333 = vsel %vm1124, %v4263, 0.0
      %4334 = vadd.xlane.f32.xlu0 %v4333
      %v4335 = vpop.xlane.xlu0 %4334
      %v4336 = vsel %vm1124, %v4264, 0.0
      %4337 = vadd.xlane.f32.xlu0 %v4336
      %v4338 = vpop.xlane.xlu0 %4337
      %v4339 = vsel %vm1124, %v4265, 0.0
      %4340 = vadd.xlane.f32.xlu0 %v4339
      %v4341 = vpop.xlane.xlu0 %4340
      %v4342 = vsel %vm1124, %v4266, 0.0
      %4343 = vadd.xlane.f32.xlu0 %v4342
      %v4344 = vpop.xlane.xlu0 %4343
      %v4345 = vsel %vm1124, %v4267, 0.0
      %4346 = vadd.xlane.f32.xlu0 %v4345
      %v4347 = vpop.xlane.xlu0 %4346
      %v4348 = vsel %vm1124, %v4268, 0.0
      %4349 = vadd.xlane.f32.xlu0 %v4348
      %v4350 = vpop.xlane.xlu0 %4349
      %v4351 = vsel %vm1124, %v4269, 0.0
      %4352 = vadd.xlane.f32.xlu0 %v4351
      %v4353 = vpop.xlane.xlu0 %4352
      %v4354 = vsel %vm1124, %v4270, 0.0
      %4355 = vadd.xlane.f32.xlu0 %v4354
      %v4356 = vpop.xlane.xlu0 %4355
      %v4357 = vsel %vm1124, %v4271, 0.0
      %4358 = vadd.xlane.f32.xlu0 %v4357
      %v4359 = vpop.xlane.xlu0 %4358
      %v4360 = vsel %vm1124, %v4272, 0.0
      %4361 = vadd.xlane.f32.xlu0 %v4360
      %v4362 = vpop.xlane.xlu0 %4361
      %v4363 = vsel %vm1124, %v4273, 0.0
      %4364 = vadd.xlane.f32.xlu0 %v4363
      %v4365 = vpop.xlane.xlu0 %4364
      %v4366 = vsel %vm1124, %v4274, 0.0
      %4367 = vadd.xlane.f32.xlu0 %v4366
      %v4368 = vpop.xlane.xlu0 %4367
      %v4369 = vsel %vm1124, %v4275, 0.0
      %4370 = vadd.xlane.f32.xlu0 %v4369
      %v4371 = vpop.xlane.xlu0 %4370
      %v4404 = vlaneseq
      %v4405 = vand.u32 %v4404, 127
      %v4406 = vlaneseq
      %v4407 = vshrl.u32 %v4406, 7
      %v4408 = vsub.s32 %v4405, %v4407
      %v4409 = vrot.slane %v4278, %v4408
      %v4410 = vadd.s32 %v4405, 4294967288
      %v4411 = vlaneseq
      %v4412 = vshrl.u32 %v4411, 7
      %v4413 = vsub.s32 %v4410, %v4412
      %v4414 = vrot.slane %v4281, %v4413
      %vm4415 = vcmask 130112
      %v4416 = vsel %vm4415, %v4414, %v4409
      %v4417 = vlaneseq
      %v4418 = vshrl.u32 %v4417, 7
      %v4419 = vsub.s32 %v4405, %v4418
      %v4420 = vrot.slane %v4284, %v4419
      %v4421 = vlaneseq
      %v4422 = vshrl.u32 %v4421, 7
      %v4423 = vsub.s32 %v4410, %v4422
      %v4424 = vrot.slane %v4287, %v4423
      %v4425 = vsel %vm4415, %v4424, %v4420
      %v4426 = vlaneseq
      %v4427 = vshrl.u32 %v4426, 7
      %v4428 = vsub.s32 %v4405, %v4427
      %v4429 = vrot.slane %v4290, %v4428
      %v4430 = vlaneseq
      %v4431 = vshrl.u32 %v4430, 7
      %v4432 = vsub.s32 %v4410, %v4431
      %v4433 = vrot.slane %v4293, %v4432
      %v4434 = vsel %vm4415, %v4433, %v4429
      %v4435 = vlaneseq
      %v4436 = vshrl.u32 %v4435, 7
      %v4437 = vsub.s32 %v4405, %v4436
      %v4438 = vrot.slane %v4296, %v4437
      %v4439 = vlaneseq
      %v4440 = vshrl.u32 %v4439, 7
      %v4441 = vsub.s32 %v4410, %v4440
      %v4442 = vrot.slane %v4299, %v4441
      %v4443 = vsel %vm4415, %v4442, %v4438
      %v4444 = vlaneseq
      %v4445 = vshrl.u32 %v4444, 7
      %v4446 = vsub.s32 %v4405, %v4445
      %v4447 = vrot.slane %v4302, %v4446
      %v4448 = vlaneseq
      %v4449 = vshrl.u32 %v4448, 7
      %v4450 = vsub.s32 %v4410, %v4449
      %v4451 = vrot.slane %v4305, %v4450
      %v4452 = vsel %vm4415, %v4451, %v4447
      %v4453 = vlaneseq
      %v4454 = vshrl.u32 %v4453, 7
      %v4455 = vsub.s32 %v4405, %v4454
      %v4456 = vrot.slane %v4308, %v4455
      %v4457 = vlaneseq
      %v4458 = vshrl.u32 %v4457, 7
      %v4459 = vsub.s32 %v4410, %v4458
      %v4460 = vrot.slane %v4311, %v4459
      %v4461 = vsel %vm4415, %v4460, %v4456
      %v4462 = vlaneseq
      %v4463 = vshrl.u32 %v4462, 7
      %v4464 = vsub.s32 %v4405, %v4463
      %v4465 = vrot.slane %v4314, %v4464
      %v4466 = vlaneseq
      %v4467 = vshrl.u32 %v4466, 7
      %v4468 = vsub.s32 %v4410, %v4467
      %v4469 = vrot.slane %v4317, %v4468
      %v4470 = vsel %vm4415, %v4469, %v4465
      %v4471 = vlaneseq
      %v4472 = vshrl.u32 %v4471, 7
      %v4473 = vsub.s32 %v4405, %v4472
      %v4474 = vrot.slane %v4320, %v4473
      %v4475 = vlaneseq
      %v4476 = vshrl.u32 %v4475, 7
      %v4477 = vsub.s32 %v4410, %v4476
      %v4478 = vrot.slane %v4323, %v4477
      %v4479 = vsel %vm4415, %v4478, %v4474
      %v4480 = vlaneseq
      %v4481 = vshrl.u32 %v4480, 7
      %v4482 = vsub.s32 %v4405, %v4481
      %v4483 = vrot.slane %v4326, %v4482
      %v4484 = vlaneseq
      %v4485 = vshrl.u32 %v4484, 7
      %v4486 = vsub.s32 %v4410, %v4485
      %v4487 = vrot.slane %v4329, %v4486
      %v4488 = vsel %vm4415, %v4487, %v4483
      %v4489 = vlaneseq
      %v4490 = vshrl.u32 %v4489, 7
      %v4491 = vsub.s32 %v4405, %v4490
      %v4492 = vrot.slane %v4332, %v4491
      %v4493 = vlaneseq
      %v4494 = vshrl.u32 %v4493, 7
      %v4495 = vsub.s32 %v4410, %v4494
      %v4496 = vrot.slane %v4335, %v4495
      %v4497 = vsel %vm4415, %v4496, %v4492
      %v4498 = vlaneseq
      %v4499 = vshrl.u32 %v4498, 7
      %v4500 = vsub.s32 %v4405, %v4499
      %v4501 = vrot.slane %v4338, %v4500
      %v4502 = vlaneseq
      %v4503 = vshrl.u32 %v4502, 7
      %v4504 = vsub.s32 %v4410, %v4503
      %v4505 = vrot.slane %v4341, %v4504
      %v4506 = vsel %vm4415, %v4505, %v4501
      %v4507 = vlaneseq
      %v4508 = vshrl.u32 %v4507, 7
      %v4509 = vsub.s32 %v4405, %v4508
      %v4510 = vrot.slane %v4344, %v4509
      %v4511 = vlaneseq
      %v4512 = vshrl.u32 %v4511, 7
      %v4513 = vsub.s32 %v4410, %v4512
      %v4514 = vrot.slane %v4347, %v4513
      %v4515 = vsel %vm4415, %v4514, %v4510
      %v4516 = vlaneseq
      %v4517 = vshrl.u32 %v4516, 7
      %v4518 = vsub.s32 %v4405, %v4517
      %v4519 = vrot.slane %v4350, %v4518
      %v4520 = vlaneseq
      %v4521 = vshrl.u32 %v4520, 7
      %v4522 = vsub.s32 %v4410, %v4521
      %v4523 = vrot.slane %v4353, %v4522
      %v4524 = vsel %vm4415, %v4523, %v4519
      %v4525 = vlaneseq
      %v4526 = vshrl.u32 %v4525, 7
      %v4527 = vsub.s32 %v4405, %v4526
      %v4528 = vrot.slane %v4356, %v4527
      %v4529 = vlaneseq
      %v4530 = vshrl.u32 %v4529, 7
      %v4531 = vsub.s32 %v4410, %v4530
      %v4532 = vrot.slane %v4359, %v4531
      %v4533 = vsel %vm4415, %v4532, %v4528
      %v4534 = vlaneseq
      %v4535 = vshrl.u32 %v4534, 7
      %v4536 = vsub.s32 %v4405, %v4535
      %v4537 = vrot.slane %v4362, %v4536
      %v4538 = vlaneseq
      %v4539 = vshrl.u32 %v4538, 7
      %v4540 = vsub.s32 %v4410, %v4539
      %v4541 = vrot.slane %v4365, %v4540
      %v4542 = vsel %vm4415, %v4541, %v4537
      %v4543 = vlaneseq
      %v4544 = vshrl.u32 %v4543, 7
      %v4545 = vsub.s32 %v4405, %v4544
      %v4546 = vrot.slane %v4368, %v4545
      %v4547 = vlaneseq
      %v4548 = vshrl.u32 %v4547, 7
      %v4549 = vsub.s32 %v4410, %v4548
      %v4550 = vrot.slane %v4371, %v4549
      %v4551 = vsel %vm4415, %v4550, %v4546
      %vm4552 = vcmask 1041409
      %v4553 = vsel %vm4552, %v4425, %v4416
      %vm4554 = vcmask 1042434
      %v4555 = vsel %vm4554, %v4434, %v4553
      %vm4556 = vcmask 1043459
      %v4557 = vsel %vm4556, %v4443, %v4555
      %vm4558 = vcmask 1044484
      %v4559 = vsel %vm4558, %v4452, %v4557
      %vm4560 = vcmask 1045509
      %v4561 = vsel %vm4560, %v4461, %v4559
      %vm4562 = vcmask 1046534
      %v4563 = vsel %vm4562, %v4470, %v4561
      %vm4564 = vcmask 1047559
      %v4565 = vsel %vm4564, %v4479, %v4563
      %v4566 = vsel %vm4552, %v4497, %v4488
      %v4567 = vsel %vm4554, %v4506, %v4566
      %v4568 = vsel %vm4556, %v4515, %v4567
      %v4569 = vsel %vm4558, %v4524, %v4568
      %v4570 = vsel %vm4560, %v4533, %v4569
      %v4571 = vsel %vm4562, %v4542, %v4570
      %v4572 = vsel %vm4564, %v4551, %v4571
      %v4575 = vmul.f32 %v1035, %v4565
      %v4576 = vmul.f32 %v1036, %v4572
      %v4577 = vmul.f32 %v4575, %v1108
      %v4578 = vmul.f32 %v4576, %v1110
      %v4579 = vmul.f32 %v4577, %v1051
      %v4580 = vmul.f32 %v4578, %v1052
      %vm4581 = vcmask 130048
      %v4582 = vsel %vm4581, %v4579, 0.0
      %v4583 = vsel %vm4581, %v4580, 0.0
      %v4584 = vadd.f32 %v4582, %v4583
      %v4585 = vrot.slane %v4584, 4
      %v4586 = vadd.f32 %v4584, %v4585
      %v4587 = vrot.slane %v4586, 2
      %v4588 = vadd.f32 %v4586, %v4587
      %v4589 = vrot.slane %v4588, 1
      %v4590 = vadd.f32 %v4588, %v4589
      %v4591 = vmul.f32 %v4577, %v1065
      %v4592 = vmul.f32 %v4578, %v1066
      %v4593 = vsel %vm4581, %v4591, 0.0
      %v4594 = vsel %vm4581, %v4592, 0.0
      %v4595 = vadd.f32 %v4593, %v4594
      %v4596 = vrot.slane %v4595, 4
      %v4597 = vadd.f32 %v4595, %v4596
      %v4598 = vrot.slane %v4597, 2
      %v4599 = vadd.f32 %v4597, %v4598
      %v4600 = vrot.slane %v4599, 1
      %v4601 = vadd.f32 %v4599, %v4600
      %v4602 = vmul.f32 %v4577, %v1079
      %v4603 = vmul.f32 %v4578, %v1080
      %v4604 = vsel %vm4581, %v4602, 0.0
      %v4605 = vsel %vm4581, %v4603, 0.0
      %v4606 = vadd.f32 %v4604, %v4605
      %v4607 = vrot.slane %v4606, 4
      %v4608 = vadd.f32 %v4606, %v4607
      %v4609 = vrot.slane %v4608, 2
      %v4610 = vadd.f32 %v4608, %v4609
      %v4611 = vrot.slane %v4610, 1
      %v4612 = vadd.f32 %v4610, %v4611
      %v4613 = vld [vmem:[#allocation3] sm:$0x7]
      %vm4614 = vcmask 1040384
      %v4615 = vsel %vm4614, %v4590, %v4601
      %vm4616 = vcmask 1041408
      %v4617 = vsel %vm4616, %v4615, %v4612
      %v4618 = vadd.f32 %v4613, %v4617
      %vm4619 = vcmask 124928
      %4620 = vst.msk [vmem:[#allocation3] sm:$0x7] %vm4619, %v4618
      // Predicated region
      $region113: #{ligrec_egnn_forward.2} parent=103 // pred_check
        _
      $region114: #{ligrec_egnn_forward.2} parent=103 // pred_check_branch
        %4622 = sbr.rel (%p860) target = $region116
      $region115: #{ligrec_egnn_forward.2} parent=103 // pred_region
        %s4623 = sld [smem:[#allocation6]]
        %v4624 = vld [vmem:[#allocation2] sm:$0xff]
        %v4625 = vld [vmem:[#allocation2 + $0x8] sm:$0xff]
        %v4626 = vstv %s4623
        %v4627 = vmul.f32 %v4624, %v4626
        %v4628 = vmul.f32 %v4625, %v4626
        %v4629 = vld [vmem:[#allocation3] sm:$0x7]
        %v4630 = vmul.f32 %v4629, %v4626
        %v4631 = vld [vmem:[%s17] sm:$0xf]
        %v4632 = vld [vmem:[%s17 + $0x4] sm:$0xf]
        %v4633 = vld [vmem:[%s17 + $0x8] sm:$0xf]
        %v4634 = vld [vmem:[%s17 + $0xc] sm:$0xf]
        %v4635 = vld [vmem:[%s17 + $0x10] sm:$0xf]
        %v4636 = vld [vmem:[%s17 + $0x14] sm:$0xf]
        %v4637 = vld [vmem:[%s17 + $0x18] sm:$0xf]
        %v4638 = vld [vmem:[%s17 + $0x1c] sm:$0xf]
        %v4639 = vpack.c.bf16 %v870, %v869
        %v4640 = vpack.c.bf16 %v4628, %v4627
        %v4645 = vunpack.c.l.b16 %v4635
        %v4646 = vunpack.c.l.b16 %v4636
        %v4647 = vunpack.c.l.b16 %v4637
        %v4648 = vunpack.c.l.b16 %v4638
        %v4649 = vpack.c.b16 %v4646, %v4645
        %v4650 = vpack.c.b16 %v4648, %v4647
        %v4654 = vsel %vm1124, %v4640, 0
        %4656 = vmatprep.subr.bf16.mxu0 0
        %4657 = vmatpush1.bf16.msra.mxu0 %v4649
        %4658 = vmatprep.subr.bf16.mxu0 0
        %4659 = vmatpush1.bf16.msra.mxu0 %v4650
        %4660 = vmatprep.subr.bf16.mxu0 0
        %4661 = vmatpush1.bf16.msra.mxu0 0
        %4662 = vmatprep.subr.bf16.mxu0 0
        %4663 = vmatpush1.bf16.msra.mxu0 0
        %4664 = vmatprep.subr.bf16.mxu0 0
        %4665 = vmatpush1.bf16.msra.mxu0 0
        %4666 = vmatprep.subr.bf16.mxu0 0
        %4667 = vmatpush1.bf16.msra.mxu0 0
        %4668 = vmatprep.subr.bf16.mxu0 0
        %4669 = vmatpush1.bf16.msra.mxu0 0
        %4670 = vmatprep.subr.bf16.mxu0 0
        %4671 = vmatpush1.bf16.msra.mxu0 0
        %4672 = vmatprep.subr.bf16.mxu0 0
        %4673 = vmatpush1.bf16.msra.mxu0 0
        %4674 = vmatprep.subr.bf16.mxu0 0
        %4675 = vmatpush1.bf16.msra.mxu0 0
        %4676 = vmatprep.subr.bf16.mxu0 0
        %4677 = vmatpush1.bf16.msra.mxu0 0
        %4678 = vmatprep.subr.bf16.mxu0 0
        %4679 = vmatpush1.bf16.msra.mxu0 0
        %4680 = vmatprep.subr.bf16.mxu0 0
        %4681 = vmatpush1.bf16.msra.mxu0 0
        %4682 = vmatprep.subr.bf16.mxu0 0
        %4683 = vmatpush1.bf16.msra.mxu0 0
        %4684 = vmatprep.subr.bf16.mxu0 0
        %4685 = vmatpush1.bf16.msra.mxu0 0
        %4686 = vmatprep.subr.bf16.mxu0 0
        %4687 = vmatpush1.bf16.msra.mxu0 0
        %4688 = vmatprep.mubr.bf16.mxu0 0
        %4689 = vmatmul.mubr.bf16.gmra.mrb[0].mxu0 %v4654
        %v4690 = vpop.f32.mrb[0].mxu0
        %v4691 = vadd.f32 0.0, %v4690
        %v4692 = vpop.f32.mrb[0].mxu0
        %v4693 = vpop.f32.mrb[0].mxu0
        %v4694 = vadd.f32 0.0, %v4693
        %v4695 = vpop.f32.mrb[0].mxu0
        %4696 = vdwg.mxu0
        %v4701 = vunpack.c.l.b16 %v4631
        %v4702 = vunpack.c.l.b16 %v4632
        %v4703 = vunpack.c.l.b16 %v4633
        %v4704 = vunpack.c.l.b16 %v4634
        %v4705 = vpack.c.b16 %v4702, %v4701
        %v4706 = vpack.c.b16 %v4704, %v4703
        %v4710 = vsel %vm1124, %v4639, 0
        %4712 = vmatprep.subr.bf16.mxu0 0
        %4713 = vmatpush1.bf16.msra.mxu0 %v4705
        %4714 = vmatprep.subr.bf16.mxu0 0
        %4715 = vmatpush1.bf16.msra.mxu0 %v4706
        %4716 = vmatprep.subr.bf16.mxu0 0
        %4717 = vmatpush1.bf16.msra.mxu0 0
        %4718 = vmatprep.subr.bf16.mxu0 0
        %4719 = vmatpush1.bf16.msra.mxu0 0
        %4720 = vmatprep.subr.bf16.mxu0 0
        %4721 = vmatpush1.bf16.msra.mxu0 0
        %4722 = vmatprep.subr.bf16.mxu0 0
        %4723 = vmatpush1.bf16.msra.mxu0 0
        %4724 = vmatprep.subr.bf16.mxu0 0
        %4725 = vmatpush1.bf16.msra.mxu0 0
        %4726 = vmatprep.subr.bf16.mxu0 0
        %4727 = vmatpush1.bf16.msra.mxu0 0
        %4728 = vmatprep.subr.bf16.mxu0 0
        %4729 = vmatpush1.bf16.msra.mxu0 0
        %4730 = vmatprep.subr.bf16.mxu0 0
        %4731 = vmatpush1.bf16.msra.mxu0 0
        %4732 = vmatprep.subr.bf16.mxu0 0
        %4733 = vmatpush1.bf16.msra.mxu0 0
        %4734 = vmatprep.subr.bf16.mxu0 0
        %4735 = vmatpush1.bf16.msra.mxu0 0
        %4736 = vmatprep.subr.bf16.mxu0 0
        %4737 = vmatpush1.bf16.msra.mxu0 0
        %4738 = vmatprep.subr.bf16.mxu0 0
        %4739 = vmatpush1.bf16.msra.mxu0 0
        %4740 = vmatprep.subr.bf16.mxu0 0
        %4741 = vmatpush1.bf16.msra.mxu0 0
        %4742 = vmatprep.subr.bf16.mxu0 0
        %4743 = vmatpush1.bf16.msra.mxu0 0
        %4744 = vmatprep.mubr.bf16.mxu0 0
        %4745 = vmatmul.mubr.bf16.gmra.mrb[0].mxu0 %v4710
        %v4746 = vpop.f32.mrb[0].mxu0
        %v4747 = vadd.f32 %v4691, %v4746
        %v4748 = vpop.f32.mrb[0].mxu0
        %v4749 = vpop.f32.mrb[0].mxu0
        %v4750 = vadd.f32 %v4694, %v4749
        %v4751 = vpop.f32.mrb[0].mxu0
        %4752 = vdwg.mxu0
        %v4753 = vld [vmem:[%s18] sm:$0x1]
        %v4755 = vlaneseq
        %v4756 = vshrl.u32 %v4755, 7
        %v4757 = vsub.s32 0, %v4756
        %v4758 = vrot.slane %v4753, %v4757
        %v4760 = vadd.f32 %v4747, %v4758
        %v4761 = vadd.f32 %v4750, %v4758
        %v4762 = vxor.u32 %v4760, 2147483648
        %v4763 = vxor.u32 %v4761, 2147483648
        %v4764 = vmul.f32 %v4762, 1.442695
        %v4765 = vpow.pop %v4764
        %v4766 = vmul.f32 %v4763, 1.442695
        %v4767 = vpow.pop %v4766
        %v4768 = vadd.f32 %v4765, 1.0
        %v4769 = vadd.f32 %v4767, 1.0
        %v4770 = vrcp.pop %v4768
        %v4771 = vmul.f32 1.0, %v4770
        %v4772 = vrcp.pop %v4769
        %v4773 = vmul.f32 1.0, %v4772
        %v4774 = vmul.f32 %v4760, %v4771
        %v4775 = vmul.f32 %v4761, %v4773
        %v4776 = vpack.c.bf16 %v4775, %v4774
        %v4777 = vld [vmem:[%s19] sm:$0xf]
        %v4778 = vld [vmem:[%s19 + $0x4] sm:$0xf]
        %v4779 = vld [vmem:[%s19 + $0x8] sm:$0xf]
        %v4780 = vld [vmem:[%s19 + $0xc] sm:$0xf]
        %v4781 = vld [vmem:[%s20] sm:$0x1]
        %v4783 = vlaneseq
        %v4784 = vshrl.u32 %v4783, 7
        %v4785 = vsub.s32 0, %v4784
        %v4786 = vrot.slane %v4781, %v4785
        %v4792 = vunpack.c.l.b16 %v4777
        %v4793 = vunpack.c.l.b16 %v4778
        %v4794 = vunpack.c.l.b16 %v4779
        %v4795 = vunpack.c.l.b16 %v4780
        %v4796 = vpack.c.b16 %v4793, %v4792
        %v4797 = vpack.c.b16 %v4795, %v4794
        %v4801 = vsel %vm1124, %v4776, 0
        %4803 = vmatprep.subr.bf16.mxu0 0
        %4804 = vmatpush1.bf16.msra.mxu0 %v4796
        %4805 = vmatprep.subr.bf16.mxu0 0
        %4806 = vmatpush1.bf16.msra.mxu0 %v4797
        %4807 = vmatprep.subr.bf16.mxu0 0
        %4808 = vmatpush1.bf16.msra.mxu0 0
        %4809 = vmatprep.subr.bf16.mxu0 0
        %4810 = vmatpush1.bf16.msra.mxu0 0
        %4811 = vmatprep.subr.bf16.mxu0 0
        %4812 = vmatpush1.bf16.msra.mxu0 0
        %4813 = vmatprep.subr.bf16.mxu0 0
        %4814 = vmatpush1.bf16.msra.mxu0 0
        %4815 = vmatprep.subr.bf16.mxu0 0
        %4816 = vmatpush1.bf16.msra.mxu0 0
        %4817 = vmatprep.subr.bf16.mxu0 0
        %4818 = vmatpush1.bf16.msra.mxu0 0
        %4819 = vmatprep.subr.bf16.mxu0 0
        %4820 = vmatpush1.bf16.msra.mxu0 0
        %4821 = vmatprep.subr.bf16.mxu0 0
        %4822 = vmatpush1.bf16.msra.mxu0 0
        %4823 = vmatprep.subr.bf16.mxu0 0
        %4824 = vmatpush1.bf16.msra.mxu0 0
        %4825 = vmatprep.subr.bf16.mxu0 0
        %4826 = vmatpush1.bf16.msra.mxu0 0
        %4827 = vmatprep.subr.bf16.mxu0 0
        %4828 = vmatpush1.bf16.msra.mxu0 0
        %4829 = vmatprep.subr.bf16.mxu0 0
        %4830 = vmatpush1.bf16.msra.mxu0 0
        %4831 = vmatprep.subr.bf16.mxu0 0
        %4832 = vmatpush1.bf16.msra.mxu0 0
        %4833 = vmatprep.subr.bf16.mxu0 0
        %4834 = vmatpush1.bf16.msra.mxu0 0
        %4835 = vmatprep.mubr.bf16.mxu0 0
        %4836 = vmatmul.mubr.bf16.gmra.mrb[0].mxu0 %v4801
        %v4837 = vpop.f32.mrb[0].mxu0
        %v4838 = vadd.f32 %v4786, %v4837
        %v4839 = vpop.f32.mrb[0].mxu0
        %v4840 = vpop.f32.mrb[0].mxu0
        %v4841 = vadd.f32 %v4786, %v4840
        %v4842 = vpop.f32.mrb[0].mxu0
        %4843 = vdwg.mxu0
        %v4844 = vadd.f32 %v869, %v4838
        %v4845 = vadd.f32 %v870, %v4841
        %4846 = vst.msk [vmem:[%s848] sm:$0xff] %vm1124, %v4844
        %4847 = vst.msk [vmem:[%s848 + $0x8] sm:$0xff] %vm1124, %v4845
        %v4848 = vadd.f32 %v871, %v4630
        %4849 = vst.msk [vmem:[%s853] sm:$0x7] %vm4619, %v4848
      $region116: #{ligrec_egnn_forward.2} parent=103 // pred_fallthru
        _
      %s4850 = smul.u32 2, %s40
      %p4851 = scmp.lt.s32.totalorder %s4850, 1
      %s4852 = scalar_select %p4851, %s4850, 1
      %s4853 = smul.addr %s4852, 8
      %s4854 = scalar_lea.vmem %s21, %s4853
      %p4855 = scmp.lt.s32.totalorder %s40, 0
      %s4856 = scalar_select %p4855, %s40, 0
      %s4857 = smul.addr %s4856, 4
      %s4858 = scalar_lea.vmem %s22, %s4857
      // Predicated region
      $region117: #{ligrec_egnn_forward.2} parent=103 // pred_check
        %p4859 = pneg %p546
      $region118: #{ligrec_egnn_forward.2} parent=103 // pred_check_branch
        %4861 = sbr.rel (%p4859) target = $region120
      $region119: #{ligrec_egnn_forward.2} parent=103 // pred_region
        %s4862 = smul.u32 2, %s40
      $region120: #{ligrec_egnn_forward.2} parent=103 // pred_fallthru
        _
      // Predicated region
      $region121: #{ligrec_egnn_forward.2} parent=103 // pred_check
        %p4863 = pneg %p572
      $region122: #{ligrec_egnn_forward.2} parent=103 // pred_check_branch
        %4865 = sbr.rel (%p4863) target = $region124
      $region123: #{ligrec_egnn_forward.2} parent=103 // pred_region
        _
      $region124: #{ligrec_egnn_forward.2} parent=103 // pred_fallthru
        _
      // Predicated region
      $region125: #{ligrec_egnn_forward.2} parent=103 // pred_check
        %p4866 = pneg %p546
      $region126: #{ligrec_egnn_forward.2} parent=103 // pred_check_branch
        %4868 = sbr.rel (%p4866) target = $region128
      $region127: #{ligrec_egnn_forward.2} parent=103 // pred_region
        %s4869 = smul.u32 2, %s40
        %p4870 = scmp.lt.s32.totalorder %s4869, 1
        %s4871 = scalar_select %p4870, %s4869, 1
        %s4872 = smul.addr %s4871, 8
        %s4873 = scalar_lea.vmem %s21, %s4872
      $region128: #{ligrec_egnn_forward.2} parent=103 // pred_fallthru
        _
      // Predicated region
      $region129: #{ligrec_egnn_forward.2} parent=103 // pred_check
        %p4874 = pneg %p572
      $region130: #{ligrec_egnn_forward.2} parent=103 // pred_check_branch
        %4876 = sbr.rel (%p4874) target = $region132
      $region131: #{ligrec_egnn_forward.2} parent=103 // pred_region
        %p4877 = scmp.lt.s32.totalorder %s40, 0
        %s4878 = scalar_select %p4877, %s40, 0
        %s4879 = smul.addr %s4878, 4
        %s4880 = scalar_lea.vmem %s22, %s4879
      $region132: #{ligrec_egnn_forward.2} parent=103 // pred_fallthru
        _
    $region104: #{ligrec_egnn_forward.2} parent=5 // pred_fallthru
      _
    %p4881 = scmp.le.s32.totalorder 2, %s30
    // Predicated region
    $region133: #{ligrec_egnn_forward.2} parent=5 // pred_check
      %p4882 = pneg %p4881
    $region134: #{ligrec_egnn_forward.2} parent=5 // pred_check_branch
      %4884 = sbr.rel (%p4882) target = $region136
    $region135: #{ligrec_egnn_forward.2} parent=5 // pred_region
      %s4885 = ssub.s32 %s30, 2
    $region136: #{ligrec_egnn_forward.2} parent=5 // pred_fallthru
      _
  $region6: #{ligrec_egnn_forward.2} parent=0 // loop_footer
    %s34 = sadd.s32 1, %s30
  $region7: #{ligrec_egnn_forward.2} parent=0 // loop_footer_branch
    %29 = sbr.rel target = $region3
  $region8: #{ligrec_egnn_forward.2} parent=0 // loop_exit
    _

// kernel: ligrec_egnn_forward.3
$region0: #{ligrec_egnn_forward.3}
  #allocation0 [shape = 'u32[]', space=smem, size = 0x4, offset = 0x4, fixed_abs, tag = 'smem constant byte address 0x4 - core index']
  #allocation1 [shape = 'u32[144,128]{1,0:T(1,128)}', space=vmem, size = 0x12000, scoped, tag = 'internal scratch']
  #allocation2 [shape = 'f32[16,32]{1,0:T(8,128)}', space=vmem, size = 0x2000, scoped, tag = 'scratch operand']
  #allocation3 [shape = 'f32[3,16]{1,0:T(4,128)}', space=vmem, size = 0x800, scoped, tag = 'scratch operand']
  #allocation4 [shape = 'f32[16,32]{1,0:T(8,128)}', space=vmem, size = 0x2000, scoped, tag = 'scratch operand']
  #allocation5 [shape = 'f32[16,32]{1,0:T(8,128)}', space=vmem, size = 0x2000, scoped, tag = 'scratch operand']
  #allocation6 [shape = 'f32[1,1]{1,0:T(1,128)S(6)}', space=smem, size = 0x200, scoped, tag = 'scoped memory for ligrec_egnn_forward.3']
  %s0 = inlined_call_operand.<no memory space> [shape: f32[1,1], index: 0, kind: input, shape index: {}]
  %s1 = inlined_call_operand.vmem [shape: f32[2,16,32], index: 1, kind: input, shape index: {}]
  %s2 = inlined_call_operand.vmem [shape: f32[2,16,3], index: 2, kind: input, shape index: {}]
  %s3 = inlined_call_operand.vmem [shape: bf16[2,16,16], index: 3, kind: input, shape index: {}]
  %s4 = inlined_call_operand.vmem [shape: f32[16,32], index: 4, kind: input, shape index: {}]
  %s5 = inlined_call_operand.vmem [shape: f32[3,16], index: 5, kind: input, shape index: {}]
  %s6 = inlined_call_operand.vmem [shape: bf16[2,65,32], index: 6, kind: input, shape index: {}]
  %s7 = inlined_call_operand.vmem [shape: f32[2,1,32], index: 7, kind: input, shape index: {}]
  %s8 = inlined_call_operand.vmem [shape: bf16[2,32,32], index: 8, kind: input, shape index: {}]
  %s9 = inlined_call_operand.vmem [shape: f32[2,1,32], index: 9, kind: input, shape index: {}]
  %s10 = inlined_call_operand.vmem [shape: f32[2,1,32], index: 10, kind: input, shape index: {}]
  %s11 = inlined_call_operand.vmem [shape: f32[2,1,1], index: 11, kind: input, shape index: {}]
  %s12 = inlined_call_operand.vmem [shape: bf16[2,65,32], index: 12, kind: input, shape index: {}]
  %s13 = inlined_call_operand.vmem [shape: f32[2,1,32], index: 13, kind: input, shape index: {}]
  %s14 = inlined_call_operand.vmem [shape: bf16[2,32,32], index: 14, kind: input, shape index: {}]
  %s15 = inlined_call_operand.vmem [shape: f32[2,1,32], index: 15, kind: input, shape index: {}]
  %s16 = inlined_call_operand.vmem [shape: f32[2,1,32], index: 16, kind: input, shape index: {}]
  %s17 = inlined_call_operand.vmem [shape: bf16[64,32], index: 17, kind: input, shape index: {}]
  %s18 = inlined_call_operand.vmem [shape: f32[1,32], index: 18, kind: input, shape index: {}]
  %s19 = inlined_call_operand.vmem [shape: bf16[32,32], index: 19, kind: input, shape index: {}]
  %s20 = inlined_call_operand.vmem [shape: f32[1,32], index: 20, kind: input, shape index: {}]
  %s21 = inlined_call_operand.hbm [shape: f32[16,32], index: 21, kind: output, shape index: {0}]
  %s22 = inlined_call_operand.hbm [shape: f32[3,16], index: 22, kind: output, shape index: {1}]
  %23 = xla_tuple %s21, %s22
  %s24 = sld [smem:[#allocation0]]
  $region137: #{ligrec_egnn_forward.3} parent=0
    _
  %s26 = ssub.s32 1, %s24
  %s27 = scalar_select 0, %s26, %s24
  %28 = sst [smem:[#allocation6]] %s0
  $region1: #{ligrec_egnn_forward.3} parent=0
    #allocation7 [shape = 'u8[8192]{0}', space=vmem, size = 0x2000, scoped, tag = 'output window, operand 0, single buffered']
    #allocation8 [shape = 's32[2]{0}', space=sflag, size = 0x8, scoped, tag = 'scoped memory for ligrec_egnn_forward.3']
    #allocation9 [shape = 'u8[2048]{0}', space=vmem, size = 0x800, scoped, tag = 'output window, operand 1, single buffered']
    #allocation10 [shape = 's32[1]{0}', space=sflag, size = 0x4, scoped, tag = 'scoped memory for ligrec_egnn_forward.3']
    %29 = vsyncpa [#allocation8], 0
    %30 = vsyncpa [#allocation10], 0
    loop: start=0, step=1, limit=4
    $region2: #{ligrec_egnn_forward.3} parent=1 // loop_pre_header
      _
    $region3: #{ligrec_egnn_forward.3} parent=1 // loop_header
      %s32 = sphi 0, %s36
      %p33 = scmp.ge.s32.totalorder %s32, 4
      %s39 = sphi 0, %s58
      %s40 = sphi 0, %s54
      %s41 = sphi 0, %s50
      %s42 = sphi 0, %s39
      %s43 = sphi 0, %s40
      %s44 = sphi 0, %s41
      %s45 = sphi 0, %s42
      %s46 = sphi 0, %s43
      %s47 = sphi 0, %s44
      %s59 = sphi 0, %s59
      %s61 = sphi 0, %s59
      %s62 = sphi 0, %s61
      %s76 = sphi 0, %s62
      %s84 = sphi 0, %s86
      %s87 = sphi 0, %s84
      %s88 = sphi 0, %s87
      %s104 = sphi 0, %s88
      %s112 = sphi 0, %s114
      %s115 = sphi 0, %s112
      %s116 = sphi 0, %s115
      %s132 = sphi 0, %s116
      %s142 = sphi 0, %s144
      %s145 = sphi 0, %s142
      %s146 = sphi 0, %s145
      %s162 = sphi 0, %s146
      %s168 = sphi 0, %s170
      %s171 = sphi 0, %s168
      %s172 = sphi 0, %s171
      %s188 = sphi 0, %s172
      %s194 = sphi 0, %s196
      %s197 = sphi 0, %s194
      %s198 = sphi 0, %s197
      %s214 = sphi 0, %s198
      %s218 = sphi 0, %s218
      %s220 = sphi 0, %s218
      %s221 = sphi 0, %s220
      %s235 = sphi 0, %s221
      %s239 = sphi 0, %s239
      %s241 = sphi 0, %s239
      %s242 = sphi 0, %s241
      %s256 = sphi 0, %s242
      %s260 = sphi 0, %s260
      %s262 = sphi 0, %s260
      %s263 = sphi 0, %s262
      %s277 = sphi 0, %s263
      %s281 = sphi 0, %s281
      %s283 = sphi 0, %s281
      %s284 = sphi 0, %s283
      %s298 = sphi 0, %s284
      %s302 = sphi 0, %s302
      %s304 = sphi 0, %s302
      %s305 = sphi 0, %s304
      %s319 = sphi 0, %s305
      %s323 = sphi 0, %s323
      %s325 = sphi 0, %s323
      %s326 = sphi 0, %s325
      %s340 = sphi 0, %s326
      %s344 = sphi 0, %s344
      %s346 = sphi 0, %s344
      %s347 = sphi 0, %s346
      %s361 = sphi 0, %s347
      %s365 = sphi 0, %s365
      %s367 = sphi 0, %s365
      %s368 = sphi 0, %s367
      %s382 = sphi 0, %s368
      %s386 = sphi 0, %s386
      %s388 = sphi 0, %s386
      %s389 = sphi 0, %s388
      %s403 = sphi 0, %s389
      %s407 = sphi 0, %s407
      %s409 = sphi 0, %s407
      %s410 = sphi 0, %s409
      %s424 = sphi 0, %s410
      %s428 = sphi 0, %s428
      %s430 = sphi 0, %s428
      %s431 = sphi 0, %s430
      %s445 = sphi 0, %s431
      %s449 = sphi 0, %s449
      %s451 = sphi 0, %s449
      %s452 = sphi 0, %s451
      %s466 = sphi 0, %s452
      %s470 = sphi 0, %s470
      %s472 = sphi 0, %s470
      %s473 = sphi 0, %s472
      %s487 = sphi 0, %s473
      %s491 = sphi 0, %s491
      %s493 = sphi 0, %s491
      %s494 = sphi 0, %s493
      %s508 = sphi 0, %s494
      %s512 = sphi 0, %s512
      %s514 = sphi 0, %s512
      %s515 = sphi 0, %s514
      %s529 = sphi 0, %s515
      %s535 = sphi 0, %s537
      %s538 = sphi 0, %s535
      %s539 = sphi 0, %s538
      %s555 = sphi 0, %s539
      %s561 = sphi 0, %s563
      %s564 = sphi 0, %s561
      %s565 = sphi 0, %s564
      %s581 = sphi 0, %s565
    $region4: #{ligrec_egnn_forward.3} parent=1 // loop_header_branch
      %35 = sbr.rel (%p33) target = $region8
    $region5: #{ligrec_egnn_forward.3} parent=1 // loop_body
      %s37 = ssub.s32 %s32, 1
      %s38 = ssub.s32 %s32, 2
      %s48 = sadd.s32 1, %s41
      %p49 = scmp.ge.s32.totalorder %s48, 1
      %s50 = scalar_select %p49, 0, %s48
      %s51 = sadd.s32 1, %s40
      %s52 = scalar_select %p49, %s51, %s40
      %p53 = scmp.ge.s32.totalorder %s52, 2
      %s54 = scalar_select %p53, 0, %s52
      %s55 = sadd.s32 1, %s39
      %s56 = scalar_select %p53, %s55, %s39
      %p57 = scmp.ge.s32.totalorder %s56, 1
      %s58 = scalar_select %p57, 0, %s56
      %s60 = sadd.s32 %s59, 1
      %p63 = scmp.eq.s32.totalorder %s32, 1
      %p64 = scmp.ne.s32.totalorder %s59, %s61
      %p65 = scmp.eq.s32.totalorder %s32, 0
      %p66 = por %p64, %p65
      %p67 = scmp.ne.s32.totalorder %s59, %s61
      %p68 = scmp.eq.s32.totalorder %s37, 1
      %p69 = por %p67, %p68
      %p70 = scmp.ne.s32.totalorder %s61, %s62
      %p71 = scmp.eq.s32.totalorder %s37, 0
      %p72 = por %p70, %p71
      %p73 = scmp.ne.s32.totalorder %s61, %s62
      %p74 = scmp.eq.s32.totalorder %s38, 1
      %p75 = por %p73, %p74
      %p77 = scmp.ne.s32.totalorder %s62, %s76
      %p78 = scmp.eq.s32.totalorder %s38, 0
      %p79 = por %p77, %p78
      %s80 = ssub.s32 %s40, %s54
      %s81 = ssub.s32 %s41, %s50
      %s82 = sor.u32 %s80, %s81
      %p83 = scmp.eq.s32.totalorder %s82, 0
      %s85 = sadd.s32 %s84, 1
      %s86 = scalar_select %p83, %s84, %s85
      %p89 = pneg %p83
      %p90 = scmp.eq.s32.totalorder %s32, 1
      %p91 = por %p89, %p90
      %p92 = scmp.ne.s32.totalorder %s84, %s87
      %p93 = scmp.eq.s32.totalorder %s32, 0
      %p94 = por %p92, %p93
      %p95 = scmp.ne.s32.totalorder %s84, %s87
      %p96 = scmp.eq.s32.totalorder %s37, 1
      %p97 = por %p95, %p96
      %p98 = scmp.ne.s32.totalorder %s87, %s88
      %p99 = scmp.eq.s32.totalorder %s37, 0
      %p100 = por %p98, %p99
      %p101 = scmp.ne.s32.totalorder %s87, %s88
      %p102 = scmp.eq.s32.totalorder %s38, 1
      %p103 = por %p101, %p102
      %p105 = scmp.ne.s32.totalorder %s88, %s104
      %p106 = scmp.eq.s32.totalorder %s38, 0
      %p107 = por %p105, %p106
      %s108 = ssub.s32 %s40, %s54
      %s109 = ssub.s32 %s41, %s50
      %s110 = sor.u32 %s108, %s109
      %p111 = scmp.eq.s32.totalorder %s110, 0
      %s113 = sadd.s32 %s112, 1
      %s114 = scalar_select %p111, %s112, %s113
      %p117 = pneg %p111
      %p118 = scmp.eq.s32.totalorder %s32, 1
      %p119 = por %p117, %p118
      %p120 = scmp.ne.s32.totalorder %s112, %s115
      %p121 = scmp.eq.s32.totalorder %s32, 0
      %p122 = por %p120, %p121
      %p123 = scmp.ne.s32.totalorder %s112, %s115
      %p124 = scmp.eq.s32.totalorder %s37, 1
      %p125 = por %p123, %p124
      %p126 = scmp.ne.s32.totalorder %s115, %s116
      %p127 = scmp.eq.s32.totalorder %s37, 0
      %p128 = por %p126, %p127
      %p129 = scmp.ne.s32.totalorder %s115, %s116
      %p130 = scmp.eq.s32.totalorder %s38, 1
      %p131 = por %p129, %p130
      %p133 = scmp.ne.s32.totalorder %s116, %s132
      %p134 = scmp.eq.s32.totalorder %s38, 0
      %p135 = por %p133, %p134
      %s136 = ssub.s32 %s40, %s54
      %s137 = ssub.s32 %s41, %s50
      %s138 = sor.u32 %s136, %s137
      %s139 = ssub.s32 %s39, %s58
      %s140 = sor.u32 %s138, %s139
      %p141 = scmp.eq.s32.totalorder %s140, 0
      %s143 = sadd.s32 %s142, 1
      %s144 = scalar_select %p141, %s142, %s143
      %p147 = pneg %p141
      %p148 = scmp.eq.s32.totalorder %s32, 1
      %p149 = por %p147, %p148
      %p150 = scmp.ne.s32.totalorder %s142, %s145
      %p151 = scmp.eq.s32.totalorder %s32, 0
      %p152 = por %p150, %p151
      %p153 = scmp.ne.s32.totalorder %s142, %s145
      %p154 = scmp.eq.s32.totalorder %s37, 1
      %p155 = por %p153, %p154
      %p156 = scmp.ne.s32.totalorder %s145, %s146
      %p157 = scmp.eq.s32.totalorder %s37, 0
      %p158 = por %p156, %p157
      %p159 = scmp.ne.s32.totalorder %s145, %s146
      %p160 = scmp.eq.s32.totalorder %s38, 1
      %p161 = por %p159, %p160
      %p163 = scmp.ne.s32.totalorder %s146, %s162
      %p164 = scmp.eq.s32.totalorder %s38, 0
      %p165 = por %p163, %p164
      %s166 = ssub.s32 %s39, %s58
      %p167 = scmp.eq.s32.totalorder %s166, 0
      %s169 = sadd.s32 %s168, 1
      %s170 = scalar_select %p167, %s168, %s169
      %p173 = pneg %p167
      %p174 = scmp.eq.s32.totalorder %s32, 1
      %p175 = por %p173, %p174
      %p176 = scmp.ne.s32.totalorder %s168, %s171
      %p177 = scmp.eq.s32.totalorder %s32, 0
      %p178 = por %p176, %p177
      %p179 = scmp.ne.s32.totalorder %s168, %s171
      %p180 = scmp.eq.s32.totalorder %s37, 1
      %p181 = por %p179, %p180
      %p182 = scmp.ne.s32.totalorder %s171, %s172
      %p183 = scmp.eq.s32.totalorder %s37, 0
      %p184 = por %p182, %p183
      %p185 = scmp.ne.s32.totalorder %s171, %s172
      %p186 = scmp.eq.s32.totalorder %s38, 1
      %p187 = por %p185, %p186
      %p189 = scmp.ne.s32.totalorder %s172, %s188
      %p190 = scmp.eq.s32.totalorder %s38, 0
      %p191 = por %p189, %p190
      %s192 = ssub.s32 %s39, %s58
      %p193 = scmp.eq.s32.totalorder %s192, 0
      %s195 = sadd.s32 %s194, 1
      %s196 = scalar_select %p193, %s194, %s195
      %p199 = pneg %p193
      %p200 = scmp.eq.s32.totalorder %s32, 1
      %p201 = por %p199, %p200
      %p202 = scmp.ne.s32.totalorder %s194, %s197
      %p203 = scmp.eq.s32.totalorder %s32, 0
      %p204 = por %p202, %p203
      %p205 = scmp.ne.s32.totalorder %s194, %s197
      %p206 = scmp.eq.s32.totalorder %s37, 1
      %p207 = por %p205, %p206
      %p208 = scmp.ne.s32.totalorder %s197, %s198
      %p209 = scmp.eq.s32.totalorder %s37, 0
      %p210 = por %p208, %p209
      %p211 = scmp.ne.s32.totalorder %s197, %s198
      %p212 = scmp.eq.s32.totalorder %s38, 1
      %p213 = por %p211, %p212
      %p215 = scmp.ne.s32.totalorder %s198, %s214
      %p216 = scmp.eq.s32.totalorder %s38, 0
      %p217 = por %p215, %p216
      %s219 = sadd.s32 %s218, 1
      %p222 = scmp.eq.s32.totalorder %s32, 1
      %p223 = scmp.ne.s32.totalorder %s218, %s220
      %p224 = scmp.eq.s32.totalorder %s32, 0
      %p225 = por %p223, %p224
      %p226 = scmp.ne.s32.totalorder %s218, %s220
      %p227 = scmp.eq.s32.totalorder %s37, 1
      %p228 = por %p226, %p227
      %p229 = scmp.ne.s32.totalorder %s220, %s221
      %p230 = scmp.eq.s32.totalorder %s37, 0
      %p231 = por %p229, %p230
      %p232 = scmp.ne.s32.totalorder %s220, %s221
      %p233 = scmp.eq.s32.totalorder %s38, 1
      %p234 = por %p232, %p233
      %p236 = scmp.ne.s32.totalorder %s221, %s235
      %p237 = scmp.eq.s32.totalorder %s38, 0
      %p238 = por %p236, %p237
      %s240 = sadd.s32 %s239, 1
      %p243 = scmp.eq.s32.totalorder %s32, 1
      %p244 = scmp.ne.s32.totalorder %s239, %s241
      %p245 = scmp.eq.s32.totalorder %s32, 0
      %p246 = por %p244, %p245
      %p247 = scmp.ne.s32.totalorder %s239, %s241
      %p248 = scmp.eq.s32.totalorder %s37, 1
      %p249 = por %p247, %p248
      %p250 = scmp.ne.s32.totalorder %s241, %s242
      %p251 = scmp.eq.s32.totalorder %s37, 0
      %p252 = por %p250, %p251
      %p253 = scmp.ne.s32.totalorder %s241, %s242
      %p254 = scmp.eq.s32.totalorder %s38, 1
      %p255 = por %p253, %p254
      %p257 = scmp.ne.s32.totalorder %s242, %s256
      %p258 = scmp.eq.s32.totalorder %s38, 0
      %p259 = por %p257, %p258
      %s261 = sadd.s32 %s260, 1
      %p264 = scmp.eq.s32.totalorder %s32, 1
      %p265 = scmp.ne.s32.totalorder %s260, %s262
      %p266 = scmp.eq.s32.totalorder %s32, 0
      %p267 = por %p265, %p266
      %p268 = scmp.ne.s32.totalorder %s260, %s262
      %p269 = scmp.eq.s32.totalorder %s37, 1
      %p270 = por %p268, %p269
      %p271 = scmp.ne.s32.totalorder %s262, %s263
      %p272 = scmp.eq.s32.totalorder %s37, 0
      %p273 = por %p271, %p272
      %p274 = scmp.ne.s32.totalorder %s262, %s263
      %p275 = scmp.eq.s32.totalorder %s38, 1
      %p276 = por %p274, %p275
      %p278 = scmp.ne.s32.totalorder %s263, %s277
      %p279 = scmp.eq.s32.totalorder %s38, 0
      %p280 = por %p278, %p279
      %s282 = sadd.s32 %s281, 1
      %p285 = scmp.eq.s32.totalorder %s32, 1
      %p286 = scmp.ne.s32.totalorder %s281, %s283
      %p287 = scmp.eq.s32.totalorder %s32, 0
      %p288 = por %p286, %p287
      %p289 = scmp.ne.s32.totalorder %s281, %s283
      %p290 = scmp.eq.s32.totalorder %s37, 1
      %p291 = por %p289, %p290
      %p292 = scmp.ne.s32.totalorder %s283, %s284
      %p293 = scmp.eq.s32.totalorder %s37, 0
      %p294 = por %p292, %p293
      %p295 = scmp.ne.s32.totalorder %s283, %s284
      %p296 = scmp.eq.s32.totalorder %s38, 1
      %p297 = por %p295, %p296
      %p299 = scmp.ne.s32.totalorder %s284, %s298
      %p300 = scmp.eq.s32.totalorder %s38, 0
      %p301 = por %p299, %p300
      %s303 = sadd.s32 %s302, 1
      %p306 = scmp.eq.s32.totalorder %s32, 1
      %p307 = scmp.ne.s32.totalorder %s302, %s304
      %p308 = scmp.eq.s32.totalorder %s32, 0
      %p309 = por %p307, %p308
      %p310 = scmp.ne.s32.totalorder %s302, %s304
      %p311 = scmp.eq.s32.totalorder %s37, 1
      %p312 = por %p310, %p311
      %p313 = scmp.ne.s32.totalorder %s304, %s305
      %p314 = scmp.eq.s32.totalorder %s37, 0
      %p315 = por %p313, %p314
      %p316 = scmp.ne.s32.totalorder %s304, %s305
      %p317 = scmp.eq.s32.totalorder %s38, 1
      %p318 = por %p316, %p317
      %p320 = scmp.ne.s32.totalorder %s305, %s319
      %p321 = scmp.eq.s32.totalorder %s38, 0
      %p322 = por %p320, %p321
      %s324 = sadd.s32 %s323, 1
      %p327 = scmp.eq.s32.totalorder %s32, 1
      %p328 = scmp.ne.s32.totalorder %s323, %s325
      %p329 = scmp.eq.s32.totalorder %s32, 0
      %p330 = por %p328, %p329
      %p331 = scmp.ne.s32.totalorder %s323, %s325
      %p332 = scmp.eq.s32.totalorder %s37, 1
      %p333 = por %p331, %p332
      %p334 = scmp.ne.s32.totalorder %s325, %s326
      %p335 = scmp.eq.s32.totalorder %s37, 0
      %p336 = por %p334, %p335
      %p337 = scmp.ne.s32.totalorder %s325, %s326
      %p338 = scmp.eq.s32.totalorder %s38, 1
      %p339 = por %p337, %p338
      %p341 = scmp.ne.s32.totalorder %s326, %s340
      %p342 = scmp.eq.s32.totalorder %s38, 0
      %p343 = por %p341, %p342
      %s345 = sadd.s32 %s344, 1
      %p348 = scmp.eq.s32.totalorder %s32, 1
      %p349 = scmp.ne.s32.totalorder %s344, %s346
      %p350 = scmp.eq.s32.totalorder %s32, 0
      %p351 = por %p349, %p350
      %p352 = scmp.ne.s32.totalorder %s344, %s346
      %p353 = scmp.eq.s32.totalorder %s37, 1
      %p354 = por %p352, %p353
      %p355 = scmp.ne.s32.totalorder %s346, %s347
      %p356 = scmp.eq.s32.totalorder %s37, 0
      %p357 = por %p355, %p356
      %p358 = scmp.ne.s32.totalorder %s346, %s347
      %p359 = scmp.eq.s32.totalorder %s38, 1
      %p360 = por %p358, %p359
      %p362 = scmp.ne.s32.totalorder %s347, %s361
      %p363 = scmp.eq.s32.totalorder %s38, 0
      %p364 = por %p362, %p363
      %s366 = sadd.s32 %s365, 1
      %p369 = scmp.eq.s32.totalorder %s32, 1
      %p370 = scmp.ne.s32.totalorder %s365, %s367
      %p371 = scmp.eq.s32.totalorder %s32, 0
      %p372 = por %p370, %p371
      %p373 = scmp.ne.s32.totalorder %s365, %s367
      %p374 = scmp.eq.s32.totalorder %s37, 1
      %p375 = por %p373, %p374
      %p376 = scmp.ne.s32.totalorder %s367, %s368
      %p377 = scmp.eq.s32.totalorder %s37, 0
      %p378 = por %p376, %p377
      %p379 = scmp.ne.s32.totalorder %s367, %s368
      %p380 = scmp.eq.s32.totalorder %s38, 1
      %p381 = por %p379, %p380
      %p383 = scmp.ne.s32.totalorder %s368, %s382
      %p384 = scmp.eq.s32.totalorder %s38, 0
      %p385 = por %p383, %p384
      %s387 = sadd.s32 %s386, 1
      %p390 = scmp.eq.s32.totalorder %s32, 1
      %p391 = scmp.ne.s32.totalorder %s386, %s388
      %p392 = scmp.eq.s32.totalorder %s32, 0
      %p393 = por %p391, %p392
      %p394 = scmp.ne.s32.totalorder %s386, %s388
      %p395 = scmp.eq.s32.totalorder %s37, 1
      %p396 = por %p394, %p395
      %p397 = scmp.ne.s32.totalorder %s388, %s389
      %p398 = scmp.eq.s32.totalorder %s37, 0
      %p399 = por %p397, %p398
      %p400 = scmp.ne.s32.totalorder %s388, %s389
      %p401 = scmp.eq.s32.totalorder %s38, 1
      %p402 = por %p400, %p401
      %p404 = scmp.ne.s32.totalorder %s389, %s403
      %p405 = scmp.eq.s32.totalorder %s38, 0
      %p406 = por %p404, %p405
      %s408 = sadd.s32 %s407, 1
      %p411 = scmp.eq.s32.totalorder %s32, 1
      %p412 = scmp.ne.s32.totalorder %s407, %s409
      %p413 = scmp.eq.s32.totalorder %s32, 0
      %p414 = por %p412, %p413
      %p415 = scmp.ne.s32.totalorder %s407, %s409
      %p416 = scmp.eq.s32.totalorder %s37, 1
      %p417 = por %p415, %p416
      %p418 = scmp.ne.s32.totalorder %s409, %s410
      %p419 = scmp.eq.s32.totalorder %s37, 0
      %p420 = por %p418, %p419
      %p421 = scmp.ne.s32.totalorder %s409, %s410
      %p422 = scmp.eq.s32.totalorder %s38, 1
      %p423 = por %p421, %p422
      %p425 = scmp.ne.s32.totalorder %s410, %s424
      %p426 = scmp.eq.s32.totalorder %s38, 0
      %p427 = por %p425, %p426
      %s429 = sadd.s32 %s428, 1
      %p432 = scmp.eq.s32.totalorder %s32, 1
      %p433 = scmp.ne.s32.totalorder %s428, %s430
      %p434 = scmp.eq.s32.totalorder %s32, 0
      %p435 = por %p433, %p434
      %p436 = scmp.ne.s32.totalorder %s428, %s430
      %p437 = scmp.eq.s32.totalorder %s37, 1
      %p438 = por %p436, %p437
      %p439 = scmp.ne.s32.totalorder %s430, %s431
      %p440 = scmp.eq.s32.totalorder %s37, 0
      %p441 = por %p439, %p440
      %p442 = scmp.ne.s32.totalorder %s430, %s431
      %p443 = scmp.eq.s32.totalorder %s38, 1
      %p444 = por %p442, %p443
      %p446 = scmp.ne.s32.totalorder %s431, %s445
      %p447 = scmp.eq.s32.totalorder %s38, 0
      %p448 = por %p446, %p447
      %s450 = sadd.s32 %s449, 1
      %p453 = scmp.eq.s32.totalorder %s32, 1
      %p454 = scmp.ne.s32.totalorder %s449, %s451
      %p455 = scmp.eq.s32.totalorder %s32, 0
      %p456 = por %p454, %p455
      %p457 = scmp.ne.s32.totalorder %s449, %s451
      %p458 = scmp.eq.s32.totalorder %s37, 1
      %p459 = por %p457, %p458
      %p460 = scmp.ne.s32.totalorder %s451, %s452
      %p461 = scmp.eq.s32.totalorder %s37, 0
      %p462 = por %p460, %p461
      %p463 = scmp.ne.s32.totalorder %s451, %s452
      %p464 = scmp.eq.s32.totalorder %s38, 1
      %p465 = por %p463, %p464
      %p467 = scmp.ne.s32.totalorder %s452, %s466
      %p468 = scmp.eq.s32.totalorder %s38, 0
      %p469 = por %p467, %p468
      %s471 = sadd.s32 %s470, 1
      %p474 = scmp.eq.s32.totalorder %s32, 1
      %p475 = scmp.ne.s32.totalorder %s470, %s472
      %p476 = scmp.eq.s32.totalorder %s32, 0
      %p477 = por %p475, %p476
      %p478 = scmp.ne.s32.totalorder %s470, %s472
      %p479 = scmp.eq.s32.totalorder %s37, 1
      %p480 = por %p478, %p479
      %p481 = scmp.ne.s32.totalorder %s472, %s473
      %p482 = scmp.eq.s32.totalorder %s37, 0
      %p483 = por %p481, %p482
      %p484 = scmp.ne.s32.totalorder %s472, %s473
      %p485 = scmp.eq.s32.totalorder %s38, 1
      %p486 = por %p484, %p485
      %p488 = scmp.ne.s32.totalorder %s473, %s487
      %p489 = scmp.eq.s32.totalorder %s38, 0
      %p490 = por %p488, %p489
      %s492 = sadd.s32 %s491, 1
      %p495 = scmp.eq.s32.totalorder %s32, 1
      %p496 = scmp.ne.s32.totalorder %s491, %s493
      %p497 = scmp.eq.s32.totalorder %s32, 0
      %p498 = por %p496, %p497
      %p499 = scmp.ne.s32.totalorder %s491, %s493
      %p500 = scmp.eq.s32.totalorder %s37, 1
      %p501 = por %p499, %p500
      %p502 = scmp.ne.s32.totalorder %s493, %s494
      %p503 = scmp.eq.s32.totalorder %s37, 0
      %p504 = por %p502, %p503
      %p505 = scmp.ne.s32.totalorder %s493, %s494
      %p506 = scmp.eq.s32.totalorder %s38, 1
      %p507 = por %p505, %p506
      %p509 = scmp.ne.s32.totalorder %s494, %s508
      %p510 = scmp.eq.s32.totalorder %s38, 0
      %p511 = por %p509, %p510
      %s513 = sadd.s32 %s512, 1
      %p516 = scmp.eq.s32.totalorder %s32, 1
      %p517 = scmp.ne.s32.totalorder %s512, %s514
      %p518 = scmp.eq.s32.totalorder %s32, 0
      %p519 = por %p517, %p518
      %p520 = scmp.ne.s32.totalorder %s512, %s514
      %p521 = scmp.eq.s32.totalorder %s37, 1
      %p522 = por %p520, %p521
      %p523 = scmp.ne.s32.totalorder %s514, %s515
      %p524 = scmp.eq.s32.totalorder %s37, 0
      %p525 = por %p523, %p524
      %p526 = scmp.ne.s32.totalorder %s514, %s515
      %p527 = scmp.eq.s32.totalorder %s38, 1
      %p528 = por %p526, %p527
      %p530 = scmp.ne.s32.totalorder %s515, %s529
      %p531 = scmp.eq.s32.totalorder %s38, 0
      %p532 = por %p530, %p531
      %s533 = ssub.s32 %s39, %s58
      %p534 = scmp.eq.s32.totalorder %s533, 0
      %s536 = sadd.s32 %s535, 1
      %s537 = scalar_select %p534, %s535, %s536
      %p540 = pneg %p534
      %p541 = scmp.eq.s32.totalorder %s32, 1
      %p542 = por %p540, %p541
      %p543 = scmp.ne.s32.totalorder %s535, %s538
      %p544 = scmp.eq.s32.totalorder %s32, 0
      %p545 = por %p543, %p544
      %p546 = scmp.ne.s32.totalorder %s535, %s538
      %p547 = scmp.eq.s32.totalorder %s37, 1
      %p548 = por %p546, %p547
      %p549 = scmp.ne.s32.totalorder %s538, %s539
      %p550 = scmp.eq.s32.totalorder %s37, 0
      %p551 = por %p549, %p550
      %p552 = scmp.ne.s32.totalorder %s538, %s539
      %p553 = scmp.eq.s32.totalorder %s38, 1
      %p554 = por %p552, %p553
      %p556 = scmp.ne.s32.totalorder %s539, %s555
      %p557 = scmp.eq.s32.totalorder %s38, 0
      %p558 = por %p556, %p557
      %s559 = ssub.s32 %s39, %s58
      %p560 = scmp.eq.s32.totalorder %s559, 0
      %s562 = sadd.s32 %s561, 1
      %s563 = scalar_select %p560, %s561, %s562
      %p566 = pneg %p560
      %p567 = scmp.eq.s32.totalorder %s32, 1
      %p568 = por %p566, %p567
      %p569 = scmp.ne.s32.totalorder %s561, %s564
      %p570 = scmp.eq.s32.totalorder %s32, 0
      %p571 = por %p569, %p570
      %p572 = scmp.ne.s32.totalorder %s561, %s564
      %p573 = scmp.eq.s32.totalorder %s37, 1
      %p574 = por %p572, %p573
      %p575 = scmp.ne.s32.totalorder %s564, %s565
      %p576 = scmp.eq.s32.totalorder %s37, 0
      %p577 = por %p575, %p576
      %p578 = scmp.ne.s32.totalorder %s564, %s565
      %p579 = scmp.eq.s32.totalorder %s38, 1
      %p580 = por %p578, %p579
      %p582 = scmp.ne.s32.totalorder %s565, %s581
      %p583 = scmp.eq.s32.totalorder %s38, 0
      %p584 = por %p582, %p583
      %p585 = scmp.le.s32.totalorder 1, %s32
      %p586 = scmp.lt.s32.totalorder %s32, 3
      %p587 = pnand %p585, %p586
      %p588 = pneg %p587
      // Predicated region
      $region9: #{ligrec_egnn_forward.3} parent=5 // pred_check
        _
      $region10: #{ligrec_egnn_forward.3} parent=5 // pred_check_branch
        %590 = sbr.rel (%p587) target = $region12
      $region11: #{ligrec_egnn_forward.3} parent=5 // pred_region
        %s591 = ssub.s32 %s32, 1
        // Predicated region
        $region13: #{ligrec_egnn_forward.3} parent=11 // pred_check
          %p592 = pneg %p72
        $region14: #{ligrec_egnn_forward.3} parent=11 // pred_check_branch
          %594 = sbr.rel (%p592) target = $region16
        $region15: #{ligrec_egnn_forward.3} parent=11 // pred_region
          _
        $region16: #{ligrec_egnn_forward.3} parent=11 // pred_fallthru
          _
        // Predicated region
        $region17: #{ligrec_egnn_forward.3} parent=11 // pred_check
          %p595 = pneg %p184
        $region18: #{ligrec_egnn_forward.3} parent=11 // pred_check_branch
          %597 = sbr.rel (%p595) target = $region20
        $region19: #{ligrec_egnn_forward.3} parent=11 // pred_region
          %s598 = smul.u32 2, %s42
          %p599 = scmp.lt.s32.totalorder %s598, 1
          %s600 = scalar_select %p599, %s598, 1
          %s601 = smul.addr %s600, 8
          %s602 = scalar_lea.vmem %s4, %s601
          %s603 = smul.u32 2, %s42
        $region20: #{ligrec_egnn_forward.3} parent=11 // pred_fallthru
          _
        // Predicated region
        $region21: #{ligrec_egnn_forward.3} parent=11 // pred_check
          %p604 = pneg %p210
        $region22: #{ligrec_egnn_forward.3} parent=11 // pred_check_branch
          %606 = sbr.rel (%p604) target = $region24
        $region23: #{ligrec_egnn_forward.3} parent=11 // pred_region
          %p607 = scmp.lt.s32.totalorder %s42, 0
          %s608 = scalar_select %p607, %s42, 0
          %s609 = smul.addr %s608, 4
          %s610 = scalar_lea.vmem %s5, %s609
        $region24: #{ligrec_egnn_forward.3} parent=11 // pred_fallthru
          _
        // Predicated region
        $region25: #{ligrec_egnn_forward.3} parent=11 // pred_check
          %p611 = pneg %p231
        $region26: #{ligrec_egnn_forward.3} parent=11 // pred_check_branch
          %613 = sbr.rel (%p611) target = $region28
        $region27: #{ligrec_egnn_forward.3} parent=11 // pred_region
          _
        $region28: #{ligrec_egnn_forward.3} parent=11 // pred_fallthru
          _
        // Predicated region
        $region29: #{ligrec_egnn_forward.3} parent=11 // pred_check
          %p614 = pneg %p252
        $region30: #{ligrec_egnn_forward.3} parent=11 // pred_check_branch
          %616 = sbr.rel (%p614) target = $region32
        $region31: #{ligrec_egnn_forward.3} parent=11 // pred_region
          _
        $region32: #{ligrec_egnn_forward.3} parent=11 // pred_fallthru
          _
        // Predicated region
        $region33: #{ligrec_egnn_forward.3} parent=11 // pred_check
          %p617 = pneg %p273
        $region34: #{ligrec_egnn_forward.3} parent=11 // pred_check_branch
          %619 = sbr.rel (%p617) target = $region36
        $region35: #{ligrec_egnn_forward.3} parent=11 // pred_region
          _
        $region36: #{ligrec_egnn_forward.3} parent=11 // pred_fallthru
          _
        // Predicated region
        $region37: #{ligrec_egnn_forward.3} parent=11 // pred_check
          %p620 = pneg %p294
        $region38: #{ligrec_egnn_forward.3} parent=11 // pred_check_branch
          %622 = sbr.rel (%p620) target = $region40
        $region39: #{ligrec_egnn_forward.3} parent=11 // pred_region
          _
        $region40: #{ligrec_egnn_forward.3} parent=11 // pred_fallthru
          _
        // Predicated region
        $region41: #{ligrec_egnn_forward.3} parent=11 // pred_check
          %p623 = pneg %p315
        $region42: #{ligrec_egnn_forward.3} parent=11 // pred_check_branch
          %625 = sbr.rel (%p623) target = $region44
        $region43: #{ligrec_egnn_forward.3} parent=11 // pred_region
          _
        $region44: #{ligrec_egnn_forward.3} parent=11 // pred_fallthru
          _
        // Predicated region
        $region45: #{ligrec_egnn_forward.3} parent=11 // pred_check
          %p626 = pneg %p336
        $region46: #{ligrec_egnn_forward.3} parent=11 // pred_check_branch
          %628 = sbr.rel (%p626) target = $region48
        $region47: #{ligrec_egnn_forward.3} parent=11 // pred_region
          _
        $region48: #{ligrec_egnn_forward.3} parent=11 // pred_fallthru
          _
        // Predicated region
        $region49: #{ligrec_egnn_forward.3} parent=11 // pred_check
          %p629 = pneg %p357
        $region50: #{ligrec_egnn_forward.3} parent=11 // pred_check_branch
          %631 = sbr.rel (%p629) target = $region52
        $region51: #{ligrec_egnn_forward.3} parent=11 // pred_region
          _
        $region52: #{ligrec_egnn_forward.3} parent=11 // pred_fallthru
          _
        // Predicated region
        $region53: #{ligrec_egnn_forward.3} parent=11 // pred_check
          %p632 = pneg %p378
        $region54: #{ligrec_egnn_forward.3} parent=11 // pred_check_branch
          %634 = sbr.rel (%p632) target = $region56
        $region55: #{ligrec_egnn_forward.3} parent=11 // pred_region
          _
        $region56: #{ligrec_egnn_forward.3} parent=11 // pred_fallthru
          _
        // Predicated region
        $region57: #{ligrec_egnn_forward.3} parent=11 // pred_check
          %p635 = pneg %p399
        $region58: #{ligrec_egnn_forward.3} parent=11 // pred_check_branch
          %637 = sbr.rel (%p635) target = $region60
        $region59: #{ligrec_egnn_forward.3} parent=11 // pred_region
          _
        $region60: #{ligrec_egnn_forward.3} parent=11 // pred_fallthru
          _
        // Predicated region
        $region61: #{ligrec_egnn_forward.3} parent=11 // pred_check
          %p638 = pneg %p420
        $region62: #{ligrec_egnn_forward.3} parent=11 // pred_check_branch
          %640 = sbr.rel (%p638) target = $region64
        $region63: #{ligrec_egnn_forward.3} parent=11 // pred_region
          _
        $region64: #{ligrec_egnn_forward.3} parent=11 // pred_fallthru
          _
        // Predicated region
        $region65: #{ligrec_egnn_forward.3} parent=11 // pred_check
          %p641 = pneg %p441
        $region66: #{ligrec_egnn_forward.3} parent=11 // pred_check_branch
          %643 = sbr.rel (%p641) target = $region68
        $region67: #{ligrec_egnn_forward.3} parent=11 // pred_region
          _
        $region68: #{ligrec_egnn_forward.3} parent=11 // pred_fallthru
          _
        // Predicated region
        $region69: #{ligrec_egnn_forward.3} parent=11 // pred_check
          %p644 = pneg %p462
        $region70: #{ligrec_egnn_forward.3} parent=11 // pred_check_branch
          %646 = sbr.rel (%p644) target = $region72
        $region71: #{ligrec_egnn_forward.3} parent=11 // pred_region
          _
        $region72: #{ligrec_egnn_forward.3} parent=11 // pred_fallthru
          _
        // Predicated region
        $region73: #{ligrec_egnn_forward.3} parent=11 // pred_check
          %p647 = pneg %p483
        $region74: #{ligrec_egnn_forward.3} parent=11 // pred_check_branch
          %649 = sbr.rel (%p647) target = $region76
        $region75: #{ligrec_egnn_forward.3} parent=11 // pred_region
          _
        $region76: #{ligrec_egnn_forward.3} parent=11 // pred_fallthru
          _
        // Predicated region
        $region77: #{ligrec_egnn_forward.3} parent=11 // pred_check
          %p650 = pneg %p504
        $region78: #{ligrec_egnn_forward.3} parent=11 // pred_check_branch
          %652 = sbr.rel (%p650) target = $region80
        $region79: #{ligrec_egnn_forward.3} parent=11 // pred_region
          _
        $region80: #{ligrec_egnn_forward.3} parent=11 // pred_fallthru
          _
        // Predicated region
        $region81: #{ligrec_egnn_forward.3} parent=11 // pred_check
          %p653 = pneg %p525
        $region82: #{ligrec_egnn_forward.3} parent=11 // pred_check_branch
          %655 = sbr.rel (%p653) target = $region84
        $region83: #{ligrec_egnn_forward.3} parent=11 // pred_region
          _
        $region84: #{ligrec_egnn_forward.3} parent=11 // pred_fallthru
          _
      $region12: #{ligrec_egnn_forward.3} parent=5 // pred_fallthru
        _
      %p656 = scmp.lt.s32.totalorder %s32, 2
      // Predicated region
      $region85: #{ligrec_egnn_forward.3} parent=5 // pred_check
        %p657 = pneg %p656
      $region86: #{ligrec_egnn_forward.3} parent=5 // pred_check_branch
        %659 = sbr.rel (%p657) target = $region88
      $region87: #{ligrec_egnn_forward.3} parent=5 // pred_region
        // Predicated region
        $region89: #{ligrec_egnn_forward.3} parent=87 // pred_check
          %p660 = pneg %p94
        $region90: #{ligrec_egnn_forward.3} parent=87 // pred_check_branch
          %662 = sbr.rel (%p660) target = $region92
        $region91: #{ligrec_egnn_forward.3} parent=87 // pred_region
          %s663 = smul.u32 2, %s41
          %p664 = scmp.lt.s32.totalorder %s40, 1
          %s665 = scalar_select %p664, %s40, 1
          %p666 = scmp.lt.s32.totalorder %s663, 1
          %s667 = scalar_select %p666, %s663, 1
          %s668 = smul.addr %s665, 2
          %s669 = sadd.s32 %s667, %s668
          %s670 = smul.addr %s669, 8
          %s671 = scalar_lea.vmem %s1, %s670
          %s672 = smul.u32 2, %s41
        $region92: #{ligrec_egnn_forward.3} parent=87 // pred_fallthru
          _
        // Predicated region
        $region93: #{ligrec_egnn_forward.3} parent=87 // pred_check
          %p673 = pneg %p122
        $region94: #{ligrec_egnn_forward.3} parent=87 // pred_check_branch
          %675 = sbr.rel (%p673) target = $region96
        $region95: #{ligrec_egnn_forward.3} parent=87 // pred_region
          %s676 = smul.u32 2, %s41
          %p677 = scmp.lt.s32.totalorder %s40, 1
          %s678 = scalar_select %p677, %s40, 1
          %p679 = scmp.lt.s32.totalorder %s676, 1
          %s680 = scalar_select %p679, %s676, 1
          %s681 = smul.addr %s678, 2
          %s682 = sadd.s32 %s680, %s681
          %s683 = smul.addr %s682, 8
          %s684 = scalar_lea.vmem %s2, %s683
          %s685 = smul.u32 2, %s41
        $region96: #{ligrec_egnn_forward.3} parent=87 // pred_fallthru
          _
        // Predicated region
        $region97: #{ligrec_egnn_forward.3} parent=87 // pred_check
          %p686 = pneg %p152
        $region98: #{ligrec_egnn_forward.3} parent=87 // pred_check_branch
          %688 = sbr.rel (%p686) target = $region100
        $region99: #{ligrec_egnn_forward.3} parent=87 // pred_region
          %s689 = smul.u32 2, %s41
          %p690 = scmp.lt.s32.totalorder %s40, 1
          %s691 = scalar_select %p690, %s40, 1
          %p692 = scmp.lt.s32.totalorder %s689, 1
          %s693 = scalar_select %p692, %s689, 1
          %p694 = scmp.lt.s32.totalorder %s39, 0
          %s695 = scalar_select %p694, %s39, 0
          %s696 = sadd.s32 %s695, %s693
          %s697 = smul.addr %s691, 2
          %s698 = sadd.s32 %s696, %s697
          %s699 = smul.addr %s698, 4
          %s700 = scalar_lea.vmem %s3, %s699
          %s701 = smul.u32 2, %s41
        $region100: #{ligrec_egnn_forward.3} parent=87 // pred_fallthru
          _
      $region88: #{ligrec_egnn_forward.3} parent=5 // pred_fallthru
        _
      %p702 = scmp.le.s32.totalorder 1, %s32
      %p703 = scmp.lt.s32.totalorder %s32, 3
      %p704 = pnand %p702, %p703
      %p705 = pneg %p704
      // Predicated region
      $region101: #{ligrec_egnn_forward.3} parent=5 // pred_check
        _
      $region102: #{ligrec_egnn_forward.3} parent=5 // pred_check_branch
        %707 = sbr.rel (%p704) target = $region104
      $region103: #{ligrec_egnn_forward.3} parent=5 // pred_region
        %s708 = ssub.s32 %s32, 1
        %p709 = pneg %p72
        %p710 = pneg %p69
        %s711 = smul.u32 2, %s44
        %p712 = scmp.lt.s32.totalorder %s43, 1
        %s713 = scalar_select %p712, %s43, 1
        %p714 = scmp.lt.s32.totalorder %s711, 1
        %s715 = scalar_select %p714, %s711, 1
        %s716 = smul.addr %s713, 2
        %s717 = sadd.s32 %s715, %s716
        %s718 = smul.addr %s717, 8
        %s719 = scalar_lea.vmem %s1, %s718
        %p720 = pneg %p100
        %p721 = pneg %p97
        %s722 = smul.u32 2, %s44
        %p723 = scmp.lt.s32.totalorder %s43, 1
        %s724 = scalar_select %p723, %s43, 1
        %p725 = scmp.lt.s32.totalorder %s722, 1
        %s726 = scalar_select %p725, %s722, 1
        %s727 = smul.addr %s724, 2
        %s728 = sadd.s32 %s726, %s727
        %s729 = smul.addr %s728, 8
        %s730 = scalar_lea.vmem %s2, %s729
        %p731 = pneg %p128
        %p732 = pneg %p125
        %s733 = smul.u32 2, %s44
        %p734 = scmp.lt.s32.totalorder %s43, 1
        %s735 = scalar_select %p734, %s43, 1
        %p736 = scmp.lt.s32.totalorder %s733, 1
        %s737 = scalar_select %p736, %s733, 1
        %p738 = scmp.lt.s32.totalorder %s42, 0
        %s739 = scalar_select %p738, %s42, 0
        %s740 = sadd.s32 %s739, %s737
        %s741 = smul.addr %s735, 2
        %s742 = sadd.s32 %s740, %s741
        %s743 = smul.addr %s742, 4
        %s744 = scalar_lea.vmem %s3, %s743
        %p745 = pneg %p158
        %p746 = pneg %p155
        %s747 = smul.u32 2, %s42
        %p748 = scmp.lt.s32.totalorder %s747, 1
        %s749 = scalar_select %p748, %s747, 1
        %s750 = smul.addr %s749, 8
        %s751 = scalar_lea.vmem %s4, %s750
        %p752 = pneg %p184
        %p753 = pneg %p181
        %p754 = scmp.lt.s32.totalorder %s42, 0
        %s755 = scalar_select %p754, %s42, 0
        %s756 = smul.addr %s755, 4
        %s757 = scalar_lea.vmem %s5, %s756
        %p758 = pneg %p210
        %p759 = pneg %p207
        %p760 = pneg %p231
        %p761 = pneg %p228
        %p762 = pneg %p252
        %p763 = pneg %p249
        %p764 = pneg %p273
        %p765 = pneg %p270
        %p766 = pneg %p294
        %p767 = pneg %p291
        %p768 = pneg %p315
        %p769 = pneg %p312
        %p770 = pneg %p336
        %p771 = pneg %p333
        %p772 = pneg %p357
        %p773 = pneg %p354
        %p774 = pneg %p378
        %p775 = pneg %p375
        %p776 = pneg %p399
        %p777 = pneg %p396
        %p778 = pneg %p420
        %p779 = pneg %p417
        %p780 = pneg %p441
        %p781 = pneg %p438
        %p782 = pneg %p462
        %p783 = pneg %p459
        %p784 = pneg %p483
        %p785 = pneg %p480
        %p786 = pneg %p504
        %p787 = pneg %p501
        %p788 = pneg %p525
        %p789 = pneg %p522
        %p790 = pneg %p551
        %p791 = pneg %p548
        %p792 = pneg %p577
        %p793 = pneg %p574
        %s794 = smul.u32 2, %s44
        %p795 = scmp.lt.s32.totalorder %s43, 1
        %s796 = scalar_select %p795, %s43, 1
        %p797 = scmp.lt.s32.totalorder %s794, 1
        %s798 = scalar_select %p797, %s794, 1
        %s799 = smul.addr %s796, 2
        %s800 = sadd.s32 %s798, %s799
        %s801 = smul.addr %s800, 8
        %s802 = scalar_lea.vmem %s1, %s801
        %s803 = smul.u32 2, %s44
        %s804 = smul.u32 2, %s44
        %p805 = scmp.lt.s32.totalorder %s43, 1
        %s806 = scalar_select %p805, %s43, 1
        %p807 = scmp.lt.s32.totalorder %s804, 1
        %s808 = scalar_select %p807, %s804, 1
        %s809 = smul.addr %s806, 2
        %s810 = sadd.s32 %s808, %s809
        %s811 = smul.addr %s810, 8
        %s812 = scalar_lea.vmem %s2, %s811
        %s813 = smul.u32 2, %s44
        %s814 = smul.u32 2, %s44
        %p815 = scmp.lt.s32.totalorder %s43, 1
        %s816 = scalar_select %p815, %s43, 1
        %p817 = scmp.lt.s32.totalorder %s814, 1
        %s818 = scalar_select %p817, %s814, 1
        %p819 = scmp.lt.s32.totalorder %s42, 0
        %s820 = scalar_select %p819, %s42, 0
        %s821 = sadd.s32 %s820, %s818
        %s822 = smul.addr %s816, 2
        %s823 = sadd.s32 %s821, %s822
        %s824 = smul.addr %s823, 4
        %s825 = scalar_lea.vmem %s3, %s824
        %s826 = smul.u32 2, %s44
        %s827 = smul.u32 2, %s42
        %p828 = scmp.lt.s32.totalorder %s827, 1
        %s829 = scalar_select %p828, %s827, 1
        %s830 = smul.addr %s829, 8
        %s831 = scalar_lea.vmem %s4, %s830
        %s832 = smul.u32 2, %s42
        %p833 = scmp.lt.s32.totalorder %s42, 0
        %s834 = scalar_select %p833, %s42, 0
        %s835 = smul.addr %s834, 4
        %s836 = scalar_lea.vmem %s5, %s835
        %s837 = smul.u32 2, %s42
        %p839 = scmp.eq.s32.totalorder %s43, 0
        %p840 = scmp.eq.s32.totalorder %s44, 0
        %p841 = pnand %p839, %p840
        %p842 = pneg %p841
        %p843 = scmp.eq.s32.totalorder %s43, 1
        %p844 = pnand %p843, %p840
        %p845 = pneg %p844
        // Predicated region
        $region105: #{ligrec_egnn_forward.3} parent=103 // pred_check
          _
        $region106: #{ligrec_egnn_forward.3} parent=103 // pred_check_branch
          %847 = sbr.rel (%p841) target = $region108
        $region107: #{ligrec_egnn_forward.3} parent=103 // pred_region
          %vm848 = vcmask 261120
          %849 = vst.msk [vmem:[#allocation2] sm:$0xff] %vm848, 0.0
          %850 = vst.msk [vmem:[#allocation2 + $0x8] sm:$0xff] %vm848, 0.0
          %vm851 = vcmask 124928
          %852 = vst.msk [vmem:[#allocation3] sm:$0x7] %vm851, 0.0
        $region108: #{ligrec_egnn_forward.3} parent=103 // pred_fallthru
          _
        %v853 = vld [vmem:[%s831] sm:$0xff]
        %v854 = vld [vmem:[%s831 + $0x8] sm:$0xff]
        %v855 = vld [vmem:[%s836] sm:$0x7]
        %s856 = smul.u32 %s43, 9
        %s857 = smul.addr %s856, 4
        %s858 = scalar_lea.vmem %s6, %s857
        %v859 = vld [vmem:[%s858] sm:$0xf]
        %v860 = vld [vmem:[%s858 + $0x4] sm:$0xf]
        %v861 = vld [vmem:[%s858 + $0x8] sm:$0xf]
        %v862 = vld [vmem:[%s858 + $0xc] sm:$0xf]
        %v863 = vld [vmem:[%s858 + $0x10] sm:$0xf]
        %v864 = vld [vmem:[%s858 + $0x14] sm:$0xf]
        %v865 = vld [vmem:[%s858 + $0x18] sm:$0xf]
        %v866 = vld [vmem:[%s858 + $0x1c] sm:$0xf]
        %v867 = vld [vmem:[%s858 + $0x20] sm:$0x1]
        %s868 = smul.addr %s856, 4
        %s869 = scalar_lea.vmem %s12, %s868
        %v870 = vld [vmem:[%s869] sm:$0xf]
        %v871 = vld [vmem:[%s869 + $0x4] sm:$0xf]
        %v872 = vld [vmem:[%s869 + $0x8] sm:$0xf]
        %v873 = vld [vmem:[%s869 + $0xc] sm:$0xf]
        %v874 = vld [vmem:[%s869 + $0x10] sm:$0xf]
        %v875 = vld [vmem:[%s869 + $0x14] sm:$0xf]
        %v876 = vld [vmem:[%s869 + $0x18] sm:$0xf]
        %v877 = vld [vmem:[%s869 + $0x1c] sm:$0xf]
        %v878 = vld [vmem:[%s869 + $0x20] sm:$0x1]
        // Predicated region
        $region109: #{ligrec_egnn_forward.3} parent=103 // pred_check
          %p879 = pneg %p840
        $region110: #{ligrec_egnn_forward.3} parent=103 // pred_check_branch
          %881 = sbr.rel (%p879) target = $region112
        $region111: #{ligrec_egnn_forward.3} parent=103 // pred_region
          %v882 = vpack.c.bf16 %v854, %v853
          %s883 = scalar_lea.vmem %s7, %s43
          %v884 = vld [vmem:[%s883] sm:$0x1]
          %v886 = vlaneseq
          %v887 = vshrl.u32 %v886, 7
          %v888 = vsub.s32 0, %v887
          %v889 = vrot.slane %v884, %v888
          %v895 = vunpack.c.l.b16 %v863
          %v896 = vunpack.c.l.b16 %v864
          %v897 = vunpack.c.l.b16 %v865
          %v898 = vunpack.c.l.b16 %v866
          %v899 = vpack.c.b16 %v896, %v895
          %v900 = vpack.c.b16 %v898, %v897
          %vm903 = vcmask 261120
          %v905 = vsel %vm903, %v882, 0
          %907 = vmatprep.subr.bf16.mxu0 0
          %908 = vmatpush1.bf16.msra.mxu0 %v899
          %909 = vmatprep.subr.bf16.mxu0 0
          %910 = vmatpush1.bf16.msra.mxu0 %v900
          %911 = vmatprep.subr.bf16.mxu0 0
          %912 = vmatpush1.bf16.msra.mxu0 0
          %913 = vmatprep.subr.bf16.mxu0 0
          %914 = vmatpush1.bf16.msra.mxu0 0
          %915 = vmatprep.subr.bf16.mxu0 0
          %916 = vmatpush1.bf16.msra.mxu0 0
          %917 = vmatprep.subr.bf16.mxu0 0
          %918 = vmatpush1.bf16.msra.mxu0 0
          %919 = vmatprep.subr.bf16.mxu0 0
          %920 = vmatpush1.bf16.msra.mxu0 0
          %921 = vmatprep.subr.bf16.mxu0 0
          %922 = vmatpush1.bf16.msra.mxu0 0
          %923 = vmatprep.subr.bf16.mxu0 0
          %924 = vmatpush1.bf16.msra.mxu0 0
          %925 = vmatprep.subr.bf16.mxu0 0
          %926 = vmatpush1.bf16.msra.mxu0 0
          %927 = vmatprep.subr.bf16.mxu0 0
          %928 = vmatpush1.bf16.msra.mxu0 0
          %929 = vmatprep.subr.bf16.mxu0 0
          %930 = vmatpush1.bf16.msra.mxu0 0
          %931 = vmatprep.subr.bf16.mxu0 0
          %932 = vmatpush1.bf16.msra.mxu0 0
          %933 = vmatprep.subr.bf16.mxu0 0
          %934 = vmatpush1.bf16.msra.mxu0 0
          %935 = vmatprep.subr.bf16.mxu0 0
          %936 = vmatpush1.bf16.msra.mxu0 0
          %937 = vmatprep.subr.bf16.mxu0 0
          %938 = vmatpush1.bf16.msra.mxu0 0
          %939 = vmatprep.mubr.bf16.mxu0 0
          %940 = vmatmul.mubr.bf16.gmra.mrb[0].mxu0 %v905
          %v941 = vpop.f32.mrb[0].mxu0
          %v942 = vadd.f32 %v889, %v941
          %v943 = vpop.f32.mrb[0].mxu0
          %v944 = vpop.f32.mrb[0].mxu0
          %v945 = vadd.f32 %v889, %v944
          %v946 = vpop.f32.mrb[0].mxu0
          %947 = vdwg.mxu0
          %948 = vst.msk [vmem:[#allocation4] sm:$0xff] %vm903, %v942
          %949 = vst.msk [vmem:[#allocation4 + $0x8] sm:$0xff] %vm903, %v945
          %s950 = scalar_lea.vmem %s13, %s43
          %v951 = vld [vmem:[%s950] sm:$0x1]
          %v953 = vlaneseq
          %v954 = vshrl.u32 %v953, 7
          %v955 = vsub.s32 0, %v954
          %v956 = vrot.slane %v951, %v955
          %v962 = vunpack.c.l.b16 %v874
          %v963 = vunpack.c.l.b16 %v875
          %v964 = vunpack.c.l.b16 %v876
          %v965 = vunpack.c.l.b16 %v877
          %v966 = vpack.c.b16 %v963, %v962
          %v967 = vpack.c.b16 %v965, %v964
          %970 = vmatprep.subr.bf16.mxu0 0
          %971 = vmatpush1.bf16.msra.mxu0 %v966
          %972 = vmatprep.subr.bf16.mxu0 0
          %973 = vmatpush1.bf16.msra.mxu0 %v967
          %974 = vmatprep.subr.bf16.mxu0 0
          %975 = vmatpush1.bf16.msra.mxu0 0
          %976 = vmatprep.subr.bf16.mxu0 0
          %977 = vmatpush1.bf16.msra.mxu0 0
          %978 = vmatprep.subr.bf16.mxu0 0
          %979 = vmatpush1.bf16.msra.mxu0 0
          %980 = vmatprep.subr.bf16.mxu0 0
          %981 = vmatpush1.bf16.msra.mxu0 0
          %982 = vmatprep.subr.bf16.mxu0 0
          %983 = vmatpush1.bf16.msra.mxu0 0
          %984 = vmatprep.subr.bf16.mxu0 0
          %985 = vmatpush1.bf16.msra.mxu0 0
          %986 = vmatprep.subr.bf16.mxu0 0
          %987 = vmatpush1.bf16.msra.mxu0 0
          %988 = vmatprep.subr.bf16.mxu0 0
          %989 = vmatpush1.bf16.msra.mxu0 0
          %990 = vmatprep.subr.bf16.mxu0 0
          %991 = vmatpush1.bf16.msra.mxu0 0
          %992 = vmatprep.subr.bf16.mxu0 0
          %993 = vmatpush1.bf16.msra.mxu0 0
          %994 = vmatprep.subr.bf16.mxu0 0
          %995 = vmatpush1.bf16.msra.mxu0 0
          %996 = vmatprep.subr.bf16.mxu0 0
          %997 = vmatpush1.bf16.msra.mxu0 0
          %998 = vmatprep.subr.bf16.mxu0 0
          %999 = vmatpush1.bf16.msra.mxu0 0
          %1000 = vmatprep.subr.bf16.mxu0 0
          %1001 = vmatpush1.bf16.msra.mxu0 0
          %1002 = vmatprep.mubr.bf16.mxu0 0
          %1003 = vmatmul.mubr.bf16.gmra.mrb[0].mxu0 %v905
          %v1004 = vpop.f32.mrb[0].mxu0
          %v1005 = vadd.f32 %v956, %v1004
          %v1006 = vpop.f32.mrb[0].mxu0
          %v1007 = vpop.f32.mrb[0].mxu0
          %v1008 = vadd.f32 %v956, %v1007
          %v1009 = vpop.f32.mrb[0].mxu0
          %1010 = vdwg.mxu0
          %1011 = vst.msk [vmem:[#allocation5] sm:$0xff] %vm903, %v1005
          %1012 = vst.msk [vmem:[#allocation5 + $0x8] sm:$0xff] %vm903, %v1008
        $region112: #{ligrec_egnn_forward.3} parent=103 // pred_fallthru
          _
        %v1013 = vld [vmem:[%s802] sm:$0xff]
        %v1014 = vld [vmem:[%s802 + $0x8] sm:$0xff]
        %v1015 = vld [vmem:[%s812] sm:$0xff]
        %v1016 = vld [vmem:[%s812 + $0x8] sm:$0xff]
        %v1017 = vld [vmem:[%s825] sm:$0xf]
        %v1018 = vld [vmem:[%s825 + $0x4] sm:$0xf]
        %v1019 = vunpack.c.l.bf16 %v1017
        %v1020 = vunpack.c.l.bf16 %v1018
        %1022 = vset.pattern.permute.xlu0 0
        %1023 = vperm.xlu0 %1022, %v1015
        %v1024 = vpop.permute.xlu0 %1023
        %1027 = vset.pattern.permute.xlu0 0
        %1028 = vperm.xlu0 %1027, %v1016
        %v1029 = vpop.permute.xlu0 %1028
        %v1031 = vlaneseq
        %v1032 = vshrl.u32 %v1031, 7
        %v1033 = vsub.s32 0, %v1032
        %v1034 = vrot.slane %v855, %v1033
        %v1035 = vsub.f32 %v1024, %v1034
        %v1036 = vsub.f32 %v1029, %v1034
        %1037 = vset.pattern.permute.xlu0 1
        %1038 = vperm.xlu0 %1037, %v1015
        %v1039 = vpop.permute.xlu0 %1038
        %1041 = vset.pattern.permute.xlu0 1
        %1042 = vperm.xlu0 %1041, %v1016
        %v1043 = vpop.permute.xlu0 %1042
        %v1045 = vlaneseq
        %v1046 = vshrl.u32 %v1045, 7
        %v1047 = vsub.s32 1, %v1046
        %v1048 = vrot.slane %v855, %v1047
        %v1049 = vsub.f32 %v1039, %v1048
        %v1050 = vsub.f32 %v1043, %v1048
        %1051 = vset.pattern.permute.xlu0 2
        %1052 = vperm.xlu0 %1051, %v1015
        %v1053 = vpop.permute.xlu0 %1052
        %1055 = vset.pattern.permute.xlu0 2
        %1056 = vperm.xlu0 %1055, %v1016
        %v1057 = vpop.permute.xlu0 %1056
        %v1059 = vlaneseq
        %v1060 = vshrl.u32 %v1059, 7
        %v1061 = vsub.s32 2, %v1060
        %v1062 = vrot.slane %v855, %v1061
        %v1063 = vsub.f32 %v1053, %v1062
        %v1064 = vsub.f32 %v1057, %v1062
        %v1065 = vmul.f32 %v1035, %v1035
        %v1066 = vmul.f32 %v1036, %v1036
        %v1067 = vmul.f32 %v1049, %v1049
        %v1068 = vmul.f32 %v1050, %v1050
        %v1069 = vadd.f32 %v1065, %v1067
        %v1070 = vadd.f32 %v1066, %v1068
        %v1071 = vmul.f32 %v1063, %v1063
        %v1072 = vmul.f32 %v1064, %v1064
        %v1073 = vadd.f32 %v1069, %v1071
        %v1074 = vadd.f32 %v1070, %v1072
        %v1075 = vrsqrt.pop %v1073
        %v1076 = vmul.f32 %v1073, %v1075
        %vm1077 = vcmp.eq.f32.partialorder %v1073, inf
        %v1078 = vsel %vm1077, %v1073, %v1076
        %vm1079 = vcmp.eq.f32.partialorder %v1073, 0.0
        %v1080 = vand.u32 %v1073, 2147483648
        %v1081 = vsel %vm1079, %v1080, %v1078
        %v1082 = vrsqrt.pop %v1074
        %v1083 = vmul.f32 %v1074, %v1082
        %vm1084 = vcmp.eq.f32.partialorder %v1074, inf
        %v1085 = vsel %vm1084, %v1074, %v1083
        %vm1086 = vcmp.eq.f32.partialorder %v1074, 0.0
        %v1087 = vand.u32 %v1074, 2147483648
        %v1088 = vsel %vm1086, %v1087, %v1085
        %v1089 = vadd.f32 %v1081, 1.0
        %v1090 = vadd.f32 %v1088, 1.0
        %v1091 = vrcp.pop %v1089
        %v1092 = vmul.f32 1.0, %v1091
        %v1093 = vrcp.pop %v1090
        %v1094 = vmul.f32 1.0, %v1093
        %v1095 = vpack.c.bf16 %v1014, %v1013
        %v1100 = vunpack.c.l.b16 %v859
        %v1101 = vunpack.c.l.b16 %v860
        %v1102 = vunpack.c.l.b16 %v861
        %v1103 = vunpack.c.l.b16 %v862
        %v1104 = vpack.c.b16 %v1101, %v1100
        %v1105 = vpack.c.b16 %v1103, %v1102
        %vm1108 = vcmask 261120
        %v1110 = vsel %vm1108, %v1095, 0
        %1112 = vmatprep.subr.bf16.mxu0 0
        %1113 = vmatpush1.bf16.msra.mxu0 %v1104
        %1114 = vmatprep.subr.bf16.mxu0 0
        %1115 = vmatpush1.bf16.msra.mxu0 %v1105
        %1116 = vmatprep.subr.bf16.mxu0 0
        %1117 = vmatpush1.bf16.msra.mxu0 0
        %1118 = vmatprep.subr.bf16.mxu0 0
        %1119 = vmatpush1.bf16.msra.mxu0 0
        %1120 = vmatprep.subr.bf16.mxu0 0
        %1121 = vmatpush1.bf16.msra.mxu0 0
        %1122 = vmatprep.subr.bf16.mxu0 0
        %1123 = vmatpush1.bf16.msra.mxu0 0
        %1124 = vmatprep.subr.bf16.mxu0 0
        %1125 = vmatpush1.bf16.msra.mxu0 0
        %1126 = vmatprep.subr.bf16.mxu0 0
        %1127 = vmatpush1.bf16.msra.mxu0 0
        %1128 = vmatprep.subr.bf16.mxu0 0
        %1129 = vmatpush1.bf16.msra.mxu0 0
        %1130 = vmatprep.subr.bf16.mxu0 0
        %1131 = vmatpush1.bf16.msra.mxu0 0
        %1132 = vmatprep.subr.bf16.mxu0 0
        %1133 = vmatpush1.bf16.msra.mxu0 0
        %1134 = vmatprep.subr.bf16.mxu0 0
        %1135 = vmatpush1.bf16.msra.mxu0 0
        %1136 = vmatprep.subr.bf16.mxu0 0
        %1137 = vmatpush1.bf16.msra.mxu0 0
        %1138 = vmatprep.subr.bf16.mxu0 0
        %1139 = vmatpush1.bf16.msra.mxu0 0
        %1140 = vmatprep.subr.bf16.mxu0 0
        %1141 = vmatpush1.bf16.msra.mxu0 0
        %1142 = vmatprep.subr.bf16.mxu0 0
        %1143 = vmatpush1.bf16.msra.mxu0 0
        %1144 = vmatprep.mubr.bf16.mxu0 0
        %1145 = vmatmul.mubr.bf16.gmra.mrb[0].mxu0 %v1110
        %v1146 = vpop.f32.mrb[0].mxu0
        %v1147 = vadd.f32 0.0, %v1146
        %v1148 = vpop.f32.mrb[0].mxu0
        %v1149 = vpop.f32.mrb[0].mxu0
        %v1150 = vadd.f32 0.0, %v1149
        %v1151 = vpop.f32.mrb[0].mxu0
        %1152 = vdwg.mxu0
        %v1157 = vunpack.c.l.b16 %v870
        %v1158 = vunpack.c.l.b16 %v871
        %v1159 = vunpack.c.l.b16 %v872
        %v1160 = vunpack.c.l.b16 %v873
        %v1161 = vpack.c.b16 %v1158, %v1157
        %v1162 = vpack.c.b16 %v1160, %v1159
        %1165 = vmatprep.subr.bf16.mxu0 0
        %1166 = vmatpush1.bf16.msra.mxu0 %v1161
        %1167 = vmatprep.subr.bf16.mxu0 0
        %1168 = vmatpush1.bf16.msra.mxu0 %v1162
        %1169 = vmatprep.subr.bf16.mxu0 0
        %1170 = vmatpush1.bf16.msra.mxu0 0
        %1171 = vmatprep.subr.bf16.mxu0 0
        %1172 = vmatpush1.bf16.msra.mxu0 0
        %1173 = vmatprep.subr.bf16.mxu0 0
        %1174 = vmatpush1.bf16.msra.mxu0 0
        %1175 = vmatprep.subr.bf16.mxu0 0
        %1176 = vmatpush1.bf16.msra.mxu0 0
        %1177 = vmatprep.subr.bf16.mxu0 0
        %1178 = vmatpush1.bf16.msra.mxu0 0
        %1179 = vmatprep.subr.bf16.mxu0 0
        %1180 = vmatpush1.bf16.msra.mxu0 0
        %1181 = vmatprep.subr.bf16.mxu0 0
        %1182 = vmatpush1.bf16.msra.mxu0 0
        %1183 = vmatprep.subr.bf16.mxu0 0
        %1184 = vmatpush1.bf16.msra.mxu0 0
        %1185 = vmatprep.subr.bf16.mxu0 0
        %1186 = vmatpush1.bf16.msra.mxu0 0
        %1187 = vmatprep.subr.bf16.mxu0 0
        %1188 = vmatpush1.bf16.msra.mxu0 0
        %1189 = vmatprep.subr.bf16.mxu0 0
        %1190 = vmatpush1.bf16.msra.mxu0 0
        %1191 = vmatprep.subr.bf16.mxu0 0
        %1192 = vmatpush1.bf16.msra.mxu0 0
        %1193 = vmatprep.subr.bf16.mxu0 0
        %1194 = vmatpush1.bf16.msra.mxu0 0
        %1195 = vmatprep.subr.bf16.mxu0 0
        %1196 = vmatpush1.bf16.msra.mxu0 0
        %1197 = vmatprep.mubr.bf16.mxu0 0
        %1198 = vmatmul.mubr.bf16.gmra.mrb[0].mxu0 %v1110
        %v1199 = vpop.f32.mrb[0].mxu0
        %v1200 = vadd.f32 0.0, %v1199
        %v1201 = vpop.f32.mrb[0].mxu0
        %v1202 = vpop.f32.mrb[0].mxu0
        %v1203 = vadd.f32 0.0, %v1202
        %v1204 = vpop.f32.mrb[0].mxu0
        %1205 = vdwg.mxu0
        %v1206 = vunpack.c.l.bf16 %v867
        %v1207 = vunpack.c.l.bf16 %v878
        %v1208 = vlaneseq
        %v1209 = vshrl.u32 %v1208, 7
        %v1210 = vsub.s32 0, %v1209
        %v1211 = vrot.slane %v1081, %v1210
        %1213 = vbcast.lane.b32.xlu0 %v1211, 256
        %v1214 = vpop.permute.xlu0 %1213
        %s1216 = sor.u32 256, 8
        %1217 = vbcast.lane.b32.xlu0 %v1211, %s1216
        %v1218 = vpop.permute.xlu0 %1217
        %v1219 = vlaneseq
        %v1220 = vshrl.u32 %v1219, 7
        %v1221 = vsub.s32 1, %v1220
        %v1222 = vrot.slane %v1081, %v1221
        %1224 = vbcast.lane.b32.xlu0 %v1222, 256
        %v1225 = vpop.permute.xlu0 %1224
        %s1227 = sor.u32 256, 8
        %1228 = vbcast.lane.b32.xlu0 %v1222, %s1227
        %v1229 = vpop.permute.xlu0 %1228
        %v1230 = vlaneseq
        %v1231 = vshrl.u32 %v1230, 7
        %v1232 = vsub.s32 2, %v1231
        %v1233 = vrot.slane %v1081, %v1232
        %1235 = vbcast.lane.b32.xlu0 %v1233, 256
        %v1236 = vpop.permute.xlu0 %1235
        %s1238 = sor.u32 256, 8
        %1239 = vbcast.lane.b32.xlu0 %v1233, %s1238
        %v1240 = vpop.permute.xlu0 %1239
        %v1241 = vlaneseq
        %v1242 = vshrl.u32 %v1241, 7
        %v1243 = vsub.s32 3, %v1242
        %v1244 = vrot.slane %v1081, %v1243
        %1246 = vbcast.lane.b32.xlu0 %v1244, 256
        %v1247 = vpop.permute.xlu0 %1246
        %s1249 = sor.u32 256, 8
        %1250 = vbcast.lane.b32.xlu0 %v1244, %s1249
        %v1251 = vpop.permute.xlu0 %1250
        %v1252 = vlaneseq
        %v1253 = vshrl.u32 %v1252, 7
        %v1254 = vsub.s32 4, %v1253
        %v1255 = vrot.slane %v1081, %v1254
        %1257 = vbcast.lane.b32.xlu0 %v1255, 256
        %v1258 = vpop.permute.xlu0 %1257
        %s1260 = sor.u32 256, 8
        %1261 = vbcast.lane.b32.xlu0 %v1255, %s1260
        %v1262 = vpop.permute.xlu0 %1261
        %v1263 = vlaneseq
        %v1264 = vshrl.u32 %v1263, 7
        %v1265 = vsub.s32 5, %v1264
        %v1266 = vrot.slane %v1081, %v1265
        %1268 = vbcast.lane.b32.xlu0 %v1266, 256
        %v1269 = vpop.permute.xlu0 %1268
        %s1271 = sor.u32 256, 8
        %1272 = vbcast.lane.b32.xlu0 %v1266, %s1271
        %v1273 = vpop.permute.xlu0 %1272
        %v1274 = vlaneseq
        %v1275 = vshrl.u32 %v1274, 7
        %v1276 = vsub.s32 6, %v1275
        %v1277 = vrot.slane %v1081, %v1276
        %1279 = vbcast.lane.b32.xlu0 %v1277, 256
        %v1280 = vpop.permute.xlu0 %1279
        %s1282 = sor.u32 256, 8
        %1283 = vbcast.lane.b32.xlu0 %v1277, %s1282
        %v1284 = vpop.permute.xlu0 %1283
        %v1285 = vlaneseq
        %v1286 = vshrl.u32 %v1285, 7
        %v1287 = vsub.s32 7, %v1286
        %v1288 = vrot.slane %v1081, %v1287
        %1290 = vbcast.lane.b32.xlu0 %v1288, 256
        %v1291 = vpop.permute.xlu0 %1290
        %s1293 = sor.u32 256, 8
        %1294 = vbcast.lane.b32.xlu0 %v1288, %s1293
        %v1295 = vpop.permute.xlu0 %1294
        %v1296 = vlaneseq
        %v1297 = vshrl.u32 %v1296, 7
        %v1298 = vsub.s32 0, %v1297
        %v1299 = vrot.slane %v1088, %v1298
        %1301 = vbcast.lane.b32.xlu0 %v1299, 256
        %v1302 = vpop.permute.xlu0 %1301
        %s1304 = sor.u32 256, 8
        %1305 = vbcast.lane.b32.xlu0 %v1299, %s1304
        %v1306 = vpop.permute.xlu0 %1305
        %v1307 = vlaneseq
        %v1308 = vshrl.u32 %v1307, 7
        %v1309 = vsub.s32 1, %v1308
        %v1310 = vrot.slane %v1088, %v1309
        %1312 = vbcast.lane.b32.xlu0 %v1310, 256
        %v1313 = vpop.permute.xlu0 %1312
        %s1315 = sor.u32 256, 8
        %1316 = vbcast.lane.b32.xlu0 %v1310, %s1315
        %v1317 = vpop.permute.xlu0 %1316
        %v1318 = vlaneseq
        %v1319 = vshrl.u32 %v1318, 7
        %v1320 = vsub.s32 2, %v1319
        %v1321 = vrot.slane %v1088, %v1320
        %1323 = vbcast.lane.b32.xlu0 %v1321, 256
        %v1324 = vpop.permute.xlu0 %1323
        %s1326 = sor.u32 256, 8
        %1327 = vbcast.lane.b32.xlu0 %v1321, %s1326
        %v1328 = vpop.permute.xlu0 %1327
        %v1329 = vlaneseq
        %v1330 = vshrl.u32 %v1329, 7
        %v1331 = vsub.s32 3, %v1330
        %v1332 = vrot.slane %v1088, %v1331
        %1334 = vbcast.lane.b32.xlu0 %v1332, 256
        %v1335 = vpop.permute.xlu0 %1334
        %s1337 = sor.u32 256, 8
        %1338 = vbcast.lane.b32.xlu0 %v1332, %s1337
        %v1339 = vpop.permute.xlu0 %1338
        %v1340 = vlaneseq
        %v1341 = vshrl.u32 %v1340, 7
        %v1342 = vsub.s32 4, %v1341
        %v1343 = vrot.slane %v1088, %v1342
        %1345 = vbcast.lane.b32.xlu0 %v1343, 256
        %v1346 = vpop.permute.xlu0 %1345
        %s1348 = sor.u32 256, 8
        %1349 = vbcast.lane.b32.xlu0 %v1343, %s1348
        %v1350 = vpop.permute.xlu0 %1349
        %v1351 = vlaneseq
        %v1352 = vshrl.u32 %v1351, 7
        %v1353 = vsub.s32 5, %v1352
        %v1354 = vrot.slane %v1088, %v1353
        %1356 = vbcast.lane.b32.xlu0 %v1354, 256
        %v1357 = vpop.permute.xlu0 %1356
        %s1359 = sor.u32 256, 8
        %1360 = vbcast.lane.b32.xlu0 %v1354, %s1359
        %v1361 = vpop.permute.xlu0 %1360
        %v1362 = vlaneseq
        %v1363 = vshrl.u32 %v1362, 7
        %v1364 = vsub.s32 6, %v1363
        %v1365 = vrot.slane %v1088, %v1364
        %1367 = vbcast.lane.b32.xlu0 %v1365, 256
        %v1368 = vpop.permute.xlu0 %1367
        %s1370 = sor.u32 256, 8
        %1371 = vbcast.lane.b32.xlu0 %v1365, %s1370
        %v1372 = vpop.permute.xlu0 %1371
        %v1373 = vlaneseq
        %v1374 = vshrl.u32 %v1373, 7
        %v1375 = vsub.s32 7, %v1374
        %v1376 = vrot.slane %v1088, %v1375
        %1378 = vbcast.lane.b32.xlu0 %v1376, 256
        %v1379 = vpop.permute.xlu0 %1378
        %s1381 = sor.u32 256, 8
        %1382 = vbcast.lane.b32.xlu0 %v1376, %s1381
        %v1383 = vpop.permute.xlu0 %1382
        %v1386 = vcombine.high %v1147, %v1147
        %v1388 = vunpack.c.l.s4 1966171168
        %v1389 = vunpack.c.0.s8 %v1388
        %v1390 = vlaneseq
        %v1391 = vshrl.u32 %v1390, 7
        %v1392 = vsub.s32 %v1389, %v1391
        %v1393 = vrot.slane %v1147, %v1392
        %v1395 = vunpack.c.l.s4 1966171168
        %v1396 = vunpack.c.0.s8 %v1395
        %v1397 = vlaneseq
        %v1398 = vshrl.u32 %v1397, 7
        %v1399 = vsub.s32 %v1396, %v1398
        %v1400 = vrot.slane %v1386, %v1399
        %v1401 = vcombine.high %v1393, %v1393
        %v1402 = vcombine.high %v1400, %v1400
        %v1404 = vunpack.c.l.s4 1966171168
        %v1405 = vunpack.c.0.s8 %v1404
        %v1406 = vlaneseq
        %v1407 = vshrl.u32 %v1406, 7
        %v1408 = vsub.s32 %v1405, %v1407
        %v1409 = vrot.slane %v1393, %v1408
        %v1411 = vunpack.c.l.s4 1966171168
        %v1412 = vunpack.c.0.s8 %v1411
        %v1413 = vlaneseq
        %v1414 = vshrl.u32 %v1413, 7
        %v1415 = vsub.s32 %v1412, %v1414
        %v1416 = vrot.slane %v1400, %v1415
        %v1418 = vunpack.c.l.s4 1966171168
        %v1419 = vunpack.c.0.s8 %v1418
        %v1420 = vlaneseq
        %v1421 = vshrl.u32 %v1420, 7
        %v1422 = vsub.s32 %v1419, %v1421
        %v1423 = vrot.slane %v1401, %v1422
        %v1425 = vunpack.c.l.s4 1966171168
        %v1426 = vunpack.c.0.s8 %v1425
        %v1427 = vlaneseq
        %v1428 = vshrl.u32 %v1427, 7
        %v1429 = vsub.s32 %v1426, %v1428
        %v1430 = vrot.slane %v1402, %v1429
        %v1431 = vcombine.high %v1409, %v1409
        %v1432 = vcombine.high %v1416, %v1416
        %v1433 = vcombine.high %v1423, %v1423
        %v1434 = vcombine.high %v1430, %v1430
        %v1435 = vcombine.high %v1150, %v1150
        %v1437 = vunpack.c.l.s4 1966171168
        %v1438 = vunpack.c.0.s8 %v1437
        %v1439 = vlaneseq
        %v1440 = vshrl.u32 %v1439, 7
        %v1441 = vsub.s32 %v1438, %v1440
        %v1442 = vrot.slane %v1150, %v1441
        %v1444 = vunpack.c.l.s4 1966171168
        %v1445 = vunpack.c.0.s8 %v1444
        %v1446 = vlaneseq
        %v1447 = vshrl.u32 %v1446, 7
        %v1448 = vsub.s32 %v1445, %v1447
        %v1449 = vrot.slane %v1435, %v1448
        %v1450 = vcombine.high %v1442, %v1442
        %v1451 = vcombine.high %v1449, %v1449
        %v1453 = vunpack.c.l.s4 1966171168
        %v1454 = vunpack.c.0.s8 %v1453
        %v1455 = vlaneseq
        %v1456 = vshrl.u32 %v1455, 7
        %v1457 = vsub.s32 %v1454, %v1456
        %v1458 = vrot.slane %v1442, %v1457
        %v1460 = vunpack.c.l.s4 1966171168
        %v1461 = vunpack.c.0.s8 %v1460
        %v1462 = vlaneseq
        %v1463 = vshrl.u32 %v1462, 7
        %v1464 = vsub.s32 %v1461, %v1463
        %v1465 = vrot.slane %v1449, %v1464
        %v1467 = vunpack.c.l.s4 1966171168
        %v1468 = vunpack.c.0.s8 %v1467
        %v1469 = vlaneseq
        %v1470 = vshrl.u32 %v1469, 7
        %v1471 = vsub.s32 %v1468, %v1470
        %v1472 = vrot.slane %v1450, %v1471
        %v1474 = vunpack.c.l.s4 1966171168
        %v1475 = vunpack.c.0.s8 %v1474
        %v1476 = vlaneseq
        %v1477 = vshrl.u32 %v1476, 7
        %v1478 = vsub.s32 %v1475, %v1477
        %v1479 = vrot.slane %v1451, %v1478
        %v1480 = vcombine.high %v1458, %v1458
        %v1481 = vcombine.high %v1465, %v1465
        %v1482 = vcombine.high %v1472, %v1472
        %v1483 = vcombine.high %v1479, %v1479
        %v1484 = vld [vmem:[#allocation4] sm:$0xff]
        %v1485 = vld [vmem:[#allocation4 + $0x8] sm:$0xff]
        %v1486 = vlaneseq
        %v1487 = vshrl.u32 %v1486, 7
        %v1488 = vsub.s32 0, %v1487
        %v1489 = vrot.slane %v1409, %v1488
        %v1490 = vlaneseq
        %v1491 = vshrl.u32 %v1490, 7
        %v1492 = vsub.s32 0, %v1491
        %v1493 = vrot.slane %v1423, %v1492
        %v1494 = vlaneseq
        %v1495 = vshrl.u32 %v1494, 7
        %v1496 = vsub.s32 0, %v1495
        %v1497 = vrot.slane %v1431, %v1496
        %v1498 = vlaneseq
        %v1499 = vshrl.u32 %v1498, 7
        %v1500 = vsub.s32 0, %v1499
        %v1501 = vrot.slane %v1433, %v1500
        %v1502 = vlaneseq
        %v1503 = vshrl.u32 %v1502, 7
        %v1504 = vsub.s32 0, %v1503
        %v1505 = vrot.slane %v1416, %v1504
        %v1506 = vlaneseq
        %v1507 = vshrl.u32 %v1506, 7
        %v1508 = vsub.s32 0, %v1507
        %v1509 = vrot.slane %v1430, %v1508
        %v1510 = vlaneseq
        %v1511 = vshrl.u32 %v1510, 7
        %v1512 = vsub.s32 0, %v1511
        %v1513 = vrot.slane %v1432, %v1512
        %v1514 = vlaneseq
        %v1515 = vshrl.u32 %v1514, 7
        %v1516 = vsub.s32 0, %v1515
        %v1517 = vrot.slane %v1434, %v1516
        %v1518 = vlaneseq
        %v1519 = vshrl.u32 %v1518, 7
        %v1520 = vsub.s32 0, %v1519
        %v1521 = vrot.slane %v1458, %v1520
        %v1522 = vlaneseq
        %v1523 = vshrl.u32 %v1522, 7
        %v1524 = vsub.s32 0, %v1523
        %v1525 = vrot.slane %v1472, %v1524
        %v1526 = vlaneseq
        %v1527 = vshrl.u32 %v1526, 7
        %v1528 = vsub.s32 0, %v1527
        %v1529 = vrot.slane %v1480, %v1528
        %v1530 = vlaneseq
        %v1531 = vshrl.u32 %v1530, 7
        %v1532 = vsub.s32 0, %v1531
        %v1533 = vrot.slane %v1482, %v1532
        %v1534 = vlaneseq
        %v1535 = vshrl.u32 %v1534, 7
        %v1536 = vsub.s32 0, %v1535
        %v1537 = vrot.slane %v1465, %v1536
        %v1538 = vlaneseq
        %v1539 = vshrl.u32 %v1538, 7
        %v1540 = vsub.s32 0, %v1539
        %v1541 = vrot.slane %v1479, %v1540
        %v1542 = vlaneseq
        %v1543 = vshrl.u32 %v1542, 7
        %v1544 = vsub.s32 0, %v1543
        %v1545 = vrot.slane %v1481, %v1544
        %v1546 = vlaneseq
        %v1547 = vshrl.u32 %v1546, 7
        %v1548 = vsub.s32 0, %v1547
        %v1549 = vrot.slane %v1483, %v1548
        %v1566 = vadd.f32 %v1489, %v1484
        %v1567 = vadd.f32 %v1489, %v1485
        %v1568 = vadd.f32 %v1493, %v1484
        %v1569 = vadd.f32 %v1493, %v1485
        %v1570 = vadd.f32 %v1497, %v1484
        %v1571 = vadd.f32 %v1497, %v1485
        %v1572 = vadd.f32 %v1501, %v1484
        %v1573 = vadd.f32 %v1501, %v1485
        %v1574 = vadd.f32 %v1505, %v1484
        %v1575 = vadd.f32 %v1505, %v1485
        %v1576 = vadd.f32 %v1509, %v1484
        %v1577 = vadd.f32 %v1509, %v1485
        %v1578 = vadd.f32 %v1513, %v1484
        %v1579 = vadd.f32 %v1513, %v1485
        %v1580 = vadd.f32 %v1517, %v1484
        %v1581 = vadd.f32 %v1517, %v1485
        %v1582 = vadd.f32 %v1521, %v1484
        %v1583 = vadd.f32 %v1521, %v1485
        %v1584 = vadd.f32 %v1525, %v1484
        %v1585 = vadd.f32 %v1525, %v1485
        %v1586 = vadd.f32 %v1529, %v1484
        %v1587 = vadd.f32 %v1529, %v1485
        %v1588 = vadd.f32 %v1533, %v1484
        %v1589 = vadd.f32 %v1533, %v1485
        %v1590 = vadd.f32 %v1537, %v1484
        %v1591 = vadd.f32 %v1537, %v1485
        %v1592 = vadd.f32 %v1541, %v1484
        %v1593 = vadd.f32 %v1541, %v1485
        %v1594 = vadd.f32 %v1545, %v1484
        %v1595 = vadd.f32 %v1545, %v1485
        %v1596 = vadd.f32 %v1549, %v1484
        %v1597 = vadd.f32 %v1549, %v1485
        %v1598 = vlaneseq
        %v1599 = vshrl.u32 %v1598, 7
        %v1600 = vsub.s32 0, %v1599
        %v1601 = vrot.slane %v1206, %v1600
        %v1602 = vmul.f32 %v1214, %v1601
        %v1603 = vmul.f32 %v1218, %v1601
        %v1604 = vmul.f32 %v1225, %v1601
        %v1605 = vmul.f32 %v1229, %v1601
        %v1606 = vmul.f32 %v1236, %v1601
        %v1607 = vmul.f32 %v1240, %v1601
        %v1608 = vmul.f32 %v1247, %v1601
        %v1609 = vmul.f32 %v1251, %v1601
        %v1610 = vmul.f32 %v1258, %v1601
        %v1611 = vmul.f32 %v1262, %v1601
        %v1612 = vmul.f32 %v1269, %v1601
        %v1613 = vmul.f32 %v1273, %v1601
        %v1614 = vmul.f32 %v1280, %v1601
        %v1615 = vmul.f32 %v1284, %v1601
        %v1616 = vmul.f32 %v1291, %v1601
        %v1617 = vmul.f32 %v1295, %v1601
        %v1618 = vmul.f32 %v1302, %v1601
        %v1619 = vmul.f32 %v1306, %v1601
        %v1620 = vmul.f32 %v1313, %v1601
        %v1621 = vmul.f32 %v1317, %v1601
        %v1622 = vmul.f32 %v1324, %v1601
        %v1623 = vmul.f32 %v1328, %v1601
        %v1624 = vmul.f32 %v1335, %v1601
        %v1625 = vmul.f32 %v1339, %v1601
        %v1626 = vmul.f32 %v1346, %v1601
        %v1627 = vmul.f32 %v1350, %v1601
        %v1628 = vmul.f32 %v1357, %v1601
        %v1629 = vmul.f32 %v1361, %v1601
        %v1630 = vmul.f32 %v1368, %v1601
        %v1631 = vmul.f32 %v1372, %v1601
        %v1632 = vmul.f32 %v1379, %v1601
        %v1633 = vmul.f32 %v1383, %v1601
        %v1634 = vadd.f32 %v1566, %v1602
        %v1635 = vadd.f32 %v1567, %v1603
        %v1636 = vadd.f32 %v1568, %v1604
        %v1637 = vadd.f32 %v1569, %v1605
        %v1638 = vadd.f32 %v1570, %v1606
        %v1639 = vadd.f32 %v1571, %v1607
        %v1640 = vadd.f32 %v1572, %v1608
        %v1641 = vadd.f32 %v1573, %v1609
        %v1642 = vadd.f32 %v1574, %v1610
        %v1643 = vadd.f32 %v1575, %v1611
        %v1644 = vadd.f32 %v1576, %v1612
        %v1645 = vadd.f32 %v1577, %v1613
        %v1646 = vadd.f32 %v1578, %v1614
        %v1647 = vadd.f32 %v1579, %v1615
        %v1648 = vadd.f32 %v1580, %v1616
        %v1649 = vadd.f32 %v1581, %v1617
        %v1650 = vadd.f32 %v1582, %v1618
        %v1651 = vadd.f32 %v1583, %v1619
        %v1652 = vadd.f32 %v1584, %v1620
        %v1653 = vadd.f32 %v1585, %v1621
        %v1654 = vadd.f32 %v1586, %v1622
        %v1655 = vadd.f32 %v1587, %v1623
        %v1656 = vadd.f32 %v1588, %v1624
        %v1657 = vadd.f32 %v1589, %v1625
        %v1658 = vadd.f32 %v1590, %v1626
        %v1659 = vadd.f32 %v1591, %v1627
        %v1660 = vadd.f32 %v1592, %v1628
        %v1661 = vadd.f32 %v1593, %v1629
        %v1662 = vadd.f32 %v1594, %v1630
        %v1663 = vadd.f32 %v1595, %v1631
        %v1664 = vadd.f32 %v1596, %v1632
        %v1665 = vadd.f32 %v1597, %v1633
        %v1668 = vcombine.high %v1200, %v1200
        %v1670 = vunpack.c.l.s4 1966171168
        %v1671 = vunpack.c.0.s8 %v1670
        %v1672 = vlaneseq
        %v1673 = vshrl.u32 %v1672, 7
        %v1674 = vsub.s32 %v1671, %v1673
        %v1675 = vrot.slane %v1200, %v1674
        %v1677 = vunpack.c.l.s4 1966171168
        %v1678 = vunpack.c.0.s8 %v1677
        %v1679 = vlaneseq
        %v1680 = vshrl.u32 %v1679, 7
        %v1681 = vsub.s32 %v1678, %v1680
        %v1682 = vrot.slane %v1668, %v1681
        %v1683 = vcombine.high %v1675, %v1675
        %v1684 = vcombine.high %v1682, %v1682
        %v1686 = vunpack.c.l.s4 1966171168
        %v1687 = vunpack.c.0.s8 %v1686
        %v1688 = vlaneseq
        %v1689 = vshrl.u32 %v1688, 7
        %v1690 = vsub.s32 %v1687, %v1689
        %v1691 = vrot.slane %v1675, %v1690
        %v1693 = vunpack.c.l.s4 1966171168
        %v1694 = vunpack.c.0.s8 %v1693
        %v1695 = vlaneseq
        %v1696 = vshrl.u32 %v1695, 7
        %v1697 = vsub.s32 %v1694, %v1696
        %v1698 = vrot.slane %v1682, %v1697
        %v1700 = vunpack.c.l.s4 1966171168
        %v1701 = vunpack.c.0.s8 %v1700
        %v1702 = vlaneseq
        %v1703 = vshrl.u32 %v1702, 7
        %v1704 = vsub.s32 %v1701, %v1703
        %v1705 = vrot.slane %v1683, %v1704
        %v1707 = vunpack.c.l.s4 1966171168
        %v1708 = vunpack.c.0.s8 %v1707
        %v1709 = vlaneseq
        %v1710 = vshrl.u32 %v1709, 7
        %v1711 = vsub.s32 %v1708, %v1710
        %v1712 = vrot.slane %v1684, %v1711
        %v1713 = vcombine.high %v1691, %v1691
        %v1714 = vcombine.high %v1698, %v1698
        %v1715 = vcombine.high %v1705, %v1705
        %v1716 = vcombine.high %v1712, %v1712
        %v1717 = vcombine.high %v1203, %v1203
        %v1719 = vunpack.c.l.s4 1966171168
        %v1720 = vunpack.c.0.s8 %v1719
        %v1721 = vlaneseq
        %v1722 = vshrl.u32 %v1721, 7
        %v1723 = vsub.s32 %v1720, %v1722
        %v1724 = vrot.slane %v1203, %v1723
        %v1726 = vunpack.c.l.s4 1966171168
        %v1727 = vunpack.c.0.s8 %v1726
        %v1728 = vlaneseq
        %v1729 = vshrl.u32 %v1728, 7
        %v1730 = vsub.s32 %v1727, %v1729
        %v1731 = vrot.slane %v1717, %v1730
        %v1732 = vcombine.high %v1724, %v1724
        %v1733 = vcombine.high %v1731, %v1731
        %v1735 = vunpack.c.l.s4 1966171168
        %v1736 = vunpack.c.0.s8 %v1735
        %v1737 = vlaneseq
        %v1738 = vshrl.u32 %v1737, 7
        %v1739 = vsub.s32 %v1736, %v1738
        %v1740 = vrot.slane %v1724, %v1739
        %v1742 = vunpack.c.l.s4 1966171168
        %v1743 = vunpack.c.0.s8 %v1742
        %v1744 = vlaneseq
        %v1745 = vshrl.u32 %v1744, 7
        %v1746 = vsub.s32 %v1743, %v1745
        %v1747 = vrot.slane %v1731, %v1746
        %v1749 = vunpack.c.l.s4 1966171168
        %v1750 = vunpack.c.0.s8 %v1749
        %v1751 = vlaneseq
        %v1752 = vshrl.u32 %v1751, 7
        %v1753 = vsub.s32 %v1750, %v1752
        %v1754 = vrot.slane %v1732, %v1753
        %v1756 = vunpack.c.l.s4 1966171168
        %v1757 = vunpack.c.0.s8 %v1756
        %v1758 = vlaneseq
        %v1759 = vshrl.u32 %v1758, 7
        %v1760 = vsub.s32 %v1757, %v1759
        %v1761 = vrot.slane %v1733, %v1760
        %v1762 = vcombine.high %v1740, %v1740
        %v1763 = vcombine.high %v1747, %v1747
        %v1764 = vcombine.high %v1754, %v1754
        %v1765 = vcombine.high %v1761, %v1761
        %v1766 = vld [vmem:[#allocation5] sm:$0xff]
        %v1767 = vld [vmem:[#allocation5 + $0x8] sm:$0xff]
        %v1768 = vlaneseq
        %v1769 = vshrl.u32 %v1768, 7
        %v1770 = vsub.s32 0, %v1769
        %v1771 = vrot.slane %v1691, %v1770
        %v1772 = vlaneseq
        %v1773 = vshrl.u32 %v1772, 7
        %v1774 = vsub.s32 0, %v1773
        %v1775 = vrot.slane %v1705, %v1774
        %v1776 = vlaneseq
        %v1777 = vshrl.u32 %v1776, 7
        %v1778 = vsub.s32 0, %v1777
        %v1779 = vrot.slane %v1713, %v1778
        %v1780 = vlaneseq
        %v1781 = vshrl.u32 %v1780, 7
        %v1782 = vsub.s32 0, %v1781
        %v1783 = vrot.slane %v1715, %v1782
        %v1784 = vlaneseq
        %v1785 = vshrl.u32 %v1784, 7
        %v1786 = vsub.s32 0, %v1785
        %v1787 = vrot.slane %v1698, %v1786
        %v1788 = vlaneseq
        %v1789 = vshrl.u32 %v1788, 7
        %v1790 = vsub.s32 0, %v1789
        %v1791 = vrot.slane %v1712, %v1790
        %v1792 = vlaneseq
        %v1793 = vshrl.u32 %v1792, 7
        %v1794 = vsub.s32 0, %v1793
        %v1795 = vrot.slane %v1714, %v1794
        %v1796 = vlaneseq
        %v1797 = vshrl.u32 %v1796, 7
        %v1798 = vsub.s32 0, %v1797
        %v1799 = vrot.slane %v1716, %v1798
        %v1800 = vlaneseq
        %v1801 = vshrl.u32 %v1800, 7
        %v1802 = vsub.s32 0, %v1801
        %v1803 = vrot.slane %v1740, %v1802
        %v1804 = vlaneseq
        %v1805 = vshrl.u32 %v1804, 7
        %v1806 = vsub.s32 0, %v1805
        %v1807 = vrot.slane %v1754, %v1806
        %v1808 = vlaneseq
        %v1809 = vshrl.u32 %v1808, 7
        %v1810 = vsub.s32 0, %v1809
        %v1811 = vrot.slane %v1762, %v1810
        %v1812 = vlaneseq
        %v1813 = vshrl.u32 %v1812, 7
        %v1814 = vsub.s32 0, %v1813
        %v1815 = vrot.slane %v1764, %v1814
        %v1816 = vlaneseq
        %v1817 = vshrl.u32 %v1816, 7
        %v1818 = vsub.s32 0, %v1817
        %v1819 = vrot.slane %v1747, %v1818
        %v1820 = vlaneseq
        %v1821 = vshrl.u32 %v1820, 7
        %v1822 = vsub.s32 0, %v1821
        %v1823 = vrot.slane %v1761, %v1822
        %v1824 = vlaneseq
        %v1825 = vshrl.u32 %v1824, 7
        %v1826 = vsub.s32 0, %v1825
        %v1827 = vrot.slane %v1763, %v1826
        %v1828 = vlaneseq
        %v1829 = vshrl.u32 %v1828, 7
        %v1830 = vsub.s32 0, %v1829
        %v1831 = vrot.slane %v1765, %v1830
        %v1848 = vadd.f32 %v1771, %v1766
        %v1849 = vadd.f32 %v1771, %v1767
        %v1850 = vadd.f32 %v1775, %v1766
        %v1851 = vadd.f32 %v1775, %v1767
        %v1852 = vadd.f32 %v1779, %v1766
        %v1853 = vadd.f32 %v1779, %v1767
        %v1854 = vadd.f32 %v1783, %v1766
        %v1855 = vadd.f32 %v1783, %v1767
        %v1856 = vadd.f32 %v1787, %v1766
        %v1857 = vadd.f32 %v1787, %v1767
        %v1858 = vadd.f32 %v1791, %v1766
        %v1859 = vadd.f32 %v1791, %v1767
        %v1860 = vadd.f32 %v1795, %v1766
        %v1861 = vadd.f32 %v1795, %v1767
        %v1862 = vadd.f32 %v1799, %v1766
        %v1863 = vadd.f32 %v1799, %v1767
        %v1864 = vadd.f32 %v1803, %v1766
        %v1865 = vadd.f32 %v1803, %v1767
        %v1866 = vadd.f32 %v1807, %v1766
        %v1867 = vadd.f32 %v1807, %v1767
        %v1868 = vadd.f32 %v1811, %v1766
        %v1869 = vadd.f32 %v1811, %v1767
        %v1870 = vadd.f32 %v1815, %v1766
        %v1871 = vadd.f32 %v1815, %v1767
        %v1872 = vadd.f32 %v1819, %v1766
        %v1873 = vadd.f32 %v1819, %v1767
        %v1874 = vadd.f32 %v1823, %v1766
        %v1875 = vadd.f32 %v1823, %v1767
        %v1876 = vadd.f32 %v1827, %v1766
        %v1877 = vadd.f32 %v1827, %v1767
        %v1878 = vadd.f32 %v1831, %v1766
        %v1879 = vadd.f32 %v1831, %v1767
        %v1880 = vlaneseq
        %v1881 = vshrl.u32 %v1880, 7
        %v1882 = vsub.s32 0, %v1881
        %v1883 = vrot.slane %v1207, %v1882
        %v1884 = vmul.f32 %v1214, %v1883
        %v1885 = vmul.f32 %v1218, %v1883
        %v1886 = vmul.f32 %v1225, %v1883
        %v1887 = vmul.f32 %v1229, %v1883
        %v1888 = vmul.f32 %v1236, %v1883
        %v1889 = vmul.f32 %v1240, %v1883
        %v1890 = vmul.f32 %v1247, %v1883
        %v1891 = vmul.f32 %v1251, %v1883
        %v1892 = vmul.f32 %v1258, %v1883
        %v1893 = vmul.f32 %v1262, %v1883
        %v1894 = vmul.f32 %v1269, %v1883
        %v1895 = vmul.f32 %v1273, %v1883
        %v1896 = vmul.f32 %v1280, %v1883
        %v1897 = vmul.f32 %v1284, %v1883
        %v1898 = vmul.f32 %v1291, %v1883
        %v1899 = vmul.f32 %v1295, %v1883
        %v1900 = vmul.f32 %v1302, %v1883
        %v1901 = vmul.f32 %v1306, %v1883
        %v1902 = vmul.f32 %v1313, %v1883
        %v1903 = vmul.f32 %v1317, %v1883
        %v1904 = vmul.f32 %v1324, %v1883
        %v1905 = vmul.f32 %v1328, %v1883
        %v1906 = vmul.f32 %v1335, %v1883
        %v1907 = vmul.f32 %v1339, %v1883
        %v1908 = vmul.f32 %v1346, %v1883
        %v1909 = vmul.f32 %v1350, %v1883
        %v1910 = vmul.f32 %v1357, %v1883
        %v1911 = vmul.f32 %v1361, %v1883
        %v1912 = vmul.f32 %v1368, %v1883
        %v1913 = vmul.f32 %v1372, %v1883
        %v1914 = vmul.f32 %v1379, %v1883
        %v1915 = vmul.f32 %v1383, %v1883
        %v1916 = vadd.f32 %v1848, %v1884
        %v1917 = vadd.f32 %v1849, %v1885
        %v1918 = vadd.f32 %v1850, %v1886
        %v1919 = vadd.f32 %v1851, %v1887
        %v1920 = vadd.f32 %v1852, %v1888
        %v1921 = vadd.f32 %v1853, %v1889
        %v1922 = vadd.f32 %v1854, %v1890
        %v1923 = vadd.f32 %v1855, %v1891
        %v1924 = vadd.f32 %v1856, %v1892
        %v1925 = vadd.f32 %v1857, %v1893
        %v1926 = vadd.f32 %v1858, %v1894
        %v1927 = vadd.f32 %v1859, %v1895
        %v1928 = vadd.f32 %v1860, %v1896
        %v1929 = vadd.f32 %v1861, %v1897
        %v1930 = vadd.f32 %v1862, %v1898
        %v1931 = vadd.f32 %v1863, %v1899
        %v1932 = vadd.f32 %v1864, %v1900
        %v1933 = vadd.f32 %v1865, %v1901
        %v1934 = vadd.f32 %v1866, %v1902
        %v1935 = vadd.f32 %v1867, %v1903
        %v1936 = vadd.f32 %v1868, %v1904
        %v1937 = vadd.f32 %v1869, %v1905
        %v1938 = vadd.f32 %v1870, %v1906
        %v1939 = vadd.f32 %v1871, %v1907
        %v1940 = vadd.f32 %v1872, %v1908
        %v1941 = vadd.f32 %v1873, %v1909
        %v1942 = vadd.f32 %v1874, %v1910
        %v1943 = vadd.f32 %v1875, %v1911
        %v1944 = vadd.f32 %v1876, %v1912
        %v1945 = vadd.f32 %v1877, %v1913
        %v1946 = vadd.f32 %v1878, %v1914
        %v1947 = vadd.f32 %v1879, %v1915
        %v1948 = vxor.u32 %v1634, 2147483648
        %v1949 = vxor.u32 %v1635, 2147483648
        %v1950 = vxor.u32 %v1636, 2147483648
        %v1951 = vxor.u32 %v1637, 2147483648
        %v1952 = vxor.u32 %v1638, 2147483648
        %v1953 = vxor.u32 %v1639, 2147483648
        %v1954 = vxor.u32 %v1640, 2147483648
        %v1955 = vxor.u32 %v1641, 2147483648
        %v1956 = vxor.u32 %v1642, 2147483648
        %v1957 = vxor.u32 %v1643, 2147483648
        %v1958 = vxor.u32 %v1644, 2147483648
        %v1959 = vxor.u32 %v1645, 2147483648
        %v1960 = vxor.u32 %v1646, 2147483648
        %v1961 = vxor.u32 %v1647, 2147483648
        %v1962 = vxor.u32 %v1648, 2147483648
        %v1963 = vxor.u32 %v1649, 2147483648
        %v1964 = vxor.u32 %v1650, 2147483648
        %v1965 = vxor.u32 %v1651, 2147483648
        %v1966 = vxor.u32 %v1652, 2147483648
        %v1967 = vxor.u32 %v1653, 2147483648
        %v1968 = vxor.u32 %v1654, 2147483648
        %v1969 = vxor.u32 %v1655, 2147483648
        %v1970 = vxor.u32 %v1656, 2147483648
        %v1971 = vxor.u32 %v1657, 2147483648
        %v1972 = vxor.u32 %v1658, 2147483648
        %v1973 = vxor.u32 %v1659, 2147483648
        %v1974 = vxor.u32 %v1660, 2147483648
        %v1975 = vxor.u32 %v1661, 2147483648
        %v1976 = vxor.u32 %v1662, 2147483648
        %v1977 = vxor.u32 %v1663, 2147483648
        %v1978 = vxor.u32 %v1664, 2147483648
        %v1979 = vxor.u32 %v1665, 2147483648
        %v1980 = vmul.f32 %v1948, 1.442695
        %v1981 = vpow.pop %v1980
        %v1982 = vmul.f32 %v1949, 1.442695
        %v1983 = vpow.pop %v1982
        %v1984 = vmul.f32 %v1950, 1.442695
        %v1985 = vpow.pop %v1984
        %v1986 = vmul.f32 %v1951, 1.442695
        %v1987 = vpow.pop %v1986
        %v1988 = vmul.f32 %v1952, 1.442695
        %v1989 = vpow.pop %v1988
        %v1990 = vmul.f32 %v1953, 1.442695
        %v1991 = vpow.pop %v1990
        %v1992 = vmul.f32 %v1954, 1.442695
        %v1993 = vpow.pop %v1992
        %v1994 = vmul.f32 %v1955, 1.442695
        %v1995 = vpow.pop %v1994
        %v1996 = vmul.f32 %v1956, 1.442695
        %v1997 = vpow.pop %v1996
        %v1998 = vmul.f32 %v1957, 1.442695
        %v1999 = vpow.pop %v1998
        %v2000 = vmul.f32 %v1958, 1.442695
        %v2001 = vpow.pop %v2000
        %v2002 = vmul.f32 %v1959, 1.442695
        %v2003 = vpow.pop %v2002
        %v2004 = vmul.f32 %v1960, 1.442695
        %v2005 = vpow.pop %v2004
        %v2006 = vmul.f32 %v1961, 1.442695
        %v2007 = vpow.pop %v2006
        %v2008 = vmul.f32 %v1962, 1.442695
        %v2009 = vpow.pop %v2008
        %v2010 = vmul.f32 %v1963, 1.442695
        %v2011 = vpow.pop %v2010
        %v2012 = vmul.f32 %v1964, 1.442695
        %v2013 = vpow.pop %v2012
        %v2014 = vmul.f32 %v1965, 1.442695
        %v2015 = vpow.pop %v2014
        %v2016 = vmul.f32 %v1966, 1.442695
        %v2017 = vpow.pop %v2016
        %v2018 = vmul.f32 %v1967, 1.442695
        %v2019 = vpow.pop %v2018
        %v2020 = vmul.f32 %v1968, 1.442695
        %v2021 = vpow.pop %v2020
        %v2022 = vmul.f32 %v1969, 1.442695
        %v2023 = vpow.pop %v2022
        %v2024 = vmul.f32 %v1970, 1.442695
        %v2025 = vpow.pop %v2024
        %v2026 = vmul.f32 %v1971, 1.442695
        %v2027 = vpow.pop %v2026
        %v2028 = vmul.f32 %v1972, 1.442695
        %v2029 = vpow.pop %v2028
        %v2030 = vmul.f32 %v1973, 1.442695
        %v2031 = vpow.pop %v2030
        %v2032 = vmul.f32 %v1974, 1.442695
        %v2033 = vpow.pop %v2032
        %v2034 = vmul.f32 %v1975, 1.442695
        %v2035 = vpow.pop %v2034
        %v2036 = vmul.f32 %v1976, 1.442695
        %v2037 = vpow.pop %v2036
        %v2038 = vmul.f32 %v1977, 1.442695
        %v2039 = vpow.pop %v2038
        %v2040 = vmul.f32 %v1978, 1.442695
        %v2041 = vpow.pop %v2040
        %v2042 = vmul.f32 %v1979, 1.442695
        %v2043 = vpow.pop %v2042
        %v2044 = vadd.f32 %v1981, 1.0
        %v2045 = vadd.f32 %v1983, 1.0
        %v2046 = vadd.f32 %v1985, 1.0
        %v2047 = vadd.f32 %v1987, 1.0
        %v2048 = vadd.f32 %v1989, 1.0
        %v2049 = vadd.f32 %v1991, 1.0
        %v2050 = vadd.f32 %v1993, 1.0
        %v2051 = vadd.f32 %v1995, 1.0
        %v2052 = vadd.f32 %v1997, 1.0
        %v2053 = vadd.f32 %v1999, 1.0
        %v2054 = vadd.f32 %v2001, 1.0
        %v2055 = vadd.f32 %v2003, 1.0
        %v2056 = vadd.f32 %v2005, 1.0
        %v2057 = vadd.f32 %v2007, 1.0
        %v2058 = vadd.f32 %v2009, 1.0
        %v2059 = vadd.f32 %v2011, 1.0
        %v2060 = vadd.f32 %v2013, 1.0
        %v2061 = vadd.f32 %v2015, 1.0
        %v2062 = vadd.f32 %v2017, 1.0
        %v2063 = vadd.f32 %v2019, 1.0
        %v2064 = vadd.f32 %v2021, 1.0
        %v2065 = vadd.f32 %v2023, 1.0
        %v2066 = vadd.f32 %v2025, 1.0
        %v2067 = vadd.f32 %v2027, 1.0
        %v2068 = vadd.f32 %v2029, 1.0
        %v2069 = vadd.f32 %v2031, 1.0
        %v2070 = vadd.f32 %v2033, 1.0
        %v2071 = vadd.f32 %v2035, 1.0
        %v2072 = vadd.f32 %v2037, 1.0
        %v2073 = vadd.f32 %v2039, 1.0
        %v2074 = vadd.f32 %v2041, 1.0
        %v2075 = vadd.f32 %v2043, 1.0
        %v2076 = vrcp.pop %v2044
        %v2077 = vmul.f32 1.0, %v2076
        %v2078 = vrcp.pop %v2045
        %v2079 = vmul.f32 1.0, %v2078
        %v2080 = vrcp.pop %v2046
        %v2081 = vmul.f32 1.0, %v2080
        %v2082 = vrcp.pop %v2047
        %v2083 = vmul.f32 1.0, %v2082
        %v2084 = vrcp.pop %v2048
        %v2085 = vmul.f32 1.0, %v2084
        %v2086 = vrcp.pop %v2049
        %v2087 = vmul.f32 1.0, %v2086
        %v2088 = vrcp.pop %v2050
        %v2089 = vmul.f32 1.0, %v2088
        %v2090 = vrcp.pop %v2051
        %v2091 = vmul.f32 1.0, %v2090
        %v2092 = vrcp.pop %v2052
        %v2093 = vmul.f32 1.0, %v2092
        %v2094 = vrcp.pop %v2053
        %v2095 = vmul.f32 1.0, %v2094
        %v2096 = vrcp.pop %v2054
        %v2097 = vmul.f32 1.0, %v2096
        %v2098 = vrcp.pop %v2055
        %v2099 = vmul.f32 1.0, %v2098
        %v2100 = vrcp.pop %v2056
        %v2101 = vmul.f32 1.0, %v2100
        %v2102 = vrcp.pop %v2057
        %v2103 = vmul.f32 1.0, %v2102
        %v2104 = vrcp.pop %v2058
        %v2105 = vmul.f32 1.0, %v2104
        %v2106 = vrcp.pop %v2059
        %v2107 = vmul.f32 1.0, %v2106
        %v2108 = vrcp.pop %v2060
        %v2109 = vmul.f32 1.0, %v2108
        %v2110 = vrcp.pop %v2061
        %v2111 = vmul.f32 1.0, %v2110
        %v2112 = vrcp.pop %v2062
        %v2113 = vmul.f32 1.0, %v2112
        %v2114 = vrcp.pop %v2063
        %v2115 = vmul.f32 1.0, %v2114
        %v2116 = vrcp.pop %v2064
        %v2117 = vmul.f32 1.0, %v2116
        %v2118 = vrcp.pop %v2065
        %v2119 = vmul.f32 1.0, %v2118
        %v2120 = vrcp.pop %v2066
        %v2121 = vmul.f32 1.0, %v2120
        %v2122 = vrcp.pop %v2067
        %v2123 = vmul.f32 1.0, %v2122
        %v2124 = vrcp.pop %v2068
        %v2125 = vmul.f32 1.0, %v2124
        %v2126 = vrcp.pop %v2069
        %v2127 = vmul.f32 1.0, %v2126
        %v2128 = vrcp.pop %v2070
        %v2129 = vmul.f32 1.0, %v2128
        %v2130 = vrcp.pop %v2071
        %v2131 = vmul.f32 1.0, %v2130
        %v2132 = vrcp.pop %v2072
        %v2133 = vmul.f32 1.0, %v2132
        %v2134 = vrcp.pop %v2073
        %v2135 = vmul.f32 1.0, %v2134
        %v2136 = vrcp.pop %v2074
        %v2137 = vmul.f32 1.0, %v2136
        %v2138 = vrcp.pop %v2075
        %v2139 = vmul.f32 1.0, %v2138
        %v2140 = vmul.f32 %v1634, %v2077
        %v2141 = vmul.f32 %v1635, %v2079
        %v2142 = vmul.f32 %v1636, %v2081
        %v2143 = vmul.f32 %v1637, %v2083
        %v2144 = vmul.f32 %v1638, %v2085
        %v2145 = vmul.f32 %v1639, %v2087
        %v2146 = vmul.f32 %v1640, %v2089
        %v2147 = vmul.f32 %v1641, %v2091
        %v2148 = vmul.f32 %v1642, %v2093
        %v2149 = vmul.f32 %v1643, %v2095
        %v2150 = vmul.f32 %v1644, %v2097
        %v2151 = vmul.f32 %v1645, %v2099
        %v2152 = vmul.f32 %v1646, %v2101
        %v2153 = vmul.f32 %v1647, %v2103
        %v2154 = vmul.f32 %v1648, %v2105
        %v2155 = vmul.f32 %v1649, %v2107
        %v2156 = vmul.f32 %v1650, %v2109
        %v2157 = vmul.f32 %v1651, %v2111
        %v2158 = vmul.f32 %v1652, %v2113
        %v2159 = vmul.f32 %v1653, %v2115
        %v2160 = vmul.f32 %v1654, %v2117
        %v2161 = vmul.f32 %v1655, %v2119
        %v2162 = vmul.f32 %v1656, %v2121
        %v2163 = vmul.f32 %v1657, %v2123
        %v2164 = vmul.f32 %v1658, %v2125
        %v2165 = vmul.f32 %v1659, %v2127
        %v2166 = vmul.f32 %v1660, %v2129
        %v2167 = vmul.f32 %v1661, %v2131
        %v2168 = vmul.f32 %v1662, %v2133
        %v2169 = vmul.f32 %v1663, %v2135
        %v2170 = vmul.f32 %v1664, %v2137
        %v2171 = vmul.f32 %v1665, %v2139
        %v2172 = vpack.c.bf16 %v2141, %v2140
        %v2173 = vpack.c.bf16 %v2143, %v2142
        %v2174 = vpack.c.bf16 %v2145, %v2144
        %v2175 = vpack.c.bf16 %v2147, %v2146
        %v2176 = vpack.c.bf16 %v2149, %v2148
        %v2177 = vpack.c.bf16 %v2151, %v2150
        %v2178 = vpack.c.bf16 %v2153, %v2152
        %v2179 = vpack.c.bf16 %v2155, %v2154
        %v2180 = vpack.c.bf16 %v2157, %v2156
        %v2181 = vpack.c.bf16 %v2159, %v2158
        %v2182 = vpack.c.bf16 %v2161, %v2160
        %v2183 = vpack.c.bf16 %v2163, %v2162
        %v2184 = vpack.c.bf16 %v2165, %v2164
        %v2185 = vpack.c.bf16 %v2167, %v2166
        %v2186 = vpack.c.bf16 %v2169, %v2168
        %v2187 = vpack.c.bf16 %v2171, %v2170
        %v2188 = vxor.u32 %v1916, 2147483648
        %v2189 = vxor.u32 %v1917, 2147483648
        %v2190 = vxor.u32 %v1918, 2147483648
        %v2191 = vxor.u32 %v1919, 2147483648
        %v2192 = vxor.u32 %v1920, 2147483648
        %v2193 = vxor.u32 %v1921, 2147483648
        %v2194 = vxor.u32 %v1922, 2147483648
        %v2195 = vxor.u32 %v1923, 2147483648
        %v2196 = vxor.u32 %v1924, 2147483648
        %v2197 = vxor.u32 %v1925, 2147483648
        %v2198 = vxor.u32 %v1926, 2147483648
        %v2199 = vxor.u32 %v1927, 2147483648
        %v2200 = vxor.u32 %v1928, 2147483648
        %v2201 = vxor.u32 %v1929, 2147483648
        %v2202 = vxor.u32 %v1930, 2147483648
        %v2203 = vxor.u32 %v1931, 2147483648
        %v2204 = vxor.u32 %v1932, 2147483648
        %v2205 = vxor.u32 %v1933, 2147483648
        %v2206 = vxor.u32 %v1934, 2147483648
        %v2207 = vxor.u32 %v1935, 2147483648
        %v2208 = vxor.u32 %v1936, 2147483648
        %v2209 = vxor.u32 %v1937, 2147483648
        %v2210 = vxor.u32 %v1938, 2147483648
        %v2211 = vxor.u32 %v1939, 2147483648
        %v2212 = vxor.u32 %v1940, 2147483648
        %v2213 = vxor.u32 %v1941, 2147483648
        %v2214 = vxor.u32 %v1942, 2147483648
        %v2215 = vxor.u32 %v1943, 2147483648
        %v2216 = vxor.u32 %v1944, 2147483648
        %v2217 = vxor.u32 %v1945, 2147483648
        %v2218 = vxor.u32 %v1946, 2147483648
        %v2219 = vxor.u32 %v1947, 2147483648
        %v2220 = vmul.f32 %v2188, 1.442695
        %v2221 = vpow.pop %v2220
        %v2222 = vmul.f32 %v2189, 1.442695
        %v2223 = vpow.pop %v2222
        %v2224 = vmul.f32 %v2190, 1.442695
        %v2225 = vpow.pop %v2224
        %v2226 = vmul.f32 %v2191, 1.442695
        %v2227 = vpow.pop %v2226
        %v2228 = vmul.f32 %v2192, 1.442695
        %v2229 = vpow.pop %v2228
        %v2230 = vmul.f32 %v2193, 1.442695
        %v2231 = vpow.pop %v2230
        %v2232 = vmul.f32 %v2194, 1.442695
        %v2233 = vpow.pop %v2232
        %v2234 = vmul.f32 %v2195, 1.442695
        %v2235 = vpow.pop %v2234
        %v2236 = vmul.f32 %v2196, 1.442695
        %v2237 = vpow.pop %v2236
        %v2238 = vmul.f32 %v2197, 1.442695
        %v2239 = vpow.pop %v2238
        %v2240 = vmul.f32 %v2198, 1.442695
        %v2241 = vpow.pop %v2240
        %v2242 = vmul.f32 %v2199, 1.442695
        %v2243 = vpow.pop %v2242
        %v2244 = vmul.f32 %v2200, 1.442695
        %v2245 = vpow.pop %v2244
        %v2246 = vmul.f32 %v2201, 1.442695
        %v2247 = vpow.pop %v2246
        %v2248 = vmul.f32 %v2202, 1.442695
        %v2249 = vpow.pop %v2248
        %v2250 = vmul.f32 %v2203, 1.442695
        %v2251 = vpow.pop %v2250
        %v2252 = vmul.f32 %v2204, 1.442695
        %v2253 = vpow.pop %v2252
        %v2254 = vmul.f32 %v2205, 1.442695
        %v2255 = vpow.pop %v2254
        %v2256 = vmul.f32 %v2206, 1.442695
        %v2257 = vpow.pop %v2256
        %v2258 = vmul.f32 %v2207, 1.442695
        %v2259 = vpow.pop %v2258
        %v2260 = vmul.f32 %v2208, 1.442695
        %v2261 = vpow.pop %v2260
        %v2262 = vmul.f32 %v2209, 1.442695
        %v2263 = vpow.pop %v2262
        %v2264 = vmul.f32 %v2210, 1.442695
        %v2265 = vpow.pop %v2264
        %v2266 = vmul.f32 %v2211, 1.442695
        %v2267 = vpow.pop %v2266
        %v2268 = vmul.f32 %v2212, 1.442695
        %v2269 = vpow.pop %v2268
        %v2270 = vmul.f32 %v2213, 1.442695
        %v2271 = vpow.pop %v2270
        %v2272 = vmul.f32 %v2214, 1.442695
        %v2273 = vpow.pop %v2272
        %v2274 = vmul.f32 %v2215, 1.442695
        %v2275 = vpow.pop %v2274
        %v2276 = vmul.f32 %v2216, 1.442695
        %v2277 = vpow.pop %v2276
        %v2278 = vmul.f32 %v2217, 1.442695
        %v2279 = vpow.pop %v2278
        %v2280 = vmul.f32 %v2218, 1.442695
        %v2281 = vpow.pop %v2280
        %v2282 = vmul.f32 %v2219, 1.442695
        %v2283 = vpow.pop %v2282
        %v2284 = vadd.f32 %v2221, 1.0
        %v2285 = vadd.f32 %v2223, 1.0
        %v2286 = vadd.f32 %v2225, 1.0
        %v2287 = vadd.f32 %v2227, 1.0
        %v2288 = vadd.f32 %v2229, 1.0
        %v2289 = vadd.f32 %v2231, 1.0
        %v2290 = vadd.f32 %v2233, 1.0
        %v2291 = vadd.f32 %v2235, 1.0
        %v2292 = vadd.f32 %v2237, 1.0
        %v2293 = vadd.f32 %v2239, 1.0
        %v2294 = vadd.f32 %v2241, 1.0
        %v2295 = vadd.f32 %v2243, 1.0
        %v2296 = vadd.f32 %v2245, 1.0
        %v2297 = vadd.f32 %v2247, 1.0
        %v2298 = vadd.f32 %v2249, 1.0
        %v2299 = vadd.f32 %v2251, 1.0
        %v2300 = vadd.f32 %v2253, 1.0
        %v2301 = vadd.f32 %v2255, 1.0
        %v2302 = vadd.f32 %v2257, 1.0
        %v2303 = vadd.f32 %v2259, 1.0
        %v2304 = vadd.f32 %v2261, 1.0
        %v2305 = vadd.f32 %v2263, 1.0
        %v2306 = vadd.f32 %v2265, 1.0
        %v2307 = vadd.f32 %v2267, 1.0
        %v2308 = vadd.f32 %v2269, 1.0
        %v2309 = vadd.f32 %v2271, 1.0
        %v2310 = vadd.f32 %v2273, 1.0
        %v2311 = vadd.f32 %v2275, 1.0
        %v2312 = vadd.f32 %v2277, 1.0
        %v2313 = vadd.f32 %v2279, 1.0
        %v2314 = vadd.f32 %v2281, 1.0
        %v2315 = vadd.f32 %v2283, 1.0
        %v2316 = vrcp.pop %v2284
        %v2317 = vmul.f32 1.0, %v2316
        %v2318 = vrcp.pop %v2285
        %v2319 = vmul.f32 1.0, %v2318
        %v2320 = vrcp.pop %v2286
        %v2321 = vmul.f32 1.0, %v2320
        %v2322 = vrcp.pop %v2287
        %v2323 = vmul.f32 1.0, %v2322
        %v2324 = vrcp.pop %v2288
        %v2325 = vmul.f32 1.0, %v2324
        %v2326 = vrcp.pop %v2289
        %v2327 = vmul.f32 1.0, %v2326
        %v2328 = vrcp.pop %v2290
        %v2329 = vmul.f32 1.0, %v2328
        %v2330 = vrcp.pop %v2291
        %v2331 = vmul.f32 1.0, %v2330
        %v2332 = vrcp.pop %v2292
        %v2333 = vmul.f32 1.0, %v2332
        %v2334 = vrcp.pop %v2293
        %v2335 = vmul.f32 1.0, %v2334
        %v2336 = vrcp.pop %v2294
        %v2337 = vmul.f32 1.0, %v2336
        %v2338 = vrcp.pop %v2295
        %v2339 = vmul.f32 1.0, %v2338
        %v2340 = vrcp.pop %v2296
        %v2341 = vmul.f32 1.0, %v2340
        %v2342 = vrcp.pop %v2297
        %v2343 = vmul.f32 1.0, %v2342
        %v2344 = vrcp.pop %v2298
        %v2345 = vmul.f32 1.0, %v2344
        %v2346 = vrcp.pop %v2299
        %v2347 = vmul.f32 1.0, %v2346
        %v2348 = vrcp.pop %v2300
        %v2349 = vmul.f32 1.0, %v2348
        %v2350 = vrcp.pop %v2301
        %v2351 = vmul.f32 1.0, %v2350
        %v2352 = vrcp.pop %v2302
        %v2353 = vmul.f32 1.0, %v2352
        %v2354 = vrcp.pop %v2303
        %v2355 = vmul.f32 1.0, %v2354
        %v2356 = vrcp.pop %v2304
        %v2357 = vmul.f32 1.0, %v2356
        %v2358 = vrcp.pop %v2305
        %v2359 = vmul.f32 1.0, %v2358
        %v2360 = vrcp.pop %v2306
        %v2361 = vmul.f32 1.0, %v2360
        %v2362 = vrcp.pop %v2307
        %v2363 = vmul.f32 1.0, %v2362
        %v2364 = vrcp.pop %v2308
        %v2365 = vmul.f32 1.0, %v2364
        %v2366 = vrcp.pop %v2309
        %v2367 = vmul.f32 1.0, %v2366
        %v2368 = vrcp.pop %v2310
        %v2369 = vmul.f32 1.0, %v2368
        %v2370 = vrcp.pop %v2311
        %v2371 = vmul.f32 1.0, %v2370
        %v2372 = vrcp.pop %v2312
        %v2373 = vmul.f32 1.0, %v2372
        %v2374 = vrcp.pop %v2313
        %v2375 = vmul.f32 1.0, %v2374
        %v2376 = vrcp.pop %v2314
        %v2377 = vmul.f32 1.0, %v2376
        %v2378 = vrcp.pop %v2315
        %v2379 = vmul.f32 1.0, %v2378
        %v2380 = vmul.f32 %v1916, %v2317
        %v2381 = vmul.f32 %v1917, %v2319
        %v2382 = vmul.f32 %v1918, %v2321
        %v2383 = vmul.f32 %v1919, %v2323
        %v2384 = vmul.f32 %v1920, %v2325
        %v2385 = vmul.f32 %v1921, %v2327
        %v2386 = vmul.f32 %v1922, %v2329
        %v2387 = vmul.f32 %v1923, %v2331
        %v2388 = vmul.f32 %v1924, %v2333
        %v2389 = vmul.f32 %v1925, %v2335
        %v2390 = vmul.f32 %v1926, %v2337
        %v2391 = vmul.f32 %v1927, %v2339
        %v2392 = vmul.f32 %v1928, %v2341
        %v2393 = vmul.f32 %v1929, %v2343
        %v2394 = vmul.f32 %v1930, %v2345
        %v2395 = vmul.f32 %v1931, %v2347
        %v2396 = vmul.f32 %v1932, %v2349
        %v2397 = vmul.f32 %v1933, %v2351
        %v2398 = vmul.f32 %v1934, %v2353
        %v2399 = vmul.f32 %v1935, %v2355
        %v2400 = vmul.f32 %v1936, %v2357
        %v2401 = vmul.f32 %v1937, %v2359
        %v2402 = vmul.f32 %v1938, %v2361
        %v2403 = vmul.f32 %v1939, %v2363
        %v2404 = vmul.f32 %v1940, %v2365
        %v2405 = vmul.f32 %v1941, %v2367
        %v2406 = vmul.f32 %v1942, %v2369
        %v2407 = vmul.f32 %v1943, %v2371
        %v2408 = vmul.f32 %v1944, %v2373
        %v2409 = vmul.f32 %v1945, %v2375
        %v2410 = vmul.f32 %v1946, %v2377
        %v2411 = vmul.f32 %v1947, %v2379
        %v2412 = vpack.c.bf16 %v2381, %v2380
        %v2413 = vpack.c.bf16 %v2383, %v2382
        %v2414 = vpack.c.bf16 %v2385, %v2384
        %v2415 = vpack.c.bf16 %v2387, %v2386
        %v2416 = vpack.c.bf16 %v2389, %v2388
        %v2417 = vpack.c.bf16 %v2391, %v2390
        %v2418 = vpack.c.bf16 %v2393, %v2392
        %v2419 = vpack.c.bf16 %v2395, %v2394
        %v2420 = vpack.c.bf16 %v2397, %v2396
        %v2421 = vpack.c.bf16 %v2399, %v2398
        %v2422 = vpack.c.bf16 %v2401, %v2400
        %v2423 = vpack.c.bf16 %v2403, %v2402
        %v2424 = vpack.c.bf16 %v2405, %v2404
        %v2425 = vpack.c.bf16 %v2407, %v2406
        %v2426 = vpack.c.bf16 %v2409, %v2408
        %v2427 = vpack.c.bf16 %v2411, %v2410
        %s2428 = smul.u32 %s43, 4
        %s2429 = smul.addr %s2428, 4
        %s2430 = scalar_lea.vmem %s8, %s2429
        %v2431 = vld [vmem:[%s2430] sm:$0xf]
        %v2432 = vld [vmem:[%s2430 + $0x4] sm:$0xf]
        %v2433 = vld [vmem:[%s2430 + $0x8] sm:$0xf]
        %v2434 = vld [vmem:[%s2430 + $0xc] sm:$0xf]
        %s2435 = scalar_lea.vmem %s9, %s43
        %v2436 = vld [vmem:[%s2435] sm:$0x1]
        %v2438 = vlaneseq
        %v2439 = vshrl.u32 %v2438, 7
        %v2440 = vsub.s32 0, %v2439
        %v2441 = vrot.slane %v2436, %v2440
        %v2447 = vunpack.c.l.b16 %v2431
        %v2448 = vunpack.c.l.b16 %v2432
        %v2449 = vunpack.c.l.b16 %v2433
        %v2450 = vunpack.c.l.b16 %v2434
        %v2451 = vpack.c.b16 %v2448, %v2447
        %v2452 = vpack.c.b16 %v2450, %v2449
        %v2456 = vsel %vm1108, %v2172, 0
        %v2459 = vsel %vm1108, %v2173, 0
        %v2462 = vsel %vm1108, %v2174, 0
        %v2465 = vsel %vm1108, %v2175, 0
        %v2468 = vsel %vm1108, %v2176, 0
        %v2471 = vsel %vm1108, %v2177, 0
        %v2474 = vsel %vm1108, %v2178, 0
        %v2477 = vsel %vm1108, %v2179, 0
        %v2480 = vsel %vm1108, %v2180, 0
        %v2483 = vsel %vm1108, %v2181, 0
        %v2486 = vsel %vm1108, %v2182, 0
        %v2489 = vsel %vm1108, %v2183, 0
        %v2492 = vsel %vm1108, %v2184, 0
        %v2495 = vsel %vm1108, %v2185, 0
        %v2498 = vsel %vm1108, %v2186, 0
        %v2501 = vsel %vm1108, %v2187, 0
        %2503 = vmatprep.subr.bf16.mxu0 0
        %2504 = vmatpush1.bf16.msra.mxu0 %v2451
        %2505 = vmatprep.subr.bf16.mxu0 0
        %2506 = vmatpush1.bf16.msra.mxu0 %v2452
        %2507 = vmatprep.subr.bf16.mxu0 0
        %2508 = vmatpush1.bf16.msra.mxu0 0
        %2509 = vmatprep.subr.bf16.mxu0 0
        %2510 = vmatpush1.bf16.msra.mxu0 0
        %2511 = vmatprep.subr.bf16.mxu0 0
        %2512 = vmatpush1.bf16.msra.mxu0 0
        %2513 = vmatprep.subr.bf16.mxu0 0
        %2514 = vmatpush1.bf16.msra.mxu0 0
        %2515 = vmatprep.subr.bf16.mxu0 0
        %2516 = vmatpush1.bf16.msra.mxu0 0
        %2517 = vmatprep.subr.bf16.mxu0 0
        %2518 = vmatpush1.bf16.msra.mxu0 0
        %2519 = vmatprep.subr.bf16.mxu0 0
        %2520 = vmatpush1.bf16.msra.mxu0 0
        %2521 = vmatprep.subr.bf16.mxu0 0
        %2522 = vmatpush1.bf16.msra.mxu0 0
        %2523 = vmatprep.subr.bf16.mxu0 0
        %2524 = vmatpush1.bf16.msra.mxu0 0
        %2525 = vmatprep.subr.bf16.mxu0 0
        %2526 = vmatpush1.bf16.msra.mxu0 0
        %2527 = vmatprep.subr.bf16.mxu0 0
        %2528 = vmatpush1.bf16.msra.mxu0 0
        %2529 = vmatprep.subr.bf16.mxu0 0
        %2530 = vmatpush1.bf16.msra.mxu0 0
        %2531 = vmatprep.subr.bf16.mxu0 0
        %2532 = vmatpush1.bf16.msra.mxu0 0
        %2533 = vmatprep.subr.bf16.mxu0 0
        %2534 = vmatpush1.bf16.msra.mxu0 0
        %2535 = vmatprep.mubr.bf16.mxu0 0
        %2536 = vmatmul.mubr.bf16.gmra.mrb[0].mxu0 %v2456
        %v2537 = vpop.f32.mrb[0].mxu0
        %v2538 = vadd.f32 %v2441, %v2537
        %v2539 = vpop.f32.mrb[0].mxu0
        %v2540 = vpop.f32.mrb[0].mxu0
        %v2541 = vadd.f32 %v2441, %v2540
        %v2542 = vpop.f32.mrb[0].mxu0
        %2543 = vmatprep.mubr.bf16.mxu0 0
        %2544 = vmatmul.mubr.bf16.gmra.mrb[0].mxu0 %v2459
        %v2545 = vpop.f32.mrb[0].mxu0
        %v2546 = vadd.f32 %v2441, %v2545
        %v2547 = vpop.f32.mrb[0].mxu0
        %v2548 = vpop.f32.mrb[0].mxu0
        %v2549 = vadd.f32 %v2441, %v2548
        %v2550 = vpop.f32.mrb[0].mxu0
        %2551 = vmatprep.mubr.bf16.mxu0 0
        %2552 = vmatmul.mubr.bf16.gmra.mrb[0].mxu0 %v2462
        %v2553 = vpop.f32.mrb[0].mxu0
        %v2554 = vadd.f32 %v2441, %v2553
        %v2555 = vpop.f32.mrb[0].mxu0
        %v2556 = vpop.f32.mrb[0].mxu0
        %v2557 = vadd.f32 %v2441, %v2556
        %v2558 = vpop.f32.mrb[0].mxu0
        %2559 = vmatprep.mubr.bf16.mxu0 0
        %2560 = vmatmul.mubr.bf16.gmra.mrb[0].mxu0 %v2465
        %v2561 = vpop.f32.mrb[0].mxu0
        %v2562 = vadd.f32 %v2441, %v2561
        %v2563 = vpop.f32.mrb[0].mxu0
        %v2564 = vpop.f32.mrb[0].mxu0
        %v2565 = vadd.f32 %v2441, %v2564
        %v2566 = vpop.f32.mrb[0].mxu0
        %2567 = vmatprep.mubr.bf16.mxu0 0
        %2568 = vmatmul.mubr.bf16.gmra.mrb[0].mxu0 %v2468
        %v2569 = vpop.f32.mrb[0].mxu0
        %v2570 = vadd.f32 %v2441, %v2569
        %v2571 = vpop.f32.mrb[0].mxu0
        %v2572 = vpop.f32.mrb[0].mxu0
        %v2573 = vadd.f32 %v2441, %v2572
        %v2574 = vpop.f32.mrb[0].mxu0
        %2575 = vmatprep.mubr.bf16.mxu0 0
        %2576 = vmatmul.mubr.bf16.gmra.mrb[0].mxu0 %v2471
        %v2577 = vpop.f32.mrb[0].mxu0
        %v2578 = vadd.f32 %v2441, %v2577
        %v2579 = vpop.f32.mrb[0].mxu0
        %v2580 = vpop.f32.mrb[0].mxu0
        %v2581 = vadd.f32 %v2441, %v2580
        %v2582 = vpop.f32.mrb[0].mxu0
        %2583 = vmatprep.mubr.bf16.mxu0 0
        %2584 = vmatmul.mubr.bf16.gmra.mrb[0].mxu0 %v2474
        %v2585 = vpop.f32.mrb[0].mxu0
        %v2586 = vadd.f32 %v2441, %v2585
        %v2587 = vpop.f32.mrb[0].mxu0
        %v2588 = vpop.f32.mrb[0].mxu0
        %v2589 = vadd.f32 %v2441, %v2588
        %v2590 = vpop.f32.mrb[0].mxu0
        %2591 = vmatprep.mubr.bf16.mxu0 0
        %2592 = vmatmul.mubr.bf16.gmra.mrb[0].mxu0 %v2477
        %v2593 = vpop.f32.mrb[0].mxu0
        %v2594 = vadd.f32 %v2441, %v2593
        %v2595 = vpop.f32.mrb[0].mxu0
        %v2596 = vpop.f32.mrb[0].mxu0
        %v2597 = vadd.f32 %v2441, %v2596
        %v2598 = vpop.f32.mrb[0].mxu0
        %2599 = vmatprep.mubr.bf16.mxu0 0
        %2600 = vmatmul.mubr.bf16.gmra.mrb[0].mxu0 %v2480
        %v2601 = vpop.f32.mrb[0].mxu0
        %v2602 = vadd.f32 %v2441, %v2601
        %v2603 = vpop.f32.mrb[0].mxu0
        %v2604 = vpop.f32.mrb[0].mxu0
        %v2605 = vadd.f32 %v2441, %v2604
        %v2606 = vpop.f32.mrb[0].mxu0
        %2607 = vmatprep.mubr.bf16.mxu0 0
        %2608 = vmatmul.mubr.bf16.gmra.mrb[0].mxu0 %v2483
        %v2609 = vpop.f32.mrb[0].mxu0
        %v2610 = vadd.f32 %v2441, %v2609
        %v2611 = vpop.f32.mrb[0].mxu0
        %v2612 = vpop.f32.mrb[0].mxu0
        %v2613 = vadd.f32 %v2441, %v2612
        %v2614 = vpop.f32.mrb[0].mxu0
        %2615 = vmatprep.mubr.bf16.mxu0 0
        %2616 = vmatmul.mubr.bf16.gmra.mrb[0].mxu0 %v2486
        %v2617 = vpop.f32.mrb[0].mxu0
        %v2618 = vadd.f32 %v2441, %v2617
        %v2619 = vpop.f32.mrb[0].mxu0
        %v2620 = vpop.f32.mrb[0].mxu0
        %v2621 = vadd.f32 %v2441, %v2620
        %v2622 = vpop.f32.mrb[0].mxu0
        %2623 = vmatprep.mubr.bf16.mxu0 0
        %2624 = vmatmul.mubr.bf16.gmra.mrb[0].mxu0 %v2489
        %v2625 = vpop.f32.mrb[0].mxu0
        %v2626 = vadd.f32 %v2441, %v2625
        %v2627 = vpop.f32.mrb[0].mxu0
        %v2628 = vpop.f32.mrb[0].mxu0
        %v2629 = vadd.f32 %v2441, %v2628
        %v2630 = vpop.f32.mrb[0].mxu0
        %2631 = vmatprep.mubr.bf16.mxu0 0
        %2632 = vmatmul.mubr.bf16.gmra.mrb[0].mxu0 %v2492
        %v2633 = vpop.f32.mrb[0].mxu0
        %v2634 = vadd.f32 %v2441, %v2633
        %v2635 = vpop.f32.mrb[0].mxu0
        %v2636 = vpop.f32.mrb[0].mxu0
        %v2637 = vadd.f32 %v2441, %v2636
        %v2638 = vpop.f32.mrb[0].mxu0
        %2639 = vmatprep.mubr.bf16.mxu0 0
        %2640 = vmatmul.mubr.bf16.gmra.mrb[0].mxu0 %v2495
        %v2641 = vpop.f32.mrb[0].mxu0
        %v2642 = vadd.f32 %v2441, %v2641
        %v2643 = vpop.f32.mrb[0].mxu0
        %v2644 = vpop.f32.mrb[0].mxu0
        %v2645 = vadd.f32 %v2441, %v2644
        %v2646 = vpop.f32.mrb[0].mxu0
        %2647 = vmatprep.mubr.bf16.mxu0 0
        %2648 = vmatmul.mubr.bf16.gmra.mrb[0].mxu0 %v2498
        %v2649 = vpop.f32.mrb[0].mxu0
        %v2650 = vadd.f32 %v2441, %v2649
        %v2651 = vpop.f32.mrb[0].mxu0
        %v2652 = vpop.f32.mrb[0].mxu0
        %v2653 = vadd.f32 %v2441, %v2652
        %v2654 = vpop.f32.mrb[0].mxu0
        %2655 = vmatprep.mubr.bf16.mxu0 0
        %2656 = vmatmul.mubr.bf16.gmra.mrb[0].mxu0 %v2501
        %v2657 = vpop.f32.mrb[0].mxu0
        %v2658 = vadd.f32 %v2441, %v2657
        %v2659 = vpop.f32.mrb[0].mxu0
        %v2660 = vpop.f32.mrb[0].mxu0
        %v2661 = vadd.f32 %v2441, %v2660
        %v2662 = vpop.f32.mrb[0].mxu0
        %2663 = vdwg.mxu0
        %v2664 = vxor.u32 %v2538, 2147483648
        %v2665 = vxor.u32 %v2541, 2147483648
        %v2666 = vxor.u32 %v2546, 2147483648
        %v2667 = vxor.u32 %v2549, 2147483648
        %v2668 = vxor.u32 %v2554, 2147483648
        %v2669 = vxor.u32 %v2557, 2147483648
        %v2670 = vxor.u32 %v2562, 2147483648
        %v2671 = vxor.u32 %v2565, 2147483648
        %v2672 = vxor.u32 %v2570, 2147483648
        %v2673 = vxor.u32 %v2573, 2147483648
        %v2674 = vxor.u32 %v2578, 2147483648
        %v2675 = vxor.u32 %v2581, 2147483648
        %v2676 = vxor.u32 %v2586, 2147483648
        %v2677 = vxor.u32 %v2589, 2147483648
        %v2678 = vxor.u32 %v2594, 2147483648
        %v2679 = vxor.u32 %v2597, 2147483648
        %v2680 = vxor.u32 %v2602, 2147483648
        %v2681 = vxor.u32 %v2605, 2147483648
        %v2682 = vxor.u32 %v2610, 2147483648
        %v2683 = vxor.u32 %v2613, 2147483648
        %v2684 = vxor.u32 %v2618, 2147483648
        %v2685 = vxor.u32 %v2621, 2147483648
        %v2686 = vxor.u32 %v2626, 2147483648
        %v2687 = vxor.u32 %v2629, 2147483648
        %v2688 = vxor.u32 %v2634, 2147483648
        %v2689 = vxor.u32 %v2637, 2147483648
        %v2690 = vxor.u32 %v2642, 2147483648
        %v2691 = vxor.u32 %v2645, 2147483648
        %v2692 = vxor.u32 %v2650, 2147483648
        %v2693 = vxor.u32 %v2653, 2147483648
        %v2694 = vxor.u32 %v2658, 2147483648
        %v2695 = vxor.u32 %v2661, 2147483648
        %v2696 = vmul.f32 %v2664, 1.442695
        %v2697 = vpow.pop %v2696
        %v2698 = vmul.f32 %v2665, 1.442695
        %v2699 = vpow.pop %v2698
        %v2700 = vmul.f32 %v2666, 1.442695
        %v2701 = vpow.pop %v2700
        %v2702 = vmul.f32 %v2667, 1.442695
        %v2703 = vpow.pop %v2702
        %v2704 = vmul.f32 %v2668, 1.442695
        %v2705 = vpow.pop %v2704
        %v2706 = vmul.f32 %v2669, 1.442695
        %v2707 = vpow.pop %v2706
        %v2708 = vmul.f32 %v2670, 1.442695
        %v2709 = vpow.pop %v2708
        %v2710 = vmul.f32 %v2671, 1.442695
        %v2711 = vpow.pop %v2710
        %v2712 = vmul.f32 %v2672, 1.442695
        %v2713 = vpow.pop %v2712
        %v2714 = vmul.f32 %v2673, 1.442695
        %v2715 = vpow.pop %v2714
        %v2716 = vmul.f32 %v2674, 1.442695
        %v2717 = vpow.pop %v2716
        %v2718 = vmul.f32 %v2675, 1.442695
        %v2719 = vpow.pop %v2718
        %v2720 = vmul.f32 %v2676, 1.442695
        %v2721 = vpow.pop %v2720
        %v2722 = vmul.f32 %v2677, 1.442695
        %v2723 = vpow.pop %v2722
        %v2724 = vmul.f32 %v2678, 1.442695
        %v2725 = vpow.pop %v2724
        %v2726 = vmul.f32 %v2679, 1.442695
        %v2727 = vpow.pop %v2726
        %v2728 = vmul.f32 %v2680, 1.442695
        %v2729 = vpow.pop %v2728
        %v2730 = vmul.f32 %v2681, 1.442695
        %v2731 = vpow.pop %v2730
        %v2732 = vmul.f32 %v2682, 1.442695
        %v2733 = vpow.pop %v2732
        %v2734 = vmul.f32 %v2683, 1.442695
        %v2735 = vpow.pop %v2734
        %v2736 = vmul.f32 %v2684, 1.442695
        %v2737 = vpow.pop %v2736
        %v2738 = vmul.f32 %v2685, 1.442695
        %v2739 = vpow.pop %v2738
        %v2740 = vmul.f32 %v2686, 1.442695
        %v2741 = vpow.pop %v2740
        %v2742 = vmul.f32 %v2687, 1.442695
        %v2743 = vpow.pop %v2742
        %v2744 = vmul.f32 %v2688, 1.442695
        %v2745 = vpow.pop %v2744
        %v2746 = vmul.f32 %v2689, 1.442695
        %v2747 = vpow.pop %v2746
        %v2748 = vmul.f32 %v2690, 1.442695
        %v2749 = vpow.pop %v2748
        %v2750 = vmul.f32 %v2691, 1.442695
        %v2751 = vpow.pop %v2750
        %v2752 = vmul.f32 %v2692, 1.442695
        %v2753 = vpow.pop %v2752
        %v2754 = vmul.f32 %v2693, 1.442695
        %v2755 = vpow.pop %v2754
        %v2756 = vmul.f32 %v2694, 1.442695
        %v2757 = vpow.pop %v2756
        %v2758 = vmul.f32 %v2695, 1.442695
        %v2759 = vpow.pop %v2758
        %v2760 = vadd.f32 %v2697, 1.0
        %v2761 = vadd.f32 %v2699, 1.0
        %v2762 = vadd.f32 %v2701, 1.0
        %v2763 = vadd.f32 %v2703, 1.0
        %v2764 = vadd.f32 %v2705, 1.0
        %v2765 = vadd.f32 %v2707, 1.0
        %v2766 = vadd.f32 %v2709, 1.0
        %v2767 = vadd.f32 %v2711, 1.0
        %v2768 = vadd.f32 %v2713, 1.0
        %v2769 = vadd.f32 %v2715, 1.0
        %v2770 = vadd.f32 %v2717, 1.0
        %v2771 = vadd.f32 %v2719, 1.0
        %v2772 = vadd.f32 %v2721, 1.0
        %v2773 = vadd.f32 %v2723, 1.0
        %v2774 = vadd.f32 %v2725, 1.0
        %v2775 = vadd.f32 %v2727, 1.0
        %v2776 = vadd.f32 %v2729, 1.0
        %v2777 = vadd.f32 %v2731, 1.0
        %v2778 = vadd.f32 %v2733, 1.0
        %v2779 = vadd.f32 %v2735, 1.0
        %v2780 = vadd.f32 %v2737, 1.0
        %v2781 = vadd.f32 %v2739, 1.0
        %v2782 = vadd.f32 %v2741, 1.0
        %v2783 = vadd.f32 %v2743, 1.0
        %v2784 = vadd.f32 %v2745, 1.0
        %v2785 = vadd.f32 %v2747, 1.0
        %v2786 = vadd.f32 %v2749, 1.0
        %v2787 = vadd.f32 %v2751, 1.0
        %v2788 = vadd.f32 %v2753, 1.0
        %v2789 = vadd.f32 %v2755, 1.0
        %v2790 = vadd.f32 %v2757, 1.0
        %v2791 = vadd.f32 %v2759, 1.0
        %v2792 = vrcp.pop %v2760
        %v2793 = vmul.f32 1.0, %v2792
        %v2794 = vrcp.pop %v2761
        %v2795 = vmul.f32 1.0, %v2794
        %v2796 = vrcp.pop %v2762
        %v2797 = vmul.f32 1.0, %v2796
        %v2798 = vrcp.pop %v2763
        %v2799 = vmul.f32 1.0, %v2798
        %v2800 = vrcp.pop %v2764
        %v2801 = vmul.f32 1.0, %v2800
        %v2802 = vrcp.pop %v2765
        %v2803 = vmul.f32 1.0, %v2802
        %v2804 = vrcp.pop %v2766
        %v2805 = vmul.f32 1.0, %v2804
        %v2806 = vrcp.pop %v2767
        %v2807 = vmul.f32 1.0, %v2806
        %v2808 = vrcp.pop %v2768
        %v2809 = vmul.f32 1.0, %v2808
        %v2810 = vrcp.pop %v2769
        %v2811 = vmul.f32 1.0, %v2810
        %v2812 = vrcp.pop %v2770
        %v2813 = vmul.f32 1.0, %v2812
        %v2814 = vrcp.pop %v2771
        %v2815 = vmul.f32 1.0, %v2814
        %v2816 = vrcp.pop %v2772
        %v2817 = vmul.f32 1.0, %v2816
        %v2818 = vrcp.pop %v2773
        %v2819 = vmul.f32 1.0, %v2818
        %v2820 = vrcp.pop %v2774
        %v2821 = vmul.f32 1.0, %v2820
        %v2822 = vrcp.pop %v2775
        %v2823 = vmul.f32 1.0, %v2822
        %v2824 = vrcp.pop %v2776
        %v2825 = vmul.f32 1.0, %v2824
        %v2826 = vrcp.pop %v2777
        %v2827 = vmul.f32 1.0, %v2826
        %v2828 = vrcp.pop %v2778
        %v2829 = vmul.f32 1.0, %v2828
        %v2830 = vrcp.pop %v2779
        %v2831 = vmul.f32 1.0, %v2830
        %v2832 = vrcp.pop %v2780
        %v2833 = vmul.f32 1.0, %v2832
        %v2834 = vrcp.pop %v2781
        %v2835 = vmul.f32 1.0, %v2834
        %v2836 = vrcp.pop %v2782
        %v2837 = vmul.f32 1.0, %v2836
        %v2838 = vrcp.pop %v2783
        %v2839 = vmul.f32 1.0, %v2838
        %v2840 = vrcp.pop %v2784
        %v2841 = vmul.f32 1.0, %v2840
        %v2842 = vrcp.pop %v2785
        %v2843 = vmul.f32 1.0, %v2842
        %v2844 = vrcp.pop %v2786
        %v2845 = vmul.f32 1.0, %v2844
        %v2846 = vrcp.pop %v2787
        %v2847 = vmul.f32 1.0, %v2846
        %v2848 = vrcp.pop %v2788
        %v2849 = vmul.f32 1.0, %v2848
        %v2850 = vrcp.pop %v2789
        %v2851 = vmul.f32 1.0, %v2850
        %v2852 = vrcp.pop %v2790
        %v2853 = vmul.f32 1.0, %v2852
        %v2854 = vrcp.pop %v2791
        %v2855 = vmul.f32 1.0, %v2854
        %v2856 = vmul.f32 %v2538, %v2793
        %v2857 = vmul.f32 %v2541, %v2795
        %v2858 = vmul.f32 %v2546, %v2797
        %v2859 = vmul.f32 %v2549, %v2799
        %v2860 = vmul.f32 %v2554, %v2801
        %v2861 = vmul.f32 %v2557, %v2803
        %v2862 = vmul.f32 %v2562, %v2805
        %v2863 = vmul.f32 %v2565, %v2807
        %v2864 = vmul.f32 %v2570, %v2809
        %v2865 = vmul.f32 %v2573, %v2811
        %v2866 = vmul.f32 %v2578, %v2813
        %v2867 = vmul.f32 %v2581, %v2815
        %v2868 = vmul.f32 %v2586, %v2817
        %v2869 = vmul.f32 %v2589, %v2819
        %v2870 = vmul.f32 %v2594, %v2821
        %v2871 = vmul.f32 %v2597, %v2823
        %v2872 = vmul.f32 %v2602, %v2825
        %v2873 = vmul.f32 %v2605, %v2827
        %v2874 = vmul.f32 %v2610, %v2829
        %v2875 = vmul.f32 %v2613, %v2831
        %v2876 = vmul.f32 %v2618, %v2833
        %v2877 = vmul.f32 %v2621, %v2835
        %v2878 = vmul.f32 %v2626, %v2837
        %v2879 = vmul.f32 %v2629, %v2839
        %v2880 = vmul.f32 %v2634, %v2841
        %v2881 = vmul.f32 %v2637, %v2843
        %v2882 = vmul.f32 %v2642, %v2845
        %v2883 = vmul.f32 %v2645, %v2847
        %v2884 = vmul.f32 %v2650, %v2849
        %v2885 = vmul.f32 %v2653, %v2851
        %v2886 = vmul.f32 %v2658, %v2853
        %v2887 = vmul.f32 %v2661, %v2855
        %s2888 = smul.addr %s2428, 4
        %s2889 = scalar_lea.vmem %s14, %s2888
        %v2890 = vld [vmem:[%s2889] sm:$0xf]
        %v2891 = vld [vmem:[%s2889 + $0x4] sm:$0xf]
        %v2892 = vld [vmem:[%s2889 + $0x8] sm:$0xf]
        %v2893 = vld [vmem:[%s2889 + $0xc] sm:$0xf]
        %s2894 = scalar_lea.vmem %s15, %s43
        %v2895 = vld [vmem:[%s2894] sm:$0x1]
        %v2897 = vlaneseq
        %v2898 = vshrl.u32 %v2897, 7
        %v2899 = vsub.s32 0, %v2898
        %v2900 = vrot.slane %v2895, %v2899
        %v2906 = vunpack.c.l.b16 %v2890
        %v2907 = vunpack.c.l.b16 %v2891
        %v2908 = vunpack.c.l.b16 %v2892
        %v2909 = vunpack.c.l.b16 %v2893
        %v2910 = vpack.c.b16 %v2907, %v2906
        %v2911 = vpack.c.b16 %v2909, %v2908
        %v2915 = vsel %vm1108, %v2412, 0
        %v2918 = vsel %vm1108, %v2413, 0
        %v2921 = vsel %vm1108, %v2414, 0
        %v2924 = vsel %vm1108, %v2415, 0
        %v2927 = vsel %vm1108, %v2416, 0
        %v2930 = vsel %vm1108, %v2417, 0
        %v2933 = vsel %vm1108, %v2418, 0
        %v2936 = vsel %vm1108, %v2419, 0
        %v2939 = vsel %vm1108, %v2420, 0
        %v2942 = vsel %vm1108, %v2421, 0
        %v2945 = vsel %vm1108, %v2422, 0
        %v2948 = vsel %vm1108, %v2423, 0
        %v2951 = vsel %vm1108, %v2424, 0
        %v2954 = vsel %vm1108, %v2425, 0
        %v2957 = vsel %vm1108, %v2426, 0
        %v2960 = vsel %vm1108, %v2427, 0
        %2962 = vmatprep.subr.bf16.mxu0 0
        %2963 = vmatpush1.bf16.msra.mxu0 %v2910
        %2964 = vmatprep.subr.bf16.mxu0 0
        %2965 = vmatpush1.bf16.msra.mxu0 %v2911
        %2966 = vmatprep.subr.bf16.mxu0 0
        %2967 = vmatpush1.bf16.msra.mxu0 0
        %2968 = vmatprep.subr.bf16.mxu0 0
        %2969 = vmatpush1.bf16.msra.mxu0 0
        %2970 = vmatprep.subr.bf16.mxu0 0
        %2971 = vmatpush1.bf16.msra.mxu0 0
        %2972 = vmatprep.subr.bf16.mxu0 0
        %2973 = vmatpush1.bf16.msra.mxu0 0
        %2974 = vmatprep.subr.bf16.mxu0 0
        %2975 = vmatpush1.bf16.msra.mxu0 0
        %2976 = vmatprep.subr.bf16.mxu0 0
        %2977 = vmatpush1.bf16.msra.mxu0 0
        %2978 = vmatprep.subr.bf16.mxu0 0
        %2979 = vmatpush1.bf16.msra.mxu0 0
        %2980 = vmatprep.subr.bf16.mxu0 0
        %2981 = vmatpush1.bf16.msra.mxu0 0
        %2982 = vmatprep.subr.bf16.mxu0 0
        %2983 = vmatpush1.bf16.msra.mxu0 0
        %2984 = vmatprep.subr.bf16.mxu0 0
        %2985 = vmatpush1.bf16.msra.mxu0 0
        %2986 = vmatprep.subr.bf16.mxu0 0
        %2987 = vmatpush1.bf16.msra.mxu0 0
        %2988 = vmatprep.subr.bf16.mxu0 0
        %2989 = vmatpush1.bf16.msra.mxu0 0
        %2990 = vmatprep.subr.bf16.mxu0 0
        %2991 = vmatpush1.bf16.msra.mxu0 0
        %2992 = vmatprep.subr.bf16.mxu0 0
        %2993 = vmatpush1.bf16.msra.mxu0 0
        %2994 = vmatprep.mubr.bf16.mxu0 0
        %2995 = vmatmul.mubr.bf16.gmra.mrb[0].mxu0 %v2915
        %v2996 = vpop.f32.mrb[0].mxu0
        %v2997 = vadd.f32 %v2900, %v2996
        %v2998 = vpop.f32.mrb[0].mxu0
        %v2999 = vpop.f32.mrb[0].mxu0
        %v3000 = vadd.f32 %v2900, %v2999
        %v3001 = vpop.f32.mrb[0].mxu0
        %3002 = vmatprep.mubr.bf16.mxu0 0
        %3003 = vmatmul.mubr.bf16.gmra.mrb[0].mxu0 %v2918
        %v3004 = vpop.f32.mrb[0].mxu0
        %v3005 = vadd.f32 %v2900, %v3004
        %v3006 = vpop.f32.mrb[0].mxu0
        %v3007 = vpop.f32.mrb[0].mxu0
        %v3008 = vadd.f32 %v2900, %v3007
        %v3009 = vpop.f32.mrb[0].mxu0
        %3010 = vmatprep.mubr.bf16.mxu0 0
        %3011 = vmatmul.mubr.bf16.gmra.mrb[0].mxu0 %v2921
        %v3012 = vpop.f32.mrb[0].mxu0
        %v3013 = vadd.f32 %v2900, %v3012
        %v3014 = vpop.f32.mrb[0].mxu0
        %v3015 = vpop.f32.mrb[0].mxu0
        %v3016 = vadd.f32 %v2900, %v3015
        %v3017 = vpop.f32.mrb[0].mxu0
        %3018 = vmatprep.mubr.bf16.mxu0 0
        %3019 = vmatmul.mubr.bf16.gmra.mrb[0].mxu0 %v2924
        %v3020 = vpop.f32.mrb[0].mxu0
        %v3021 = vadd.f32 %v2900, %v3020
        %v3022 = vpop.f32.mrb[0].mxu0
        %v3023 = vpop.f32.mrb[0].mxu0
        %v3024 = vadd.f32 %v2900, %v3023
        %v3025 = vpop.f32.mrb[0].mxu0
        %3026 = vmatprep.mubr.bf16.mxu0 0
        %3027 = vmatmul.mubr.bf16.gmra.mrb[0].mxu0 %v2927
        %v3028 = vpop.f32.mrb[0].mxu0
        %v3029 = vadd.f32 %v2900, %v3028
        %v3030 = vpop.f32.mrb[0].mxu0
        %v3031 = vpop.f32.mrb[0].mxu0
        %v3032 = vadd.f32 %v2900, %v3031
        %v3033 = vpop.f32.mrb[0].mxu0
        %3034 = vmatprep.mubr.bf16.mxu0 0
        %3035 = vmatmul.mubr.bf16.gmra.mrb[0].mxu0 %v2930
        %v3036 = vpop.f32.mrb[0].mxu0
        %v3037 = vadd.f32 %v2900, %v3036
        %v3038 = vpop.f32.mrb[0].mxu0
        %v3039 = vpop.f32.mrb[0].mxu0
        %v3040 = vadd.f32 %v2900, %v3039
        %v3041 = vpop.f32.mrb[0].mxu0
        %3042 = vmatprep.mubr.bf16.mxu0 0
        %3043 = vmatmul.mubr.bf16.gmra.mrb[0].mxu0 %v2933
        %v3044 = vpop.f32.mrb[0].mxu0
        %v3045 = vadd.f32 %v2900, %v3044
        %v3046 = vpop.f32.mrb[0].mxu0
        %v3047 = vpop.f32.mrb[0].mxu0
        %v3048 = vadd.f32 %v2900, %v3047
        %v3049 = vpop.f32.mrb[0].mxu0
        %3050 = vmatprep.mubr.bf16.mxu0 0
        %3051 = vmatmul.mubr.bf16.gmra.mrb[0].mxu0 %v2936
        %v3052 = vpop.f32.mrb[0].mxu0
        %v3053 = vadd.f32 %v2900, %v3052
        %v3054 = vpop.f32.mrb[0].mxu0
        %v3055 = vpop.f32.mrb[0].mxu0
        %v3056 = vadd.f32 %v2900, %v3055
        %v3057 = vpop.f32.mrb[0].mxu0
        %3058 = vmatprep.mubr.bf16.mxu0 0
        %3059 = vmatmul.mubr.bf16.gmra.mrb[0].mxu0 %v2939
        %v3060 = vpop.f32.mrb[0].mxu0
        %v3061 = vadd.f32 %v2900, %v3060
        %v3062 = vpop.f32.mrb[0].mxu0
        %v3063 = vpop.f32.mrb[0].mxu0
        %v3064 = vadd.f32 %v2900, %v3063
        %v3065 = vpop.f32.mrb[0].mxu0
        %3066 = vmatprep.mubr.bf16.mxu0 0
        %3067 = vmatmul.mubr.bf16.gmra.mrb[0].mxu0 %v2942
        %v3068 = vpop.f32.mrb[0].mxu0
        %v3069 = vadd.f32 %v2900, %v3068
        %v3070 = vpop.f32.mrb[0].mxu0
        %v3071 = vpop.f32.mrb[0].mxu0
        %v3072 = vadd.f32 %v2900, %v3071
        %v3073 = vpop.f32.mrb[0].mxu0
        %3074 = vmatprep.mubr.bf16.mxu0 0
        %3075 = vmatmul.mubr.bf16.gmra.mrb[0].mxu0 %v2945
        %v3076 = vpop.f32.mrb[0].mxu0
        %v3077 = vadd.f32 %v2900, %v3076
        %v3078 = vpop.f32.mrb[0].mxu0
        %v3079 = vpop.f32.mrb[0].mxu0
        %v3080 = vadd.f32 %v2900, %v3079
        %v3081 = vpop.f32.mrb[0].mxu0
        %3082 = vmatprep.mubr.bf16.mxu0 0
        %3083 = vmatmul.mubr.bf16.gmra.mrb[0].mxu0 %v2948
        %v3084 = vpop.f32.mrb[0].mxu0
        %v3085 = vadd.f32 %v2900, %v3084
        %v3086 = vpop.f32.mrb[0].mxu0
        %v3087 = vpop.f32.mrb[0].mxu0
        %v3088 = vadd.f32 %v2900, %v3087
        %v3089 = vpop.f32.mrb[0].mxu0
        %3090 = vmatprep.mubr.bf16.mxu0 0
        %3091 = vmatmul.mubr.bf16.gmra.mrb[0].mxu0 %v2951
        %v3092 = vpop.f32.mrb[0].mxu0
        %v3093 = vadd.f32 %v2900, %v3092
        %v3094 = vpop.f32.mrb[0].mxu0
        %v3095 = vpop.f32.mrb[0].mxu0
        %v3096 = vadd.f32 %v2900, %v3095
        %v3097 = vpop.f32.mrb[0].mxu0
        %3098 = vmatprep.mubr.bf16.mxu0 0
        %3099 = vmatmul.mubr.bf16.gmra.mrb[0].mxu0 %v2954
        %v3100 = vpop.f32.mrb[0].mxu0
        %v3101 = vadd.f32 %v2900, %v3100
        %v3102 = vpop.f32.mrb[0].mxu0
        %v3103 = vpop.f32.mrb[0].mxu0
        %v3104 = vadd.f32 %v2900, %v3103
        %v3105 = vpop.f32.mrb[0].mxu0
        %3106 = vmatprep.mubr.bf16.mxu0 0
        %3107 = vmatmul.mubr.bf16.gmra.mrb[0].mxu0 %v2957
        %v3108 = vpop.f32.mrb[0].mxu0
        %v3109 = vadd.f32 %v2900, %v3108
        %v3110 = vpop.f32.mrb[0].mxu0
        %v3111 = vpop.f32.mrb[0].mxu0
        %v3112 = vadd.f32 %v2900, %v3111
        %v3113 = vpop.f32.mrb[0].mxu0
        %3114 = vmatprep.mubr.bf16.mxu0 0
        %3115 = vmatmul.mubr.bf16.gmra.mrb[0].mxu0 %v2960
        %v3116 = vpop.f32.mrb[0].mxu0
        %v3117 = vadd.f32 %v2900, %v3116
        %v3118 = vpop.f32.mrb[0].mxu0
        %v3119 = vpop.f32.mrb[0].mxu0
        %v3120 = vadd.f32 %v2900, %v3119
        %v3121 = vpop.f32.mrb[0].mxu0
        %3122 = vdwg.mxu0
        %v3123 = vxor.u32 %v2997, 2147483648
        %v3124 = vxor.u32 %v3000, 2147483648
        %v3125 = vxor.u32 %v3005, 2147483648
        %v3126 = vxor.u32 %v3008, 2147483648
        %v3127 = vxor.u32 %v3013, 2147483648
        %v3128 = vxor.u32 %v3016, 2147483648
        %v3129 = vxor.u32 %v3021, 2147483648
        %v3130 = vxor.u32 %v3024, 2147483648
        %v3131 = vxor.u32 %v3029, 2147483648
        %v3132 = vxor.u32 %v3032, 2147483648
        %v3133 = vxor.u32 %v3037, 2147483648
        %v3134 = vxor.u32 %v3040, 2147483648
        %v3135 = vxor.u32 %v3045, 2147483648
        %v3136 = vxor.u32 %v3048, 2147483648
        %v3137 = vxor.u32 %v3053, 2147483648
        %v3138 = vxor.u32 %v3056, 2147483648
        %v3139 = vxor.u32 %v3061, 2147483648
        %v3140 = vxor.u32 %v3064, 2147483648
        %v3141 = vxor.u32 %v3069, 2147483648
        %v3142 = vxor.u32 %v3072, 2147483648
        %v3143 = vxor.u32 %v3077, 2147483648
        %v3144 = vxor.u32 %v3080, 2147483648
        %v3145 = vxor.u32 %v3085, 2147483648
        %v3146 = vxor.u32 %v3088, 2147483648
        %v3147 = vxor.u32 %v3093, 2147483648
        %v3148 = vxor.u32 %v3096, 2147483648
        %v3149 = vxor.u32 %v3101, 2147483648
        %v3150 = vxor.u32 %v3104, 2147483648
        %v3151 = vxor.u32 %v3109, 2147483648
        %v3152 = vxor.u32 %v3112, 2147483648
        %v3153 = vxor.u32 %v3117, 2147483648
        %v3154 = vxor.u32 %v3120, 2147483648
        %v3155 = vmul.f32 %v3123, 1.442695
        %v3156 = vpow.pop %v3155
        %v3157 = vmul.f32 %v3124, 1.442695
        %v3158 = vpow.pop %v3157
        %v3159 = vmul.f32 %v3125, 1.442695
        %v3160 = vpow.pop %v3159
        %v3161 = vmul.f32 %v3126, 1.442695
        %v3162 = vpow.pop %v3161
        %v3163 = vmul.f32 %v3127, 1.442695
        %v3164 = vpow.pop %v3163
        %v3165 = vmul.f32 %v3128, 1.442695
        %v3166 = vpow.pop %v3165
        %v3167 = vmul.f32 %v3129, 1.442695
        %v3168 = vpow.pop %v3167
        %v3169 = vmul.f32 %v3130, 1.442695
        %v3170 = vpow.pop %v3169
        %v3171 = vmul.f32 %v3131, 1.442695
        %v3172 = vpow.pop %v3171
        %v3173 = vmul.f32 %v3132, 1.442695
        %v3174 = vpow.pop %v3173
        %v3175 = vmul.f32 %v3133, 1.442695
        %v3176 = vpow.pop %v3175
        %v3177 = vmul.f32 %v3134, 1.442695
        %v3178 = vpow.pop %v3177
        %v3179 = vmul.f32 %v3135, 1.442695
        %v3180 = vpow.pop %v3179
        %v3181 = vmul.f32 %v3136, 1.442695
        %v3182 = vpow.pop %v3181
        %v3183 = vmul.f32 %v3137, 1.442695
        %v3184 = vpow.pop %v3183
        %v3185 = vmul.f32 %v3138, 1.442695
        %v3186 = vpow.pop %v3185
        %v3187 = vmul.f32 %v3139, 1.442695
        %v3188 = vpow.pop %v3187
        %v3189 = vmul.f32 %v3140, 1.442695
        %v3190 = vpow.pop %v3189
        %v3191 = vmul.f32 %v3141, 1.442695
        %v3192 = vpow.pop %v3191
        %v3193 = vmul.f32 %v3142, 1.442695
        %v3194 = vpow.pop %v3193
        %v3195 = vmul.f32 %v3143, 1.442695
        %v3196 = vpow.pop %v3195
        %v3197 = vmul.f32 %v3144, 1.442695
        %v3198 = vpow.pop %v3197
        %v3199 = vmul.f32 %v3145, 1.442695
        %v3200 = vpow.pop %v3199
        %v3201 = vmul.f32 %v3146, 1.442695
        %v3202 = vpow.pop %v3201
        %v3203 = vmul.f32 %v3147, 1.442695
        %v3204 = vpow.pop %v3203
        %v3205 = vmul.f32 %v3148, 1.442695
        %v3206 = vpow.pop %v3205
        %v3207 = vmul.f32 %v3149, 1.442695
        %v3208 = vpow.pop %v3207
        %v3209 = vmul.f32 %v3150, 1.442695
        %v3210 = vpow.pop %v3209
        %v3211 = vmul.f32 %v3151, 1.442695
        %v3212 = vpow.pop %v3211
        %v3213 = vmul.f32 %v3152, 1.442695
        %v3214 = vpow.pop %v3213
        %v3215 = vmul.f32 %v3153, 1.442695
        %v3216 = vpow.pop %v3215
        %v3217 = vmul.f32 %v3154, 1.442695
        %v3218 = vpow.pop %v3217
        %v3219 = vadd.f32 %v3156, 1.0
        %v3220 = vadd.f32 %v3158, 1.0
        %v3221 = vadd.f32 %v3160, 1.0
        %v3222 = vadd.f32 %v3162, 1.0
        %v3223 = vadd.f32 %v3164, 1.0
        %v3224 = vadd.f32 %v3166, 1.0
        %v3225 = vadd.f32 %v3168, 1.0
        %v3226 = vadd.f32 %v3170, 1.0
        %v3227 = vadd.f32 %v3172, 1.0
        %v3228 = vadd.f32 %v3174, 1.0
        %v3229 = vadd.f32 %v3176, 1.0
        %v3230 = vadd.f32 %v3178, 1.0
        %v3231 = vadd.f32 %v3180, 1.0
        %v3232 = vadd.f32 %v3182, 1.0
        %v3233 = vadd.f32 %v3184, 1.0
        %v3234 = vadd.f32 %v3186, 1.0
        %v3235 = vadd.f32 %v3188, 1.0
        %v3236 = vadd.f32 %v3190, 1.0
        %v3237 = vadd.f32 %v3192, 1.0
        %v3238 = vadd.f32 %v3194, 1.0
        %v3239 = vadd.f32 %v3196, 1.0
        %v3240 = vadd.f32 %v3198, 1.0
        %v3241 = vadd.f32 %v3200, 1.0
        %v3242 = vadd.f32 %v3202, 1.0
        %v3243 = vadd.f32 %v3204, 1.0
        %v3244 = vadd.f32 %v3206, 1.0
        %v3245 = vadd.f32 %v3208, 1.0
        %v3246 = vadd.f32 %v3210, 1.0
        %v3247 = vadd.f32 %v3212, 1.0
        %v3248 = vadd.f32 %v3214, 1.0
        %v3249 = vadd.f32 %v3216, 1.0
        %v3250 = vadd.f32 %v3218, 1.0
        %v3251 = vrcp.pop %v3219
        %v3252 = vmul.f32 1.0, %v3251
        %v3253 = vrcp.pop %v3220
        %v3254 = vmul.f32 1.0, %v3253
        %v3255 = vrcp.pop %v3221
        %v3256 = vmul.f32 1.0, %v3255
        %v3257 = vrcp.pop %v3222
        %v3258 = vmul.f32 1.0, %v3257
        %v3259 = vrcp.pop %v3223
        %v3260 = vmul.f32 1.0, %v3259
        %v3261 = vrcp.pop %v3224
        %v3262 = vmul.f32 1.0, %v3261
        %v3263 = vrcp.pop %v3225
        %v3264 = vmul.f32 1.0, %v3263
        %v3265 = vrcp.pop %v3226
        %v3266 = vmul.f32 1.0, %v3265
        %v3267 = vrcp.pop %v3227
        %v3268 = vmul.f32 1.0, %v3267
        %v3269 = vrcp.pop %v3228
        %v3270 = vmul.f32 1.0, %v3269
        %v3271 = vrcp.pop %v3229
        %v3272 = vmul.f32 1.0, %v3271
        %v3273 = vrcp.pop %v3230
        %v3274 = vmul.f32 1.0, %v3273
        %v3275 = vrcp.pop %v3231
        %v3276 = vmul.f32 1.0, %v3275
        %v3277 = vrcp.pop %v3232
        %v3278 = vmul.f32 1.0, %v3277
        %v3279 = vrcp.pop %v3233
        %v3280 = vmul.f32 1.0, %v3279
        %v3281 = vrcp.pop %v3234
        %v3282 = vmul.f32 1.0, %v3281
        %v3283 = vrcp.pop %v3235
        %v3284 = vmul.f32 1.0, %v3283
        %v3285 = vrcp.pop %v3236
        %v3286 = vmul.f32 1.0, %v3285
        %v3287 = vrcp.pop %v3237
        %v3288 = vmul.f32 1.0, %v3287
        %v3289 = vrcp.pop %v3238
        %v3290 = vmul.f32 1.0, %v3289
        %v3291 = vrcp.pop %v3239
        %v3292 = vmul.f32 1.0, %v3291
        %v3293 = vrcp.pop %v3240
        %v3294 = vmul.f32 1.0, %v3293
        %v3295 = vrcp.pop %v3241
        %v3296 = vmul.f32 1.0, %v3295
        %v3297 = vrcp.pop %v3242
        %v3298 = vmul.f32 1.0, %v3297
        %v3299 = vrcp.pop %v3243
        %v3300 = vmul.f32 1.0, %v3299
        %v3301 = vrcp.pop %v3244
        %v3302 = vmul.f32 1.0, %v3301
        %v3303 = vrcp.pop %v3245
        %v3304 = vmul.f32 1.0, %v3303
        %v3305 = vrcp.pop %v3246
        %v3306 = vmul.f32 1.0, %v3305
        %v3307 = vrcp.pop %v3247
        %v3308 = vmul.f32 1.0, %v3307
        %v3309 = vrcp.pop %v3248
        %v3310 = vmul.f32 1.0, %v3309
        %v3311 = vrcp.pop %v3249
        %v3312 = vmul.f32 1.0, %v3311
        %v3313 = vrcp.pop %v3250
        %v3314 = vmul.f32 1.0, %v3313
        %v3315 = vmul.f32 %v2997, %v3252
        %v3316 = vmul.f32 %v3000, %v3254
        %v3317 = vmul.f32 %v3005, %v3256
        %v3318 = vmul.f32 %v3008, %v3258
        %v3319 = vmul.f32 %v3013, %v3260
        %v3320 = vmul.f32 %v3016, %v3262
        %v3321 = vmul.f32 %v3021, %v3264
        %v3322 = vmul.f32 %v3024, %v3266
        %v3323 = vmul.f32 %v3029, %v3268
        %v3324 = vmul.f32 %v3032, %v3270
        %v3325 = vmul.f32 %v3037, %v3272
        %v3326 = vmul.f32 %v3040, %v3274
        %v3327 = vmul.f32 %v3045, %v3276
        %v3328 = vmul.f32 %v3048, %v3278
        %v3329 = vmul.f32 %v3053, %v3280
        %v3330 = vmul.f32 %v3056, %v3282
        %v3331 = vmul.f32 %v3061, %v3284
        %v3332 = vmul.f32 %v3064, %v3286
        %v3333 = vmul.f32 %v3069, %v3288
        %v3334 = vmul.f32 %v3072, %v3290
        %v3335 = vmul.f32 %v3077, %v3292
        %v3336 = vmul.f32 %v3080, %v3294
        %v3337 = vmul.f32 %v3085, %v3296
        %v3338 = vmul.f32 %v3088, %v3298
        %v3339 = vmul.f32 %v3093, %v3300
        %v3340 = vmul.f32 %v3096, %v3302
        %v3341 = vmul.f32 %v3101, %v3304
        %v3342 = vmul.f32 %v3104, %v3306
        %v3343 = vmul.f32 %v3109, %v3308
        %v3344 = vmul.f32 %v3112, %v3310
        %v3345 = vmul.f32 %v3117, %v3312
        %v3346 = vmul.f32 %v3120, %v3314
        %s3347 = scalar_lea.vmem %s10, %s43
        %v3348 = vld [vmem:[%s3347] sm:$0x1]
        %v3350 = vlaneseq
        %v3351 = vshrl.u32 %v3350, 7
        %v3352 = vsub.s32 0, %v3351
        %v3353 = vrot.slane %v3348, %v3352
        %v3355 = vmul.f32 %v2856, %v3353
        %v3356 = vmul.f32 %v2857, %v3353
        %v3357 = vmul.f32 %v2858, %v3353
        %v3358 = vmul.f32 %v2859, %v3353
        %v3359 = vmul.f32 %v2860, %v3353
        %v3360 = vmul.f32 %v2861, %v3353
        %v3361 = vmul.f32 %v2862, %v3353
        %v3362 = vmul.f32 %v2863, %v3353
        %v3363 = vmul.f32 %v2864, %v3353
        %v3364 = vmul.f32 %v2865, %v3353
        %v3365 = vmul.f32 %v2866, %v3353
        %v3366 = vmul.f32 %v2867, %v3353
        %v3367 = vmul.f32 %v2868, %v3353
        %v3368 = vmul.f32 %v2869, %v3353
        %v3369 = vmul.f32 %v2870, %v3353
        %v3370 = vmul.f32 %v2871, %v3353
        %v3371 = vmul.f32 %v2872, %v3353
        %v3372 = vmul.f32 %v2873, %v3353
        %v3373 = vmul.f32 %v2874, %v3353
        %v3374 = vmul.f32 %v2875, %v3353
        %v3375 = vmul.f32 %v2876, %v3353
        %v3376 = vmul.f32 %v2877, %v3353
        %v3377 = vmul.f32 %v2878, %v3353
        %v3378 = vmul.f32 %v2879, %v3353
        %v3379 = vmul.f32 %v2880, %v3353
        %v3380 = vmul.f32 %v2881, %v3353
        %v3381 = vmul.f32 %v2882, %v3353
        %v3382 = vmul.f32 %v2883, %v3353
        %v3383 = vmul.f32 %v2884, %v3353
        %v3384 = vmul.f32 %v2885, %v3353
        %v3385 = vmul.f32 %v2886, %v3353
        %v3386 = vmul.f32 %v2887, %v3353
        %v3387 = vsel %vm1108, %v3355, 0.0
        %3388 = vadd.xlane.f32.xlu0 %v3387
        %v3389 = vpop.xlane.xlu0 %3388
        %v3390 = vsel %vm1108, %v3356, 0.0
        %3391 = vadd.xlane.f32.xlu0 %v3390
        %v3392 = vpop.xlane.xlu0 %3391
        %v3393 = vsel %vm1108, %v3357, 0.0
        %3394 = vadd.xlane.f32.xlu0 %v3393
        %v3395 = vpop.xlane.xlu0 %3394
        %v3396 = vsel %vm1108, %v3358, 0.0
        %3397 = vadd.xlane.f32.xlu0 %v3396
        %v3398 = vpop.xlane.xlu0 %3397
        %v3399 = vsel %vm1108, %v3359, 0.0
        %3400 = vadd.xlane.f32.xlu0 %v3399
        %v3401 = vpop.xlane.xlu0 %3400
        %v3402 = vsel %vm1108, %v3360, 0.0
        %3403 = vadd.xlane.f32.xlu0 %v3402
        %v3404 = vpop.xlane.xlu0 %3403
        %v3405 = vsel %vm1108, %v3361, 0.0
        %3406 = vadd.xlane.f32.xlu0 %v3405
        %v3407 = vpop.xlane.xlu0 %3406
        %v3408 = vsel %vm1108, %v3362, 0.0
        %3409 = vadd.xlane.f32.xlu0 %v3408
        %v3410 = vpop.xlane.xlu0 %3409
        %v3411 = vsel %vm1108, %v3363, 0.0
        %3412 = vadd.xlane.f32.xlu0 %v3411
        %v3413 = vpop.xlane.xlu0 %3412
        %v3414 = vsel %vm1108, %v3364, 0.0
        %3415 = vadd.xlane.f32.xlu0 %v3414
        %v3416 = vpop.xlane.xlu0 %3415
        %v3417 = vsel %vm1108, %v3365, 0.0
        %3418 = vadd.xlane.f32.xlu0 %v3417
        %v3419 = vpop.xlane.xlu0 %3418
        %v3420 = vsel %vm1108, %v3366, 0.0
        %3421 = vadd.xlane.f32.xlu0 %v3420
        %v3422 = vpop.xlane.xlu0 %3421
        %v3423 = vsel %vm1108, %v3367, 0.0
        %3424 = vadd.xlane.f32.xlu0 %v3423
        %v3425 = vpop.xlane.xlu0 %3424
        %v3426 = vsel %vm1108, %v3368, 0.0
        %3427 = vadd.xlane.f32.xlu0 %v3426
        %v3428 = vpop.xlane.xlu0 %3427
        %v3429 = vsel %vm1108, %v3369, 0.0
        %3430 = vadd.xlane.f32.xlu0 %v3429
        %v3431 = vpop.xlane.xlu0 %3430
        %v3432 = vsel %vm1108, %v3370, 0.0
        %3433 = vadd.xlane.f32.xlu0 %v3432
        %v3434 = vpop.xlane.xlu0 %3433
        %v3435 = vsel %vm1108, %v3371, 0.0
        %3436 = vadd.xlane.f32.xlu0 %v3435
        %v3437 = vpop.xlane.xlu0 %3436
        %v3438 = vsel %vm1108, %v3372, 0.0
        %3439 = vadd.xlane.f32.xlu0 %v3438
        %v3440 = vpop.xlane.xlu0 %3439
        %v3441 = vsel %vm1108, %v3373, 0.0
        %3442 = vadd.xlane.f32.xlu0 %v3441
        %v3443 = vpop.xlane.xlu0 %3442
        %v3444 = vsel %vm1108, %v3374, 0.0
        %3445 = vadd.xlane.f32.xlu0 %v3444
        %v3446 = vpop.xlane.xlu0 %3445
        %v3447 = vsel %vm1108, %v3375, 0.0
        %3448 = vadd.xlane.f32.xlu0 %v3447
        %v3449 = vpop.xlane.xlu0 %3448
        %v3450 = vsel %vm1108, %v3376, 0.0
        %3451 = vadd.xlane.f32.xlu0 %v3450
        %v3452 = vpop.xlane.xlu0 %3451
        %v3453 = vsel %vm1108, %v3377, 0.0
        %3454 = vadd.xlane.f32.xlu0 %v3453
        %v3455 = vpop.xlane.xlu0 %3454
        %v3456 = vsel %vm1108, %v3378, 0.0
        %3457 = vadd.xlane.f32.xlu0 %v3456
        %v3458 = vpop.xlane.xlu0 %3457
        %v3459 = vsel %vm1108, %v3379, 0.0
        %3460 = vadd.xlane.f32.xlu0 %v3459
        %v3461 = vpop.xlane.xlu0 %3460
        %v3462 = vsel %vm1108, %v3380, 0.0
        %3463 = vadd.xlane.f32.xlu0 %v3462
        %v3464 = vpop.xlane.xlu0 %3463
        %v3465 = vsel %vm1108, %v3381, 0.0
        %3466 = vadd.xlane.f32.xlu0 %v3465
        %v3467 = vpop.xlane.xlu0 %3466
        %v3468 = vsel %vm1108, %v3382, 0.0
        %3469 = vadd.xlane.f32.xlu0 %v3468
        %v3470 = vpop.xlane.xlu0 %3469
        %v3471 = vsel %vm1108, %v3383, 0.0
        %3472 = vadd.xlane.f32.xlu0 %v3471
        %v3473 = vpop.xlane.xlu0 %3472
        %v3474 = vsel %vm1108, %v3384, 0.0
        %3475 = vadd.xlane.f32.xlu0 %v3474
        %v3476 = vpop.xlane.xlu0 %3475
        %v3477 = vsel %vm1108, %v3385, 0.0
        %3478 = vadd.xlane.f32.xlu0 %v3477
        %v3479 = vpop.xlane.xlu0 %3478
        %v3480 = vsel %vm1108, %v3386, 0.0
        %3481 = vadd.xlane.f32.xlu0 %v3480
        %v3482 = vpop.xlane.xlu0 %3481
        %s3483 = scalar_lea.vmem %s11, %s43
        %v3484 = vld [vmem:[%s3483] sm:$0x1]
        %v3486 = vlaneseq
        %v3487 = vshrl.u32 %v3486, 7
        %v3488 = vsub.s32 0, %v3487
        %v3489 = vrot.slane %v3484, %v3488
        %3490 = vset.pattern.permute.xlu0 0
        %3491 = vperm.xlu0 %3490, %v3489
        %v3492 = vpop.permute.xlu0 %3491
        %v3494 = vadd.f32 %v3389, %v3492
        %v3495 = vadd.f32 %v3392, %v3492
        %v3496 = vadd.f32 %v3395, %v3492
        %v3497 = vadd.f32 %v3398, %v3492
        %v3498 = vadd.f32 %v3401, %v3492
        %v3499 = vadd.f32 %v3404, %v3492
        %v3500 = vadd.f32 %v3407, %v3492
        %v3501 = vadd.f32 %v3410, %v3492
        %v3502 = vadd.f32 %v3413, %v3492
        %v3503 = vadd.f32 %v3416, %v3492
        %v3504 = vadd.f32 %v3419, %v3492
        %v3505 = vadd.f32 %v3422, %v3492
        %v3506 = vadd.f32 %v3425, %v3492
        %v3507 = vadd.f32 %v3428, %v3492
        %v3508 = vadd.f32 %v3431, %v3492
        %v3509 = vadd.f32 %v3434, %v3492
        %v3510 = vadd.f32 %v3437, %v3492
        %v3511 = vadd.f32 %v3440, %v3492
        %v3512 = vadd.f32 %v3443, %v3492
        %v3513 = vadd.f32 %v3446, %v3492
        %v3514 = vadd.f32 %v3449, %v3492
        %v3515 = vadd.f32 %v3452, %v3492
        %v3516 = vadd.f32 %v3455, %v3492
        %v3517 = vadd.f32 %v3458, %v3492
        %v3518 = vadd.f32 %v3461, %v3492
        %v3519 = vadd.f32 %v3464, %v3492
        %v3520 = vadd.f32 %v3467, %v3492
        %v3521 = vadd.f32 %v3470, %v3492
        %v3522 = vadd.f32 %v3473, %v3492
        %v3523 = vadd.f32 %v3476, %v3492
        %v3524 = vadd.f32 %v3479, %v3492
        %v3525 = vadd.f32 %v3482, %v3492
        %v3526 = vxor.u32 %v3494, 2147483648
        %v3527 = vxor.u32 %v3495, 2147483648
        %v3528 = vxor.u32 %v3496, 2147483648
        %v3529 = vxor.u32 %v3497, 2147483648
        %v3530 = vxor.u32 %v3498, 2147483648
        %v3531 = vxor.u32 %v3499, 2147483648
        %v3532 = vxor.u32 %v3500, 2147483648
        %v3533 = vxor.u32 %v3501, 2147483648
        %v3534 = vxor.u32 %v3502, 2147483648
        %v3535 = vxor.u32 %v3503, 2147483648
        %v3536 = vxor.u32 %v3504, 2147483648
        %v3537 = vxor.u32 %v3505, 2147483648
        %v3538 = vxor.u32 %v3506, 2147483648
        %v3539 = vxor.u32 %v3507, 2147483648
        %v3540 = vxor.u32 %v3508, 2147483648
        %v3541 = vxor.u32 %v3509, 2147483648
        %v3542 = vxor.u32 %v3510, 2147483648
        %v3543 = vxor.u32 %v3511, 2147483648
        %v3544 = vxor.u32 %v3512, 2147483648
        %v3545 = vxor.u32 %v3513, 2147483648
        %v3546 = vxor.u32 %v3514, 2147483648
        %v3547 = vxor.u32 %v3515, 2147483648
        %v3548 = vxor.u32 %v3516, 2147483648
        %v3549 = vxor.u32 %v3517, 2147483648
        %v3550 = vxor.u32 %v3518, 2147483648
        %v3551 = vxor.u32 %v3519, 2147483648
        %v3552 = vxor.u32 %v3520, 2147483648
        %v3553 = vxor.u32 %v3521, 2147483648
        %v3554 = vxor.u32 %v3522, 2147483648
        %v3555 = vxor.u32 %v3523, 2147483648
        %v3556 = vxor.u32 %v3524, 2147483648
        %v3557 = vxor.u32 %v3525, 2147483648
        %v3558 = vmul.f32 %v3526, 1.442695
        %v3559 = vpow.pop %v3558
        %v3560 = vmul.f32 %v3527, 1.442695
        %v3561 = vpow.pop %v3560
        %v3562 = vmul.f32 %v3528, 1.442695
        %v3563 = vpow.pop %v3562
        %v3564 = vmul.f32 %v3529, 1.442695
        %v3565 = vpow.pop %v3564
        %v3566 = vmul.f32 %v3530, 1.442695
        %v3567 = vpow.pop %v3566
        %v3568 = vmul.f32 %v3531, 1.442695
        %v3569 = vpow.pop %v3568
        %v3570 = vmul.f32 %v3532, 1.442695
        %v3571 = vpow.pop %v3570
        %v3572 = vmul.f32 %v3533, 1.442695
        %v3573 = vpow.pop %v3572
        %v3574 = vmul.f32 %v3534, 1.442695
        %v3575 = vpow.pop %v3574
        %v3576 = vmul.f32 %v3535, 1.442695
        %v3577 = vpow.pop %v3576
        %v3578 = vmul.f32 %v3536, 1.442695
        %v3579 = vpow.pop %v3578
        %v3580 = vmul.f32 %v3537, 1.442695
        %v3581 = vpow.pop %v3580
        %v3582 = vmul.f32 %v3538, 1.442695
        %v3583 = vpow.pop %v3582
        %v3584 = vmul.f32 %v3539, 1.442695
        %v3585 = vpow.pop %v3584
        %v3586 = vmul.f32 %v3540, 1.442695
        %v3587 = vpow.pop %v3586
        %v3588 = vmul.f32 %v3541, 1.442695
        %v3589 = vpow.pop %v3588
        %v3590 = vmul.f32 %v3542, 1.442695
        %v3591 = vpow.pop %v3590
        %v3592 = vmul.f32 %v3543, 1.442695
        %v3593 = vpow.pop %v3592
        %v3594 = vmul.f32 %v3544, 1.442695
        %v3595 = vpow.pop %v3594
        %v3596 = vmul.f32 %v3545, 1.442695
        %v3597 = vpow.pop %v3596
        %v3598 = vmul.f32 %v3546, 1.442695
        %v3599 = vpow.pop %v3598
        %v3600 = vmul.f32 %v3547, 1.442695
        %v3601 = vpow.pop %v3600
        %v3602 = vmul.f32 %v3548, 1.442695
        %v3603 = vpow.pop %v3602
        %v3604 = vmul.f32 %v3549, 1.442695
        %v3605 = vpow.pop %v3604
        %v3606 = vmul.f32 %v3550, 1.442695
        %v3607 = vpow.pop %v3606
        %v3608 = vmul.f32 %v3551, 1.442695
        %v3609 = vpow.pop %v3608
        %v3610 = vmul.f32 %v3552, 1.442695
        %v3611 = vpow.pop %v3610
        %v3612 = vmul.f32 %v3553, 1.442695
        %v3613 = vpow.pop %v3612
        %v3614 = vmul.f32 %v3554, 1.442695
        %v3615 = vpow.pop %v3614
        %v3616 = vmul.f32 %v3555, 1.442695
        %v3617 = vpow.pop %v3616
        %v3618 = vmul.f32 %v3556, 1.442695
        %v3619 = vpow.pop %v3618
        %v3620 = vmul.f32 %v3557, 1.442695
        %v3621 = vpow.pop %v3620
        %v3622 = vadd.f32 %v3559, 1.0
        %v3623 = vadd.f32 %v3561, 1.0
        %v3624 = vadd.f32 %v3563, 1.0
        %v3625 = vadd.f32 %v3565, 1.0
        %v3626 = vadd.f32 %v3567, 1.0
        %v3627 = vadd.f32 %v3569, 1.0
        %v3628 = vadd.f32 %v3571, 1.0
        %v3629 = vadd.f32 %v3573, 1.0
        %v3630 = vadd.f32 %v3575, 1.0
        %v3631 = vadd.f32 %v3577, 1.0
        %v3632 = vadd.f32 %v3579, 1.0
        %v3633 = vadd.f32 %v3581, 1.0
        %v3634 = vadd.f32 %v3583, 1.0
        %v3635 = vadd.f32 %v3585, 1.0
        %v3636 = vadd.f32 %v3587, 1.0
        %v3637 = vadd.f32 %v3589, 1.0
        %v3638 = vadd.f32 %v3591, 1.0
        %v3639 = vadd.f32 %v3593, 1.0
        %v3640 = vadd.f32 %v3595, 1.0
        %v3641 = vadd.f32 %v3597, 1.0
        %v3642 = vadd.f32 %v3599, 1.0
        %v3643 = vadd.f32 %v3601, 1.0
        %v3644 = vadd.f32 %v3603, 1.0
        %v3645 = vadd.f32 %v3605, 1.0
        %v3646 = vadd.f32 %v3607, 1.0
        %v3647 = vadd.f32 %v3609, 1.0
        %v3648 = vadd.f32 %v3611, 1.0
        %v3649 = vadd.f32 %v3613, 1.0
        %v3650 = vadd.f32 %v3615, 1.0
        %v3651 = vadd.f32 %v3617, 1.0
        %v3652 = vadd.f32 %v3619, 1.0
        %v3653 = vadd.f32 %v3621, 1.0
        %v3654 = vrcp.pop %v3622
        %v3655 = vmul.f32 1.0, %v3654
        %v3656 = vrcp.pop %v3623
        %v3657 = vmul.f32 1.0, %v3656
        %v3658 = vrcp.pop %v3624
        %v3659 = vmul.f32 1.0, %v3658
        %v3660 = vrcp.pop %v3625
        %v3661 = vmul.f32 1.0, %v3660
        %v3662 = vrcp.pop %v3626
        %v3663 = vmul.f32 1.0, %v3662
        %v3664 = vrcp.pop %v3627
        %v3665 = vmul.f32 1.0, %v3664
        %v3666 = vrcp.pop %v3628
        %v3667 = vmul.f32 1.0, %v3666
        %v3668 = vrcp.pop %v3629
        %v3669 = vmul.f32 1.0, %v3668
        %v3670 = vrcp.pop %v3630
        %v3671 = vmul.f32 1.0, %v3670
        %v3672 = vrcp.pop %v3631
        %v3673 = vmul.f32 1.0, %v3672
        %v3674 = vrcp.pop %v3632
        %v3675 = vmul.f32 1.0, %v3674
        %v3676 = vrcp.pop %v3633
        %v3677 = vmul.f32 1.0, %v3676
        %v3678 = vrcp.pop %v3634
        %v3679 = vmul.f32 1.0, %v3678
        %v3680 = vrcp.pop %v3635
        %v3681 = vmul.f32 1.0, %v3680
        %v3682 = vrcp.pop %v3636
        %v3683 = vmul.f32 1.0, %v3682
        %v3684 = vrcp.pop %v3637
        %v3685 = vmul.f32 1.0, %v3684
        %v3686 = vrcp.pop %v3638
        %v3687 = vmul.f32 1.0, %v3686
        %v3688 = vrcp.pop %v3639
        %v3689 = vmul.f32 1.0, %v3688
        %v3690 = vrcp.pop %v3640
        %v3691 = vmul.f32 1.0, %v3690
        %v3692 = vrcp.pop %v3641
        %v3693 = vmul.f32 1.0, %v3692
        %v3694 = vrcp.pop %v3642
        %v3695 = vmul.f32 1.0, %v3694
        %v3696 = vrcp.pop %v3643
        %v3697 = vmul.f32 1.0, %v3696
        %v3698 = vrcp.pop %v3644
        %v3699 = vmul.f32 1.0, %v3698
        %v3700 = vrcp.pop %v3645
        %v3701 = vmul.f32 1.0, %v3700
        %v3702 = vrcp.pop %v3646
        %v3703 = vmul.f32 1.0, %v3702
        %v3704 = vrcp.pop %v3647
        %v3705 = vmul.f32 1.0, %v3704
        %v3706 = vrcp.pop %v3648
        %v3707 = vmul.f32 1.0, %v3706
        %v3708 = vrcp.pop %v3649
        %v3709 = vmul.f32 1.0, %v3708
        %v3710 = vrcp.pop %v3650
        %v3711 = vmul.f32 1.0, %v3710
        %v3712 = vrcp.pop %v3651
        %v3713 = vmul.f32 1.0, %v3712
        %v3714 = vrcp.pop %v3652
        %v3715 = vmul.f32 1.0, %v3714
        %v3716 = vrcp.pop %v3653
        %v3717 = vmul.f32 1.0, %v3716
        %v3720 = vlaneseq
        %v3721 = vshrl.u32 %v3720, 7
        %v3722 = vsub.s32 0, %v3721
        %v3723 = vrot.slane %v1019, %v3722
        %3725 = vbcast.lane.b32.xlu0 %v3723, 256
        %v3726 = vpop.permute.xlu0 %3725
        %s3728 = sor.u32 256, 8
        %3729 = vbcast.lane.b32.xlu0 %v3723, %s3728
        %v3730 = vpop.permute.xlu0 %3729
        %v3731 = vlaneseq
        %v3732 = vshrl.u32 %v3731, 7
        %v3733 = vsub.s32 1, %v3732
        %v3734 = vrot.slane %v1019, %v3733
        %3736 = vbcast.lane.b32.xlu0 %v3734, 256
        %v3737 = vpop.permute.xlu0 %3736
        %s3739 = sor.u32 256, 8
        %3740 = vbcast.lane.b32.xlu0 %v3734, %s3739
        %v3741 = vpop.permute.xlu0 %3740
        %v3742 = vlaneseq
        %v3743 = vshrl.u32 %v3742, 7
        %v3744 = vsub.s32 2, %v3743
        %v3745 = vrot.slane %v1019, %v3744
        %3747 = vbcast.lane.b32.xlu0 %v3745, 256
        %v3748 = vpop.permute.xlu0 %3747
        %s3750 = sor.u32 256, 8
        %3751 = vbcast.lane.b32.xlu0 %v3745, %s3750
        %v3752 = vpop.permute.xlu0 %3751
        %v3753 = vlaneseq
        %v3754 = vshrl.u32 %v3753, 7
        %v3755 = vsub.s32 3, %v3754
        %v3756 = vrot.slane %v1019, %v3755
        %3758 = vbcast.lane.b32.xlu0 %v3756, 256
        %v3759 = vpop.permute.xlu0 %3758
        %s3761 = sor.u32 256, 8
        %3762 = vbcast.lane.b32.xlu0 %v3756, %s3761
        %v3763 = vpop.permute.xlu0 %3762
        %v3764 = vlaneseq
        %v3765 = vshrl.u32 %v3764, 7
        %v3766 = vsub.s32 4, %v3765
        %v3767 = vrot.slane %v1019, %v3766
        %3769 = vbcast.lane.b32.xlu0 %v3767, 256
        %v3770 = vpop.permute.xlu0 %3769
        %s3772 = sor.u32 256, 8
        %3773 = vbcast.lane.b32.xlu0 %v3767, %s3772
        %v3774 = vpop.permute.xlu0 %3773
        %v3775 = vlaneseq
        %v3776 = vshrl.u32 %v3775, 7
        %v3777 = vsub.s32 5, %v3776
        %v3778 = vrot.slane %v1019, %v3777
        %3780 = vbcast.lane.b32.xlu0 %v3778, 256
        %v3781 = vpop.permute.xlu0 %3780
        %s3783 = sor.u32 256, 8
        %3784 = vbcast.lane.b32.xlu0 %v3778, %s3783
        %v3785 = vpop.permute.xlu0 %3784
        %v3786 = vlaneseq
        %v3787 = vshrl.u32 %v3786, 7
        %v3788 = vsub.s32 6, %v3787
        %v3789 = vrot.slane %v1019, %v3788
        %3791 = vbcast.lane.b32.xlu0 %v3789, 256
        %v3792 = vpop.permute.xlu0 %3791
        %s3794 = sor.u32 256, 8
        %3795 = vbcast.lane.b32.xlu0 %v3789, %s3794
        %v3796 = vpop.permute.xlu0 %3795
        %v3797 = vlaneseq
        %v3798 = vshrl.u32 %v3797, 7
        %v3799 = vsub.s32 7, %v3798
        %v3800 = vrot.slane %v1019, %v3799
        %3802 = vbcast.lane.b32.xlu0 %v3800, 256
        %v3803 = vpop.permute.xlu0 %3802
        %s3805 = sor.u32 256, 8
        %3806 = vbcast.lane.b32.xlu0 %v3800, %s3805
        %v3807 = vpop.permute.xlu0 %3806
        %v3808 = vlaneseq
        %v3809 = vshrl.u32 %v3808, 7
        %v3810 = vsub.s32 0, %v3809
        %v3811 = vrot.slane %v1020, %v3810
        %3813 = vbcast.lane.b32.xlu0 %v3811, 256
        %v3814 = vpop.permute.xlu0 %3813
        %s3816 = sor.u32 256, 8
        %3817 = vbcast.lane.b32.xlu0 %v3811, %s3816
        %v3818 = vpop.permute.xlu0 %3817
        %v3819 = vlaneseq
        %v3820 = vshrl.u32 %v3819, 7
        %v3821 = vsub.s32 1, %v3820
        %v3822 = vrot.slane %v1020, %v3821
        %3824 = vbcast.lane.b32.xlu0 %v3822, 256
        %v3825 = vpop.permute.xlu0 %3824
        %s3827 = sor.u32 256, 8
        %3828 = vbcast.lane.b32.xlu0 %v3822, %s3827
        %v3829 = vpop.permute.xlu0 %3828
        %v3830 = vlaneseq
        %v3831 = vshrl.u32 %v3830, 7
        %v3832 = vsub.s32 2, %v3831
        %v3833 = vrot.slane %v1020, %v3832
        %3835 = vbcast.lane.b32.xlu0 %v3833, 256
        %v3836 = vpop.permute.xlu0 %3835
        %s3838 = sor.u32 256, 8
        %3839 = vbcast.lane.b32.xlu0 %v3833, %s3838
        %v3840 = vpop.permute.xlu0 %3839
        %v3841 = vlaneseq
        %v3842 = vshrl.u32 %v3841, 7
        %v3843 = vsub.s32 3, %v3842
        %v3844 = vrot.slane %v1020, %v3843
        %3846 = vbcast.lane.b32.xlu0 %v3844, 256
        %v3847 = vpop.permute.xlu0 %3846
        %s3849 = sor.u32 256, 8
        %3850 = vbcast.lane.b32.xlu0 %v3844, %s3849
        %v3851 = vpop.permute.xlu0 %3850
        %v3852 = vlaneseq
        %v3853 = vshrl.u32 %v3852, 7
        %v3854 = vsub.s32 4, %v3853
        %v3855 = vrot.slane %v1020, %v3854
        %3857 = vbcast.lane.b32.xlu0 %v3855, 256
        %v3858 = vpop.permute.xlu0 %3857
        %s3860 = sor.u32 256, 8
        %3861 = vbcast.lane.b32.xlu0 %v3855, %s3860
        %v3862 = vpop.permute.xlu0 %3861
        %v3863 = vlaneseq
        %v3864 = vshrl.u32 %v3863, 7
        %v3865 = vsub.s32 5, %v3864
        %v3866 = vrot.slane %v1020, %v3865
        %3868 = vbcast.lane.b32.xlu0 %v3866, 256
        %v3869 = vpop.permute.xlu0 %3868
        %s3871 = sor.u32 256, 8
        %3872 = vbcast.lane.b32.xlu0 %v3866, %s3871
        %v3873 = vpop.permute.xlu0 %3872
        %v3874 = vlaneseq
        %v3875 = vshrl.u32 %v3874, 7
        %v3876 = vsub.s32 6, %v3875
        %v3877 = vrot.slane %v1020, %v3876
        %3879 = vbcast.lane.b32.xlu0 %v3877, 256
        %v3880 = vpop.permute.xlu0 %3879
        %s3882 = sor.u32 256, 8
        %3883 = vbcast.lane.b32.xlu0 %v3877, %s3882
        %v3884 = vpop.permute.xlu0 %3883
        %v3885 = vlaneseq
        %v3886 = vshrl.u32 %v3885, 7
        %v3887 = vsub.s32 7, %v3886
        %v3888 = vrot.slane %v1020, %v3887
        %3890 = vbcast.lane.b32.xlu0 %v3888, 256
        %v3891 = vpop.permute.xlu0 %3890
        %s3893 = sor.u32 256, 8
        %3894 = vbcast.lane.b32.xlu0 %v3888, %s3893
        %v3895 = vpop.permute.xlu0 %3894
        %v3928 = vmul.f32 %v3655, %v3726
        %v3929 = vmul.f32 %v3657, %v3730
        %v3930 = vmul.f32 %v3659, %v3737
        %v3931 = vmul.f32 %v3661, %v3741
        %v3932 = vmul.f32 %v3663, %v3748
        %v3933 = vmul.f32 %v3665, %v3752
        %v3934 = vmul.f32 %v3667, %v3759
        %v3935 = vmul.f32 %v3669, %v3763
        %v3936 = vmul.f32 %v3671, %v3770
        %v3937 = vmul.f32 %v3673, %v3774
        %v3938 = vmul.f32 %v3675, %v3781
        %v3939 = vmul.f32 %v3677, %v3785
        %v3940 = vmul.f32 %v3679, %v3792
        %v3941 = vmul.f32 %v3681, %v3796
        %v3942 = vmul.f32 %v3683, %v3803
        %v3943 = vmul.f32 %v3685, %v3807
        %v3944 = vmul.f32 %v3687, %v3814
        %v3945 = vmul.f32 %v3689, %v3818
        %v3946 = vmul.f32 %v3691, %v3825
        %v3947 = vmul.f32 %v3693, %v3829
        %v3948 = vmul.f32 %v3695, %v3836
        %v3949 = vmul.f32 %v3697, %v3840
        %v3950 = vmul.f32 %v3699, %v3847
        %v3951 = vmul.f32 %v3701, %v3851
        %v3952 = vmul.f32 %v3703, %v3858
        %v3953 = vmul.f32 %v3705, %v3862
        %v3954 = vmul.f32 %v3707, %v3869
        %v3955 = vmul.f32 %v3709, %v3873
        %v3956 = vmul.f32 %v3711, %v3880
        %v3957 = vmul.f32 %v3713, %v3884
        %v3958 = vmul.f32 %v3715, %v3891
        %v3959 = vmul.f32 %v3717, %v3895
        %v3960 = vld [vmem:[#allocation2] sm:$0xff]
        %v3961 = vld [vmem:[#allocation2 + $0x8] sm:$0xff]
        %3963 = vset.pattern.permute.xlu0 0
        %3964 = vperm.xlu0 %3963, %v3928
        %v3965 = vpop.permute.xlu0 %3964
        %3968 = vset.pattern.permute.xlu0 0
        %3969 = vperm.xlu0 %3968, %v3929
        %v3970 = vpop.permute.xlu0 %3969
        %3973 = vset.pattern.permute.xlu0 0
        %3974 = vperm.xlu0 %3973, %v3930
        %v3975 = vpop.permute.xlu0 %3974
        %3978 = vset.pattern.permute.xlu0 0
        %3979 = vperm.xlu0 %3978, %v3931
        %v3980 = vpop.permute.xlu0 %3979
        %3983 = vset.pattern.permute.xlu0 0
        %3984 = vperm.xlu0 %3983, %v3932
        %v3985 = vpop.permute.xlu0 %3984
        %3988 = vset.pattern.permute.xlu0 0
        %3989 = vperm.xlu0 %3988, %v3933
        %v3990 = vpop.permute.xlu0 %3989
        %3993 = vset.pattern.permute.xlu0 0
        %3994 = vperm.xlu0 %3993, %v3934
        %v3995 = vpop.permute.xlu0 %3994
        %3998 = vset.pattern.permute.xlu0 0
        %3999 = vperm.xlu0 %3998, %v3935
        %v4000 = vpop.permute.xlu0 %3999
        %4003 = vset.pattern.permute.xlu0 0
        %4004 = vperm.xlu0 %4003, %v3936
        %v4005 = vpop.permute.xlu0 %4004
        %4008 = vset.pattern.permute.xlu0 0
        %4009 = vperm.xlu0 %4008, %v3937
        %v4010 = vpop.permute.xlu0 %4009
        %4013 = vset.pattern.permute.xlu0 0
        %4014 = vperm.xlu0 %4013, %v3938
        %v4015 = vpop.permute.xlu0 %4014
        %4018 = vset.pattern.permute.xlu0 0
        %4019 = vperm.xlu0 %4018, %v3939
        %v4020 = vpop.permute.xlu0 %4019
        %4023 = vset.pattern.permute.xlu0 0
        %4024 = vperm.xlu0 %4023, %v3940
        %v4025 = vpop.permute.xlu0 %4024
        %4028 = vset.pattern.permute.xlu0 0
        %4029 = vperm.xlu0 %4028, %v3941
        %v4030 = vpop.permute.xlu0 %4029
        %4033 = vset.pattern.permute.xlu0 0
        %4034 = vperm.xlu0 %4033, %v3942
        %v4035 = vpop.permute.xlu0 %4034
        %4038 = vset.pattern.permute.xlu0 0
        %4039 = vperm.xlu0 %4038, %v3943
        %v4040 = vpop.permute.xlu0 %4039
        %4043 = vset.pattern.permute.xlu0 0
        %4044 = vperm.xlu0 %4043, %v3944
        %v4045 = vpop.permute.xlu0 %4044
        %4048 = vset.pattern.permute.xlu0 0
        %4049 = vperm.xlu0 %4048, %v3945
        %v4050 = vpop.permute.xlu0 %4049
        %4053 = vset.pattern.permute.xlu0 0
        %4054 = vperm.xlu0 %4053, %v3946
        %v4055 = vpop.permute.xlu0 %4054
        %4058 = vset.pattern.permute.xlu0 0
        %4059 = vperm.xlu0 %4058, %v3947
        %v4060 = vpop.permute.xlu0 %4059
        %4063 = vset.pattern.permute.xlu0 0
        %4064 = vperm.xlu0 %4063, %v3948
        %v4065 = vpop.permute.xlu0 %4064
        %4068 = vset.pattern.permute.xlu0 0
        %4069 = vperm.xlu0 %4068, %v3949
        %v4070 = vpop.permute.xlu0 %4069
        %4073 = vset.pattern.permute.xlu0 0
        %4074 = vperm.xlu0 %4073, %v3950
        %v4075 = vpop.permute.xlu0 %4074
        %4078 = vset.pattern.permute.xlu0 0
        %4079 = vperm.xlu0 %4078, %v3951
        %v4080 = vpop.permute.xlu0 %4079
        %4083 = vset.pattern.permute.xlu0 0
        %4084 = vperm.xlu0 %4083, %v3952
        %v4085 = vpop.permute.xlu0 %4084
        %4088 = vset.pattern.permute.xlu0 0
        %4089 = vperm.xlu0 %4088, %v3953
        %v4090 = vpop.permute.xlu0 %4089
        %4093 = vset.pattern.permute.xlu0 0
        %4094 = vperm.xlu0 %4093, %v3954
        %v4095 = vpop.permute.xlu0 %4094
        %4098 = vset.pattern.permute.xlu0 0
        %4099 = vperm.xlu0 %4098, %v3955
        %v4100 = vpop.permute.xlu0 %4099
        %4103 = vset.pattern.permute.xlu0 0
        %4104 = vperm.xlu0 %4103, %v3956
        %v4105 = vpop.permute.xlu0 %4104
        %4108 = vset.pattern.permute.xlu0 0
        %4109 = vperm.xlu0 %4108, %v3957
        %v4110 = vpop.permute.xlu0 %4109
        %4113 = vset.pattern.permute.xlu0 0
        %4114 = vperm.xlu0 %4113, %v3958
        %v4115 = vpop.permute.xlu0 %4114
        %4118 = vset.pattern.permute.xlu0 0
        %4119 = vperm.xlu0 %4118, %v3959
        %v4120 = vpop.permute.xlu0 %4119
        %v4122 = vmul.f32 %v2856, %v3965
        %v4123 = vmul.f32 %v2857, %v3970
        %v4124 = vmul.f32 %v2858, %v3975
        %v4125 = vmul.f32 %v2859, %v3980
        %v4126 = vmul.f32 %v2860, %v3985
        %v4127 = vmul.f32 %v2861, %v3990
        %v4128 = vmul.f32 %v2862, %v3995
        %v4129 = vmul.f32 %v2863, %v4000
        %v4130 = vmul.f32 %v2864, %v4005
        %v4131 = vmul.f32 %v2865, %v4010
        %v4132 = vmul.f32 %v2866, %v4015
        %v4133 = vmul.f32 %v2867, %v4020
        %v4134 = vmul.f32 %v2868, %v4025
        %v4135 = vmul.f32 %v2869, %v4030
        %v4136 = vmul.f32 %v2870, %v4035
        %v4137 = vmul.f32 %v2871, %v4040
        %v4138 = vmul.f32 %v2872, %v4045
        %v4139 = vmul.f32 %v2873, %v4050
        %v4140 = vmul.f32 %v2874, %v4055
        %v4141 = vmul.f32 %v2875, %v4060
        %v4142 = vmul.f32 %v2876, %v4065
        %v4143 = vmul.f32 %v2877, %v4070
        %v4144 = vmul.f32 %v2878, %v4075
        %v4145 = vmul.f32 %v2879, %v4080
        %v4146 = vmul.f32 %v2880, %v4085
        %v4147 = vmul.f32 %v2881, %v4090
        %v4148 = vmul.f32 %v2882, %v4095
        %v4149 = vmul.f32 %v2883, %v4100
        %v4150 = vmul.f32 %v2884, %v4105
        %v4151 = vmul.f32 %v2885, %v4110
        %v4152 = vmul.f32 %v2886, %v4115
        %v4153 = vmul.f32 %v2887, %v4120
        %v4154 = vsel %vm1108, %v4122, 0.0
        %v4155 = vsel %vm1108, %v4124, 0.0
        %v4156 = vadd.f32 %v4154, %v4155
        %v4157 = vsel %vm1108, %v4126, 0.0
        %v4158 = vadd.f32 %v4156, %v4157
        %v4159 = vsel %vm1108, %v4128, 0.0
        %v4160 = vadd.f32 %v4158, %v4159
        %v4161 = vsel %vm1108, %v4130, 0.0
        %v4162 = vadd.f32 %v4160, %v4161
        %v4163 = vsel %vm1108, %v4132, 0.0
        %v4164 = vadd.f32 %v4162, %v4163
        %v4165 = vsel %vm1108, %v4134, 0.0
        %v4166 = vadd.f32 %v4164, %v4165
        %v4167 = vsel %vm1108, %v4136, 0.0
        %v4168 = vadd.f32 %v4166, %v4167
        %v4169 = vsel %vm1108, %v4138, 0.0
        %v4170 = vadd.f32 %v4168, %v4169
        %v4171 = vsel %vm1108, %v4140, 0.0
        %v4172 = vadd.f32 %v4170, %v4171
        %v4173 = vsel %vm1108, %v4142, 0.0
        %v4174 = vadd.f32 %v4172, %v4173
        %v4175 = vsel %vm1108, %v4144, 0.0
        %v4176 = vadd.f32 %v4174, %v4175
        %v4177 = vsel %vm1108, %v4146, 0.0
        %v4178 = vadd.f32 %v4176, %v4177
        %v4179 = vsel %vm1108, %v4148, 0.0
        %v4180 = vadd.f32 %v4178, %v4179
        %v4181 = vsel %vm1108, %v4150, 0.0
        %v4182 = vadd.f32 %v4180, %v4181
        %v4183 = vsel %vm1108, %v4152, 0.0
        %v4184 = vadd.f32 %v4182, %v4183
        %v4185 = vsel %vm1108, %v4123, 0.0
        %v4186 = vsel %vm1108, %v4125, 0.0
        %v4187 = vadd.f32 %v4185, %v4186
        %v4188 = vsel %vm1108, %v4127, 0.0
        %v4189 = vadd.f32 %v4187, %v4188
        %v4190 = vsel %vm1108, %v4129, 0.0
        %v4191 = vadd.f32 %v4189, %v4190
        %v4192 = vsel %vm1108, %v4131, 0.0
        %v4193 = vadd.f32 %v4191, %v4192
        %v4194 = vsel %vm1108, %v4133, 0.0
        %v4195 = vadd.f32 %v4193, %v4194
        %v4196 = vsel %vm1108, %v4135, 0.0
        %v4197 = vadd.f32 %v4195, %v4196
        %v4198 = vsel %vm1108, %v4137, 0.0
        %v4199 = vadd.f32 %v4197, %v4198
        %v4200 = vsel %vm1108, %v4139, 0.0
        %v4201 = vadd.f32 %v4199, %v4200
        %v4202 = vsel %vm1108, %v4141, 0.0
        %v4203 = vadd.f32 %v4201, %v4202
        %v4204 = vsel %vm1108, %v4143, 0.0
        %v4205 = vadd.f32 %v4203, %v4204
        %v4206 = vsel %vm1108, %v4145, 0.0
        %v4207 = vadd.f32 %v4205, %v4206
        %v4208 = vsel %vm1108, %v4147, 0.0
        %v4209 = vadd.f32 %v4207, %v4208
        %v4210 = vsel %vm1108, %v4149, 0.0
        %v4211 = vadd.f32 %v4209, %v4210
        %v4212 = vsel %vm1108, %v4151, 0.0
        %v4213 = vadd.f32 %v4211, %v4212
        %v4214 = vsel %vm1108, %v4153, 0.0
        %v4215 = vadd.f32 %v4213, %v4214
        %v4216 = vadd.f32 %v3960, %v4184
        %v4217 = vadd.f32 %v3961, %v4215
        %4218 = vst.msk [vmem:[#allocation2] sm:$0xff] %vm1108, %v4216
        %4219 = vst.msk [vmem:[#allocation2 + $0x8] sm:$0xff] %vm1108, %v4217
        %s4220 = scalar_lea.vmem %s16, %s43
        %v4221 = vld [vmem:[%s4220] sm:$0x1]
        %v4223 = vlaneseq
        %v4224 = vshrl.u32 %v4223, 7
        %v4225 = vsub.s32 0, %v4224
        %v4226 = vrot.slane %v4221, %v4225
        %v4228 = vmul.f32 %v3315, %v4226
        %v4229 = vmul.f32 %v3316, %v4226
        %v4230 = vmul.f32 %v3317, %v4226
        %v4231 = vmul.f32 %v3318, %v4226
        %v4232 = vmul.f32 %v3319, %v4226
        %v4233 = vmul.f32 %v3320, %v4226
        %v4234 = vmul.f32 %v3321, %v4226
        %v4235 = vmul.f32 %v3322, %v4226
        %v4236 = vmul.f32 %v3323, %v4226
        %v4237 = vmul.f32 %v3324, %v4226
        %v4238 = vmul.f32 %v3325, %v4226
        %v4239 = vmul.f32 %v3326, %v4226
        %v4240 = vmul.f32 %v3327, %v4226
        %v4241 = vmul.f32 %v3328, %v4226
        %v4242 = vmul.f32 %v3329, %v4226
        %v4243 = vmul.f32 %v3330, %v4226
        %v4244 = vmul.f32 %v3331, %v4226
        %v4245 = vmul.f32 %v3332, %v4226
        %v4246 = vmul.f32 %v3333, %v4226
        %v4247 = vmul.f32 %v3334, %v4226
        %v4248 = vmul.f32 %v3335, %v4226
        %v4249 = vmul.f32 %v3336, %v4226
        %v4250 = vmul.f32 %v3337, %v4226
        %v4251 = vmul.f32 %v3338, %v4226
        %v4252 = vmul.f32 %v3339, %v4226
        %v4253 = vmul.f32 %v3340, %v4226
        %v4254 = vmul.f32 %v3341, %v4226
        %v4255 = vmul.f32 %v3342, %v4226
        %v4256 = vmul.f32 %v3343, %v4226
        %v4257 = vmul.f32 %v3344, %v4226
        %v4258 = vmul.f32 %v3345, %v4226
        %v4259 = vmul.f32 %v3346, %v4226
        %v4260 = vsel %vm1108, %v4228, 0.0
        %4261 = vadd.xlane.f32.xlu0 %v4260
        %v4262 = vpop.xlane.xlu0 %4261
        %v4263 = vsel %vm1108, %v4229, 0.0
        %4264 = vadd.xlane.f32.xlu0 %v4263
        %v4265 = vpop.xlane.xlu0 %4264
        %v4266 = vsel %vm1108, %v4230, 0.0
        %4267 = vadd.xlane.f32.xlu0 %v4266
        %v4268 = vpop.xlane.xlu0 %4267
        %v4269 = vsel %vm1108, %v4231, 0.0
        %4270 = vadd.xlane.f32.xlu0 %v4269
        %v4271 = vpop.xlane.xlu0 %4270
        %v4272 = vsel %vm1108, %v4232, 0.0
        %4273 = vadd.xlane.f32.xlu0 %v4272
        %v4274 = vpop.xlane.xlu0 %4273
        %v4275 = vsel %vm1108, %v4233, 0.0
        %4276 = vadd.xlane.f32.xlu0 %v4275
        %v4277 = vpop.xlane.xlu0 %4276
        %v4278 = vsel %vm1108, %v4234, 0.0
        %4279 = vadd.xlane.f32.xlu0 %v4278
        %v4280 = vpop.xlane.xlu0 %4279
        %v4281 = vsel %vm1108, %v4235, 0.0
        %4282 = vadd.xlane.f32.xlu0 %v4281
        %v4283 = vpop.xlane.xlu0 %4282
        %v4284 = vsel %vm1108, %v4236, 0.0
        %4285 = vadd.xlane.f32.xlu0 %v4284
        %v4286 = vpop.xlane.xlu0 %4285
        %v4287 = vsel %vm1108, %v4237, 0.0
        %4288 = vadd.xlane.f32.xlu0 %v4287
        %v4289 = vpop.xlane.xlu0 %4288
        %v4290 = vsel %vm1108, %v4238, 0.0
        %4291 = vadd.xlane.f32.xlu0 %v4290
        %v4292 = vpop.xlane.xlu0 %4291
        %v4293 = vsel %vm1108, %v4239, 0.0
        %4294 = vadd.xlane.f32.xlu0 %v4293
        %v4295 = vpop.xlane.xlu0 %4294
        %v4296 = vsel %vm1108, %v4240, 0.0
        %4297 = vadd.xlane.f32.xlu0 %v4296
        %v4298 = vpop.xlane.xlu0 %4297
        %v4299 = vsel %vm1108, %v4241, 0.0
        %4300 = vadd.xlane.f32.xlu0 %v4299
        %v4301 = vpop.xlane.xlu0 %4300
        %v4302 = vsel %vm1108, %v4242, 0.0
        %4303 = vadd.xlane.f32.xlu0 %v4302
        %v4304 = vpop.xlane.xlu0 %4303
        %v4305 = vsel %vm1108, %v4243, 0.0
        %4306 = vadd.xlane.f32.xlu0 %v4305
        %v4307 = vpop.xlane.xlu0 %4306
        %v4308 = vsel %vm1108, %v4244, 0.0
        %4309 = vadd.xlane.f32.xlu0 %v4308
        %v4310 = vpop.xlane.xlu0 %4309
        %v4311 = vsel %vm1108, %v4245, 0.0
        %4312 = vadd.xlane.f32.xlu0 %v4311
        %v4313 = vpop.xlane.xlu0 %4312
        %v4314 = vsel %vm1108, %v4246, 0.0
        %4315 = vadd.xlane.f32.xlu0 %v4314
        %v4316 = vpop.xlane.xlu0 %4315
        %v4317 = vsel %vm1108, %v4247, 0.0
        %4318 = vadd.xlane.f32.xlu0 %v4317
        %v4319 = vpop.xlane.xlu0 %4318
        %v4320 = vsel %vm1108, %v4248, 0.0
        %4321 = vadd.xlane.f32.xlu0 %v4320
        %v4322 = vpop.xlane.xlu0 %4321
        %v4323 = vsel %vm1108, %v4249, 0.0
        %4324 = vadd.xlane.f32.xlu0 %v4323
        %v4325 = vpop.xlane.xlu0 %4324
        %v4326 = vsel %vm1108, %v4250, 0.0
        %4327 = vadd.xlane.f32.xlu0 %v4326
        %v4328 = vpop.xlane.xlu0 %4327
        %v4329 = vsel %vm1108, %v4251, 0.0
        %4330 = vadd.xlane.f32.xlu0 %v4329
        %v4331 = vpop.xlane.xlu0 %4330
        %v4332 = vsel %vm1108, %v4252, 0.0
        %4333 = vadd.xlane.f32.xlu0 %v4332
        %v4334 = vpop.xlane.xlu0 %4333
        %v4335 = vsel %vm1108, %v4253, 0.0
        %4336 = vadd.xlane.f32.xlu0 %v4335
        %v4337 = vpop.xlane.xlu0 %4336
        %v4338 = vsel %vm1108, %v4254, 0.0
        %4339 = vadd.xlane.f32.xlu0 %v4338
        %v4340 = vpop.xlane.xlu0 %4339
        %v4341 = vsel %vm1108, %v4255, 0.0
        %4342 = vadd.xlane.f32.xlu0 %v4341
        %v4343 = vpop.xlane.xlu0 %4342
        %v4344 = vsel %vm1108, %v4256, 0.0
        %4345 = vadd.xlane.f32.xlu0 %v4344
        %v4346 = vpop.xlane.xlu0 %4345
        %v4347 = vsel %vm1108, %v4257, 0.0
        %4348 = vadd.xlane.f32.xlu0 %v4347
        %v4349 = vpop.xlane.xlu0 %4348
        %v4350 = vsel %vm1108, %v4258, 0.0
        %4351 = vadd.xlane.f32.xlu0 %v4350
        %v4352 = vpop.xlane.xlu0 %4351
        %v4353 = vsel %vm1108, %v4259, 0.0
        %4354 = vadd.xlane.f32.xlu0 %v4353
        %v4355 = vpop.xlane.xlu0 %4354
        %v4388 = vlaneseq
        %v4389 = vand.u32 %v4388, 127
        %v4390 = vlaneseq
        %v4391 = vshrl.u32 %v4390, 7
        %v4392 = vsub.s32 %v4389, %v4391
        %v4393 = vrot.slane %v4262, %v4392
        %v4394 = vadd.s32 %v4389, 4294967288
        %v4395 = vlaneseq
        %v4396 = vshrl.u32 %v4395, 7
        %v4397 = vsub.s32 %v4394, %v4396
        %v4398 = vrot.slane %v4265, %v4397
        %vm4399 = vcmask 130112
        %v4400 = vsel %vm4399, %v4398, %v4393
        %v4401 = vlaneseq
        %v4402 = vshrl.u32 %v4401, 7
        %v4403 = vsub.s32 %v4389, %v4402
        %v4404 = vrot.slane %v4268, %v4403
        %v4405 = vlaneseq
        %v4406 = vshrl.u32 %v4405, 7
        %v4407 = vsub.s32 %v4394, %v4406
        %v4408 = vrot.slane %v4271, %v4407
        %v4409 = vsel %vm4399, %v4408, %v4404
        %v4410 = vlaneseq
        %v4411 = vshrl.u32 %v4410, 7
        %v4412 = vsub.s32 %v4389, %v4411
        %v4413 = vrot.slane %v4274, %v4412
        %v4414 = vlaneseq
        %v4415 = vshrl.u32 %v4414, 7
        %v4416 = vsub.s32 %v4394, %v4415
        %v4417 = vrot.slane %v4277, %v4416
        %v4418 = vsel %vm4399, %v4417, %v4413
        %v4419 = vlaneseq
        %v4420 = vshrl.u32 %v4419, 7
        %v4421 = vsub.s32 %v4389, %v4420
        %v4422 = vrot.slane %v4280, %v4421
        %v4423 = vlaneseq
        %v4424 = vshrl.u32 %v4423, 7
        %v4425 = vsub.s32 %v4394, %v4424
        %v4426 = vrot.slane %v4283, %v4425
        %v4427 = vsel %vm4399, %v4426, %v4422
        %v4428 = vlaneseq
        %v4429 = vshrl.u32 %v4428, 7
        %v4430 = vsub.s32 %v4389, %v4429
        %v4431 = vrot.slane %v4286, %v4430
        %v4432 = vlaneseq
        %v4433 = vshrl.u32 %v4432, 7
        %v4434 = vsub.s32 %v4394, %v4433
        %v4435 = vrot.slane %v4289, %v4434
        %v4436 = vsel %vm4399, %v4435, %v4431
        %v4437 = vlaneseq
        %v4438 = vshrl.u32 %v4437, 7
        %v4439 = vsub.s32 %v4389, %v4438
        %v4440 = vrot.slane %v4292, %v4439
        %v4441 = vlaneseq
        %v4442 = vshrl.u32 %v4441, 7
        %v4443 = vsub.s32 %v4394, %v4442
        %v4444 = vrot.slane %v4295, %v4443
        %v4445 = vsel %vm4399, %v4444, %v4440
        %v4446 = vlaneseq
        %v4447 = vshrl.u32 %v4446, 7
        %v4448 = vsub.s32 %v4389, %v4447
        %v4449 = vrot.slane %v4298, %v4448
        %v4450 = vlaneseq
        %v4451 = vshrl.u32 %v4450, 7
        %v4452 = vsub.s32 %v4394, %v4451
        %v4453 = vrot.slane %v4301, %v4452
        %v4454 = vsel %vm4399, %v4453, %v4449
        %v4455 = vlaneseq
        %v4456 = vshrl.u32 %v4455, 7
        %v4457 = vsub.s32 %v4389, %v4456
        %v4458 = vrot.slane %v4304, %v4457
        %v4459 = vlaneseq
        %v4460 = vshrl.u32 %v4459, 7
        %v4461 = vsub.s32 %v4394, %v4460
        %v4462 = vrot.slane %v4307, %v4461
        %v4463 = vsel %vm4399, %v4462, %v4458
        %v4464 = vlaneseq
        %v4465 = vshrl.u32 %v4464, 7
        %v4466 = vsub.s32 %v4389, %v4465
        %v4467 = vrot.slane %v4310, %v4466
        %v4468 = vlaneseq
        %v4469 = vshrl.u32 %v4468, 7
        %v4470 = vsub.s32 %v4394, %v4469
        %v4471 = vrot.slane %v4313, %v4470
        %v4472 = vsel %vm4399, %v4471, %v4467
        %v4473 = vlaneseq
        %v4474 = vshrl.u32 %v4473, 7
        %v4475 = vsub.s32 %v4389, %v4474
        %v4476 = vrot.slane %v4316, %v4475
        %v4477 = vlaneseq
        %v4478 = vshrl.u32 %v4477, 7
        %v4479 = vsub.s32 %v4394, %v4478
        %v4480 = vrot.slane %v4319, %v4479
        %v4481 = vsel %vm4399, %v4480, %v4476
        %v4482 = vlaneseq
        %v4483 = vshrl.u32 %v4482, 7
        %v4484 = vsub.s32 %v4389, %v4483
        %v4485 = vrot.slane %v4322, %v4484
        %v4486 = vlaneseq
        %v4487 = vshrl.u32 %v4486, 7
        %v4488 = vsub.s32 %v4394, %v4487
        %v4489 = vrot.slane %v4325, %v4488
        %v4490 = vsel %vm4399, %v4489, %v4485
        %v4491 = vlaneseq
        %v4492 = vshrl.u32 %v4491, 7
        %v4493 = vsub.s32 %v4389, %v4492
        %v4494 = vrot.slane %v4328, %v4493
        %v4495 = vlaneseq
        %v4496 = vshrl.u32 %v4495, 7
        %v4497 = vsub.s32 %v4394, %v4496
        %v4498 = vrot.slane %v4331, %v4497
        %v4499 = vsel %vm4399, %v4498, %v4494
        %v4500 = vlaneseq
        %v4501 = vshrl.u32 %v4500, 7
        %v4502 = vsub.s32 %v4389, %v4501
        %v4503 = vrot.slane %v4334, %v4502
        %v4504 = vlaneseq
        %v4505 = vshrl.u32 %v4504, 7
        %v4506 = vsub.s32 %v4394, %v4505
        %v4507 = vrot.slane %v4337, %v4506
        %v4508 = vsel %vm4399, %v4507, %v4503
        %v4509 = vlaneseq
        %v4510 = vshrl.u32 %v4509, 7
        %v4511 = vsub.s32 %v4389, %v4510
        %v4512 = vrot.slane %v4340, %v4511
        %v4513 = vlaneseq
        %v4514 = vshrl.u32 %v4513, 7
        %v4515 = vsub.s32 %v4394, %v4514
        %v4516 = vrot.slane %v4343, %v4515
        %v4517 = vsel %vm4399, %v4516, %v4512
        %v4518 = vlaneseq
        %v4519 = vshrl.u32 %v4518, 7
        %v4520 = vsub.s32 %v4389, %v4519
        %v4521 = vrot.slane %v4346, %v4520
        %v4522 = vlaneseq
        %v4523 = vshrl.u32 %v4522, 7
        %v4524 = vsub.s32 %v4394, %v4523
        %v4525 = vrot.slane %v4349, %v4524
        %v4526 = vsel %vm4399, %v4525, %v4521
        %v4527 = vlaneseq
        %v4528 = vshrl.u32 %v4527, 7
        %v4529 = vsub.s32 %v4389, %v4528
        %v4530 = vrot.slane %v4352, %v4529
        %v4531 = vlaneseq
        %v4532 = vshrl.u32 %v4531, 7
        %v4533 = vsub.s32 %v4394, %v4532
        %v4534 = vrot.slane %v4355, %v4533
        %v4535 = vsel %vm4399, %v4534, %v4530
        %vm4536 = vcmask 1041409
        %v4537 = vsel %vm4536, %v4409, %v4400
        %vm4538 = vcmask 1042434
        %v4539 = vsel %vm4538, %v4418, %v4537
        %vm4540 = vcmask 1043459
        %v4541 = vsel %vm4540, %v4427, %v4539
        %vm4542 = vcmask 1044484
        %v4543 = vsel %vm4542, %v4436, %v4541
        %vm4544 = vcmask 1045509
        %v4545 = vsel %vm4544, %v4445, %v4543
        %vm4546 = vcmask 1046534
        %v4547 = vsel %vm4546, %v4454, %v4545
        %vm4548 = vcmask 1047559
        %v4549 = vsel %vm4548, %v4463, %v4547
        %v4550 = vsel %vm4536, %v4481, %v4472
        %v4551 = vsel %vm4538, %v4490, %v4550
        %v4552 = vsel %vm4540, %v4499, %v4551
        %v4553 = vsel %vm4542, %v4508, %v4552
        %v4554 = vsel %vm4544, %v4517, %v4553
        %v4555 = vsel %vm4546, %v4526, %v4554
        %v4556 = vsel %vm4548, %v4535, %v4555
        %v4559 = vmul.f32 %v1019, %v4549
        %v4560 = vmul.f32 %v1020, %v4556
        %v4561 = vmul.f32 %v4559, %v1092
        %v4562 = vmul.f32 %v4560, %v1094
        %v4563 = vmul.f32 %v4561, %v1035
        %v4564 = vmul.f32 %v4562, %v1036
        %vm4565 = vcmask 130048
        %v4566 = vsel %vm4565, %v4563, 0.0
        %v4567 = vsel %vm4565, %v4564, 0.0
        %v4568 = vadd.f32 %v4566, %v4567
        %v4569 = vrot.slane %v4568, 4
        %v4570 = vadd.f32 %v4568, %v4569
        %v4571 = vrot.slane %v4570, 2
        %v4572 = vadd.f32 %v4570, %v4571
        %v4573 = vrot.slane %v4572, 1
        %v4574 = vadd.f32 %v4572, %v4573
        %v4575 = vmul.f32 %v4561, %v1049
        %v4576 = vmul.f32 %v4562, %v1050
        %v4577 = vsel %vm4565, %v4575, 0.0
        %v4578 = vsel %vm4565, %v4576, 0.0
        %v4579 = vadd.f32 %v4577, %v4578
        %v4580 = vrot.slane %v4579, 4
        %v4581 = vadd.f32 %v4579, %v4580
        %v4582 = vrot.slane %v4581, 2
        %v4583 = vadd.f32 %v4581, %v4582
        %v4584 = vrot.slane %v4583, 1
        %v4585 = vadd.f32 %v4583, %v4584
        %v4586 = vmul.f32 %v4561, %v1063
        %v4587 = vmul.f32 %v4562, %v1064
        %v4588 = vsel %vm4565, %v4586, 0.0
        %v4589 = vsel %vm4565, %v4587, 0.0
        %v4590 = vadd.f32 %v4588, %v4589
        %v4591 = vrot.slane %v4590, 4
        %v4592 = vadd.f32 %v4590, %v4591
        %v4593 = vrot.slane %v4592, 2
        %v4594 = vadd.f32 %v4592, %v4593
        %v4595 = vrot.slane %v4594, 1
        %v4596 = vadd.f32 %v4594, %v4595
        %v4597 = vld [vmem:[#allocation3] sm:$0x7]
        %vm4598 = vcmask 1040384
        %v4599 = vsel %vm4598, %v4574, %v4585
        %vm4600 = vcmask 1041408
        %v4601 = vsel %vm4600, %v4599, %v4596
        %v4602 = vadd.f32 %v4597, %v4601
        %vm4603 = vcmask 124928
        %4604 = vst.msk [vmem:[#allocation3] sm:$0x7] %vm4603, %v4602
        // Predicated region
        $region113: #{ligrec_egnn_forward.3} parent=103 // pred_check
          _
        $region114: #{ligrec_egnn_forward.3} parent=103 // pred_check_branch
          %4606 = sbr.rel (%p844) target = $region116
        $region115: #{ligrec_egnn_forward.3} parent=103 // pred_region
          %s4607 = sld [smem:[#allocation6]]
          %v4608 = vld [vmem:[#allocation2] sm:$0xff]
          %v4609 = vld [vmem:[#allocation2 + $0x8] sm:$0xff]
          %v4610 = vstv %s4607
          %v4611 = vmul.f32 %v4608, %v4610
          %v4612 = vmul.f32 %v4609, %v4610
          %v4613 = vld [vmem:[#allocation3] sm:$0x7]
          %v4614 = vmul.f32 %v4613, %v4610
          %v4615 = vld [vmem:[%s17] sm:$0xf]
          %v4616 = vld [vmem:[%s17 + $0x4] sm:$0xf]
          %v4617 = vld [vmem:[%s17 + $0x8] sm:$0xf]
          %v4618 = vld [vmem:[%s17 + $0xc] sm:$0xf]
          %v4619 = vld [vmem:[%s17 + $0x10] sm:$0xf]
          %v4620 = vld [vmem:[%s17 + $0x14] sm:$0xf]
          %v4621 = vld [vmem:[%s17 + $0x18] sm:$0xf]
          %v4622 = vld [vmem:[%s17 + $0x1c] sm:$0xf]
          %v4623 = vpack.c.bf16 %v854, %v853
          %v4624 = vpack.c.bf16 %v4612, %v4611
          %v4629 = vunpack.c.l.b16 %v4619
          %v4630 = vunpack.c.l.b16 %v4620
          %v4631 = vunpack.c.l.b16 %v4621
          %v4632 = vunpack.c.l.b16 %v4622
          %v4633 = vpack.c.b16 %v4630, %v4629
          %v4634 = vpack.c.b16 %v4632, %v4631
          %v4638 = vsel %vm1108, %v4624, 0
          %4640 = vmatprep.subr.bf16.mxu0 0
          %4641 = vmatpush1.bf16.msra.mxu0 %v4633
          %4642 = vmatprep.subr.bf16.mxu0 0
          %4643 = vmatpush1.bf16.msra.mxu0 %v4634
          %4644 = vmatprep.subr.bf16.mxu0 0
          %4645 = vmatpush1.bf16.msra.mxu0 0
          %4646 = vmatprep.subr.bf16.mxu0 0
          %4647 = vmatpush1.bf16.msra.mxu0 0
          %4648 = vmatprep.subr.bf16.mxu0 0
          %4649 = vmatpush1.bf16.msra.mxu0 0
          %4650 = vmatprep.subr.bf16.mxu0 0
          %4651 = vmatpush1.bf16.msra.mxu0 0
          %4652 = vmatprep.subr.bf16.mxu0 0
          %4653 = vmatpush1.bf16.msra.mxu0 0
          %4654 = vmatprep.subr.bf16.mxu0 0
          %4655 = vmatpush1.bf16.msra.mxu0 0
          %4656 = vmatprep.subr.bf16.mxu0 0
          %4657 = vmatpush1.bf16.msra.mxu0 0
          %4658 = vmatprep.subr.bf16.mxu0 0
          %4659 = vmatpush1.bf16.msra.mxu0 0
          %4660 = vmatprep.subr.bf16.mxu0 0
          %4661 = vmatpush1.bf16.msra.mxu0 0
          %4662 = vmatprep.subr.bf16.mxu0 0
          %4663 = vmatpush1.bf16.msra.mxu0 0
          %4664 = vmatprep.subr.bf16.mxu0 0
          %4665 = vmatpush1.bf16.msra.mxu0 0
          %4666 = vmatprep.subr.bf16.mxu0 0
          %4667 = vmatpush1.bf16.msra.mxu0 0
          %4668 = vmatprep.subr.bf16.mxu0 0
          %4669 = vmatpush1.bf16.msra.mxu0 0
          %4670 = vmatprep.subr.bf16.mxu0 0
          %4671 = vmatpush1.bf16.msra.mxu0 0
          %4672 = vmatprep.mubr.bf16.mxu0 0
          %4673 = vmatmul.mubr.bf16.gmra.mrb[0].mxu0 %v4638
          %v4674 = vpop.f32.mrb[0].mxu0
          %v4675 = vadd.f32 0.0, %v4674
          %v4676 = vpop.f32.mrb[0].mxu0
          %v4677 = vpop.f32.mrb[0].mxu0
          %v4678 = vadd.f32 0.0, %v4677
          %v4679 = vpop.f32.mrb[0].mxu0
          %4680 = vdwg.mxu0
          %v4685 = vunpack.c.l.b16 %v4615
          %v4686 = vunpack.c.l.b16 %v4616
          %v4687 = vunpack.c.l.b16 %v4617
          %v4688 = vunpack.c.l.b16 %v4618
          %v4689 = vpack.c.b16 %v4686, %v4685
          %v4690 = vpack.c.b16 %v4688, %v4687
          %v4694 = vsel %vm1108, %v4623, 0
          %4696 = vmatprep.subr.bf16.mxu0 0
          %4697 = vmatpush1.bf16.msra.mxu0 %v4689
          %4698 = vmatprep.subr.bf16.mxu0 0
          %4699 = vmatpush1.bf16.msra.mxu0 %v4690
          %4700 = vmatprep.subr.bf16.mxu0 0
          %4701 = vmatpush1.bf16.msra.mxu0 0
          %4702 = vmatprep.subr.bf16.mxu0 0
          %4703 = vmatpush1.bf16.msra.mxu0 0
          %4704 = vmatprep.subr.bf16.mxu0 0
          %4705 = vmatpush1.bf16.msra.mxu0 0
          %4706 = vmatprep.subr.bf16.mxu0 0
          %4707 = vmatpush1.bf16.msra.mxu0 0
          %4708 = vmatprep.subr.bf16.mxu0 0
          %4709 = vmatpush1.bf16.msra.mxu0 0
          %4710 = vmatprep.subr.bf16.mxu0 0
          %4711 = vmatpush1.bf16.msra.mxu0 0
          %4712 = vmatprep.subr.bf16.mxu0 0
          %4713 = vmatpush1.bf16.msra.mxu0 0
          %4714 = vmatprep.subr.bf16.mxu0 0
          %4715 = vmatpush1.bf16.msra.mxu0 0
          %4716 = vmatprep.subr.bf16.mxu0 0
          %4717 = vmatpush1.bf16.msra.mxu0 0
          %4718 = vmatprep.subr.bf16.mxu0 0
          %4719 = vmatpush1.bf16.msra.mxu0 0
          %4720 = vmatprep.subr.bf16.mxu0 0
          %4721 = vmatpush1.bf16.msra.mxu0 0
          %4722 = vmatprep.subr.bf16.mxu0 0
          %4723 = vmatpush1.bf16.msra.mxu0 0
          %4724 = vmatprep.subr.bf16.mxu0 0
          %4725 = vmatpush1.bf16.msra.mxu0 0
          %4726 = vmatprep.subr.bf16.mxu0 0
          %4727 = vmatpush1.bf16.msra.mxu0 0
          %4728 = vmatprep.mubr.bf16.mxu0 0
          %4729 = vmatmul.mubr.bf16.gmra.mrb[0].mxu0 %v4694
          %v4730 = vpop.f32.mrb[0].mxu0
          %v4731 = vadd.f32 %v4675, %v4730
          %v4732 = vpop.f32.mrb[0].mxu0
          %v4733 = vpop.f32.mrb[0].mxu0
          %v4734 = vadd.f32 %v4678, %v4733
          %v4735 = vpop.f32.mrb[0].mxu0
          %4736 = vdwg.mxu0
          %v4737 = vld [vmem:[%s18] sm:$0x1]
          %v4739 = vlaneseq
          %v4740 = vshrl.u32 %v4739, 7
          %v4741 = vsub.s32 0, %v4740
          %v4742 = vrot.slane %v4737, %v4741
          %v4744 = vadd.f32 %v4731, %v4742
          %v4745 = vadd.f32 %v4734, %v4742
          %v4746 = vxor.u32 %v4744, 2147483648
          %v4747 = vxor.u32 %v4745, 2147483648
          %v4748 = vmul.f32 %v4746, 1.442695
          %v4749 = vpow.pop %v4748
          %v4750 = vmul.f32 %v4747, 1.442695
          %v4751 = vpow.pop %v4750
          %v4752 = vadd.f32 %v4749, 1.0
          %v4753 = vadd.f32 %v4751, 1.0
          %v4754 = vrcp.pop %v4752
          %v4755 = vmul.f32 1.0, %v4754
          %v4756 = vrcp.pop %v4753
          %v4757 = vmul.f32 1.0, %v4756
          %v4758 = vmul.f32 %v4744, %v4755
          %v4759 = vmul.f32 %v4745, %v4757
          %v4760 = vpack.c.bf16 %v4759, %v4758
          %v4761 = vld [vmem:[%s19] sm:$0xf]
          %v4762 = vld [vmem:[%s19 + $0x4] sm:$0xf]
          %v4763 = vld [vmem:[%s19 + $0x8] sm:$0xf]
          %v4764 = vld [vmem:[%s19 + $0xc] sm:$0xf]
          %v4765 = vld [vmem:[%s20] sm:$0x1]
          %v4767 = vlaneseq
          %v4768 = vshrl.u32 %v4767, 7
          %v4769 = vsub.s32 0, %v4768
          %v4770 = vrot.slane %v4765, %v4769
          %v4776 = vunpack.c.l.b16 %v4761
          %v4777 = vunpack.c.l.b16 %v4762
          %v4778 = vunpack.c.l.b16 %v4763
          %v4779 = vunpack.c.l.b16 %v4764
          %v4780 = vpack.c.b16 %v4777, %v4776
          %v4781 = vpack.c.b16 %v4779, %v4778
          %v4785 = vsel %vm1108, %v4760, 0
          %4787 = vmatprep.subr.bf16.mxu0 0
          %4788 = vmatpush1.bf16.msra.mxu0 %v4780
          %4789 = vmatprep.subr.bf16.mxu0 0
          %4790 = vmatpush1.bf16.msra.mxu0 %v4781
          %4791 = vmatprep.subr.bf16.mxu0 0
          %4792 = vmatpush1.bf16.msra.mxu0 0
          %4793 = vmatprep.subr.bf16.mxu0 0
          %4794 = vmatpush1.bf16.msra.mxu0 0
          %4795 = vmatprep.subr.bf16.mxu0 0
          %4796 = vmatpush1.bf16.msra.mxu0 0
          %4797 = vmatprep.subr.bf16.mxu0 0
          %4798 = vmatpush1.bf16.msra.mxu0 0
          %4799 = vmatprep.subr.bf16.mxu0 0
          %4800 = vmatpush1.bf16.msra.mxu0 0
          %4801 = vmatprep.subr.bf16.mxu0 0
          %4802 = vmatpush1.bf16.msra.mxu0 0
          %4803 = vmatprep.subr.bf16.mxu0 0
          %4804 = vmatpush1.bf16.msra.mxu0 0
          %4805 = vmatprep.subr.bf16.mxu0 0
          %4806 = vmatpush1.bf16.msra.mxu0 0
          %4807 = vmatprep.subr.bf16.mxu0 0
          %4808 = vmatpush1.bf16.msra.mxu0 0
          %4809 = vmatprep.subr.bf16.mxu0 0
          %4810 = vmatpush1.bf16.msra.mxu0 0
          %4811 = vmatprep.subr.bf16.mxu0 0
          %4812 = vmatpush1.bf16.msra.mxu0 0
          %4813 = vmatprep.subr.bf16.mxu0 0
          %4814 = vmatpush1.bf16.msra.mxu0 0
          %4815 = vmatprep.subr.bf16.mxu0 0
          %4816 = vmatpush1.bf16.msra.mxu0 0
          %4817 = vmatprep.subr.bf16.mxu0 0
          %4818 = vmatpush1.bf16.msra.mxu0 0
          %4819 = vmatprep.mubr.bf16.mxu0 0
          %4820 = vmatmul.mubr.bf16.gmra.mrb[0].mxu0 %v4785
          %v4821 = vpop.f32.mrb[0].mxu0
          %v4822 = vadd.f32 %v4770, %v4821
          %v4823 = vpop.f32.mrb[0].mxu0
          %v4824 = vpop.f32.mrb[0].mxu0
          %v4825 = vadd.f32 %v4770, %v4824
          %v4826 = vpop.f32.mrb[0].mxu0
          %4827 = vdwg.mxu0
          %v4828 = vadd.f32 %v853, %v4822
          %v4829 = vadd.f32 %v854, %v4825
          %4830 = vst.msk [vmem:[#allocation7] sm:$0xff] %vm1108, %v4828
          %4831 = vst.msk [vmem:[#allocation7 + $0x8] sm:$0xff] %vm1108, %v4829
          %v4832 = vadd.f32 %v855, %v4614
          %4833 = vst.msk [vmem:[#allocation9] sm:$0x7] %vm4603, %v4832
        $region116: #{ligrec_egnn_forward.3} parent=103 // pred_fallthru
          _
        // Predicated region
        $region117: #{ligrec_egnn_forward.3} parent=103 // pred_check
          %p4834 = pneg %p548
        $region118: #{ligrec_egnn_forward.3} parent=103 // pred_check_branch
          %4836 = sbr.rel (%p4834) target = $region120
        $region119: #{ligrec_egnn_forward.3} parent=103 // pred_region
          %s4837 = smul.u32 2, %s42
          %s4839 = ssub.s32 256, 256
          %4840 = vsyncadd [#allocation8], %s4839
          %s4841 = smul.addr %s4837, 128
          %s4842 = scalar_lea.hbm %s21, %s4841
          %s4843 = sshll.u32 [#allocation7], 4
          %s4844 = int_to_ptr.vmem [resolvable:$true] %s4843
          %4849 = dma.vmem_to_hbm [thread:$0]  %s4844, 256, %s4842, [#allocation8], 128, 128, 8
        $region120: #{ligrec_egnn_forward.3} parent=103 // pred_fallthru
          _
        // Predicated region
        $region121: #{ligrec_egnn_forward.3} parent=103 // pred_check
          %p4850 = pneg %p574
        $region122: #{ligrec_egnn_forward.3} parent=103 // pred_check_branch
          %4852 = sbr.rel (%p4850) target = $region124
        $region123: #{ligrec_egnn_forward.3} parent=103 // pred_region
          %s4854 = ssub.s32 64, 64
          %4855 = vsyncadd [#allocation10], %s4854
          %s4856 = smul.addr %s42, 64
          %s4857 = scalar_lea.hbm %s22, %s4856
          %s4859 = sshll.u32 [#allocation9], 4
          %s4860 = int_to_ptr.vmem [resolvable:$true] %s4859
          %4862 = dma.vmem_to_hbm [thread:$0]  %s4860, 64, %s4857, [#allocation10]
        $region124: #{ligrec_egnn_forward.3} parent=103 // pred_fallthru
          _
        // Predicated region
        $region125: #{ligrec_egnn_forward.3} parent=103 // pred_check
          %p4863 = pneg %p548
        $region126: #{ligrec_egnn_forward.3} parent=103 // pred_check_branch
          %4865 = sbr.rel (%p4863) target = $region128
        $region127: #{ligrec_egnn_forward.3} parent=103 // pred_region
          %4866 = dma.done [#allocation8], 256
        $region128: #{ligrec_egnn_forward.3} parent=103 // pred_fallthru
          _
        // Predicated region
        $region129: #{ligrec_egnn_forward.3} parent=103 // pred_check
          %p4867 = pneg %p574
        $region130: #{ligrec_egnn_forward.3} parent=103 // pred_check_branch
          %4869 = sbr.rel (%p4867) target = $region132
        $region131: #{ligrec_egnn_forward.3} parent=103 // pred_region
          %4870 = dma.done [#allocation10], 64
        $region132: #{ligrec_egnn_forward.3} parent=103 // pred_fallthru
          _
      $region104: #{ligrec_egnn_forward.3} parent=5 // pred_fallthru
        _
      %p4871 = scmp.le.s32.totalorder 2, %s32
      // Predicated region
      $region133: #{ligrec_egnn_forward.3} parent=5 // pred_check
        %p4872 = pneg %p4871
      $region134: #{ligrec_egnn_forward.3} parent=5 // pred_check_branch
        %4874 = sbr.rel (%p4872) target = $region136
      $region135: #{ligrec_egnn_forward.3} parent=5 // pred_region
        %s4875 = ssub.s32 %s32, 2
      $region136: #{ligrec_egnn_forward.3} parent=5 // pred_fallthru
        _
    $region6: #{ligrec_egnn_forward.3} parent=1 // loop_footer
      %s36 = sadd.s32 1, %s32
    $region7: #{ligrec_egnn_forward.3} parent=1 // loop_footer_branch
      %31 = sbr.rel target = $region3
    $region8: #{ligrec_egnn_forward.3} parent=1 // loop_exit
      _
    %4876 = vsyncpa [#allocation8], 1
    %s4877 = scalar_lea.sflag [#allocation8], 1
    %4878 = vsyncpa %s4877, 1
    %4879 = vsyncpa [#allocation10], 1

</llo_original>
